<compile_context>
chip_gen: v7x
topology: tpu7x:2x2x1
jax: 0.10.0
libtpu: 0.0.40
codegen_flags: <defaults>
</compile_context>

<pallas_src>
import functools

import jax
import jax.numpy as jnp
from jax.experimental import pallas as pl
from jax.experimental.pallas import tpu as pltpu

LANE = 128


def _round_up(x, m):
    return ((x + m - 1) // m) * m


# ----------------------------- Pallas kernels -----------------------------

def _conv3x3_acc(xpad_ref, w_ref, h, w, c):
    """3x3 / stride-1 conv of one halo-padded image tile held in VMEM.

    xpad_ref: (1, h+2, w+2, c) f32 block; w_ref: (9, c, c) bf16.
    Returns the conv output as an (h*w, c) f32 array.
    """
    acc = jnp.zeros((h * w, c), jnp.float32)
    for dh in range(3):
        for dw in range(3):
            patch = xpad_ref[0, dh:dh + h, dw:dw + w, :]        # (h, w, c) f32
            patch = patch.reshape(h * w, c).astype(jnp.bfloat16)
            acc = acc + jnp.dot(patch, w_ref[dh * 3 + dw],
                                preferred_element_type=jnp.float32)
    return acc


def _conv_stats_kernel(xpad_ref, w_ref, stats_ref, *, h, w, c):
    """Pass 1: per-image, per-channel sum and sum-of-squares of conv3x3(x)."""
    acc = _conv3x3_acc(xpad_ref, w_ref, h, w, c)                # (h*w, c) f32
    stats_ref[0, 0:1, :] = jnp.sum(acc, axis=0, keepdims=True)
    stats_ref[0, 1:2, :] = jnp.sum(acc * acc, axis=0, keepdims=True)


def _conv_bn_res_relu_kernel(xpad_ref, w_ref, scale_ref, shift_ref, o_ref,
                             *, h, w, c):
    """Pass 2: fused conv3x3 -> BN(scale,shift) -> + identity -> ReLU."""
    acc = _conv3x3_acc(xpad_ref, w_ref, h, w, c)                # (h*w, c) f32
    identity = xpad_ref[0, 1:1 + h, 1:1 + w, :].reshape(h * w, c)
    out = acc * scale_ref[...] + shift_ref[...] + identity
    out = jnp.maximum(out, 0.0)
    o_ref[0] = out.reshape(h, w, c)


# ------------------------------ forward pass -------------------------------

def newblock_forward(params, x_nchw, eps=1e-5):
    """`newBlock.forward`: relu(bn2(conv2(x)) + x). NCHW in / NCHW out."""
    wt = params["conv2_w"]            # (C, C, 3, 3), PyTorch OIHW layout
    gamma = params["bn2_gamma"]       # (C,)
    beta = params["bn2_beta"]         # (C,)

    n, c, h, w = x_nchw.shape
    assert wt.shape == (c, c, 3, 3)
    cp = _round_up(c, LANE)

    # NHWC, channels padded to the 128-lane width, +1 spatial halo for the 3x3
    # (padding=1 conv).  This is the only host-side copy of the activations.
    x = jnp.transpose(x_nchw, (0, 2, 3, 1)).astype(jnp.float32)
    xpad = jnp.pad(x, ((0, 0), (1, 1), (1, 1), (0, cp - c)))

    # (Cout, Cin, 3, 3) -> (9, Cin_p, Cout_p), stored bf16 for the MXU.
    wk = jnp.transpose(wt, (2, 3, 1, 0)).reshape(9, c, c)
    wk = jnp.pad(wk, ((0, 0), (0, cp - c), (0, cp - c))).astype(jnp.bfloat16)

    xpad_spec = pl.BlockSpec((1, h + 2, w + 2, cp), lambda i: (i, 0, 0, 0))
    w_spec = pl.BlockSpec((9, cp, cp), lambda i: (0, 0, 0))
    parallel = pltpu.CompilerParams(dimension_semantics=("parallel",))

    # ---- pass 1: per-image conv statistics (tiny output, no y in HBM) -----
    stats = pl.pallas_call(
        functools.partial(_conv_stats_kernel, h=h, w=w, c=cp),
        out_shape=jax.ShapeDtypeStruct((n, 2, cp), jnp.float32),
        grid=(n,),
        in_specs=[xpad_spec, w_spec],
        out_specs=pl.BlockSpec((1, 2, cp), lambda i: (i, 0, 0)),
        compiler_params=parallel,
    )(xpad, wk)

    # ---- BatchNorm batch stats folded to a per-channel scale / shift -------
    cnt = jnp.float32(n * h * w)
    sums = jnp.sum(stats, axis=0)                              # (2, cp)
    mean = sums[0] / cnt
    var = jnp.maximum(sums[1] / cnt - mean * mean, 0.0)        # biased, like PyTorch
    gamma_p = jnp.pad(gamma.astype(jnp.float32), (0, cp - c))
    beta_p = jnp.pad(beta.astype(jnp.float32), (0, cp - c))
    scale = gamma_p * jax.lax.rsqrt(var + eps)
    shift = beta_p - mean * scale

    # ---- pass 2: fused conv + BN + residual + ReLU --------------------------
    out = pl.pallas_call(
        functools.partial(_conv_bn_res_relu_kernel, h=h, w=w, c=cp),
        out_shape=jax.ShapeDtypeStruct((n, h, w, cp), jnp.float32),
        grid=(n,),
        in_specs=[xpad_spec, w_spec,
                  pl.BlockSpec((1, cp), lambda i: (0, 0)),
                  pl.BlockSpec((1, cp), lambda i: (0, 0))],
        out_specs=pl.BlockSpec((1, h, w, cp), lambda i: (i, 0, 0, 0)),
        compiler_params=parallel,
    )(xpad, wk, scale.reshape(1, cp), shift.reshape(1, cp))

    return jnp.transpose(out[..., :c], (0, 3, 1, 2))


def init_params(key, planes):
    std = 1.0 / jnp.sqrt(jnp.float32(planes * 9))
    w = std * jax.random.normal(key, (planes, planes, 3, 3), jnp.float32)
    return {
        "conv2_w": w,
        "bn2_gamma": jnp.ones((planes,), jnp.float32),   # PyTorch BN init
        "bn2_beta": jnp.zeros((planes,), jnp.float32),
    }


# ------------------------------ test driver --------------------------------

if __name__ == "__main__":
    key = jax.random.PRNGKey(0)
    k_param, k_x = jax.random.split(key)
    planes = 128                       # lane-aligned ResNet width
    params = init_params(k_param, planes)
    x = jax.random.normal(k_x, (2, planes, 16, 16), jnp.float32)

    fwd = jax.jit(newblock_forward)
    y = jax.block_until_ready(fwd(params, x))

    assert y.shape == x.shape, y.shape
    assert bool(jnp.all(jnp.isfinite(y)))
    assert bool(jnp.all(y >= 0.0))     # ReLU output

    # Pure-JAX reference (f32 conv); bf16 MXU operands -> loosened tolerance.
    def ref_forward(p, xr):
        wr = p["conv2_w"]
        g = p["bn2_gamma"]
        b = p["bn2_beta"]
        yr = jax.lax.conv_general_dilated(
            xr, wr, window_strides=(1, 1), padding=((1, 1), (1, 1)),
            dimension_numbers=("NCHW", "OIHW", "NCHW"))
        mu = jnp.mean(yr, axis=(0, 2, 3), keepdims=True)
        va = jnp.var(yr, axis=(0, 2, 3), keepdims=True)
        yn = (yr - mu) * jax.lax.rsqrt(va + 1e-5)
        yn = yn * g[None, :, None, None] + b[None, :, None, None]
        return jnp.maximum(yn + xr, 0.0)

    y_ref = ref_forward(params, x)
    err = float(jnp.max(jnp.abs(y - y_ref)))
    assert err < 1e-1, err
    print("KERNEL_OK")
</pallas_src>

<mosaic_0001>
module attributes {stable_mosaic.version = 11 : i64} {
  func.func @_conv_stats_kernel(%arg0: i32, %arg1: memref<1x18x18x128xf32, #tpu.memory_space<vmem>>, %arg2: memref<9x128x128xbf16, #tpu.memory_space<vmem>>, %arg3: memref<1x2x128xf32, #tpu.memory_space<vmem>>) attributes {dimension_semantics = [#tpu.dimension_semantics<parallel>], iteration_bounds = array<i64: 2>, scalar_prefetch = 0 : i64, scratch_operands = 0 : i64, tpu.core_type = #tpu.core_type<tc>, window_params = [{transform_indices = @transform_0, window_bounds = array<i64: 1, 18, 18, 128>}, {pipeline_mode = #tpu.pipeline_mode<synchronous>, transform_indices = @transform_1, window_bounds = array<i64: 9, 128, 128>}, {transform_indices = @transform_2, window_bounds = array<i64: 1, 2, 128>}]} {
    %cst = arith.constant 0.000000e+00 : f32
    %0 = vector.broadcast %cst : f32 to vector<256x128xf32>
    %c0 = arith.constant 0 : index
    %c0_0 = arith.constant 0 : index
    %c0_1 = arith.constant 0 : index
    %c0_2 = arith.constant 0 : index
    %1 = vector.load %arg1[%c0, %c0_0, %c0_1, %c0_2] : memref<1x18x18x128xf32, #tpu.memory_space<vmem>>, vector<1x16x16x128xf32>
    %2 = vector.shape_cast %1 : vector<1x16x16x128xf32> to vector<16x16x128xf32>
    %3 = vector.shape_cast %2 : vector<16x16x128xf32> to vector<256x128xf32>
    %4 = arith.truncf %3 : vector<256x128xf32> to vector<256x128xbf16>
    %c0_3 = arith.constant 0 : index
    %c0_4 = arith.constant 0 : index
    %c0_5 = arith.constant 0 : index
    %5 = vector.load %arg2[%c0_3, %c0_4, %c0_5] : memref<9x128x128xbf16, #tpu.memory_space<vmem>>, vector<1x128x128xbf16>
    %6 = vector.shape_cast %5 : vector<1x128x128xbf16> to vector<128x128xbf16>
    %cst_6 = arith.constant dense<0.000000e+00> : vector<256x128xf32>
    %7 = tpu.matmul %4, %6, %cst_6 {dimension_numbers = #tpu.dot_dimension_numbers<[1], [0], [0], [1], [0, 0, 1, 1], [], []>} : vector<256x128xbf16>, vector<128x128xbf16>, vector<256x128xf32> -> vector<256x128xf32>
    %8 = arith.addf %0, %7 : vector<256x128xf32>
    %c0_7 = arith.constant 0 : index
    %c0_8 = arith.constant 0 : index
    %c1 = arith.constant 1 : index
    %c0_9 = arith.constant 0 : index
    %9 = vector.load %arg1[%c0_7, %c0_8, %c1, %c0_9] : memref<1x18x18x128xf32, #tpu.memory_space<vmem>>, vector<1x16x16x128xf32>
    %10 = vector.shape_cast %9 : vector<1x16x16x128xf32> to vector<16x16x128xf32>
    %11 = vector.shape_cast %10 : vector<16x16x128xf32> to vector<256x128xf32>
    %12 = arith.truncf %11 : vector<256x128xf32> to vector<256x128xbf16>
    %c1_10 = arith.constant 1 : index
    %c0_11 = arith.constant 0 : index
    %c0_12 = arith.constant 0 : index
    %13 = vector.load %arg2[%c1_10, %c0_11, %c0_12] : memref<9x128x128xbf16, #tpu.memory_space<vmem>>, vector<1x128x128xbf16>
    %14 = vector.shape_cast %13 : vector<1x128x128xbf16> to vector<128x128xbf16>
    %cst_13 = arith.constant dense<0.000000e+00> : vector<256x128xf32>
    %15 = tpu.matmul %12, %14, %cst_13 {dimension_numbers = #tpu.dot_dimension_numbers<[1], [0], [0], [1], [0, 0, 1, 1], [], []>} : vector<256x128xbf16>, vector<128x128xbf16>, vector<256x128xf32> -> vector<256x128xf32>
    %16 = arith.addf %8, %15 : vector<256x128xf32>
    %c0_14 = arith.constant 0 : index
    %c0_15 = arith.constant 0 : index
    %c2 = arith.constant 2 : index
    %c0_16 = arith.constant 0 : index
    %17 = vector.load %arg1[%c0_14, %c0_15, %c2, %c0_16] : memref<1x18x18x128xf32, #tpu.memory_space<vmem>>, vector<1x16x16x128xf32>
    %18 = vector.shape_cast %17 : vector<1x16x16x128xf32> to vector<16x16x128xf32>
    %19 = vector.shape_cast %18 : vector<16x16x128xf32> to vector<256x128xf32>
    %20 = arith.truncf %19 : vector<256x128xf32> to vector<256x128xbf16>
    %c2_17 = arith.constant 2 : index
    %c0_18 = arith.constant 0 : index
    %c0_19 = arith.constant 0 : index
    %21 = vector.load %arg2[%c2_17, %c0_18, %c0_19] : memref<9x128x128xbf16, #tpu.memory_space<vmem>>, vector<1x128x128xbf16>
    %22 = vector.shape_cast %21 : vector<1x128x128xbf16> to vector<128x128xbf16>
    %cst_20 = arith.constant dense<0.000000e+00> : vector<256x128xf32>
    %23 = tpu.matmul %20, %22, %cst_20 {dimension_numbers = #tpu.dot_dimension_numbers<[1], [0], [0], [1], [0, 0, 1, 1], [], []>} : vector<256x128xbf16>, vector<128x128xbf16>, vector<256x128xf32> -> vector<256x128xf32>
    %24 = arith.addf %16, %23 : vector<256x128xf32>
    %c0_21 = arith.constant 0 : index
    %c1_22 = arith.constant 1 : index
    %c0_23 = arith.constant 0 : index
    %c0_24 = arith.constant 0 : index
    %25 = vector.load %arg1[%c0_21, %c1_22, %c0_23, %c0_24] : memref<1x18x18x128xf32, #tpu.memory_space<vmem>>, vector<1x16x16x128xf32>
    %26 = vector.shape_cast %25 : vector<1x16x16x128xf32> to vector<16x16x128xf32>
    %27 = vector.shape_cast %26 : vector<16x16x128xf32> to vector<256x128xf32>
    %28 = arith.truncf %27 : vector<256x128xf32> to vector<256x128xbf16>
    %c3 = arith.constant 3 : index
    %c0_25 = arith.constant 0 : index
    %c0_26 = arith.constant 0 : index
    %29 = vector.load %arg2[%c3, %c0_25, %c0_26] : memref<9x128x128xbf16, #tpu.memory_space<vmem>>, vector<1x128x128xbf16>
    %30 = vector.shape_cast %29 : vector<1x128x128xbf16> to vector<128x128xbf16>
    %cst_27 = arith.constant dense<0.000000e+00> : vector<256x128xf32>
    %31 = tpu.matmul %28, %30, %cst_27 {dimension_numbers = #tpu.dot_dimension_numbers<[1], [0], [0], [1], [0, 0, 1, 1], [], []>} : vector<256x128xbf16>, vector<128x128xbf16>, vector<256x128xf32> -> vector<256x128xf32>
    %32 = arith.addf %24, %31 : vector<256x128xf32>
    %c0_28 = arith.constant 0 : index
    %c1_29 = arith.constant 1 : index
    %c1_30 = arith.constant 1 : index
    %c0_31 = arith.constant 0 : index
    %33 = vector.load %arg1[%c0_28, %c1_29, %c1_30, %c0_31] : memref<1x18x18x128xf32, #tpu.memory_space<vmem>>, vector<1x16x16x128xf32>
    %34 = vector.shape_cast %33 : vector<1x16x16x128xf32> to vector<16x16x128xf32>
    %35 = vector.shape_cast %34 : vector<16x16x128xf32> to vector<256x128xf32>
    %36 = arith.truncf %35 : vector<256x128xf32> to vector<256x128xbf16>
    %c4 = arith.constant 4 : index
    %c0_32 = arith.constant 0 : index
    %c0_33 = arith.constant 0 : index
    %37 = vector.load %arg2[%c4, %c0_32, %c0_33] : memref<9x128x128xbf16, #tpu.memory_space<vmem>>, vector<1x128x128xbf16>
    %38 = vector.shape_cast %37 : vector<1x128x128xbf16> to vector<128x128xbf16>
    %cst_34 = arith.constant dense<0.000000e+00> : vector<256x128xf32>
    %39 = tpu.matmul %36, %38, %cst_34 {dimension_numbers = #tpu.dot_dimension_numbers<[1], [0], [0], [1], [0, 0, 1, 1], [], []>} : vector<256x128xbf16>, vector<128x128xbf16>, vector<256x128xf32> -> vector<256x128xf32>
    %40 = arith.addf %32, %39 : vector<256x128xf32>
    %c0_35 = arith.constant 0 : index
    %c1_36 = arith.constant 1 : index
    %c2_37 = arith.constant 2 : index
    %c0_38 = arith.constant 0 : index
    %41 = vector.load %arg1[%c0_35, %c1_36, %c2_37, %c0_38] : memref<1x18x18x128xf32, #tpu.memory_space<vmem>>, vector<1x16x16x128xf32>
    %42 = vector.shape_cast %41 : vector<1x16x16x128xf32> to vector<16x16x128xf32>
    %43 = vector.shape_cast %42 : vector<16x16x128xf32> to vector<256x128xf32>
    %44 = arith.truncf %43 : vector<256x128xf32> to vector<256x128xbf16>
    %c5 = arith.constant 5 : index
    %c0_39 = arith.constant 0 : index
    %c0_40 = arith.constant 0 : index
    %45 = vector.load %arg2[%c5, %c0_39, %c0_40] : memref<9x128x128xbf16, #tpu.memory_space<vmem>>, vector<1x128x128xbf16>
    %46 = vector.shape_cast %45 : vector<1x128x128xbf16> to vector<128x128xbf16>
    %cst_41 = arith.constant dense<0.000000e+00> : vector<256x128xf32>
    %47 = tpu.matmul %44, %46, %cst_41 {dimension_numbers = #tpu.dot_dimension_numbers<[1], [0], [0], [1], [0, 0, 1, 1], [], []>} : vector<256x128xbf16>, vector<128x128xbf16>, vector<256x128xf32> -> vector<256x128xf32>
    %48 = arith.addf %40, %47 : vector<256x128xf32>
    %c0_42 = arith.constant 0 : index
    %c2_43 = arith.constant 2 : index
    %c0_44 = arith.constant 0 : index
    %c0_45 = arith.constant 0 : index
    %49 = vector.load %arg1[%c0_42, %c2_43, %c0_44, %c0_45] : memref<1x18x18x128xf32, #tpu.memory_space<vmem>>, vector<1x16x16x128xf32>
    %50 = vector.shape_cast %49 : vector<1x16x16x128xf32> to vector<16x16x128xf32>
    %51 = vector.shape_cast %50 : vector<16x16x128xf32> to vector<256x128xf32>
    %52 = arith.truncf %51 : vector<256x128xf32> to vector<256x128xbf16>
    %c6 = arith.constant 6 : index
    %c0_46 = arith.constant 0 : index
    %c0_47 = arith.constant 0 : index
    %53 = vector.load %arg2[%c6, %c0_46, %c0_47] : memref<9x128x128xbf16, #tpu.memory_space<vmem>>, vector<1x128x128xbf16>
    %54 = vector.shape_cast %53 : vector<1x128x128xbf16> to vector<128x128xbf16>
    %cst_48 = arith.constant dense<0.000000e+00> : vector<256x128xf32>
    %55 = tpu.matmul %52, %54, %cst_48 {dimension_numbers = #tpu.dot_dimension_numbers<[1], [0], [0], [1], [0, 0, 1, 1], [], []>} : vector<256x128xbf16>, vector<128x128xbf16>, vector<256x128xf32> -> vector<256x128xf32>
    %56 = arith.addf %48, %55 : vector<256x128xf32>
    %c0_49 = arith.constant 0 : index
    %c2_50 = arith.constant 2 : index
    %c1_51 = arith.constant 1 : index
    %c0_52 = arith.constant 0 : index
    %57 = vector.load %arg1[%c0_49, %c2_50, %c1_51, %c0_52] : memref<1x18x18x128xf32, #tpu.memory_space<vmem>>, vector<1x16x16x128xf32>
    %58 = vector.shape_cast %57 : vector<1x16x16x128xf32> to vector<16x16x128xf32>
    %59 = vector.shape_cast %58 : vector<16x16x128xf32> to vector<256x128xf32>
    %60 = arith.truncf %59 : vector<256x128xf32> to vector<256x128xbf16>
    %c7 = arith.constant 7 : index
    %c0_53 = arith.constant 0 : index
    %c0_54 = arith.constant 0 : index
    %61 = vector.load %arg2[%c7, %c0_53, %c0_54] : memref<9x128x128xbf16, #tpu.memory_space<vmem>>, vector<1x128x128xbf16>
    %62 = vector.shape_cast %61 : vector<1x128x128xbf16> to vector<128x128xbf16>
    %cst_55 = arith.constant dense<0.000000e+00> : vector<256x128xf32>
    %63 = tpu.matmul %60, %62, %cst_55 {dimension_numbers = #tpu.dot_dimension_numbers<[1], [0], [0], [1], [0, 0, 1, 1], [], []>} : vector<256x128xbf16>, vector<128x128xbf16>, vector<256x128xf32> -> vector<256x128xf32>
    %64 = arith.addf %56, %63 : vector<256x128xf32>
    %c0_56 = arith.constant 0 : index
    %c2_57 = arith.constant 2 : index
    %c2_58 = arith.constant 2 : index
    %c0_59 = arith.constant 0 : index
    %65 = vector.load %arg1[%c0_56, %c2_57, %c2_58, %c0_59] : memref<1x18x18x128xf32, #tpu.memory_space<vmem>>, vector<1x16x16x128xf32>
    %66 = vector.shape_cast %65 : vector<1x16x16x128xf32> to vector<16x16x128xf32>
    %67 = vector.shape_cast %66 : vector<16x16x128xf32> to vector<256x128xf32>
    %68 = arith.truncf %67 : vector<256x128xf32> to vector<256x128xbf16>
    %c8 = arith.constant 8 : index
    %c0_60 = arith.constant 0 : index
    %c0_61 = arith.constant 0 : index
    %69 = vector.load %arg2[%c8, %c0_60, %c0_61] : memref<9x128x128xbf16, #tpu.memory_space<vmem>>, vector<1x128x128xbf16>
    %70 = vector.shape_cast %69 : vector<1x128x128xbf16> to vector<128x128xbf16>
    %cst_62 = arith.constant dense<0.000000e+00> : vector<256x128xf32>
    %71 = tpu.matmul %68, %70, %cst_62 {dimension_numbers = #tpu.dot_dimension_numbers<[1], [0], [0], [1], [0, 0, 1, 1], [], []>} : vector<256x128xbf16>, vector<128x128xbf16>, vector<256x128xf32> -> vector<256x128xf32>
    %72 = arith.addf %64, %71 : vector<256x128xf32>
    %cst_63 = arith.constant dense<0.000000e+00> : vector<128xf32>
    %73 = vector.multi_reduction <add>, %72, %cst_63 [0] : vector<256x128xf32> to vector<128xf32>
    %74 = vector.shape_cast %73 : vector<128xf32> to vector<1x128xf32>
    %c0_64 = arith.constant 0 : index
    %c0_65 = arith.constant 0 : index
    %c0_66 = arith.constant 0 : index
    %75 = vector.load %arg3[%c0_64, %c0_65, %c0_66] : memref<1x2x128xf32, #tpu.memory_space<vmem>>, vector<1x1x128xf32>
    %76 = vector.shape_cast %75 : vector<1x1x128xf32> to vector<1x128xf32>
    %77 = vector.shape_cast %74 : vector<1x128xf32> to vector<1x1x128xf32>
    tpu.vector_store %arg3[%c0_64, %c0_65, %c0_66], %77 {strides = array<i32>} : memref<1x2x128xf32, #tpu.memory_space<vmem>>, vector<1x1x128xf32>,
    %78 = arith.mulf %72, %72 : vector<256x128xf32>
    %cst_67 = arith.constant dense<0.000000e+00> : vector<128xf32>
    %79 = vector.multi_reduction <add>, %78, %cst_67 [0] : vector<256x128xf32> to vector<128xf32>
    %80 = vector.shape_cast %79 : vector<128xf32> to vector<1x128xf32>
    %c0_68 = arith.constant 0 : index
    %c1_69 = arith.constant 1 : index
    %c0_70 = arith.constant 0 : index
    %81 = vector.load %arg3[%c0_68, %c1_69, %c0_70] : memref<1x2x128xf32, #tpu.memory_space<vmem>>, vector<1x1x128xf32>
    %82 = vector.shape_cast %81 : vector<1x1x128xf32> to vector<1x128xf32>
    %83 = vector.shape_cast %80 : vector<1x128xf32> to vector<1x1x128xf32>
    tpu.vector_store %arg3[%c0_68, %c1_69, %c0_70], %83 {strides = array<i32>} : memref<1x2x128xf32, #tpu.memory_space<vmem>>, vector<1x1x128xf32>,
    return
  }
  func.func @transform_0(%arg0: i32) -> (i32, i32, i32, i32) {
    %c0_i32 = arith.constant 0 : i32
    %c0_i32_0 = arith.constant 0 : i32
    %c0_i32_1 = arith.constant 0 : i32
    %c0_i32_2 = arith.constant 0 : i32
    return %arg0, %c0_i32, %c0_i32_0, %c0_i32_1 : i32, i32, i32, i32
  }
  func.func @transform_1(%arg0: i32) -> (i32, i32, i32) {
    %c0_i32 = arith.constant 0 : i32
    %c0_i32_0 = arith.constant 0 : i32
    %c0_i32_1 = arith.constant 0 : i32
    %c0_i32_2 = arith.constant 0 : i32
    return %c0_i32, %c0_i32_0, %c0_i32_1 : i32, i32, i32
  }
  func.func @transform_2(%arg0: i32) -> (i32, i32, i32) {
    %c0_i32 = arith.constant 0 : i32
    %c0_i32_0 = arith.constant 0 : i32
    %c0_i32_1 = arith.constant 0 : i32
    return %arg0, %c0_i32, %c0_i32_0 : i32, i32, i32
  }
}

module attributes {stable_mosaic.version = 11 : i64} {
  func.func @_conv_bn_res_relu_kernel(%arg0: i32, %arg1: memref<1x18x18x128xf32, #tpu.memory_space<vmem>>, %arg2: memref<9x128x128xbf16, #tpu.memory_space<vmem>>, %arg3: memref<1x128xf32, #tpu.memory_space<vmem>>, %arg4: memref<1x128xf32, #tpu.memory_space<vmem>>, %arg5: memref<1x16x16x128xf32, #tpu.memory_space<vmem>>) attributes {dimension_semantics = [#tpu.dimension_semantics<parallel>], iteration_bounds = array<i64: 2>, scalar_prefetch = 0 : i64, scratch_operands = 0 : i64, tpu.core_type = #tpu.core_type<tc>, window_params = [{transform_indices = @transform_0, window_bounds = array<i64: 1, 18, 18, 128>}, {pipeline_mode = #tpu.pipeline_mode<synchronous>, transform_indices = @transform_1, window_bounds = array<i64: 9, 128, 128>}, {pipeline_mode = #tpu.pipeline_mode<synchronous>, transform_indices = @transform_2, window_bounds = array<i64: 1, 128>}, {pipeline_mode = #tpu.pipeline_mode<synchronous>, transform_indices = @transform_3, window_bounds = array<i64: 1, 128>}, {transform_indices = @transform_4, window_bounds = array<i64: 1, 16, 16, 128>}]} {
    %cst = arith.constant 0.000000e+00 : f32
    %0 = vector.broadcast %cst : f32 to vector<256x128xf32>
    %c0 = arith.constant 0 : index
    %c0_0 = arith.constant 0 : index
    %c0_1 = arith.constant 0 : index
    %c0_2 = arith.constant 0 : index
    %1 = vector.load %arg1[%c0, %c0_0, %c0_1, %c0_2] : memref<1x18x18x128xf32, #tpu.memory_space<vmem>>, vector<1x16x16x128xf32>
    %2 = vector.shape_cast %1 : vector<1x16x16x128xf32> to vector<16x16x128xf32>
    %3 = vector.shape_cast %2 : vector<16x16x128xf32> to vector<256x128xf32>
    %4 = arith.truncf %3 : vector<256x128xf32> to vector<256x128xbf16>
    %c0_3 = arith.constant 0 : index
    %c0_4 = arith.constant 0 : index
    %c0_5 = arith.constant 0 : index
    %5 = vector.load %arg2[%c0_3, %c0_4, %c0_5] : memref<9x128x128xbf16, #tpu.memory_space<vmem>>, vector<1x128x128xbf16>
    %6 = vector.shape_cast %5 : vector<1x128x128xbf16> to vector<128x128xbf16>
    %cst_6 = arith.constant dense<0.000000e+00> : vector<256x128xf32>
    %7 = tpu.matmul %4, %6, %cst_6 {dimension_numbers = #tpu.dot_dimension_numbers<[1], [0], [0], [1], [0, 0, 1, 1], [], []>} : vector<256x128xbf16>, vector<128x128xbf16>, vector<256x128xf32> -> vector<256x128xf32>
    %8 = arith.addf %0, %7 : vector<256x128xf32>
    %c0_7 = arith.constant 0 : index
    %c0_8 = arith.constant 0 : index
    %c1 = arith.constant 1 : index
    %c0_9 = arith.constant 0 : index
    %9 = vector.load %arg1[%c0_7, %c0_8, %c1, %c0_9] : memref<1x18x18x128xf32, #tpu.memory_space<vmem>>, vector<1x16x16x128xf32>
    %10 = vector.shape_cast %9 : vector<1x16x16x128xf32> to vector<16x16x128xf32>
    %11 = vector.shape_cast %10 : vector<16x16x128xf32> to vector<256x128xf32>
    %12 = arith.truncf %11 : vector<256x128xf32> to vector<256x128xbf16>
    %c1_10 = arith.constant 1 : index
    %c0_11 = arith.constant 0 : index
    %c0_12 = arith.constant 0 : index
    %13 = vector.load %arg2[%c1_10, %c0_11, %c0_12] : memref<9x128x128xbf16, #tpu.memory_space<vmem>>, vector<1x128x128xbf16>
    %14 = vector.shape_cast %13 : vector<1x128x128xbf16> to vector<128x128xbf16>
    %cst_13 = arith.constant dense<0.000000e+00> : vector<256x128xf32>
    %15 = tpu.matmul %12, %14, %cst_13 {dimension_numbers = #tpu.dot_dimension_numbers<[1], [0], [0], [1], [0, 0, 1, 1], [], []>} : vector<256x128xbf16>, vector<128x128xbf16>, vector<256x128xf32> -> vector<256x128xf32>
    %16 = arith.addf %8, %15 : vector<256x128xf32>
    %c0_14 = arith.constant 0 : index
    %c0_15 = arith.constant 0 : index
    %c2 = arith.constant 2 : index
    %c0_16 = arith.constant 0 : index
    %17 = vector.load %arg1[%c0_14, %c0_15, %c2, %c0_16] : memref<1x18x18x128xf32, #tpu.memory_space<vmem>>, vector<1x16x16x128xf32>
    %18 = vector.shape_cast %17 : vector<1x16x16x128xf32> to vector<16x16x128xf32>
    %19 = vector.shape_cast %18 : vector<16x16x128xf32> to vector<256x128xf32>
    %20 = arith.truncf %19 : vector<256x128xf32> to vector<256x128xbf16>
    %c2_17 = arith.constant 2 : index
    %c0_18 = arith.constant 0 : index
    %c0_19 = arith.constant 0 : index
    %21 = vector.load %arg2[%c2_17, %c0_18, %c0_19] : memref<9x128x128xbf16, #tpu.memory_space<vmem>>, vector<1x128x128xbf16>
    %22 = vector.shape_cast %21 : vector<1x128x128xbf16> to vector<128x128xbf16>
    %cst_20 = arith.constant dense<0.000000e+00> : vector<256x128xf32>
    %23 = tpu.matmul %20, %22, %cst_20 {dimension_numbers = #tpu.dot_dimension_numbers<[1], [0], [0], [1], [0, 0, 1, 1], [], []>} : vector<256x128xbf16>, vector<128x128xbf16>, vector<256x128xf32> -> vector<256x128xf32>
    %24 = arith.addf %16, %23 : vector<256x128xf32>
    %c0_21 = arith.constant 0 : index
    %c1_22 = arith.constant 1 : index
    %c0_23 = arith.constant 0 : index
    %c0_24 = arith.constant 0 : index
    %25 = vector.load %arg1[%c0_21, %c1_22, %c0_23, %c0_24] : memref<1x18x18x128xf32, #tpu.memory_space<vmem>>, vector<1x16x16x128xf32>
    %26 = vector.shape_cast %25 : vector<1x16x16x128xf32> to vector<16x16x128xf32>
    %27 = vector.shape_cast %26 : vector<16x16x128xf32> to vector<256x128xf32>
    %28 = arith.truncf %27 : vector<256x128xf32> to vector<256x128xbf16>
    %c3 = arith.constant 3 : index
    %c0_25 = arith.constant 0 : index
    %c0_26 = arith.constant 0 : index
    %29 = vector.load %arg2[%c3, %c0_25, %c0_26] : memref<9x128x128xbf16, #tpu.memory_space<vmem>>, vector<1x128x128xbf16>
    %30 = vector.shape_cast %29 : vector<1x128x128xbf16> to vector<128x128xbf16>
    %cst_27 = arith.constant dense<0.000000e+00> : vector<256x128xf32>
    %31 = tpu.matmul %28, %30, %cst_27 {dimension_numbers = #tpu.dot_dimension_numbers<[1], [0], [0], [1], [0, 0, 1, 1], [], []>} : vector<256x128xbf16>, vector<128x128xbf16>, vector<256x128xf32> -> vector<256x128xf32>
    %32 = arith.addf %24, %31 : vector<256x128xf32>
    %c0_28 = arith.constant 0 : index
    %c1_29 = arith.constant 1 : index
    %c1_30 = arith.constant 1 : index
    %c0_31 = arith.constant 0 : index
    %33 = vector.load %arg1[%c0_28, %c1_29, %c1_30, %c0_31] : memref<1x18x18x128xf32, #tpu.memory_space<vmem>>, vector<1x16x16x128xf32>
    %34 = vector.shape_cast %33 : vector<1x16x16x128xf32> to vector<16x16x128xf32>
    %35 = vector.shape_cast %34 : vector<16x16x128xf32> to vector<256x128xf32>
    %36 = arith.truncf %35 : vector<256x128xf32> to vector<256x128xbf16>
    %c4 = arith.constant 4 : index
    %c0_32 = arith.constant 0 : index
    %c0_33 = arith.constant 0 : index
    %37 = vector.load %arg2[%c4, %c0_32, %c0_33] : memref<9x128x128xbf16, #tpu.memory_space<vmem>>, vector<1x128x128xbf16>
    %38 = vector.shape_cast %37 : vector<1x128x128xbf16> to vector<128x128xbf16>
    %cst_34 = arith.constant dense<0.000000e+00> : vector<256x128xf32>
    %39 = tpu.matmul %36, %38, %cst_34 {dimension_numbers = #tpu.dot_dimension_numbers<[1], [0], [0], [1], [0, 0, 1, 1], [], []>} : vector<256x128xbf16>, vector<128x128xbf16>, vector<256x128xf32> -> vector<256x128xf32>
    %40 = arith.addf %32, %39 : vector<256x128xf32>
    %c0_35 = arith.constant 0 : index
    %c1_36 = arith.constant 1 : index
    %c2_37 = arith.constant 2 : index
    %c0_38 = arith.constant 0 : index
    %41 = vector.load %arg1[%c0_35, %c1_36, %c2_37, %c0_38] : memref<1x18x18x128xf32, #tpu.memory_space<vmem>>, vector<1x16x16x128xf32>
    %42 = vector.shape_cast %41 : vector<1x16x16x128xf32> to vector<16x16x128xf32>
    %43 = vector.shape_cast %42 : vector<16x16x128xf32> to vector<256x128xf32>
    %44 = arith.truncf %43 : vector<256x128xf32> to vector<256x128xbf16>
    %c5 = arith.constant 5 : index
    %c0_39 = arith.constant 0 : index
    %c0_40 = arith.constant 0 : index
    %45 = vector.load %arg2[%c5, %c0_39, %c0_40] : memref<9x128x128xbf16, #tpu.memory_space<vmem>>, vector<1x128x128xbf16>
    %46 = vector.shape_cast %45 : vector<1x128x128xbf16> to vector<128x128xbf16>
    %cst_41 = arith.constant dense<0.000000e+00> : vector<256x128xf32>
    %47 = tpu.matmul %44, %46, %cst_41 {dimension_numbers = #tpu.dot_dimension_numbers<[1], [0], [0], [1], [0, 0, 1, 1], [], []>} : vector<256x128xbf16>, vector<128x128xbf16>, vector<256x128xf32> -> vector<256x128xf32>
    %48 = arith.addf %40, %47 : vector<256x128xf32>
    %c0_42 = arith.constant 0 : index
    %c2_43 = arith.constant 2 : index
    %c0_44 = arith.constant 0 : index
    %c0_45 = arith.constant 0 : index
    %49 = vector.load %arg1[%c0_42, %c2_43, %c0_44, %c0_45] : memref<1x18x18x128xf32, #tpu.memory_space<vmem>>, vector<1x16x16x128xf32>
    %50 = vector.shape_cast %49 : vector<1x16x16x128xf32> to vector<16x16x128xf32>
    %51 = vector.shape_cast %50 : vector<16x16x128xf32> to vector<256x128xf32>
    %52 = arith.truncf %51 : vector<256x128xf32> to vector<256x128xbf16>
    %c6 = arith.constant 6 : index
    %c0_46 = arith.constant 0 : index
    %c0_47 = arith.constant 0 : index
    %53 = vector.load %arg2[%c6, %c0_46, %c0_47] : memref<9x128x128xbf16, #tpu.memory_space<vmem>>, vector<1x128x128xbf16>
    %54 = vector.shape_cast %53 : vector<1x128x128xbf16> to vector<128x128xbf16>
    %cst_48 = arith.constant dense<0.000000e+00> : vector<256x128xf32>
    %55 = tpu.matmul %52, %54, %cst_48 {dimension_numbers = #tpu.dot_dimension_numbers<[1], [0], [0], [1], [0, 0, 1, 1], [], []>} : vector<256x128xbf16>, vector<128x128xbf16>, vector<256x128xf32> -> vector<256x128xf32>
    %56 = arith.addf %48, %55 : vector<256x128xf32>
    %c0_49 = arith.constant 0 : index
    %c2_50 = arith.constant 2 : index
    %c1_51 = arith.constant 1 : index
    %c0_52 = arith.constant 0 : index
    %57 = vector.load %arg1[%c0_49, %c2_50, %c1_51, %c0_52] : memref<1x18x18x128xf32, #tpu.memory_space<vmem>>, vector<1x16x16x128xf32>
    %58 = vector.shape_cast %57 : vector<1x16x16x128xf32> to vector<16x16x128xf32>
    %59 = vector.shape_cast %58 : vector<16x16x128xf32> to vector<256x128xf32>
    %60 = arith.truncf %59 : vector<256x128xf32> to vector<256x128xbf16>
    %c7 = arith.constant 7 : index
    %c0_53 = arith.constant 0 : index
    %c0_54 = arith.constant 0 : index
    %61 = vector.load %arg2[%c7, %c0_53, %c0_54] : memref<9x128x128xbf16, #tpu.memory_space<vmem>>, vector<1x128x128xbf16>
    %62 = vector.shape_cast %61 : vector<1x128x128xbf16> to vector<128x128xbf16>
    %cst_55 = arith.constant dense<0.000000e+00> : vector<256x128xf32>
    %63 = tpu.matmul %60, %62, %cst_55 {dimension_numbers = #tpu.dot_dimension_numbers<[1], [0], [0], [1], [0, 0, 1, 1], [], []>} : vector<256x128xbf16>, vector<128x128xbf16>, vector<256x128xf32> -> vector<256x128xf32>
    %64 = arith.addf %56, %63 : vector<256x128xf32>
    %c0_56 = arith.constant 0 : index
    %c2_57 = arith.constant 2 : index
    %c2_58 = arith.constant 2 : index
    %c0_59 = arith.constant 0 : index
    %65 = vector.load %arg1[%c0_56, %c2_57, %c2_58, %c0_59] : memref<1x18x18x128xf32, #tpu.memory_space<vmem>>, vector<1x16x16x128xf32>
    %66 = vector.shape_cast %65 : vector<1x16x16x128xf32> to vector<16x16x128xf32>
    %67 = vector.shape_cast %66 : vector<16x16x128xf32> to vector<256x128xf32>
    %68 = arith.truncf %67 : vector<256x128xf32> to vector<256x128xbf16>
    %c8 = arith.constant 8 : index
    %c0_60 = arith.constant 0 : index
    %c0_61 = arith.constant 0 : index
    %69 = vector.load %arg2[%c8, %c0_60, %c0_61] : memref<9x128x128xbf16, #tpu.memory_space<vmem>>, vector<1x128x128xbf16>
    %70 = vector.shape_cast %69 : vector<1x128x128xbf16> to vector<128x128xbf16>
    %cst_62 = arith.constant dense<0.000000e+00> : vector<256x128xf32>
    %71 = tpu.matmul %68, %70, %cst_62 {dimension_numbers = #tpu.dot_dimension_numbers<[1], [0], [0], [1], [0, 0, 1, 1], [], []>} : vector<256x128xbf16>, vector<128x128xbf16>, vector<256x128xf32> -> vector<256x128xf32>
    %72 = arith.addf %64, %71 : vector<256x128xf32>
    %c0_63 = arith.constant 0 : index
    %c1_64 = arith.constant 1 : index
    %c1_65 = arith.constant 1 : index
    %c0_66 = arith.constant 0 : index
    %73 = vector.load %arg1[%c0_63, %c1_64, %c1_65, %c0_66] : memref<1x18x18x128xf32, #tpu.memory_space<vmem>>, vector<1x16x16x128xf32>
    %74 = vector.shape_cast %73 : vector<1x16x16x128xf32> to vector<16x16x128xf32>
    %75 = vector.shape_cast %74 : vector<16x16x128xf32> to vector<256x128xf32>
    %c0_67 = arith.constant 0 : index
    %c0_68 = arith.constant 0 : index
    %76 = vector.load %arg3[%c0_67, %c0_68] : memref<1x128xf32, #tpu.memory_space<vmem>>, vector<1x128xf32>
    %77 = vector.broadcast %76 : vector<1x128xf32> to vector<256x128xf32>
    %78 = arith.mulf %72, %77 : vector<256x128xf32>
    %c0_69 = arith.constant 0 : index
    %c0_70 = arith.constant 0 : index
    %79 = vector.load %arg4[%c0_69, %c0_70] : memref<1x128xf32, #tpu.memory_space<vmem>>, vector<1x128xf32>
    %80 = vector.broadcast %79 : vector<1x128xf32> to vector<256x128xf32>
    %81 = arith.addf %78, %80 : vector<256x128xf32>
    %82 = arith.addf %81, %75 : vector<256x128xf32>
    %cst_71 = arith.constant 0.000000e+00 : f32
    %83 = vector.broadcast %cst_71 : f32 to vector<256x128xf32>
    %84 = arith.maximumf %82, %83 : vector<256x128xf32>
    %85 = vector.shape_cast %84 : vector<256x128xf32> to vector<16x16x128xf32>
    %c0_72 = arith.constant 0 : index
    %c0_73 = arith.constant 0 : index
    %c0_74 = arith.constant 0 : index
    %c0_75 = arith.constant 0 : index
    %86 = vector.load %arg5[%c0_72, %c0_73, %c0_74, %c0_75] : memref<1x16x16x128xf32, #tpu.memory_space<vmem>>, vector<1x16x16x128xf32>
    %87 = vector.shape_cast %86 : vector<1x16x16x128xf32> to vector<16x16x128xf32>
    %88 = vector.shape_cast %85 : vector<16x16x128xf32> to vector<1x16x16x128xf32>
    tpu.vector_store %arg5[%c0_72, %c0_73, %c0_74, %c0_75], %88 {strides = array<i32>} : memref<1x16x16x128xf32, #tpu.memory_space<vmem>>, vector<1x16x16x128xf32>,
    return
  }
  func.func @transform_0(%arg0: i32) -> (i32, i32, i32, i32) {
    %c0_i32 = arith.constant 0 : i32
    %c0_i32_0 = arith.constant 0 : i32
    %c0_i32_1 = arith.constant 0 : i32
    %c0_i32_2 = arith.constant 0 : i32
    return %arg0, %c0_i32, %c0_i32_0, %c0_i32_1 : i32, i32, i32, i32
  }
  func.func @transform_1(%arg0: i32) -> (i32, i32, i32) {
    %c0_i32 = arith.constant 0 : i32
    %c0_i32_0 = arith.constant 0 : i32
    %c0_i32_1 = arith.constant 0 : i32
    %c0_i32_2 = arith.constant 0 : i32
    return %c0_i32, %c0_i32_0, %c0_i32_1 : i32, i32, i32
  }
  func.func @transform_2(%arg0: i32) -> (i32, i32) {
    %c0_i32 = arith.constant 0 : i32
    %c0_i32_0 = arith.constant 0 : i32
    %c0_i32_1 = arith.constant 0 : i32
    return %c0_i32, %c0_i32_0 : i32, i32
  }
  func.func @transform_3(%arg0: i32) -> (i32, i32) {
    %c0_i32 = arith.constant 0 : i32
    %c0_i32_0 = arith.constant 0 : i32
    %c0_i32_1 = arith.constant 0 : i32
    return %c0_i32, %c0_i32_0 : i32, i32
  }
  func.func @transform_4(%arg0: i32) -> (i32, i32, i32, i32) {
    %c0_i32 = arith.constant 0 : i32
    %c0_i32_0 = arith.constant 0 : i32
    %c0_i32_1 = arith.constant 0 : i32
    %c0_i32_2 = arith.constant 0 : i32
    return %arg0, %c0_i32, %c0_i32_0, %c0_i32_1 : i32, i32, i32, i32
  }
}

</mosaic_0001>

<llo_original>
// kernel: newblock_forward.2
$region0: #{newblock_forward.2}
  #allocation0 [shape = 'u32[]', space=smem, size = 0x4, offset = 0x4, fixed_abs, tag = 'smem constant byte address 0x4 - core index']
  #allocation1 [shape = 'u32[144,128]{1,0:T(1,128)}', space=vmem, size = 0x12000, scoped, tag = 'internal scratch']
  %s0 = inlined_call_operand.vmem [shape: f32[2,18,18,128], index: 0, kind: input, shape index: {}]
  %s1 = inlined_call_operand.vmem [shape: bf16[9,128,128], index: 1, kind: input, shape index: {}]
  %s2 = inlined_call_operand.vmem [shape: f32[2,2,128], index: 2, kind: output, shape index: {}]
  %s3 = sld [smem:[#allocation0]]
  $region41: #{newblock_forward.2} parent=0
    _
  %s5 = ssub.s32 1, %s3
  %s6 = scalar_select 0, %s5, %s3
  loop: start=0, step=1, limit=4
  $region2: #{newblock_forward.2} parent=0 // loop_pre_header
    _
  $region3: #{newblock_forward.2} parent=0 // loop_header
    %s8 = sphi 0, %s12
    %p9 = scmp.ge.s32.totalorder %s8, 4
    %s18 = sphi 0, %s20
    %s21 = sphi 0, %s18
    %s22 = sphi 0, %s21
    %s38 = sphi 0, %s22
    %s42 = sphi 0, %s42
    %s44 = sphi 0, %s42
    %s45 = sphi 0, %s44
    %s59 = sphi 0, %s45
    %s65 = sphi 0, %s67
    %s68 = sphi 0, %s65
    %s69 = sphi 0, %s68
    %s85 = sphi 0, %s69
  $region4: #{newblock_forward.2} parent=0 // loop_header_branch
    %11 = sbr.rel (%p9) target = $region8
  $region5: #{newblock_forward.2} parent=0 // loop_body
    %s13 = ssub.s32 %s8, 1
    %s14 = ssub.s32 %s8, 2
    %s15 = sadd.s32 %s8, 1
    %s16 = ssub.s32 %s8, %s15
    %p17 = scmp.eq.s32.totalorder %s16, 0
    %s19 = sadd.s32 %s18, 1
    %s20 = scalar_select %p17, %s18, %s19
    %p23 = pneg %p17
    %p24 = scmp.eq.s32.totalorder %s8, 1
    %p25 = por %p23, %p24
    %p26 = scmp.ne.s32.totalorder %s18, %s21
    %p27 = scmp.eq.s32.totalorder %s8, 0
    %p28 = por %p26, %p27
    %p29 = scmp.ne.s32.totalorder %s18, %s21
    %p30 = scmp.eq.s32.totalorder %s13, 1
    %p31 = por %p29, %p30
    %p32 = scmp.ne.s32.totalorder %s21, %s22
    %p33 = scmp.eq.s32.totalorder %s13, 0
    %p34 = por %p32, %p33
    %p35 = scmp.ne.s32.totalorder %s21, %s22
    %p36 = scmp.eq.s32.totalorder %s14, 1
    %p37 = por %p35, %p36
    %p39 = scmp.ne.s32.totalorder %s22, %s38
    %p40 = scmp.eq.s32.totalorder %s14, 0
    %p41 = por %p39, %p40
    %s43 = sadd.s32 %s42, 1
    %p46 = scmp.eq.s32.totalorder %s8, 1
    %p47 = scmp.ne.s32.totalorder %s42, %s44
    %p48 = scmp.eq.s32.totalorder %s8, 0
    %p49 = por %p47, %p48
    %p50 = scmp.ne.s32.totalorder %s42, %s44
    %p51 = scmp.eq.s32.totalorder %s13, 1
    %p52 = por %p50, %p51
    %p53 = scmp.ne.s32.totalorder %s44, %s45
    %p54 = scmp.eq.s32.totalorder %s13, 0
    %p55 = por %p53, %p54
    %p56 = scmp.ne.s32.totalorder %s44, %s45
    %p57 = scmp.eq.s32.totalorder %s14, 1
    %p58 = por %p56, %p57
    %p60 = scmp.ne.s32.totalorder %s45, %s59
    %p61 = scmp.eq.s32.totalorder %s14, 0
    %p62 = por %p60, %p61
    %s63 = ssub.s32 %s8, %s15
    %p64 = scmp.eq.s32.totalorder %s63, 0
    %s66 = sadd.s32 %s65, 1
    %s67 = scalar_select %p64, %s65, %s66
    %p70 = pneg %p64
    %p71 = scmp.eq.s32.totalorder %s8, 1
    %p72 = por %p70, %p71
    %p73 = scmp.ne.s32.totalorder %s65, %s68
    %p74 = scmp.eq.s32.totalorder %s8, 0
    %p75 = por %p73, %p74
    %p76 = scmp.ne.s32.totalorder %s65, %s68
    %p77 = scmp.eq.s32.totalorder %s13, 1
    %p78 = por %p76, %p77
    %p79 = scmp.ne.s32.totalorder %s68, %s69
    %p80 = scmp.eq.s32.totalorder %s13, 0
    %p81 = por %p79, %p80
    %p82 = scmp.ne.s32.totalorder %s68, %s69
    %p83 = scmp.eq.s32.totalorder %s14, 1
    %p84 = por %p82, %p83
    %p86 = scmp.ne.s32.totalorder %s69, %s85
    %p87 = scmp.eq.s32.totalorder %s14, 0
    %p88 = por %p86, %p87
    %p89 = scmp.le.s32.totalorder 1, %s8
    %p90 = scmp.lt.s32.totalorder %s8, 3
    %p91 = pnand %p89, %p90
    %p92 = pneg %p91
    // Predicated region
    $region9: #{newblock_forward.2} parent=5 // pred_check
      _
    $region10: #{newblock_forward.2} parent=5 // pred_check_branch
      %94 = sbr.rel (%p91) target = $region12
    $region11: #{newblock_forward.2} parent=5 // pred_region
      %s95 = ssub.s32 %s8, 1
      // Predicated region
      $region13: #{newblock_forward.2} parent=11 // pred_check
        %p96 = pneg %p55
      $region14: #{newblock_forward.2} parent=11 // pred_check_branch
        %98 = sbr.rel (%p96) target = $region16
      $region15: #{newblock_forward.2} parent=11 // pred_region
        _
      $region16: #{newblock_forward.2} parent=11 // pred_fallthru
        _
    $region12: #{newblock_forward.2} parent=5 // pred_fallthru
      _
    %p99 = scmp.lt.s32.totalorder %s8, 2
    // Predicated region
    $region17: #{newblock_forward.2} parent=5 // pred_check
      %p100 = pneg %p99
    $region18: #{newblock_forward.2} parent=5 // pred_check_branch
      %102 = sbr.rel (%p100) target = $region20
    $region19: #{newblock_forward.2} parent=5 // pred_region
      // Predicated region
      $region21: #{newblock_forward.2} parent=19 // pred_check
        %p103 = pneg %p28
      $region22: #{newblock_forward.2} parent=19 // pred_check_branch
        %105 = sbr.rel (%p103) target = $region24
      $region23: #{newblock_forward.2} parent=19 // pred_region
        %p106 = scmp.lt.s32.totalorder %s8, 1
        %s107 = scalar_select %p106, %s8, 1
        %s108 = smul.addr %s107, 54
        %s109 = smul.addr %s108, 8
        %s110 = scalar_lea.vmem %s0, %s109
      $region24: #{newblock_forward.2} parent=19 // pred_fallthru
        _
    $region20: #{newblock_forward.2} parent=5 // pred_fallthru
      _
    %p111 = scmp.le.s32.totalorder 1, %s8
    %p112 = scmp.lt.s32.totalorder %s8, 3
    %p113 = pnand %p111, %p112
    %p114 = pneg %p113
    // Predicated region
    $region25: #{newblock_forward.2} parent=5 // pred_check
      _
    $region26: #{newblock_forward.2} parent=5 // pred_check_branch
      %116 = sbr.rel (%p113) target = $region28
    $region27: #{newblock_forward.2} parent=5 // pred_region
      %s117 = ssub.s32 %s8, 1
      %p118 = scmp.lt.s32.totalorder %s13, 1
      %s119 = scalar_select %p118, %s13, 1
      %s120 = smul.addr %s119, 54
      %s121 = smul.addr %s120, 8
      %s122 = scalar_lea.vmem %s0, %s121
      %p123 = pneg %p34
      %p124 = pneg %p31
      %p125 = pneg %p55
      %p126 = pneg %p52
      %p127 = pneg %p81
      %p128 = pneg %p78
      %p129 = scmp.lt.s32.totalorder %s13, 1
      %s130 = scalar_select %p129, %s13, 1
      %s131 = smul.addr %s130, 2
      %s132 = scalar_lea.vmem %s2, %s131
      %p133 = scmp.lt.s32.totalorder %s13, 1
      %s134 = scalar_select %p133, %s13, 1
      %s135 = smul.addr %s134, 54
      %s136 = smul.addr %s135, 8
      %s137 = scalar_lea.vmem %s0, %s136
      %p138 = scmp.lt.s32.totalorder %s13, 1
      %s139 = scalar_select %p138, %s13, 1
      %s140 = smul.addr %s139, 2
      %s141 = scalar_lea.vmem %s2, %s140
      %v143 = vld [vmem:[%s137] sm:$0xff]
      %v144 = vld [vmem:[%s137 + $0x8] sm:$0xff]
      %v145 = vld [vmem:[%s137 + $0x18] sm:$0xff]
      %v146 = vld [vmem:[%s137 + $0x20] sm:$0xff]
      %v147 = vld [vmem:[%s137 + $0x30] sm:$0xff]
      %v148 = vld [vmem:[%s137 + $0x38] sm:$0xff]
      %v149 = vld [vmem:[%s137 + $0x48] sm:$0xff]
      %v150 = vld [vmem:[%s137 + $0x50] sm:$0xff]
      %v151 = vld [vmem:[%s137 + $0x60] sm:$0xff]
      %v152 = vld [vmem:[%s137 + $0x68] sm:$0xff]
      %v153 = vld [vmem:[%s137 + $0x78] sm:$0xff]
      %v154 = vld [vmem:[%s137 + $0x80] sm:$0xff]
      %v155 = vld [vmem:[%s137 + $0x90] sm:$0xff]
      %v156 = vld [vmem:[%s137 + $0x98] sm:$0xff]
      %v157 = vld [vmem:[%s137 + $0xa8] sm:$0xff]
      %v158 = vld [vmem:[%s137 + $0xb0] sm:$0xff]
      %v159 = vld [vmem:[%s137 + $0xc0] sm:$0xff]
      %v160 = vld [vmem:[%s137 + $0xc8] sm:$0xff]
      %v161 = vld [vmem:[%s137 + $0xd8] sm:$0xff]
      %v162 = vld [vmem:[%s137 + $0xe0] sm:$0xff]
      %v163 = vld [vmem:[%s137 + $0xf0] sm:$0xff]
      %v164 = vld [vmem:[%s137 + $0xf8] sm:$0xff]
      %v165 = vld [vmem:[%s137 + $0x108] sm:$0xff]
      %v166 = vld [vmem:[%s137 + $0x110] sm:$0xff]
      %v167 = vld [vmem:[%s137 + $0x120] sm:$0xff]
      %v168 = vld [vmem:[%s137 + $0x128] sm:$0xff]
      %v169 = vld [vmem:[%s137 + $0x138] sm:$0xff]
      %v170 = vld [vmem:[%s137 + $0x140] sm:$0xff]
      %v171 = vld [vmem:[%s137 + $0x150] sm:$0xff]
      %v172 = vld [vmem:[%s137 + $0x158] sm:$0xff]
      %v173 = vld [vmem:[%s137 + $0x168] sm:$0xff]
      %v174 = vld [vmem:[%s137 + $0x170] sm:$0xff]
      %v175 = vpack.c.bf16 %v144, %v143
      %v176 = vpack.c.bf16 %v146, %v145
      %v177 = vpack.c.bf16 %v148, %v147
      %v178 = vpack.c.bf16 %v150, %v149
      %v179 = vpack.c.bf16 %v152, %v151
      %v180 = vpack.c.bf16 %v154, %v153
      %v181 = vpack.c.bf16 %v156, %v155
      %v182 = vpack.c.bf16 %v158, %v157
      %v183 = vpack.c.bf16 %v160, %v159
      %v184 = vpack.c.bf16 %v162, %v161
      %v185 = vpack.c.bf16 %v164, %v163
      %v186 = vpack.c.bf16 %v166, %v165
      %v187 = vpack.c.bf16 %v168, %v167
      %v188 = vpack.c.bf16 %v170, %v169
      %v189 = vpack.c.bf16 %v172, %v171
      %v190 = vpack.c.bf16 %v174, %v173
      %v191 = vld [vmem:[%s1] sm:$0xf]
      %v192 = vld [vmem:[%s1 + $0x4] sm:$0xf]
      %v193 = vld [vmem:[%s1 + $0x8] sm:$0xf]
      %v194 = vld [vmem:[%s1 + $0xc] sm:$0xf]
      %v195 = vld [vmem:[%s1 + $0x10] sm:$0xf]
      %v196 = vld [vmem:[%s1 + $0x14] sm:$0xf]
      %v197 = vld [vmem:[%s1 + $0x18] sm:$0xf]
      %v198 = vld [vmem:[%s1 + $0x1c] sm:$0xf]
      %v199 = vld [vmem:[%s1 + $0x20] sm:$0xf]
      %v200 = vld [vmem:[%s1 + $0x24] sm:$0xf]
      %v201 = vld [vmem:[%s1 + $0x28] sm:$0xf]
      %v202 = vld [vmem:[%s1 + $0x2c] sm:$0xf]
      %v203 = vld [vmem:[%s1 + $0x30] sm:$0xf]
      %v204 = vld [vmem:[%s1 + $0x34] sm:$0xf]
      %v205 = vld [vmem:[%s1 + $0x38] sm:$0xf]
      %v206 = vld [vmem:[%s1 + $0x3c] sm:$0xf]
      %v207 = vld [vmem:[%s137 + $0x1] sm:$0xff]
      %v208 = vld [vmem:[%s137 + $0x9] sm:$0xff]
      %v209 = vld [vmem:[%s137 + $0x19] sm:$0xff]
      %v210 = vld [vmem:[%s137 + $0x21] sm:$0xff]
      %v211 = vld [vmem:[%s137 + $0x31] sm:$0xff]
      %v212 = vld [vmem:[%s137 + $0x39] sm:$0xff]
      %v213 = vld [vmem:[%s137 + $0x49] sm:$0xff]
      %v214 = vld [vmem:[%s137 + $0x51] sm:$0xff]
      %v215 = vld [vmem:[%s137 + $0x61] sm:$0xff]
      %v216 = vld [vmem:[%s137 + $0x69] sm:$0xff]
      %v217 = vld [vmem:[%s137 + $0x79] sm:$0xff]
      %v218 = vld [vmem:[%s137 + $0x81] sm:$0xff]
      %v219 = vld [vmem:[%s137 + $0x91] sm:$0xff]
      %v220 = vld [vmem:[%s137 + $0x99] sm:$0xff]
      %v221 = vld [vmem:[%s137 + $0xa9] sm:$0xff]
      %v222 = vld [vmem:[%s137 + $0xb1] sm:$0xff]
      %v223 = vld [vmem:[%s137 + $0xc1] sm:$0xff]
      %v224 = vld [vmem:[%s137 + $0xc9] sm:$0xff]
      %v225 = vld [vmem:[%s137 + $0xd9] sm:$0xff]
      %v226 = vld [vmem:[%s137 + $0xe1] sm:$0xff]
      %v227 = vld [vmem:[%s137 + $0xf1] sm:$0xff]
      %v228 = vld [vmem:[%s137 + $0xf9] sm:$0xff]
      %v229 = vld [vmem:[%s137 + $0x109] sm:$0xff]
      %v230 = vld [vmem:[%s137 + $0x111] sm:$0xff]
      %v231 = vld [vmem:[%s137 + $0x121] sm:$0xff]
      %v232 = vld [vmem:[%s137 + $0x129] sm:$0xff]
      %v233 = vld [vmem:[%s137 + $0x139] sm:$0xff]
      %v234 = vld [vmem:[%s137 + $0x141] sm:$0xff]
      %v235 = vld [vmem:[%s137 + $0x151] sm:$0xff]
      %v236 = vld [vmem:[%s137 + $0x159] sm:$0xff]
      %v237 = vld [vmem:[%s137 + $0x169] sm:$0xff]
      %v238 = vld [vmem:[%s137 + $0x171] sm:$0xff]
      %v239 = vpack.c.bf16 %v208, %v207
      %v240 = vpack.c.bf16 %v210, %v209
      %v241 = vpack.c.bf16 %v212, %v211
      %v242 = vpack.c.bf16 %v214, %v213
      %v243 = vpack.c.bf16 %v216, %v215
      %v244 = vpack.c.bf16 %v218, %v217
      %v245 = vpack.c.bf16 %v220, %v219
      %v246 = vpack.c.bf16 %v222, %v221
      %v247 = vpack.c.bf16 %v224, %v223
      %v248 = vpack.c.bf16 %v226, %v225
      %v249 = vpack.c.bf16 %v228, %v227
      %v250 = vpack.c.bf16 %v230, %v229
      %v251 = vpack.c.bf16 %v232, %v231
      %v252 = vpack.c.bf16 %v234, %v233
      %v253 = vpack.c.bf16 %v236, %v235
      %v254 = vpack.c.bf16 %v238, %v237
      %s255 = scalar_lea.vmem %s1, 64
      %v256 = vld [vmem:[%s255] sm:$0xf]
      %v257 = vld [vmem:[%s255 + $0x4] sm:$0xf]
      %v258 = vld [vmem:[%s255 + $0x8] sm:$0xf]
      %v259 = vld [vmem:[%s255 + $0xc] sm:$0xf]
      %v260 = vld [vmem:[%s255 + $0x10] sm:$0xf]
      %v261 = vld [vmem:[%s255 + $0x14] sm:$0xf]
      %v262 = vld [vmem:[%s255 + $0x18] sm:$0xf]
      %v263 = vld [vmem:[%s255 + $0x1c] sm:$0xf]
      %v264 = vld [vmem:[%s255 + $0x20] sm:$0xf]
      %v265 = vld [vmem:[%s255 + $0x24] sm:$0xf]
      %v266 = vld [vmem:[%s255 + $0x28] sm:$0xf]
      %v267 = vld [vmem:[%s255 + $0x2c] sm:$0xf]
      %v268 = vld [vmem:[%s255 + $0x30] sm:$0xf]
      %v269 = vld [vmem:[%s255 + $0x34] sm:$0xf]
      %v270 = vld [vmem:[%s255 + $0x38] sm:$0xf]
      %v271 = vld [vmem:[%s255 + $0x3c] sm:$0xf]
      %v288 = vunpack.c.l.b16 %v256
      %v289 = vunpack.c.l.b16 %v257
      %v290 = vunpack.c.l.b16 %v258
      %v291 = vunpack.c.l.b16 %v259
      %v292 = vunpack.c.l.b16 %v260
      %v293 = vunpack.c.l.b16 %v261
      %v294 = vunpack.c.l.b16 %v262
      %v295 = vunpack.c.l.b16 %v263
      %v296 = vunpack.c.l.b16 %v264
      %v297 = vunpack.c.l.b16 %v265
      %v298 = vunpack.c.l.b16 %v266
      %v299 = vunpack.c.l.b16 %v267
      %v300 = vunpack.c.l.b16 %v268
      %v301 = vunpack.c.l.b16 %v269
      %v302 = vunpack.c.l.b16 %v270
      %v303 = vunpack.c.l.b16 %v271
      %v304 = vpack.c.b16 %v289, %v288
      %v305 = vpack.c.b16 %v291, %v290
      %v306 = vpack.c.b16 %v293, %v292
      %v307 = vpack.c.b16 %v295, %v294
      %v308 = vpack.c.b16 %v297, %v296
      %v309 = vpack.c.b16 %v299, %v298
      %v310 = vpack.c.b16 %v301, %v300
      %v311 = vpack.c.b16 %v303, %v302
      %320 = vmatprep.subr.bf16.mxu0 0
      %321 = vmatpush1.bf16.msra.mxu0 %v304
      %322 = vmatprep.subr.bf16.mxu0 0
      %323 = vmatpush1.bf16.msra.mxu0 %v305
      %324 = vmatprep.subr.bf16.mxu0 0
      %325 = vmatpush1.bf16.msra.mxu0 %v306
      %326 = vmatprep.subr.bf16.mxu0 0
      %327 = vmatpush1.bf16.msra.mxu0 %v307
      %328 = vmatprep.subr.bf16.mxu0 0
      %329 = vmatpush1.bf16.msra.mxu0 %v308
      %330 = vmatprep.subr.bf16.mxu0 0
      %331 = vmatpush1.bf16.msra.mxu0 %v309
      %332 = vmatprep.subr.bf16.mxu0 0
      %333 = vmatpush1.bf16.msra.mxu0 %v310
      %334 = vmatprep.subr.bf16.mxu0 0
      %335 = vmatpush1.bf16.msra.mxu0 %v311
      %336 = vmatprep.subr.bf16.mxu0 0
      %337 = vmatpush1.bf16.msra.mxu0 0
      %338 = vmatprep.subr.bf16.mxu0 0
      %339 = vmatpush1.bf16.msra.mxu0 0
      %340 = vmatprep.subr.bf16.mxu0 0
      %341 = vmatpush1.bf16.msra.mxu0 0
      %342 = vmatprep.subr.bf16.mxu0 0
      %343 = vmatpush1.bf16.msra.mxu0 0
      %344 = vmatprep.subr.bf16.mxu0 0
      %345 = vmatpush1.bf16.msra.mxu0 0
      %346 = vmatprep.subr.bf16.mxu0 0
      %347 = vmatpush1.bf16.msra.mxu0 0
      %348 = vmatprep.subr.bf16.mxu0 0
      %349 = vmatpush1.bf16.msra.mxu0 0
      %350 = vmatprep.subr.bf16.mxu0 0
      %351 = vmatpush1.bf16.msra.mxu0 0
      %352 = vmatprep.mubr.bf16.mxu0 0
      %353 = vmatmul.mubr.bf16.gmra.mrb[0].mxu0 %v239
      %v354 = vpop.f32.mrb[0].mxu0
      %v355 = vadd.f32 0.0, %v354
      %v356 = vpop.f32.mrb[0].mxu0
      %v357 = vpop.f32.mrb[0].mxu0
      %v358 = vadd.f32 0.0, %v357
      %v359 = vpop.f32.mrb[0].mxu0
      %360 = vmatprep.mubr.bf16.mxu0 0
      %361 = vmatmul.mubr.bf16.gmra.mrb[0].mxu0 %v240
      %v362 = vpop.f32.mrb[0].mxu0
      %v363 = vadd.f32 0.0, %v362
      %v364 = vpop.f32.mrb[0].mxu0
      %v365 = vpop.f32.mrb[0].mxu0
      %v366 = vadd.f32 0.0, %v365
      %v367 = vpop.f32.mrb[0].mxu0
      %368 = vmatprep.mubr.bf16.mxu0 0
      %369 = vmatmul.mubr.bf16.gmra.mrb[0].mxu0 %v241
      %v370 = vpop.f32.mrb[0].mxu0
      %v371 = vadd.f32 0.0, %v370
      %v372 = vpop.f32.mrb[0].mxu0
      %v373 = vpop.f32.mrb[0].mxu0
      %v374 = vadd.f32 0.0, %v373
      %v375 = vpop.f32.mrb[0].mxu0
      %376 = vmatprep.mubr.bf16.mxu0 0
      %377 = vmatmul.mubr.bf16.gmra.mrb[0].mxu0 %v242
      %v378 = vpop.f32.mrb[0].mxu0
      %v379 = vadd.f32 0.0, %v378
      %v380 = vpop.f32.mrb[0].mxu0
      %v381 = vpop.f32.mrb[0].mxu0
      %v382 = vadd.f32 0.0, %v381
      %v383 = vpop.f32.mrb[0].mxu0
      %384 = vmatprep.mubr.bf16.mxu0 0
      %385 = vmatmul.mubr.bf16.gmra.mrb[0].mxu0 %v243
      %v386 = vpop.f32.mrb[0].mxu0
      %v387 = vadd.f32 0.0, %v386
      %v388 = vpop.f32.mrb[0].mxu0
      %v389 = vpop.f32.mrb[0].mxu0
      %v390 = vadd.f32 0.0, %v389
      %v391 = vpop.f32.mrb[0].mxu0
      %392 = vmatprep.mubr.bf16.mxu0 0
      %393 = vmatmul.mubr.bf16.gmra.mrb[0].mxu0 %v244
      %v394 = vpop.f32.mrb[0].mxu0
      %v395 = vadd.f32 0.0, %v394
      %v396 = vpop.f32.mrb[0].mxu0
      %v397 = vpop.f32.mrb[0].mxu0
      %v398 = vadd.f32 0.0, %v397
      %v399 = vpop.f32.mrb[0].mxu0
      %400 = vmatprep.mubr.bf16.mxu0 0
      %401 = vmatmul.mubr.bf16.gmra.mrb[0].mxu0 %v245
      %v402 = vpop.f32.mrb[0].mxu0
      %v403 = vadd.f32 0.0, %v402
      %v404 = vpop.f32.mrb[0].mxu0
      %v405 = vpop.f32.mrb[0].mxu0
      %v406 = vadd.f32 0.0, %v405
      %v407 = vpop.f32.mrb[0].mxu0
      %408 = vmatprep.mubr.bf16.mxu0 0
      %409 = vmatmul.mubr.bf16.gmra.mrb[0].mxu0 %v246
      %v410 = vpop.f32.mrb[0].mxu0
      %v411 = vadd.f32 0.0, %v410
      %v412 = vpop.f32.mrb[0].mxu0
      %v413 = vpop.f32.mrb[0].mxu0
      %v414 = vadd.f32 0.0, %v413
      %v415 = vpop.f32.mrb[0].mxu0
      %416 = vmatprep.mubr.bf16.mxu0 0
      %417 = vmatmul.mubr.bf16.gmra.mrb[0].mxu0 %v247
      %v418 = vpop.f32.mrb[0].mxu0
      %v419 = vadd.f32 0.0, %v418
      %v420 = vpop.f32.mrb[0].mxu0
      %v421 = vpop.f32.mrb[0].mxu0
      %v422 = vadd.f32 0.0, %v421
      %v423 = vpop.f32.mrb[0].mxu0
      %424 = vmatprep.mubr.bf16.mxu0 0
      %425 = vmatmul.mubr.bf16.gmra.mrb[0].mxu0 %v248
      %v426 = vpop.f32.mrb[0].mxu0
      %v427 = vadd.f32 0.0, %v426
      %v428 = vpop.f32.mrb[0].mxu0
      %v429 = vpop.f32.mrb[0].mxu0
      %v430 = vadd.f32 0.0, %v429
      %v431 = vpop.f32.mrb[0].mxu0
      %432 = vmatprep.mubr.bf16.mxu0 0
      %433 = vmatmul.mubr.bf16.gmra.mrb[0].mxu0 %v249
      %v434 = vpop.f32.mrb[0].mxu0
      %v435 = vadd.f32 0.0, %v434
      %v436 = vpop.f32.mrb[0].mxu0
      %v437 = vpop.f32.mrb[0].mxu0
      %v438 = vadd.f32 0.0, %v437
      %v439 = vpop.f32.mrb[0].mxu0
      %440 = vmatprep.mubr.bf16.mxu0 0
      %441 = vmatmul.mubr.bf16.gmra.mrb[0].mxu0 %v250
      %v442 = vpop.f32.mrb[0].mxu0
      %v443 = vadd.f32 0.0, %v442
      %v444 = vpop.f32.mrb[0].mxu0
      %v445 = vpop.f32.mrb[0].mxu0
      %v446 = vadd.f32 0.0, %v445
      %v447 = vpop.f32.mrb[0].mxu0
      %448 = vmatprep.mubr.bf16.mxu0 0
      %449 = vmatmul.mubr.bf16.gmra.mrb[0].mxu0 %v251
      %v450 = vpop.f32.mrb[0].mxu0
      %v451 = vadd.f32 0.0, %v450
      %v452 = vpop.f32.mrb[0].mxu0
      %v453 = vpop.f32.mrb[0].mxu0
      %v454 = vadd.f32 0.0, %v453
      %v455 = vpop.f32.mrb[0].mxu0
      %456 = vmatprep.mubr.bf16.mxu0 0
      %457 = vmatmul.mubr.bf16.gmra.mrb[0].mxu0 %v252
      %v458 = vpop.f32.mrb[0].mxu0
      %v459 = vadd.f32 0.0, %v458
      %v460 = vpop.f32.mrb[0].mxu0
      %v461 = vpop.f32.mrb[0].mxu0
      %v462 = vadd.f32 0.0, %v461
      %v463 = vpop.f32.mrb[0].mxu0
      %464 = vmatprep.mubr.bf16.mxu0 0
      %465 = vmatmul.mubr.bf16.gmra.mrb[0].mxu0 %v253
      %v466 = vpop.f32.mrb[0].mxu0
      %v467 = vadd.f32 0.0, %v466
      %v468 = vpop.f32.mrb[0].mxu0
      %v469 = vpop.f32.mrb[0].mxu0
      %v470 = vadd.f32 0.0, %v469
      %v471 = vpop.f32.mrb[0].mxu0
      %472 = vmatprep.mubr.bf16.mxu0 0
      %473 = vmatmul.mubr.bf16.gmra.mrb[0].mxu0 %v254
      %v474 = vpop.f32.mrb[0].mxu0
      %v475 = vadd.f32 0.0, %v474
      %v476 = vpop.f32.mrb[0].mxu0
      %v477 = vpop.f32.mrb[0].mxu0
      %v478 = vadd.f32 0.0, %v477
      %v479 = vpop.f32.mrb[0].mxu0
      %480 = vdwg.mxu0
      %v497 = vunpack.c.l.b16 %v191
      %v498 = vunpack.c.l.b16 %v192
      %v499 = vunpack.c.l.b16 %v193
      %v500 = vunpack.c.l.b16 %v194
      %v501 = vunpack.c.l.b16 %v195
      %v502 = vunpack.c.l.b16 %v196
      %v503 = vunpack.c.l.b16 %v197
      %v504 = vunpack.c.l.b16 %v198
      %v505 = vunpack.c.l.b16 %v199
      %v506 = vunpack.c.l.b16 %v200
      %v507 = vunpack.c.l.b16 %v201
      %v508 = vunpack.c.l.b16 %v202
      %v509 = vunpack.c.l.b16 %v203
      %v510 = vunpack.c.l.b16 %v204
      %v511 = vunpack.c.l.b16 %v205
      %v512 = vunpack.c.l.b16 %v206
      %v513 = vpack.c.b16 %v498, %v497
      %v514 = vpack.c.b16 %v500, %v499
      %v515 = vpack.c.b16 %v502, %v501
      %v516 = vpack.c.b16 %v504, %v503
      %v517 = vpack.c.b16 %v506, %v505
      %v518 = vpack.c.b16 %v508, %v507
      %v519 = vpack.c.b16 %v510, %v509
      %v520 = vpack.c.b16 %v512, %v511
      %529 = vmatprep.subr.bf16.mxu0 0
      %530 = vmatpush1.bf16.msra.mxu0 %v513
      %531 = vmatprep.subr.bf16.mxu0 0
      %532 = vmatpush1.bf16.msra.mxu0 %v514
      %533 = vmatprep.subr.bf16.mxu0 0
      %534 = vmatpush1.bf16.msra.mxu0 %v515
      %535 = vmatprep.subr.bf16.mxu0 0
      %536 = vmatpush1.bf16.msra.mxu0 %v516
      %537 = vmatprep.subr.bf16.mxu0 0
      %538 = vmatpush1.bf16.msra.mxu0 %v517
      %539 = vmatprep.subr.bf16.mxu0 0
      %540 = vmatpush1.bf16.msra.mxu0 %v518
      %541 = vmatprep.subr.bf16.mxu0 0
      %542 = vmatpush1.bf16.msra.mxu0 %v519
      %543 = vmatprep.subr.bf16.mxu0 0
      %544 = vmatpush1.bf16.msra.mxu0 %v520
      %545 = vmatprep.subr.bf16.mxu0 0
      %546 = vmatpush1.bf16.msra.mxu0 0
      %547 = vmatprep.subr.bf16.mxu0 0
      %548 = vmatpush1.bf16.msra.mxu0 0
      %549 = vmatprep.subr.bf16.mxu0 0
      %550 = vmatpush1.bf16.msra.mxu0 0
      %551 = vmatprep.subr.bf16.mxu0 0
      %552 = vmatpush1.bf16.msra.mxu0 0
      %553 = vmatprep.subr.bf16.mxu0 0
      %554 = vmatpush1.bf16.msra.mxu0 0
      %555 = vmatprep.subr.bf16.mxu0 0
      %556 = vmatpush1.bf16.msra.mxu0 0
      %557 = vmatprep.subr.bf16.mxu0 0
      %558 = vmatpush1.bf16.msra.mxu0 0
      %559 = vmatprep.subr.bf16.mxu0 0
      %560 = vmatpush1.bf16.msra.mxu0 0
      %561 = vmatprep.mubr.bf16.mxu0 0
      %562 = vmatmul.mubr.bf16.gmra.mrb[0].mxu0 %v175
      %v563 = vpop.f32.mrb[0].mxu0
      %v564 = vadd.f32 %v355, %v563
      %v565 = vpop.f32.mrb[0].mxu0
      %v566 = vpop.f32.mrb[0].mxu0
      %v567 = vadd.f32 %v358, %v566
      %v568 = vpop.f32.mrb[0].mxu0
      %569 = vmatprep.mubr.bf16.mxu0 0
      %570 = vmatmul.mubr.bf16.gmra.mrb[0].mxu0 %v176
      %v571 = vpop.f32.mrb[0].mxu0
      %v572 = vadd.f32 %v363, %v571
      %v573 = vpop.f32.mrb[0].mxu0
      %v574 = vpop.f32.mrb[0].mxu0
      %v575 = vadd.f32 %v366, %v574
      %v576 = vpop.f32.mrb[0].mxu0
      %577 = vmatprep.mubr.bf16.mxu0 0
      %578 = vmatmul.mubr.bf16.gmra.mrb[0].mxu0 %v177
      %v579 = vpop.f32.mrb[0].mxu0
      %v580 = vadd.f32 %v371, %v579
      %v581 = vpop.f32.mrb[0].mxu0
      %v582 = vpop.f32.mrb[0].mxu0
      %v583 = vadd.f32 %v374, %v582
      %v584 = vpop.f32.mrb[0].mxu0
      %585 = vmatprep.mubr.bf16.mxu0 0
      %586 = vmatmul.mubr.bf16.gmra.mrb[0].mxu0 %v178
      %v587 = vpop.f32.mrb[0].mxu0
      %v588 = vadd.f32 %v379, %v587
      %v589 = vpop.f32.mrb[0].mxu0
      %v590 = vpop.f32.mrb[0].mxu0
      %v591 = vadd.f32 %v382, %v590
      %v592 = vpop.f32.mrb[0].mxu0
      %593 = vmatprep.mubr.bf16.mxu0 0
      %594 = vmatmul.mubr.bf16.gmra.mrb[0].mxu0 %v179
      %v595 = vpop.f32.mrb[0].mxu0
      %v596 = vadd.f32 %v387, %v595
      %v597 = vpop.f32.mrb[0].mxu0
      %v598 = vpop.f32.mrb[0].mxu0
      %v599 = vadd.f32 %v390, %v598
      %v600 = vpop.f32.mrb[0].mxu0
      %601 = vmatprep.mubr.bf16.mxu0 0
      %602 = vmatmul.mubr.bf16.gmra.mrb[0].mxu0 %v180
      %v603 = vpop.f32.mrb[0].mxu0
      %v604 = vadd.f32 %v395, %v603
      %v605 = vpop.f32.mrb[0].mxu0
      %v606 = vpop.f32.mrb[0].mxu0
      %v607 = vadd.f32 %v398, %v606
      %v608 = vpop.f32.mrb[0].mxu0
      %609 = vmatprep.mubr.bf16.mxu0 0
      %610 = vmatmul.mubr.bf16.gmra.mrb[0].mxu0 %v181
      %v611 = vpop.f32.mrb[0].mxu0
      %v612 = vadd.f32 %v403, %v611
      %v613 = vpop.f32.mrb[0].mxu0
      %v614 = vpop.f32.mrb[0].mxu0
      %v615 = vadd.f32 %v406, %v614
      %v616 = vpop.f32.mrb[0].mxu0
      %617 = vmatprep.mubr.bf16.mxu0 0
      %618 = vmatmul.mubr.bf16.gmra.mrb[0].mxu0 %v182
      %v619 = vpop.f32.mrb[0].mxu0
      %v620 = vadd.f32 %v411, %v619
      %v621 = vpop.f32.mrb[0].mxu0
      %v622 = vpop.f32.mrb[0].mxu0
      %v623 = vadd.f32 %v414, %v622
      %v624 = vpop.f32.mrb[0].mxu0
      %625 = vmatprep.mubr.bf16.mxu0 0
      %626 = vmatmul.mubr.bf16.gmra.mrb[0].mxu0 %v183
      %v627 = vpop.f32.mrb[0].mxu0
      %v628 = vadd.f32 %v419, %v627
      %v629 = vpop.f32.mrb[0].mxu0
      %v630 = vpop.f32.mrb[0].mxu0
      %v631 = vadd.f32 %v422, %v630
      %v632 = vpop.f32.mrb[0].mxu0
      %633 = vmatprep.mubr.bf16.mxu0 0
      %634 = vmatmul.mubr.bf16.gmra.mrb[0].mxu0 %v184
      %v635 = vpop.f32.mrb[0].mxu0
      %v636 = vadd.f32 %v427, %v635
      %v637 = vpop.f32.mrb[0].mxu0
      %v638 = vpop.f32.mrb[0].mxu0
      %v639 = vadd.f32 %v430, %v638
      %v640 = vpop.f32.mrb[0].mxu0
      %641 = vmatprep.mubr.bf16.mxu0 0
      %642 = vmatmul.mubr.bf16.gmra.mrb[0].mxu0 %v185
      %v643 = vpop.f32.mrb[0].mxu0
      %v644 = vadd.f32 %v435, %v643
      %v645 = vpop.f32.mrb[0].mxu0
      %v646 = vpop.f32.mrb[0].mxu0
      %v647 = vadd.f32 %v438, %v646
      %v648 = vpop.f32.mrb[0].mxu0
      %649 = vmatprep.mubr.bf16.mxu0 0
      %650 = vmatmul.mubr.bf16.gmra.mrb[0].mxu0 %v186
      %v651 = vpop.f32.mrb[0].mxu0
      %v652 = vadd.f32 %v443, %v651
      %v653 = vpop.f32.mrb[0].mxu0
      %v654 = vpop.f32.mrb[0].mxu0
      %v655 = vadd.f32 %v446, %v654
      %v656 = vpop.f32.mrb[0].mxu0
      %657 = vmatprep.mubr.bf16.mxu0 0
      %658 = vmatmul.mubr.bf16.gmra.mrb[0].mxu0 %v187
      %v659 = vpop.f32.mrb[0].mxu0
      %v660 = vadd.f32 %v451, %v659
      %v661 = vpop.f32.mrb[0].mxu0
      %v662 = vpop.f32.mrb[0].mxu0
      %v663 = vadd.f32 %v454, %v662
      %v664 = vpop.f32.mrb[0].mxu0
      %665 = vmatprep.mubr.bf16.mxu0 0
      %666 = vmatmul.mubr.bf16.gmra.mrb[0].mxu0 %v188
      %v667 = vpop.f32.mrb[0].mxu0
      %v668 = vadd.f32 %v459, %v667
      %v669 = vpop.f32.mrb[0].mxu0
      %v670 = vpop.f32.mrb[0].mxu0
      %v671 = vadd.f32 %v462, %v670
      %v672 = vpop.f32.mrb[0].mxu0
      %673 = vmatprep.mubr.bf16.mxu0 0
      %674 = vmatmul.mubr.bf16.gmra.mrb[0].mxu0 %v189
      %v675 = vpop.f32.mrb[0].mxu0
      %v676 = vadd.f32 %v467, %v675
      %v677 = vpop.f32.mrb[0].mxu0
      %v678 = vpop.f32.mrb[0].mxu0
      %v679 = vadd.f32 %v470, %v678
      %v680 = vpop.f32.mrb[0].mxu0
      %681 = vmatprep.mubr.bf16.mxu0 0
      %682 = vmatmul.mubr.bf16.gmra.mrb[0].mxu0 %v190
      %v683 = vpop.f32.mrb[0].mxu0
      %v684 = vadd.f32 %v475, %v683
      %v685 = vpop.f32.mrb[0].mxu0
      %v686 = vpop.f32.mrb[0].mxu0
      %v687 = vadd.f32 %v478, %v686
      %v688 = vpop.f32.mrb[0].mxu0
      %689 = vdwg.mxu0
      %v690 = vld [vmem:[%s137 + $0x2] sm:$0xff]
      %v691 = vld [vmem:[%s137 + $0xa] sm:$0xff]
      %v692 = vld [vmem:[%s137 + $0x1a] sm:$0xff]
      %v693 = vld [vmem:[%s137 + $0x22] sm:$0xff]
      %v694 = vld [vmem:[%s137 + $0x32] sm:$0xff]
      %v695 = vld [vmem:[%s137 + $0x3a] sm:$0xff]
      %v696 = vld [vmem:[%s137 + $0x4a] sm:$0xff]
      %v697 = vld [vmem:[%s137 + $0x52] sm:$0xff]
      %v698 = vld [vmem:[%s137 + $0x62] sm:$0xff]
      %v699 = vld [vmem:[%s137 + $0x6a] sm:$0xff]
      %v700 = vld [vmem:[%s137 + $0x7a] sm:$0xff]
      %v701 = vld [vmem:[%s137 + $0x82] sm:$0xff]
      %v702 = vld [vmem:[%s137 + $0x92] sm:$0xff]
      %v703 = vld [vmem:[%s137 + $0x9a] sm:$0xff]
      %v704 = vld [vmem:[%s137 + $0xaa] sm:$0xff]
      %v705 = vld [vmem:[%s137 + $0xb2] sm:$0xff]
      %v706 = vld [vmem:[%s137 + $0xc2] sm:$0xff]
      %v707 = vld [vmem:[%s137 + $0xca] sm:$0xff]
      %v708 = vld [vmem:[%s137 + $0xda] sm:$0xff]
      %v709 = vld [vmem:[%s137 + $0xe2] sm:$0xff]
      %v710 = vld [vmem:[%s137 + $0xf2] sm:$0xff]
      %v711 = vld [vmem:[%s137 + $0xfa] sm:$0xff]
      %v712 = vld [vmem:[%s137 + $0x10a] sm:$0xff]
      %v713 = vld [vmem:[%s137 + $0x112] sm:$0xff]
      %v714 = vld [vmem:[%s137 + $0x122] sm:$0xff]
      %v715 = vld [vmem:[%s137 + $0x12a] sm:$0xff]
      %v716 = vld [vmem:[%s137 + $0x13a] sm:$0xff]
      %v717 = vld [vmem:[%s137 + $0x142] sm:$0xff]
      %v718 = vld [vmem:[%s137 + $0x152] sm:$0xff]
      %v719 = vld [vmem:[%s137 + $0x15a] sm:$0xff]
      %v720 = vld [vmem:[%s137 + $0x16a] sm:$0xff]
      %v721 = vld [vmem:[%s137 + $0x172] sm:$0xff]
      %v722 = vpack.c.bf16 %v691, %v690
      %v723 = vpack.c.bf16 %v693, %v692
      %v724 = vpack.c.bf16 %v695, %v694
      %v725 = vpack.c.bf16 %v697, %v696
      %v726 = vpack.c.bf16 %v699, %v698
      %v727 = vpack.c.bf16 %v701, %v700
      %v728 = vpack.c.bf16 %v703, %v702
      %v729 = vpack.c.bf16 %v705, %v704
      %v730 = vpack.c.bf16 %v707, %v706
      %v731 = vpack.c.bf16 %v709, %v708
      %v732 = vpack.c.bf16 %v711, %v710
      %v733 = vpack.c.bf16 %v713, %v712
      %v734 = vpack.c.bf16 %v715, %v714
      %v735 = vpack.c.bf16 %v717, %v716
      %v736 = vpack.c.bf16 %v719, %v718
      %v737 = vpack.c.bf16 %v721, %v720
      %s738 = scalar_lea.vmem %s1, 128
      %v739 = vld [vmem:[%s738] sm:$0xf]
      %v740 = vld [vmem:[%s738 + $0x4] sm:$0xf]
      %v741 = vld [vmem:[%s738 + $0x8] sm:$0xf]
      %v742 = vld [vmem:[%s738 + $0xc] sm:$0xf]
      %v743 = vld [vmem:[%s738 + $0x10] sm:$0xf]
      %v744 = vld [vmem:[%s738 + $0x14] sm:$0xf]
      %v745 = vld [vmem:[%s738 + $0x18] sm:$0xf]
      %v746 = vld [vmem:[%s738 + $0x1c] sm:$0xf]
      %v747 = vld [vmem:[%s738 + $0x20] sm:$0xf]
      %v748 = vld [vmem:[%s738 + $0x24] sm:$0xf]
      %v749 = vld [vmem:[%s738 + $0x28] sm:$0xf]
      %v750 = vld [vmem:[%s738 + $0x2c] sm:$0xf]
      %v751 = vld [vmem:[%s738 + $0x30] sm:$0xf]
      %v752 = vld [vmem:[%s738 + $0x34] sm:$0xf]
      %v753 = vld [vmem:[%s738 + $0x38] sm:$0xf]
      %v754 = vld [vmem:[%s738 + $0x3c] sm:$0xf]
      %v771 = vunpack.c.l.b16 %v739
      %v772 = vunpack.c.l.b16 %v740
      %v773 = vunpack.c.l.b16 %v741
      %v774 = vunpack.c.l.b16 %v742
      %v775 = vunpack.c.l.b16 %v743
      %v776 = vunpack.c.l.b16 %v744
      %v777 = vunpack.c.l.b16 %v745
      %v778 = vunpack.c.l.b16 %v746
      %v779 = vunpack.c.l.b16 %v747
      %v780 = vunpack.c.l.b16 %v748
      %v781 = vunpack.c.l.b16 %v749
      %v782 = vunpack.c.l.b16 %v750
      %v783 = vunpack.c.l.b16 %v751
      %v784 = vunpack.c.l.b16 %v752
      %v785 = vunpack.c.l.b16 %v753
      %v786 = vunpack.c.l.b16 %v754
      %v787 = vpack.c.b16 %v772, %v771
      %v788 = vpack.c.b16 %v774, %v773
      %v789 = vpack.c.b16 %v776, %v775
      %v790 = vpack.c.b16 %v778, %v777
      %v791 = vpack.c.b16 %v780, %v779
      %v792 = vpack.c.b16 %v782, %v781
      %v793 = vpack.c.b16 %v784, %v783
      %v794 = vpack.c.b16 %v786, %v785
      %803 = vmatprep.subr.bf16.mxu0 0
      %804 = vmatpush1.bf16.msra.mxu0 %v787
      %805 = vmatprep.subr.bf16.mxu0 0
      %806 = vmatpush1.bf16.msra.mxu0 %v788
      %807 = vmatprep.subr.bf16.mxu0 0
      %808 = vmatpush1.bf16.msra.mxu0 %v789
      %809 = vmatprep.subr.bf16.mxu0 0
      %810 = vmatpush1.bf16.msra.mxu0 %v790
      %811 = vmatprep.subr.bf16.mxu0 0
      %812 = vmatpush1.bf16.msra.mxu0 %v791
      %813 = vmatprep.subr.bf16.mxu0 0
      %814 = vmatpush1.bf16.msra.mxu0 %v792
      %815 = vmatprep.subr.bf16.mxu0 0
      %816 = vmatpush1.bf16.msra.mxu0 %v793
      %817 = vmatprep.subr.bf16.mxu0 0
      %818 = vmatpush1.bf16.msra.mxu0 %v794
      %819 = vmatprep.subr.bf16.mxu0 0
      %820 = vmatpush1.bf16.msra.mxu0 0
      %821 = vmatprep.subr.bf16.mxu0 0
      %822 = vmatpush1.bf16.msra.mxu0 0
      %823 = vmatprep.subr.bf16.mxu0 0
      %824 = vmatpush1.bf16.msra.mxu0 0
      %825 = vmatprep.subr.bf16.mxu0 0
      %826 = vmatpush1.bf16.msra.mxu0 0
      %827 = vmatprep.subr.bf16.mxu0 0
      %828 = vmatpush1.bf16.msra.mxu0 0
      %829 = vmatprep.subr.bf16.mxu0 0
      %830 = vmatpush1.bf16.msra.mxu0 0
      %831 = vmatprep.subr.bf16.mxu0 0
      %832 = vmatpush1.bf16.msra.mxu0 0
      %833 = vmatprep.subr.bf16.mxu0 0
      %834 = vmatpush1.bf16.msra.mxu0 0
      %835 = vmatprep.mubr.bf16.mxu0 0
      %836 = vmatmul.mubr.bf16.gmra.mrb[0].mxu0 %v722
      %v837 = vpop.f32.mrb[0].mxu0
      %v838 = vadd.f32 0.0, %v837
      %v839 = vpop.f32.mrb[0].mxu0
      %v840 = vpop.f32.mrb[0].mxu0
      %v841 = vadd.f32 0.0, %v840
      %v842 = vpop.f32.mrb[0].mxu0
      %843 = vmatprep.mubr.bf16.mxu0 0
      %844 = vmatmul.mubr.bf16.gmra.mrb[0].mxu0 %v723
      %v845 = vpop.f32.mrb[0].mxu0
      %v846 = vadd.f32 0.0, %v845
      %v847 = vpop.f32.mrb[0].mxu0
      %v848 = vpop.f32.mrb[0].mxu0
      %v849 = vadd.f32 0.0, %v848
      %v850 = vpop.f32.mrb[0].mxu0
      %851 = vmatprep.mubr.bf16.mxu0 0
      %852 = vmatmul.mubr.bf16.gmra.mrb[0].mxu0 %v724
      %v853 = vpop.f32.mrb[0].mxu0
      %v854 = vadd.f32 0.0, %v853
      %v855 = vpop.f32.mrb[0].mxu0
      %v856 = vpop.f32.mrb[0].mxu0
      %v857 = vadd.f32 0.0, %v856
      %v858 = vpop.f32.mrb[0].mxu0
      %859 = vmatprep.mubr.bf16.mxu0 0
      %860 = vmatmul.mubr.bf16.gmra.mrb[0].mxu0 %v725
      %v861 = vpop.f32.mrb[0].mxu0
      %v862 = vadd.f32 0.0, %v861
      %v863 = vpop.f32.mrb[0].mxu0
      %v864 = vpop.f32.mrb[0].mxu0
      %v865 = vadd.f32 0.0, %v864
      %v866 = vpop.f32.mrb[0].mxu0
      %867 = vmatprep.mubr.bf16.mxu0 0
      %868 = vmatmul.mubr.bf16.gmra.mrb[0].mxu0 %v726
      %v869 = vpop.f32.mrb[0].mxu0
      %v870 = vadd.f32 0.0, %v869
      %v871 = vpop.f32.mrb[0].mxu0
      %v872 = vpop.f32.mrb[0].mxu0
      %v873 = vadd.f32 0.0, %v872
      %v874 = vpop.f32.mrb[0].mxu0
      %875 = vmatprep.mubr.bf16.mxu0 0
      %876 = vmatmul.mubr.bf16.gmra.mrb[0].mxu0 %v727
      %v877 = vpop.f32.mrb[0].mxu0
      %v878 = vadd.f32 0.0, %v877
      %v879 = vpop.f32.mrb[0].mxu0
      %v880 = vpop.f32.mrb[0].mxu0
      %v881 = vadd.f32 0.0, %v880
      %v882 = vpop.f32.mrb[0].mxu0
      %883 = vmatprep.mubr.bf16.mxu0 0
      %884 = vmatmul.mubr.bf16.gmra.mrb[0].mxu0 %v728
      %v885 = vpop.f32.mrb[0].mxu0
      %v886 = vadd.f32 0.0, %v885
      %v887 = vpop.f32.mrb[0].mxu0
      %v888 = vpop.f32.mrb[0].mxu0
      %v889 = vadd.f32 0.0, %v888
      %v890 = vpop.f32.mrb[0].mxu0
      %891 = vmatprep.mubr.bf16.mxu0 0
      %892 = vmatmul.mubr.bf16.gmra.mrb[0].mxu0 %v729
      %v893 = vpop.f32.mrb[0].mxu0
      %v894 = vadd.f32 0.0, %v893
      %v895 = vpop.f32.mrb[0].mxu0
      %v896 = vpop.f32.mrb[0].mxu0
      %v897 = vadd.f32 0.0, %v896
      %v898 = vpop.f32.mrb[0].mxu0
      %899 = vmatprep.mubr.bf16.mxu0 0
      %900 = vmatmul.mubr.bf16.gmra.mrb[0].mxu0 %v730
      %v901 = vpop.f32.mrb[0].mxu0
      %v902 = vadd.f32 0.0, %v901
      %v903 = vpop.f32.mrb[0].mxu0
      %v904 = vpop.f32.mrb[0].mxu0
      %v905 = vadd.f32 0.0, %v904
      %v906 = vpop.f32.mrb[0].mxu0
      %907 = vmatprep.mubr.bf16.mxu0 0
      %908 = vmatmul.mubr.bf16.gmra.mrb[0].mxu0 %v731
      %v909 = vpop.f32.mrb[0].mxu0
      %v910 = vadd.f32 0.0, %v909
      %v911 = vpop.f32.mrb[0].mxu0
      %v912 = vpop.f32.mrb[0].mxu0
      %v913 = vadd.f32 0.0, %v912
      %v914 = vpop.f32.mrb[0].mxu0
      %915 = vmatprep.mubr.bf16.mxu0 0
      %916 = vmatmul.mubr.bf16.gmra.mrb[0].mxu0 %v732
      %v917 = vpop.f32.mrb[0].mxu0
      %v918 = vadd.f32 0.0, %v917
      %v919 = vpop.f32.mrb[0].mxu0
      %v920 = vpop.f32.mrb[0].mxu0
      %v921 = vadd.f32 0.0, %v920
      %v922 = vpop.f32.mrb[0].mxu0
      %923 = vmatprep.mubr.bf16.mxu0 0
      %924 = vmatmul.mubr.bf16.gmra.mrb[0].mxu0 %v733
      %v925 = vpop.f32.mrb[0].mxu0
      %v926 = vadd.f32 0.0, %v925
      %v927 = vpop.f32.mrb[0].mxu0
      %v928 = vpop.f32.mrb[0].mxu0
      %v929 = vadd.f32 0.0, %v928
      %v930 = vpop.f32.mrb[0].mxu0
      %931 = vmatprep.mubr.bf16.mxu0 0
      %932 = vmatmul.mubr.bf16.gmra.mrb[0].mxu0 %v734
      %v933 = vpop.f32.mrb[0].mxu0
      %v934 = vadd.f32 0.0, %v933
      %v935 = vpop.f32.mrb[0].mxu0
      %v936 = vpop.f32.mrb[0].mxu0
      %v937 = vadd.f32 0.0, %v936
      %v938 = vpop.f32.mrb[0].mxu0
      %939 = vmatprep.mubr.bf16.mxu0 0
      %940 = vmatmul.mubr.bf16.gmra.mrb[0].mxu0 %v735
      %v941 = vpop.f32.mrb[0].mxu0
      %v942 = vadd.f32 0.0, %v941
      %v943 = vpop.f32.mrb[0].mxu0
      %v944 = vpop.f32.mrb[0].mxu0
      %v945 = vadd.f32 0.0, %v944
      %v946 = vpop.f32.mrb[0].mxu0
      %947 = vmatprep.mubr.bf16.mxu0 0
      %948 = vmatmul.mubr.bf16.gmra.mrb[0].mxu0 %v736
      %v949 = vpop.f32.mrb[0].mxu0
      %v950 = vadd.f32 0.0, %v949
      %v951 = vpop.f32.mrb[0].mxu0
      %v952 = vpop.f32.mrb[0].mxu0
      %v953 = vadd.f32 0.0, %v952
      %v954 = vpop.f32.mrb[0].mxu0
      %955 = vmatprep.mubr.bf16.mxu0 0
      %956 = vmatmul.mubr.bf16.gmra.mrb[0].mxu0 %v737
      %v957 = vpop.f32.mrb[0].mxu0
      %v958 = vadd.f32 0.0, %v957
      %v959 = vpop.f32.mrb[0].mxu0
      %v960 = vpop.f32.mrb[0].mxu0
      %v961 = vadd.f32 0.0, %v960
      %v962 = vpop.f32.mrb[0].mxu0
      %963 = vdwg.mxu0
      %v964 = vadd.f32 %v564, %v838
      %v965 = vadd.f32 %v567, %v841
      %v966 = vadd.f32 %v572, %v846
      %v967 = vadd.f32 %v575, %v849
      %v968 = vadd.f32 %v580, %v854
      %v969 = vadd.f32 %v583, %v857
      %v970 = vadd.f32 %v588, %v862
      %v971 = vadd.f32 %v591, %v865
      %v972 = vadd.f32 %v596, %v870
      %v973 = vadd.f32 %v599, %v873
      %v974 = vadd.f32 %v604, %v878
      %v975 = vadd.f32 %v607, %v881
      %v976 = vadd.f32 %v612, %v886
      %v977 = vadd.f32 %v615, %v889
      %v978 = vadd.f32 %v620, %v894
      %v979 = vadd.f32 %v623, %v897
      %v980 = vadd.f32 %v628, %v902
      %v981 = vadd.f32 %v631, %v905
      %v982 = vadd.f32 %v636, %v910
      %v983 = vadd.f32 %v639, %v913
      %v984 = vadd.f32 %v644, %v918
      %v985 = vadd.f32 %v647, %v921
      %v986 = vadd.f32 %v652, %v926
      %v987 = vadd.f32 %v655, %v929
      %v988 = vadd.f32 %v660, %v934
      %v989 = vadd.f32 %v663, %v937
      %v990 = vadd.f32 %v668, %v942
      %v991 = vadd.f32 %v671, %v945
      %v992 = vadd.f32 %v676, %v950
      %v993 = vadd.f32 %v679, %v953
      %v994 = vadd.f32 %v684, %v958
      %v995 = vadd.f32 %v687, %v961
      %s996 = scalar_lea.vmem %s137, 24
      %v997 = vld [vmem:[%s996] sm:$0xff]
      %v998 = vld [vmem:[%s996 + $0x8] sm:$0xff]
      %v999 = vld [vmem:[%s996 + $0x18] sm:$0xff]
      %v1000 = vld [vmem:[%s996 + $0x20] sm:$0xff]
      %v1001 = vld [vmem:[%s996 + $0x30] sm:$0xff]
      %v1002 = vld [vmem:[%s996 + $0x38] sm:$0xff]
      %v1003 = vld [vmem:[%s996 + $0x48] sm:$0xff]
      %v1004 = vld [vmem:[%s996 + $0x50] sm:$0xff]
      %v1005 = vld [vmem:[%s996 + $0x60] sm:$0xff]
      %v1006 = vld [vmem:[%s996 + $0x68] sm:$0xff]
      %v1007 = vld [vmem:[%s996 + $0x78] sm:$0xff]
      %v1008 = vld [vmem:[%s996 + $0x80] sm:$0xff]
      %v1009 = vld [vmem:[%s996 + $0x90] sm:$0xff]
      %v1010 = vld [vmem:[%s996 + $0x98] sm:$0xff]
      %v1011 = vld [vmem:[%s996 + $0xa8] sm:$0xff]
      %v1012 = vld [vmem:[%s996 + $0xb0] sm:$0xff]
      %v1013 = vld [vmem:[%s996 + $0xc0] sm:$0xff]
      %v1014 = vld [vmem:[%s996 + $0xc8] sm:$0xff]
      %v1015 = vld [vmem:[%s996 + $0xd8] sm:$0xff]
      %v1016 = vld [vmem:[%s996 + $0xe0] sm:$0xff]
      %v1017 = vld [vmem:[%s996 + $0xf0] sm:$0xff]
      %v1018 = vld [vmem:[%s996 + $0xf8] sm:$0xff]
      %v1019 = vld [vmem:[%s996 + $0x108] sm:$0xff]
      %v1020 = vld [vmem:[%s996 + $0x110] sm:$0xff]
      %v1021 = vld [vmem:[%s996 + $0x120] sm:$0xff]
      %v1022 = vld [vmem:[%s996 + $0x128] sm:$0xff]
      %v1023 = vld [vmem:[%s996 + $0x138] sm:$0xff]
      %v1024 = vld [vmem:[%s996 + $0x140] sm:$0xff]
      %v1025 = vld [vmem:[%s996 + $0x150] sm:$0xff]
      %v1026 = vld [vmem:[%s996 + $0x158] sm:$0xff]
      %v1027 = vld [vmem:[%s996 + $0x168] sm:$0xff]
      %v1028 = vld [vmem:[%s996 + $0x170] sm:$0xff]
      %v1029 = vpack.c.bf16 %v998, %v997
      %v1030 = vpack.c.bf16 %v1000, %v999
      %v1031 = vpack.c.bf16 %v1002, %v1001
      %v1032 = vpack.c.bf16 %v1004, %v1003
      %v1033 = vpack.c.bf16 %v1006, %v1005
      %v1034 = vpack.c.bf16 %v1008, %v1007
      %v1035 = vpack.c.bf16 %v1010, %v1009
      %v1036 = vpack.c.bf16 %v1012, %v1011
      %v1037 = vpack.c.bf16 %v1014, %v1013
      %v1038 = vpack.c.bf16 %v1016, %v1015
      %v1039 = vpack.c.bf16 %v1018, %v1017
      %v1040 = vpack.c.bf16 %v1020, %v1019
      %v1041 = vpack.c.bf16 %v1022, %v1021
      %v1042 = vpack.c.bf16 %v1024, %v1023
      %v1043 = vpack.c.bf16 %v1026, %v1025
      %v1044 = vpack.c.bf16 %v1028, %v1027
      %s1045 = scalar_lea.vmem %s1, 192
      %v1046 = vld [vmem:[%s1045] sm:$0xf]
      %v1047 = vld [vmem:[%s1045 + $0x4] sm:$0xf]
      %v1048 = vld [vmem:[%s1045 + $0x8] sm:$0xf]
      %v1049 = vld [vmem:[%s1045 + $0xc] sm:$0xf]
      %v1050 = vld [vmem:[%s1045 + $0x10] sm:$0xf]
      %v1051 = vld [vmem:[%s1045 + $0x14] sm:$0xf]
      %v1052 = vld [vmem:[%s1045 + $0x18] sm:$0xf]
      %v1053 = vld [vmem:[%s1045 + $0x1c] sm:$0xf]
      %v1054 = vld [vmem:[%s1045 + $0x20] sm:$0xf]
      %v1055 = vld [vmem:[%s1045 + $0x24] sm:$0xf]
      %v1056 = vld [vmem:[%s1045 + $0x28] sm:$0xf]
      %v1057 = vld [vmem:[%s1045 + $0x2c] sm:$0xf]
      %v1058 = vld [vmem:[%s1045 + $0x30] sm:$0xf]
      %v1059 = vld [vmem:[%s1045 + $0x34] sm:$0xf]
      %v1060 = vld [vmem:[%s1045 + $0x38] sm:$0xf]
      %v1061 = vld [vmem:[%s1045 + $0x3c] sm:$0xf]
      %v1078 = vunpack.c.l.b16 %v1046
      %v1079 = vunpack.c.l.b16 %v1047
      %v1080 = vunpack.c.l.b16 %v1048
      %v1081 = vunpack.c.l.b16 %v1049
      %v1082 = vunpack.c.l.b16 %v1050
      %v1083 = vunpack.c.l.b16 %v1051
      %v1084 = vunpack.c.l.b16 %v1052
      %v1085 = vunpack.c.l.b16 %v1053
      %v1086 = vunpack.c.l.b16 %v1054
      %v1087 = vunpack.c.l.b16 %v1055
      %v1088 = vunpack.c.l.b16 %v1056
      %v1089 = vunpack.c.l.b16 %v1057
      %v1090 = vunpack.c.l.b16 %v1058
      %v1091 = vunpack.c.l.b16 %v1059
      %v1092 = vunpack.c.l.b16 %v1060
      %v1093 = vunpack.c.l.b16 %v1061
      %v1094 = vpack.c.b16 %v1079, %v1078
      %v1095 = vpack.c.b16 %v1081, %v1080
      %v1096 = vpack.c.b16 %v1083, %v1082
      %v1097 = vpack.c.b16 %v1085, %v1084
      %v1098 = vpack.c.b16 %v1087, %v1086
      %v1099 = vpack.c.b16 %v1089, %v1088
      %v1100 = vpack.c.b16 %v1091, %v1090
      %v1101 = vpack.c.b16 %v1093, %v1092
      %1110 = vmatprep.subr.bf16.mxu0 0
      %1111 = vmatpush1.bf16.msra.mxu0 %v1094
      %1112 = vmatprep.subr.bf16.mxu0 0
      %1113 = vmatpush1.bf16.msra.mxu0 %v1095
      %1114 = vmatprep.subr.bf16.mxu0 0
      %1115 = vmatpush1.bf16.msra.mxu0 %v1096
      %1116 = vmatprep.subr.bf16.mxu0 0
      %1117 = vmatpush1.bf16.msra.mxu0 %v1097
      %1118 = vmatprep.subr.bf16.mxu0 0
      %1119 = vmatpush1.bf16.msra.mxu0 %v1098
      %1120 = vmatprep.subr.bf16.mxu0 0
      %1121 = vmatpush1.bf16.msra.mxu0 %v1099
      %1122 = vmatprep.subr.bf16.mxu0 0
      %1123 = vmatpush1.bf16.msra.mxu0 %v1100
      %1124 = vmatprep.subr.bf16.mxu0 0
      %1125 = vmatpush1.bf16.msra.mxu0 %v1101
      %1126 = vmatprep.subr.bf16.mxu0 0
      %1127 = vmatpush1.bf16.msra.mxu0 0
      %1128 = vmatprep.subr.bf16.mxu0 0
      %1129 = vmatpush1.bf16.msra.mxu0 0
      %1130 = vmatprep.subr.bf16.mxu0 0
      %1131 = vmatpush1.bf16.msra.mxu0 0
      %1132 = vmatprep.subr.bf16.mxu0 0
      %1133 = vmatpush1.bf16.msra.mxu0 0
      %1134 = vmatprep.subr.bf16.mxu0 0
      %1135 = vmatpush1.bf16.msra.mxu0 0
      %1136 = vmatprep.subr.bf16.mxu0 0
      %1137 = vmatpush1.bf16.msra.mxu0 0
      %1138 = vmatprep.subr.bf16.mxu0 0
      %1139 = vmatpush1.bf16.msra.mxu0 0
      %1140 = vmatprep.subr.bf16.mxu0 0
      %1141 = vmatpush1.bf16.msra.mxu0 0
      %1142 = vmatprep.mubr.bf16.mxu0 0
      %1143 = vmatmul.mubr.bf16.gmra.mrb[0].mxu0 %v1029
      %v1144 = vpop.f32.mrb[0].mxu0
      %v1145 = vadd.f32 0.0, %v1144
      %v1146 = vpop.f32.mrb[0].mxu0
      %v1147 = vpop.f32.mrb[0].mxu0
      %v1148 = vadd.f32 0.0, %v1147
      %v1149 = vpop.f32.mrb[0].mxu0
      %1150 = vmatprep.mubr.bf16.mxu0 0
      %1151 = vmatmul.mubr.bf16.gmra.mrb[0].mxu0 %v1030
      %v1152 = vpop.f32.mrb[0].mxu0
      %v1153 = vadd.f32 0.0, %v1152
      %v1154 = vpop.f32.mrb[0].mxu0
      %v1155 = vpop.f32.mrb[0].mxu0
      %v1156 = vadd.f32 0.0, %v1155
      %v1157 = vpop.f32.mrb[0].mxu0
      %1158 = vmatprep.mubr.bf16.mxu0 0
      %1159 = vmatmul.mubr.bf16.gmra.mrb[0].mxu0 %v1031
      %v1160 = vpop.f32.mrb[0].mxu0
      %v1161 = vadd.f32 0.0, %v1160
      %v1162 = vpop.f32.mrb[0].mxu0
      %v1163 = vpop.f32.mrb[0].mxu0
      %v1164 = vadd.f32 0.0, %v1163
      %v1165 = vpop.f32.mrb[0].mxu0
      %1166 = vmatprep.mubr.bf16.mxu0 0
      %1167 = vmatmul.mubr.bf16.gmra.mrb[0].mxu0 %v1032
      %v1168 = vpop.f32.mrb[0].mxu0
      %v1169 = vadd.f32 0.0, %v1168
      %v1170 = vpop.f32.mrb[0].mxu0
      %v1171 = vpop.f32.mrb[0].mxu0
      %v1172 = vadd.f32 0.0, %v1171
      %v1173 = vpop.f32.mrb[0].mxu0
      %1174 = vmatprep.mubr.bf16.mxu0 0
      %1175 = vmatmul.mubr.bf16.gmra.mrb[0].mxu0 %v1033
      %v1176 = vpop.f32.mrb[0].mxu0
      %v1177 = vadd.f32 0.0, %v1176
      %v1178 = vpop.f32.mrb[0].mxu0
      %v1179 = vpop.f32.mrb[0].mxu0
      %v1180 = vadd.f32 0.0, %v1179
      %v1181 = vpop.f32.mrb[0].mxu0
      %1182 = vmatprep.mubr.bf16.mxu0 0
      %1183 = vmatmul.mubr.bf16.gmra.mrb[0].mxu0 %v1034
      %v1184 = vpop.f32.mrb[0].mxu0
      %v1185 = vadd.f32 0.0, %v1184
      %v1186 = vpop.f32.mrb[0].mxu0
      %v1187 = vpop.f32.mrb[0].mxu0
      %v1188 = vadd.f32 0.0, %v1187
      %v1189 = vpop.f32.mrb[0].mxu0
      %1190 = vmatprep.mubr.bf16.mxu0 0
      %1191 = vmatmul.mubr.bf16.gmra.mrb[0].mxu0 %v1035
      %v1192 = vpop.f32.mrb[0].mxu0
      %v1193 = vadd.f32 0.0, %v1192
      %v1194 = vpop.f32.mrb[0].mxu0
      %v1195 = vpop.f32.mrb[0].mxu0
      %v1196 = vadd.f32 0.0, %v1195
      %v1197 = vpop.f32.mrb[0].mxu0
      %1198 = vmatprep.mubr.bf16.mxu0 0
      %1199 = vmatmul.mubr.bf16.gmra.mrb[0].mxu0 %v1036
      %v1200 = vpop.f32.mrb[0].mxu0
      %v1201 = vadd.f32 0.0, %v1200
      %v1202 = vpop.f32.mrb[0].mxu0
      %v1203 = vpop.f32.mrb[0].mxu0
      %v1204 = vadd.f32 0.0, %v1203
      %v1205 = vpop.f32.mrb[0].mxu0
      %1206 = vmatprep.mubr.bf16.mxu0 0
      %1207 = vmatmul.mubr.bf16.gmra.mrb[0].mxu0 %v1037
      %v1208 = vpop.f32.mrb[0].mxu0
      %v1209 = vadd.f32 0.0, %v1208
      %v1210 = vpop.f32.mrb[0].mxu0
      %v1211 = vpop.f32.mrb[0].mxu0
      %v1212 = vadd.f32 0.0, %v1211
      %v1213 = vpop.f32.mrb[0].mxu0
      %1214 = vmatprep.mubr.bf16.mxu0 0
      %1215 = vmatmul.mubr.bf16.gmra.mrb[0].mxu0 %v1038
      %v1216 = vpop.f32.mrb[0].mxu0
      %v1217 = vadd.f32 0.0, %v1216
      %v1218 = vpop.f32.mrb[0].mxu0
      %v1219 = vpop.f32.mrb[0].mxu0
      %v1220 = vadd.f32 0.0, %v1219
      %v1221 = vpop.f32.mrb[0].mxu0
      %1222 = vmatprep.mubr.bf16.mxu0 0
      %1223 = vmatmul.mubr.bf16.gmra.mrb[0].mxu0 %v1039
      %v1224 = vpop.f32.mrb[0].mxu0
      %v1225 = vadd.f32 0.0, %v1224
      %v1226 = vpop.f32.mrb[0].mxu0
      %v1227 = vpop.f32.mrb[0].mxu0
      %v1228 = vadd.f32 0.0, %v1227
      %v1229 = vpop.f32.mrb[0].mxu0
      %1230 = vmatprep.mubr.bf16.mxu0 0
      %1231 = vmatmul.mubr.bf16.gmra.mrb[0].mxu0 %v1040
      %v1232 = vpop.f32.mrb[0].mxu0
      %v1233 = vadd.f32 0.0, %v1232
      %v1234 = vpop.f32.mrb[0].mxu0
      %v1235 = vpop.f32.mrb[0].mxu0
      %v1236 = vadd.f32 0.0, %v1235
      %v1237 = vpop.f32.mrb[0].mxu0
      %1238 = vmatprep.mubr.bf16.mxu0 0
      %1239 = vmatmul.mubr.bf16.gmra.mrb[0].mxu0 %v1041
      %v1240 = vpop.f32.mrb[0].mxu0
      %v1241 = vadd.f32 0.0, %v1240
      %v1242 = vpop.f32.mrb[0].mxu0
      %v1243 = vpop.f32.mrb[0].mxu0
      %v1244 = vadd.f32 0.0, %v1243
      %v1245 = vpop.f32.mrb[0].mxu0
      %1246 = vmatprep.mubr.bf16.mxu0 0
      %1247 = vmatmul.mubr.bf16.gmra.mrb[0].mxu0 %v1042
      %v1248 = vpop.f32.mrb[0].mxu0
      %v1249 = vadd.f32 0.0, %v1248
      %v1250 = vpop.f32.mrb[0].mxu0
      %v1251 = vpop.f32.mrb[0].mxu0
      %v1252 = vadd.f32 0.0, %v1251
      %v1253 = vpop.f32.mrb[0].mxu0
      %1254 = vmatprep.mubr.bf16.mxu0 0
      %1255 = vmatmul.mubr.bf16.gmra.mrb[0].mxu0 %v1043
      %v1256 = vpop.f32.mrb[0].mxu0
      %v1257 = vadd.f32 0.0, %v1256
      %v1258 = vpop.f32.mrb[0].mxu0
      %v1259 = vpop.f32.mrb[0].mxu0
      %v1260 = vadd.f32 0.0, %v1259
      %v1261 = vpop.f32.mrb[0].mxu0
      %1262 = vmatprep.mubr.bf16.mxu0 0
      %1263 = vmatmul.mubr.bf16.gmra.mrb[0].mxu0 %v1044
      %v1264 = vpop.f32.mrb[0].mxu0
      %v1265 = vadd.f32 0.0, %v1264
      %v1266 = vpop.f32.mrb[0].mxu0
      %v1267 = vpop.f32.mrb[0].mxu0
      %v1268 = vadd.f32 0.0, %v1267
      %v1269 = vpop.f32.mrb[0].mxu0
      %1270 = vdwg.mxu0
      %v1271 = vadd.f32 %v964, %v1145
      %v1272 = vadd.f32 %v965, %v1148
      %v1273 = vadd.f32 %v966, %v1153
      %v1274 = vadd.f32 %v967, %v1156
      %v1275 = vadd.f32 %v968, %v1161
      %v1276 = vadd.f32 %v969, %v1164
      %v1277 = vadd.f32 %v970, %v1169
      %v1278 = vadd.f32 %v971, %v1172
      %v1279 = vadd.f32 %v972, %v1177
      %v1280 = vadd.f32 %v973, %v1180
      %v1281 = vadd.f32 %v974, %v1185
      %v1282 = vadd.f32 %v975, %v1188
      %v1283 = vadd.f32 %v976, %v1193
      %v1284 = vadd.f32 %v977, %v1196
      %v1285 = vadd.f32 %v978, %v1201
      %v1286 = vadd.f32 %v979, %v1204
      %v1287 = vadd.f32 %v980, %v1209
      %v1288 = vadd.f32 %v981, %v1212
      %v1289 = vadd.f32 %v982, %v1217
      %v1290 = vadd.f32 %v983, %v1220
      %v1291 = vadd.f32 %v984, %v1225
      %v1292 = vadd.f32 %v985, %v1228
      %v1293 = vadd.f32 %v986, %v1233
      %v1294 = vadd.f32 %v987, %v1236
      %v1295 = vadd.f32 %v988, %v1241
      %v1296 = vadd.f32 %v989, %v1244
      %v1297 = vadd.f32 %v990, %v1249
      %v1298 = vadd.f32 %v991, %v1252
      %v1299 = vadd.f32 %v992, %v1257
      %v1300 = vadd.f32 %v993, %v1260
      %v1301 = vadd.f32 %v994, %v1265
      %v1302 = vadd.f32 %v995, %v1268
      %v1303 = vld [vmem:[%s996 + $0x1] sm:$0xff]
      %v1304 = vld [vmem:[%s996 + $0x9] sm:$0xff]
      %v1305 = vld [vmem:[%s996 + $0x19] sm:$0xff]
      %v1306 = vld [vmem:[%s996 + $0x21] sm:$0xff]
      %v1307 = vld [vmem:[%s996 + $0x31] sm:$0xff]
      %v1308 = vld [vmem:[%s996 + $0x39] sm:$0xff]
      %v1309 = vld [vmem:[%s996 + $0x49] sm:$0xff]
      %v1310 = vld [vmem:[%s996 + $0x51] sm:$0xff]
      %v1311 = vld [vmem:[%s996 + $0x61] sm:$0xff]
      %v1312 = vld [vmem:[%s996 + $0x69] sm:$0xff]
      %v1313 = vld [vmem:[%s996 + $0x79] sm:$0xff]
      %v1314 = vld [vmem:[%s996 + $0x81] sm:$0xff]
      %v1315 = vld [vmem:[%s996 + $0x91] sm:$0xff]
      %v1316 = vld [vmem:[%s996 + $0x99] sm:$0xff]
      %v1317 = vld [vmem:[%s996 + $0xa9] sm:$0xff]
      %v1318 = vld [vmem:[%s996 + $0xb1] sm:$0xff]
      %v1319 = vld [vmem:[%s996 + $0xc1] sm:$0xff]
      %v1320 = vld [vmem:[%s996 + $0xc9] sm:$0xff]
      %v1321 = vld [vmem:[%s996 + $0xd9] sm:$0xff]
      %v1322 = vld [vmem:[%s996 + $0xe1] sm:$0xff]
      %v1323 = vld [vmem:[%s996 + $0xf1] sm:$0xff]
      %v1324 = vld [vmem:[%s996 + $0xf9] sm:$0xff]
      %v1325 = vld [vmem:[%s996 + $0x109] sm:$0xff]
      %v1326 = vld [vmem:[%s996 + $0x111] sm:$0xff]
      %v1327 = vld [vmem:[%s996 + $0x121] sm:$0xff]
      %v1328 = vld [vmem:[%s996 + $0x129] sm:$0xff]
      %v1329 = vld [vmem:[%s996 + $0x139] sm:$0xff]
      %v1330 = vld [vmem:[%s996 + $0x141] sm:$0xff]
      %v1331 = vld [vmem:[%s996 + $0x151] sm:$0xff]
      %v1332 = vld [vmem:[%s996 + $0x159] sm:$0xff]
      %v1333 = vld [vmem:[%s996 + $0x169] sm:$0xff]
      %v1334 = vld [vmem:[%s996 + $0x171] sm:$0xff]
      %v1335 = vpack.c.bf16 %v1304, %v1303
      %v1336 = vpack.c.bf16 %v1306, %v1305
      %v1337 = vpack.c.bf16 %v1308, %v1307
      %v1338 = vpack.c.bf16 %v1310, %v1309
      %v1339 = vpack.c.bf16 %v1312, %v1311
      %v1340 = vpack.c.bf16 %v1314, %v1313
      %v1341 = vpack.c.bf16 %v1316, %v1315
      %v1342 = vpack.c.bf16 %v1318, %v1317
      %v1343 = vpack.c.bf16 %v1320, %v1319
      %v1344 = vpack.c.bf16 %v1322, %v1321
      %v1345 = vpack.c.bf16 %v1324, %v1323
      %v1346 = vpack.c.bf16 %v1326, %v1325
      %v1347 = vpack.c.bf16 %v1328, %v1327
      %v1348 = vpack.c.bf16 %v1330, %v1329
      %v1349 = vpack.c.bf16 %v1332, %v1331
      %v1350 = vpack.c.bf16 %v1334, %v1333
      %s1351 = scalar_lea.vmem %s1, 256
      %v1352 = vld [vmem:[%s1351] sm:$0xf]
      %v1353 = vld [vmem:[%s1351 + $0x4] sm:$0xf]
      %v1354 = vld [vmem:[%s1351 + $0x8] sm:$0xf]
      %v1355 = vld [vmem:[%s1351 + $0xc] sm:$0xf]
      %v1356 = vld [vmem:[%s1351 + $0x10] sm:$0xf]
      %v1357 = vld [vmem:[%s1351 + $0x14] sm:$0xf]
      %v1358 = vld [vmem:[%s1351 + $0x18] sm:$0xf]
      %v1359 = vld [vmem:[%s1351 + $0x1c] sm:$0xf]
      %v1360 = vld [vmem:[%s1351 + $0x20] sm:$0xf]
      %v1361 = vld [vmem:[%s1351 + $0x24] sm:$0xf]
      %v1362 = vld [vmem:[%s1351 + $0x28] sm:$0xf]
      %v1363 = vld [vmem:[%s1351 + $0x2c] sm:$0xf]
      %v1364 = vld [vmem:[%s1351 + $0x30] sm:$0xf]
      %v1365 = vld [vmem:[%s1351 + $0x34] sm:$0xf]
      %v1366 = vld [vmem:[%s1351 + $0x38] sm:$0xf]
      %v1367 = vld [vmem:[%s1351 + $0x3c] sm:$0xf]
      %v1384 = vunpack.c.l.b16 %v1352
      %v1385 = vunpack.c.l.b16 %v1353
      %v1386 = vunpack.c.l.b16 %v1354
      %v1387 = vunpack.c.l.b16 %v1355
      %v1388 = vunpack.c.l.b16 %v1356
      %v1389 = vunpack.c.l.b16 %v1357
      %v1390 = vunpack.c.l.b16 %v1358
      %v1391 = vunpack.c.l.b16 %v1359
      %v1392 = vunpack.c.l.b16 %v1360
      %v1393 = vunpack.c.l.b16 %v1361
      %v1394 = vunpack.c.l.b16 %v1362
      %v1395 = vunpack.c.l.b16 %v1363
      %v1396 = vunpack.c.l.b16 %v1364
      %v1397 = vunpack.c.l.b16 %v1365
      %v1398 = vunpack.c.l.b16 %v1366
      %v1399 = vunpack.c.l.b16 %v1367
      %v1400 = vpack.c.b16 %v1385, %v1384
      %v1401 = vpack.c.b16 %v1387, %v1386
      %v1402 = vpack.c.b16 %v1389, %v1388
      %v1403 = vpack.c.b16 %v1391, %v1390
      %v1404 = vpack.c.b16 %v1393, %v1392
      %v1405 = vpack.c.b16 %v1395, %v1394
      %v1406 = vpack.c.b16 %v1397, %v1396
      %v1407 = vpack.c.b16 %v1399, %v1398
      %1416 = vmatprep.subr.bf16.mxu0 0
      %1417 = vmatpush1.bf16.msra.mxu0 %v1400
      %1418 = vmatprep.subr.bf16.mxu0 0
      %1419 = vmatpush1.bf16.msra.mxu0 %v1401
      %1420 = vmatprep.subr.bf16.mxu0 0
      %1421 = vmatpush1.bf16.msra.mxu0 %v1402
      %1422 = vmatprep.subr.bf16.mxu0 0
      %1423 = vmatpush1.bf16.msra.mxu0 %v1403
      %1424 = vmatprep.subr.bf16.mxu0 0
      %1425 = vmatpush1.bf16.msra.mxu0 %v1404
      %1426 = vmatprep.subr.bf16.mxu0 0
      %1427 = vmatpush1.bf16.msra.mxu0 %v1405
      %1428 = vmatprep.subr.bf16.mxu0 0
      %1429 = vmatpush1.bf16.msra.mxu0 %v1406
      %1430 = vmatprep.subr.bf16.mxu0 0
      %1431 = vmatpush1.bf16.msra.mxu0 %v1407
      %1432 = vmatprep.subr.bf16.mxu0 0
      %1433 = vmatpush1.bf16.msra.mxu0 0
      %1434 = vmatprep.subr.bf16.mxu0 0
      %1435 = vmatpush1.bf16.msra.mxu0 0
      %1436 = vmatprep.subr.bf16.mxu0 0
      %1437 = vmatpush1.bf16.msra.mxu0 0
      %1438 = vmatprep.subr.bf16.mxu0 0
      %1439 = vmatpush1.bf16.msra.mxu0 0
      %1440 = vmatprep.subr.bf16.mxu0 0
      %1441 = vmatpush1.bf16.msra.mxu0 0
      %1442 = vmatprep.subr.bf16.mxu0 0
      %1443 = vmatpush1.bf16.msra.mxu0 0
      %1444 = vmatprep.subr.bf16.mxu0 0
      %1445 = vmatpush1.bf16.msra.mxu0 0
      %1446 = vmatprep.subr.bf16.mxu0 0
      %1447 = vmatpush1.bf16.msra.mxu0 0
      %1448 = vmatprep.mubr.bf16.mxu0 0
      %1449 = vmatmul.mubr.bf16.gmra.mrb[0].mxu0 %v1335
      %v1450 = vpop.f32.mrb[0].mxu0
      %v1451 = vadd.f32 0.0, %v1450
      %v1452 = vpop.f32.mrb[0].mxu0
      %v1453 = vpop.f32.mrb[0].mxu0
      %v1454 = vadd.f32 0.0, %v1453
      %v1455 = vpop.f32.mrb[0].mxu0
      %1456 = vmatprep.mubr.bf16.mxu0 0
      %1457 = vmatmul.mubr.bf16.gmra.mrb[0].mxu0 %v1336
      %v1458 = vpop.f32.mrb[0].mxu0
      %v1459 = vadd.f32 0.0, %v1458
      %v1460 = vpop.f32.mrb[0].mxu0
      %v1461 = vpop.f32.mrb[0].mxu0
      %v1462 = vadd.f32 0.0, %v1461
      %v1463 = vpop.f32.mrb[0].mxu0
      %1464 = vmatprep.mubr.bf16.mxu0 0
      %1465 = vmatmul.mubr.bf16.gmra.mrb[0].mxu0 %v1337
      %v1466 = vpop.f32.mrb[0].mxu0
      %v1467 = vadd.f32 0.0, %v1466
      %v1468 = vpop.f32.mrb[0].mxu0
      %v1469 = vpop.f32.mrb[0].mxu0
      %v1470 = vadd.f32 0.0, %v1469
      %v1471 = vpop.f32.mrb[0].mxu0
      %1472 = vmatprep.mubr.bf16.mxu0 0
      %1473 = vmatmul.mubr.bf16.gmra.mrb[0].mxu0 %v1338
      %v1474 = vpop.f32.mrb[0].mxu0
      %v1475 = vadd.f32 0.0, %v1474
      %v1476 = vpop.f32.mrb[0].mxu0
      %v1477 = vpop.f32.mrb[0].mxu0
      %v1478 = vadd.f32 0.0, %v1477
      %v1479 = vpop.f32.mrb[0].mxu0
      %1480 = vmatprep.mubr.bf16.mxu0 0
      %1481 = vmatmul.mubr.bf16.gmra.mrb[0].mxu0 %v1339
      %v1482 = vpop.f32.mrb[0].mxu0
      %v1483 = vadd.f32 0.0, %v1482
      %v1484 = vpop.f32.mrb[0].mxu0
      %v1485 = vpop.f32.mrb[0].mxu0
      %v1486 = vadd.f32 0.0, %v1485
      %v1487 = vpop.f32.mrb[0].mxu0
      %1488 = vmatprep.mubr.bf16.mxu0 0
      %1489 = vmatmul.mubr.bf16.gmra.mrb[0].mxu0 %v1340
      %v1490 = vpop.f32.mrb[0].mxu0
      %v1491 = vadd.f32 0.0, %v1490
      %v1492 = vpop.f32.mrb[0].mxu0
      %v1493 = vpop.f32.mrb[0].mxu0
      %v1494 = vadd.f32 0.0, %v1493
      %v1495 = vpop.f32.mrb[0].mxu0
      %1496 = vmatprep.mubr.bf16.mxu0 0
      %1497 = vmatmul.mubr.bf16.gmra.mrb[0].mxu0 %v1341
      %v1498 = vpop.f32.mrb[0].mxu0
      %v1499 = vadd.f32 0.0, %v1498
      %v1500 = vpop.f32.mrb[0].mxu0
      %v1501 = vpop.f32.mrb[0].mxu0
      %v1502 = vadd.f32 0.0, %v1501
      %v1503 = vpop.f32.mrb[0].mxu0
      %1504 = vmatprep.mubr.bf16.mxu0 0
      %1505 = vmatmul.mubr.bf16.gmra.mrb[0].mxu0 %v1342
      %v1506 = vpop.f32.mrb[0].mxu0
      %v1507 = vadd.f32 0.0, %v1506
      %v1508 = vpop.f32.mrb[0].mxu0
      %v1509 = vpop.f32.mrb[0].mxu0
      %v1510 = vadd.f32 0.0, %v1509
      %v1511 = vpop.f32.mrb[0].mxu0
      %1512 = vmatprep.mubr.bf16.mxu0 0
      %1513 = vmatmul.mubr.bf16.gmra.mrb[0].mxu0 %v1343
      %v1514 = vpop.f32.mrb[0].mxu0
      %v1515 = vadd.f32 0.0, %v1514
      %v1516 = vpop.f32.mrb[0].mxu0
      %v1517 = vpop.f32.mrb[0].mxu0
      %v1518 = vadd.f32 0.0, %v1517
      %v1519 = vpop.f32.mrb[0].mxu0
      %1520 = vmatprep.mubr.bf16.mxu0 0
      %1521 = vmatmul.mubr.bf16.gmra.mrb[0].mxu0 %v1344
      %v1522 = vpop.f32.mrb[0].mxu0
      %v1523 = vadd.f32 0.0, %v1522
      %v1524 = vpop.f32.mrb[0].mxu0
      %v1525 = vpop.f32.mrb[0].mxu0
      %v1526 = vadd.f32 0.0, %v1525
      %v1527 = vpop.f32.mrb[0].mxu0
      %1528 = vmatprep.mubr.bf16.mxu0 0
      %1529 = vmatmul.mubr.bf16.gmra.mrb[0].mxu0 %v1345
      %v1530 = vpop.f32.mrb[0].mxu0
      %v1531 = vadd.f32 0.0, %v1530
      %v1532 = vpop.f32.mrb[0].mxu0
      %v1533 = vpop.f32.mrb[0].mxu0
      %v1534 = vadd.f32 0.0, %v1533
      %v1535 = vpop.f32.mrb[0].mxu0
      %1536 = vmatprep.mubr.bf16.mxu0 0
      %1537 = vmatmul.mubr.bf16.gmra.mrb[0].mxu0 %v1346
      %v1538 = vpop.f32.mrb[0].mxu0
      %v1539 = vadd.f32 0.0, %v1538
      %v1540 = vpop.f32.mrb[0].mxu0
      %v1541 = vpop.f32.mrb[0].mxu0
      %v1542 = vadd.f32 0.0, %v1541
      %v1543 = vpop.f32.mrb[0].mxu0
      %1544 = vmatprep.mubr.bf16.mxu0 0
      %1545 = vmatmul.mubr.bf16.gmra.mrb[0].mxu0 %v1347
      %v1546 = vpop.f32.mrb[0].mxu0
      %v1547 = vadd.f32 0.0, %v1546
      %v1548 = vpop.f32.mrb[0].mxu0
      %v1549 = vpop.f32.mrb[0].mxu0
      %v1550 = vadd.f32 0.0, %v1549
      %v1551 = vpop.f32.mrb[0].mxu0
      %1552 = vmatprep.mubr.bf16.mxu0 0
      %1553 = vmatmul.mubr.bf16.gmra.mrb[0].mxu0 %v1348
      %v1554 = vpop.f32.mrb[0].mxu0
      %v1555 = vadd.f32 0.0, %v1554
      %v1556 = vpop.f32.mrb[0].mxu0
      %v1557 = vpop.f32.mrb[0].mxu0
      %v1558 = vadd.f32 0.0, %v1557
      %v1559 = vpop.f32.mrb[0].mxu0
      %1560 = vmatprep.mubr.bf16.mxu0 0
      %1561 = vmatmul.mubr.bf16.gmra.mrb[0].mxu0 %v1349
      %v1562 = vpop.f32.mrb[0].mxu0
      %v1563 = vadd.f32 0.0, %v1562
      %v1564 = vpop.f32.mrb[0].mxu0
      %v1565 = vpop.f32.mrb[0].mxu0
      %v1566 = vadd.f32 0.0, %v1565
      %v1567 = vpop.f32.mrb[0].mxu0
      %1568 = vmatprep.mubr.bf16.mxu0 0
      %1569 = vmatmul.mubr.bf16.gmra.mrb[0].mxu0 %v1350
      %v1570 = vpop.f32.mrb[0].mxu0
      %v1571 = vadd.f32 0.0, %v1570
      %v1572 = vpop.f32.mrb[0].mxu0
      %v1573 = vpop.f32.mrb[0].mxu0
      %v1574 = vadd.f32 0.0, %v1573
      %v1575 = vpop.f32.mrb[0].mxu0
      %1576 = vdwg.mxu0
      %v1577 = vadd.f32 %v1271, %v1451
      %v1578 = vadd.f32 %v1272, %v1454
      %v1579 = vadd.f32 %v1273, %v1459
      %v1580 = vadd.f32 %v1274, %v1462
      %v1581 = vadd.f32 %v1275, %v1467
      %v1582 = vadd.f32 %v1276, %v1470
      %v1583 = vadd.f32 %v1277, %v1475
      %v1584 = vadd.f32 %v1278, %v1478
      %v1585 = vadd.f32 %v1279, %v1483
      %v1586 = vadd.f32 %v1280, %v1486
      %v1587 = vadd.f32 %v1281, %v1491
      %v1588 = vadd.f32 %v1282, %v1494
      %v1589 = vadd.f32 %v1283, %v1499
      %v1590 = vadd.f32 %v1284, %v1502
      %v1591 = vadd.f32 %v1285, %v1507
      %v1592 = vadd.f32 %v1286, %v1510
      %v1593 = vadd.f32 %v1287, %v1515
      %v1594 = vadd.f32 %v1288, %v1518
      %v1595 = vadd.f32 %v1289, %v1523
      %v1596 = vadd.f32 %v1290, %v1526
      %v1597 = vadd.f32 %v1291, %v1531
      %v1598 = vadd.f32 %v1292, %v1534
      %v1599 = vadd.f32 %v1293, %v1539
      %v1600 = vadd.f32 %v1294, %v1542
      %v1601 = vadd.f32 %v1295, %v1547
      %v1602 = vadd.f32 %v1296, %v1550
      %v1603 = vadd.f32 %v1297, %v1555
      %v1604 = vadd.f32 %v1298, %v1558
      %v1605 = vadd.f32 %v1299, %v1563
      %v1606 = vadd.f32 %v1300, %v1566
      %v1607 = vadd.f32 %v1301, %v1571
      %v1608 = vadd.f32 %v1302, %v1574
      %v1609 = vld [vmem:[%s996 + $0x2] sm:$0xff]
      %v1610 = vld [vmem:[%s996 + $0xa] sm:$0xff]
      %v1611 = vld [vmem:[%s996 + $0x1a] sm:$0xff]
      %v1612 = vld [vmem:[%s996 + $0x22] sm:$0xff]
      %v1613 = vld [vmem:[%s996 + $0x32] sm:$0xff]
      %v1614 = vld [vmem:[%s996 + $0x3a] sm:$0xff]
      %v1615 = vld [vmem:[%s996 + $0x4a] sm:$0xff]
      %v1616 = vld [vmem:[%s996 + $0x52] sm:$0xff]
      %v1617 = vld [vmem:[%s996 + $0x62] sm:$0xff]
      %v1618 = vld [vmem:[%s996 + $0x6a] sm:$0xff]
      %v1619 = vld [vmem:[%s996 + $0x7a] sm:$0xff]
      %v1620 = vld [vmem:[%s996 + $0x82] sm:$0xff]
      %v1621 = vld [vmem:[%s996 + $0x92] sm:$0xff]
      %v1622 = vld [vmem:[%s996 + $0x9a] sm:$0xff]
      %v1623 = vld [vmem:[%s996 + $0xaa] sm:$0xff]
      %v1624 = vld [vmem:[%s996 + $0xb2] sm:$0xff]
      %v1625 = vld [vmem:[%s996 + $0xc2] sm:$0xff]
      %v1626 = vld [vmem:[%s996 + $0xca] sm:$0xff]
      %v1627 = vld [vmem:[%s996 + $0xda] sm:$0xff]
      %v1628 = vld [vmem:[%s996 + $0xe2] sm:$0xff]
      %v1629 = vld [vmem:[%s996 + $0xf2] sm:$0xff]
      %v1630 = vld [vmem:[%s996 + $0xfa] sm:$0xff]
      %v1631 = vld [vmem:[%s996 + $0x10a] sm:$0xff]
      %v1632 = vld [vmem:[%s996 + $0x112] sm:$0xff]
      %v1633 = vld [vmem:[%s996 + $0x122] sm:$0xff]
      %v1634 = vld [vmem:[%s996 + $0x12a] sm:$0xff]
      %v1635 = vld [vmem:[%s996 + $0x13a] sm:$0xff]
      %v1636 = vld [vmem:[%s996 + $0x142] sm:$0xff]
      %v1637 = vld [vmem:[%s996 + $0x152] sm:$0xff]
      %v1638 = vld [vmem:[%s996 + $0x15a] sm:$0xff]
      %v1639 = vld [vmem:[%s996 + $0x16a] sm:$0xff]
      %v1640 = vld [vmem:[%s996 + $0x172] sm:$0xff]
      %v1641 = vpack.c.bf16 %v1610, %v1609
      %v1642 = vpack.c.bf16 %v1612, %v1611
      %v1643 = vpack.c.bf16 %v1614, %v1613
      %v1644 = vpack.c.bf16 %v1616, %v1615
      %v1645 = vpack.c.bf16 %v1618, %v1617
      %v1646 = vpack.c.bf16 %v1620, %v1619
      %v1647 = vpack.c.bf16 %v1622, %v1621
      %v1648 = vpack.c.bf16 %v1624, %v1623
      %v1649 = vpack.c.bf16 %v1626, %v1625
      %v1650 = vpack.c.bf16 %v1628, %v1627
      %v1651 = vpack.c.bf16 %v1630, %v1629
      %v1652 = vpack.c.bf16 %v1632, %v1631
      %v1653 = vpack.c.bf16 %v1634, %v1633
      %v1654 = vpack.c.bf16 %v1636, %v1635
      %v1655 = vpack.c.bf16 %v1638, %v1637
      %v1656 = vpack.c.bf16 %v1640, %v1639
      %s1657 = scalar_lea.vmem %s1, 320
      %v1658 = vld [vmem:[%s1657] sm:$0xf]
      %v1659 = vld [vmem:[%s1657 + $0x4] sm:$0xf]
      %v1660 = vld [vmem:[%s1657 + $0x8] sm:$0xf]
      %v1661 = vld [vmem:[%s1657 + $0xc] sm:$0xf]
      %v1662 = vld [vmem:[%s1657 + $0x10] sm:$0xf]
      %v1663 = vld [vmem:[%s1657 + $0x14] sm:$0xf]
      %v1664 = vld [vmem:[%s1657 + $0x18] sm:$0xf]
      %v1665 = vld [vmem:[%s1657 + $0x1c] sm:$0xf]
      %v1666 = vld [vmem:[%s1657 + $0x20] sm:$0xf]
      %v1667 = vld [vmem:[%s1657 + $0x24] sm:$0xf]
      %v1668 = vld [vmem:[%s1657 + $0x28] sm:$0xf]
      %v1669 = vld [vmem:[%s1657 + $0x2c] sm:$0xf]
      %v1670 = vld [vmem:[%s1657 + $0x30] sm:$0xf]
      %v1671 = vld [vmem:[%s1657 + $0x34] sm:$0xf]
      %v1672 = vld [vmem:[%s1657 + $0x38] sm:$0xf]
      %v1673 = vld [vmem:[%s1657 + $0x3c] sm:$0xf]
      %v1690 = vunpack.c.l.b16 %v1658
      %v1691 = vunpack.c.l.b16 %v1659
      %v1692 = vunpack.c.l.b16 %v1660
      %v1693 = vunpack.c.l.b16 %v1661
      %v1694 = vunpack.c.l.b16 %v1662
      %v1695 = vunpack.c.l.b16 %v1663
      %v1696 = vunpack.c.l.b16 %v1664
      %v1697 = vunpack.c.l.b16 %v1665
      %v1698 = vunpack.c.l.b16 %v1666
      %v1699 = vunpack.c.l.b16 %v1667
      %v1700 = vunpack.c.l.b16 %v1668
      %v1701 = vunpack.c.l.b16 %v1669
      %v1702 = vunpack.c.l.b16 %v1670
      %v1703 = vunpack.c.l.b16 %v1671
      %v1704 = vunpack.c.l.b16 %v1672
      %v1705 = vunpack.c.l.b16 %v1673
      %v1706 = vpack.c.b16 %v1691, %v1690
      %v1707 = vpack.c.b16 %v1693, %v1692
      %v1708 = vpack.c.b16 %v1695, %v1694
      %v1709 = vpack.c.b16 %v1697, %v1696
      %v1710 = vpack.c.b16 %v1699, %v1698
      %v1711 = vpack.c.b16 %v1701, %v1700
      %v1712 = vpack.c.b16 %v1703, %v1702
      %v1713 = vpack.c.b16 %v1705, %v1704
      %1722 = vmatprep.subr.bf16.mxu0 0
      %1723 = vmatpush1.bf16.msra.mxu0 %v1706
      %1724 = vmatprep.subr.bf16.mxu0 0
      %1725 = vmatpush1.bf16.msra.mxu0 %v1707
      %1726 = vmatprep.subr.bf16.mxu0 0
      %1727 = vmatpush1.bf16.msra.mxu0 %v1708
      %1728 = vmatprep.subr.bf16.mxu0 0
      %1729 = vmatpush1.bf16.msra.mxu0 %v1709
      %1730 = vmatprep.subr.bf16.mxu0 0
      %1731 = vmatpush1.bf16.msra.mxu0 %v1710
      %1732 = vmatprep.subr.bf16.mxu0 0
      %1733 = vmatpush1.bf16.msra.mxu0 %v1711
      %1734 = vmatprep.subr.bf16.mxu0 0
      %1735 = vmatpush1.bf16.msra.mxu0 %v1712
      %1736 = vmatprep.subr.bf16.mxu0 0
      %1737 = vmatpush1.bf16.msra.mxu0 %v1713
      %1738 = vmatprep.subr.bf16.mxu0 0
      %1739 = vmatpush1.bf16.msra.mxu0 0
      %1740 = vmatprep.subr.bf16.mxu0 0
      %1741 = vmatpush1.bf16.msra.mxu0 0
      %1742 = vmatprep.subr.bf16.mxu0 0
      %1743 = vmatpush1.bf16.msra.mxu0 0
      %1744 = vmatprep.subr.bf16.mxu0 0
      %1745 = vmatpush1.bf16.msra.mxu0 0
      %1746 = vmatprep.subr.bf16.mxu0 0
      %1747 = vmatpush1.bf16.msra.mxu0 0
      %1748 = vmatprep.subr.bf16.mxu0 0
      %1749 = vmatpush1.bf16.msra.mxu0 0
      %1750 = vmatprep.subr.bf16.mxu0 0
      %1751 = vmatpush1.bf16.msra.mxu0 0
      %1752 = vmatprep.subr.bf16.mxu0 0
      %1753 = vmatpush1.bf16.msra.mxu0 0
      %1754 = vmatprep.mubr.bf16.mxu0 0
      %1755 = vmatmul.mubr.bf16.gmra.mrb[0].mxu0 %v1641
      %v1756 = vpop.f32.mrb[0].mxu0
      %v1757 = vadd.f32 0.0, %v1756
      %v1758 = vpop.f32.mrb[0].mxu0
      %v1759 = vpop.f32.mrb[0].mxu0
      %v1760 = vadd.f32 0.0, %v1759
      %v1761 = vpop.f32.mrb[0].mxu0
      %1762 = vmatprep.mubr.bf16.mxu0 0
      %1763 = vmatmul.mubr.bf16.gmra.mrb[0].mxu0 %v1642
      %v1764 = vpop.f32.mrb[0].mxu0
      %v1765 = vadd.f32 0.0, %v1764
      %v1766 = vpop.f32.mrb[0].mxu0
      %v1767 = vpop.f32.mrb[0].mxu0
      %v1768 = vadd.f32 0.0, %v1767
      %v1769 = vpop.f32.mrb[0].mxu0
      %1770 = vmatprep.mubr.bf16.mxu0 0
      %1771 = vmatmul.mubr.bf16.gmra.mrb[0].mxu0 %v1643
      %v1772 = vpop.f32.mrb[0].mxu0
      %v1773 = vadd.f32 0.0, %v1772
      %v1774 = vpop.f32.mrb[0].mxu0
      %v1775 = vpop.f32.mrb[0].mxu0
      %v1776 = vadd.f32 0.0, %v1775
      %v1777 = vpop.f32.mrb[0].mxu0
      %1778 = vmatprep.mubr.bf16.mxu0 0
      %1779 = vmatmul.mubr.bf16.gmra.mrb[0].mxu0 %v1644
      %v1780 = vpop.f32.mrb[0].mxu0
      %v1781 = vadd.f32 0.0, %v1780
      %v1782 = vpop.f32.mrb[0].mxu0
      %v1783 = vpop.f32.mrb[0].mxu0
      %v1784 = vadd.f32 0.0, %v1783
      %v1785 = vpop.f32.mrb[0].mxu0
      %1786 = vmatprep.mubr.bf16.mxu0 0
      %1787 = vmatmul.mubr.bf16.gmra.mrb[0].mxu0 %v1645
      %v1788 = vpop.f32.mrb[0].mxu0
      %v1789 = vadd.f32 0.0, %v1788
      %v1790 = vpop.f32.mrb[0].mxu0
      %v1791 = vpop.f32.mrb[0].mxu0
      %v1792 = vadd.f32 0.0, %v1791
      %v1793 = vpop.f32.mrb[0].mxu0
      %1794 = vmatprep.mubr.bf16.mxu0 0
      %1795 = vmatmul.mubr.bf16.gmra.mrb[0].mxu0 %v1646
      %v1796 = vpop.f32.mrb[0].mxu0
      %v1797 = vadd.f32 0.0, %v1796
      %v1798 = vpop.f32.mrb[0].mxu0
      %v1799 = vpop.f32.mrb[0].mxu0
      %v1800 = vadd.f32 0.0, %v1799
      %v1801 = vpop.f32.mrb[0].mxu0
      %1802 = vmatprep.mubr.bf16.mxu0 0
      %1803 = vmatmul.mubr.bf16.gmra.mrb[0].mxu0 %v1647
      %v1804 = vpop.f32.mrb[0].mxu0
      %v1805 = vadd.f32 0.0, %v1804
      %v1806 = vpop.f32.mrb[0].mxu0
      %v1807 = vpop.f32.mrb[0].mxu0
      %v1808 = vadd.f32 0.0, %v1807
      %v1809 = vpop.f32.mrb[0].mxu0
      %1810 = vmatprep.mubr.bf16.mxu0 0
      %1811 = vmatmul.mubr.bf16.gmra.mrb[0].mxu0 %v1648
      %v1812 = vpop.f32.mrb[0].mxu0
      %v1813 = vadd.f32 0.0, %v1812
      %v1814 = vpop.f32.mrb[0].mxu0
      %v1815 = vpop.f32.mrb[0].mxu0
      %v1816 = vadd.f32 0.0, %v1815
      %v1817 = vpop.f32.mrb[0].mxu0
      %1818 = vmatprep.mubr.bf16.mxu0 0
      %1819 = vmatmul.mubr.bf16.gmra.mrb[0].mxu0 %v1649
      %v1820 = vpop.f32.mrb[0].mxu0
      %v1821 = vadd.f32 0.0, %v1820
      %v1822 = vpop.f32.mrb[0].mxu0
      %v1823 = vpop.f32.mrb[0].mxu0
      %v1824 = vadd.f32 0.0, %v1823
      %v1825 = vpop.f32.mrb[0].mxu0
      %1826 = vmatprep.mubr.bf16.mxu0 0
      %1827 = vmatmul.mubr.bf16.gmra.mrb[0].mxu0 %v1650
      %v1828 = vpop.f32.mrb[0].mxu0
      %v1829 = vadd.f32 0.0, %v1828
      %v1830 = vpop.f32.mrb[0].mxu0
      %v1831 = vpop.f32.mrb[0].mxu0
      %v1832 = vadd.f32 0.0, %v1831
      %v1833 = vpop.f32.mrb[0].mxu0
      %1834 = vmatprep.mubr.bf16.mxu0 0
      %1835 = vmatmul.mubr.bf16.gmra.mrb[0].mxu0 %v1651
      %v1836 = vpop.f32.mrb[0].mxu0
      %v1837 = vadd.f32 0.0, %v1836
      %v1838 = vpop.f32.mrb[0].mxu0
      %v1839 = vpop.f32.mrb[0].mxu0
      %v1840 = vadd.f32 0.0, %v1839
      %v1841 = vpop.f32.mrb[0].mxu0
      %1842 = vmatprep.mubr.bf16.mxu0 0
      %1843 = vmatmul.mubr.bf16.gmra.mrb[0].mxu0 %v1652
      %v1844 = vpop.f32.mrb[0].mxu0
      %v1845 = vadd.f32 0.0, %v1844
      %v1846 = vpop.f32.mrb[0].mxu0
      %v1847 = vpop.f32.mrb[0].mxu0
      %v1848 = vadd.f32 0.0, %v1847
      %v1849 = vpop.f32.mrb[0].mxu0
      %1850 = vmatprep.mubr.bf16.mxu0 0
      %1851 = vmatmul.mubr.bf16.gmra.mrb[0].mxu0 %v1653
      %v1852 = vpop.f32.mrb[0].mxu0
      %v1853 = vadd.f32 0.0, %v1852
      %v1854 = vpop.f32.mrb[0].mxu0
      %v1855 = vpop.f32.mrb[0].mxu0
      %v1856 = vadd.f32 0.0, %v1855
      %v1857 = vpop.f32.mrb[0].mxu0
      %1858 = vmatprep.mubr.bf16.mxu0 0
      %1859 = vmatmul.mubr.bf16.gmra.mrb[0].mxu0 %v1654
      %v1860 = vpop.f32.mrb[0].mxu0
      %v1861 = vadd.f32 0.0, %v1860
      %v1862 = vpop.f32.mrb[0].mxu0
      %v1863 = vpop.f32.mrb[0].mxu0
      %v1864 = vadd.f32 0.0, %v1863
      %v1865 = vpop.f32.mrb[0].mxu0
      %1866 = vmatprep.mubr.bf16.mxu0 0
      %1867 = vmatmul.mubr.bf16.gmra.mrb[0].mxu0 %v1655
      %v1868 = vpop.f32.mrb[0].mxu0
      %v1869 = vadd.f32 0.0, %v1868
      %v1870 = vpop.f32.mrb[0].mxu0
      %v1871 = vpop.f32.mrb[0].mxu0
      %v1872 = vadd.f32 0.0, %v1871
      %v1873 = vpop.f32.mrb[0].mxu0
      %1874 = vmatprep.mubr.bf16.mxu0 0
      %1875 = vmatmul.mubr.bf16.gmra.mrb[0].mxu0 %v1656
      %v1876 = vpop.f32.mrb[0].mxu0
      %v1877 = vadd.f32 0.0, %v1876
      %v1878 = vpop.f32.mrb[0].mxu0
      %v1879 = vpop.f32.mrb[0].mxu0
      %v1880 = vadd.f32 0.0, %v1879
      %v1881 = vpop.f32.mrb[0].mxu0
      %1882 = vdwg.mxu0
      %v1883 = vadd.f32 %v1577, %v1757
      %v1884 = vadd.f32 %v1578, %v1760
      %v1885 = vadd.f32 %v1579, %v1765
      %v1886 = vadd.f32 %v1580, %v1768
      %v1887 = vadd.f32 %v1581, %v1773
      %v1888 = vadd.f32 %v1582, %v1776
      %v1889 = vadd.f32 %v1583, %v1781
      %v1890 = vadd.f32 %v1584, %v1784
      %v1891 = vadd.f32 %v1585, %v1789
      %v1892 = vadd.f32 %v1586, %v1792
      %v1893 = vadd.f32 %v1587, %v1797
      %v1894 = vadd.f32 %v1588, %v1800
      %v1895 = vadd.f32 %v1589, %v1805
      %v1896 = vadd.f32 %v1590, %v1808
      %v1897 = vadd.f32 %v1591, %v1813
      %v1898 = vadd.f32 %v1592, %v1816
      %v1899 = vadd.f32 %v1593, %v1821
      %v1900 = vadd.f32 %v1594, %v1824
      %v1901 = vadd.f32 %v1595, %v1829
      %v1902 = vadd.f32 %v1596, %v1832
      %v1903 = vadd.f32 %v1597, %v1837
      %v1904 = vadd.f32 %v1598, %v1840
      %v1905 = vadd.f32 %v1599, %v1845
      %v1906 = vadd.f32 %v1600, %v1848
      %v1907 = vadd.f32 %v1601, %v1853
      %v1908 = vadd.f32 %v1602, %v1856
      %v1909 = vadd.f32 %v1603, %v1861
      %v1910 = vadd.f32 %v1604, %v1864
      %v1911 = vadd.f32 %v1605, %v1869
      %v1912 = vadd.f32 %v1606, %v1872
      %v1913 = vadd.f32 %v1607, %v1877
      %v1914 = vadd.f32 %v1608, %v1880
      %s1915 = scalar_lea.vmem %s137, 48
      %v1916 = vld [vmem:[%s1915] sm:$0xff]
      %v1917 = vld [vmem:[%s1915 + $0x8] sm:$0xff]
      %v1918 = vld [vmem:[%s1915 + $0x18] sm:$0xff]
      %v1919 = vld [vmem:[%s1915 + $0x20] sm:$0xff]
      %v1920 = vld [vmem:[%s1915 + $0x30] sm:$0xff]
      %v1921 = vld [vmem:[%s1915 + $0x38] sm:$0xff]
      %v1922 = vld [vmem:[%s1915 + $0x48] sm:$0xff]
      %v1923 = vld [vmem:[%s1915 + $0x50] sm:$0xff]
      %v1924 = vld [vmem:[%s1915 + $0x60] sm:$0xff]
      %v1925 = vld [vmem:[%s1915 + $0x68] sm:$0xff]
      %v1926 = vld [vmem:[%s1915 + $0x78] sm:$0xff]
      %v1927 = vld [vmem:[%s1915 + $0x80] sm:$0xff]
      %v1928 = vld [vmem:[%s1915 + $0x90] sm:$0xff]
      %v1929 = vld [vmem:[%s1915 + $0x98] sm:$0xff]
      %v1930 = vld [vmem:[%s1915 + $0xa8] sm:$0xff]
      %v1931 = vld [vmem:[%s1915 + $0xb0] sm:$0xff]
      %v1932 = vld [vmem:[%s1915 + $0xc0] sm:$0xff]
      %v1933 = vld [vmem:[%s1915 + $0xc8] sm:$0xff]
      %v1934 = vld [vmem:[%s1915 + $0xd8] sm:$0xff]
      %v1935 = vld [vmem:[%s1915 + $0xe0] sm:$0xff]
      %v1936 = vld [vmem:[%s1915 + $0xf0] sm:$0xff]
      %v1937 = vld [vmem:[%s1915 + $0xf8] sm:$0xff]
      %v1938 = vld [vmem:[%s1915 + $0x108] sm:$0xff]
      %v1939 = vld [vmem:[%s1915 + $0x110] sm:$0xff]
      %v1940 = vld [vmem:[%s1915 + $0x120] sm:$0xff]
      %v1941 = vld [vmem:[%s1915 + $0x128] sm:$0xff]
      %v1942 = vld [vmem:[%s1915 + $0x138] sm:$0xff]
      %v1943 = vld [vmem:[%s1915 + $0x140] sm:$0xff]
      %v1944 = vld [vmem:[%s1915 + $0x150] sm:$0xff]
      %v1945 = vld [vmem:[%s1915 + $0x158] sm:$0xff]
      %v1946 = vld [vmem:[%s1915 + $0x168] sm:$0xff]
      %v1947 = vld [vmem:[%s1915 + $0x170] sm:$0xff]
      %v1948 = vpack.c.bf16 %v1917, %v1916
      %v1949 = vpack.c.bf16 %v1919, %v1918
      %v1950 = vpack.c.bf16 %v1921, %v1920
      %v1951 = vpack.c.bf16 %v1923, %v1922
      %v1952 = vpack.c.bf16 %v1925, %v1924
      %v1953 = vpack.c.bf16 %v1927, %v1926
      %v1954 = vpack.c.bf16 %v1929, %v1928
      %v1955 = vpack.c.bf16 %v1931, %v1930
      %v1956 = vpack.c.bf16 %v1933, %v1932
      %v1957 = vpack.c.bf16 %v1935, %v1934
      %v1958 = vpack.c.bf16 %v1937, %v1936
      %v1959 = vpack.c.bf16 %v1939, %v1938
      %v1960 = vpack.c.bf16 %v1941, %v1940
      %v1961 = vpack.c.bf16 %v1943, %v1942
      %v1962 = vpack.c.bf16 %v1945, %v1944
      %v1963 = vpack.c.bf16 %v1947, %v1946
      %s1964 = scalar_lea.vmem %s1, 384
      %v1965 = vld [vmem:[%s1964] sm:$0xf]
      %v1966 = vld [vmem:[%s1964 + $0x4] sm:$0xf]
      %v1967 = vld [vmem:[%s1964 + $0x8] sm:$0xf]
      %v1968 = vld [vmem:[%s1964 + $0xc] sm:$0xf]
      %v1969 = vld [vmem:[%s1964 + $0x10] sm:$0xf]
      %v1970 = vld [vmem:[%s1964 + $0x14] sm:$0xf]
      %v1971 = vld [vmem:[%s1964 + $0x18] sm:$0xf]
      %v1972 = vld [vmem:[%s1964 + $0x1c] sm:$0xf]
      %v1973 = vld [vmem:[%s1964 + $0x20] sm:$0xf]
      %v1974 = vld [vmem:[%s1964 + $0x24] sm:$0xf]
      %v1975 = vld [vmem:[%s1964 + $0x28] sm:$0xf]
      %v1976 = vld [vmem:[%s1964 + $0x2c] sm:$0xf]
      %v1977 = vld [vmem:[%s1964 + $0x30] sm:$0xf]
      %v1978 = vld [vmem:[%s1964 + $0x34] sm:$0xf]
      %v1979 = vld [vmem:[%s1964 + $0x38] sm:$0xf]
      %v1980 = vld [vmem:[%s1964 + $0x3c] sm:$0xf]
      %v1997 = vunpack.c.l.b16 %v1965
      %v1998 = vunpack.c.l.b16 %v1966
      %v1999 = vunpack.c.l.b16 %v1967
      %v2000 = vunpack.c.l.b16 %v1968
      %v2001 = vunpack.c.l.b16 %v1969
      %v2002 = vunpack.c.l.b16 %v1970
      %v2003 = vunpack.c.l.b16 %v1971
      %v2004 = vunpack.c.l.b16 %v1972
      %v2005 = vunpack.c.l.b16 %v1973
      %v2006 = vunpack.c.l.b16 %v1974
      %v2007 = vunpack.c.l.b16 %v1975
      %v2008 = vunpack.c.l.b16 %v1976
      %v2009 = vunpack.c.l.b16 %v1977
      %v2010 = vunpack.c.l.b16 %v1978
      %v2011 = vunpack.c.l.b16 %v1979
      %v2012 = vunpack.c.l.b16 %v1980
      %v2013 = vpack.c.b16 %v1998, %v1997
      %v2014 = vpack.c.b16 %v2000, %v1999
      %v2015 = vpack.c.b16 %v2002, %v2001
      %v2016 = vpack.c.b16 %v2004, %v2003
      %v2017 = vpack.c.b16 %v2006, %v2005
      %v2018 = vpack.c.b16 %v2008, %v2007
      %v2019 = vpack.c.b16 %v2010, %v2009
      %v2020 = vpack.c.b16 %v2012, %v2011
      %2029 = vmatprep.subr.bf16.mxu0 0
      %2030 = vmatpush1.bf16.msra.mxu0 %v2013
      %2031 = vmatprep.subr.bf16.mxu0 0
      %2032 = vmatpush1.bf16.msra.mxu0 %v2014
      %2033 = vmatprep.subr.bf16.mxu0 0
      %2034 = vmatpush1.bf16.msra.mxu0 %v2015
      %2035 = vmatprep.subr.bf16.mxu0 0
      %2036 = vmatpush1.bf16.msra.mxu0 %v2016
      %2037 = vmatprep.subr.bf16.mxu0 0
      %2038 = vmatpush1.bf16.msra.mxu0 %v2017
      %2039 = vmatprep.subr.bf16.mxu0 0
      %2040 = vmatpush1.bf16.msra.mxu0 %v2018
      %2041 = vmatprep.subr.bf16.mxu0 0
      %2042 = vmatpush1.bf16.msra.mxu0 %v2019
      %2043 = vmatprep.subr.bf16.mxu0 0
      %2044 = vmatpush1.bf16.msra.mxu0 %v2020
      %2045 = vmatprep.subr.bf16.mxu0 0
      %2046 = vmatpush1.bf16.msra.mxu0 0
      %2047 = vmatprep.subr.bf16.mxu0 0
      %2048 = vmatpush1.bf16.msra.mxu0 0
      %2049 = vmatprep.subr.bf16.mxu0 0
      %2050 = vmatpush1.bf16.msra.mxu0 0
      %2051 = vmatprep.subr.bf16.mxu0 0
      %2052 = vmatpush1.bf16.msra.mxu0 0
      %2053 = vmatprep.subr.bf16.mxu0 0
      %2054 = vmatpush1.bf16.msra.mxu0 0
      %2055 = vmatprep.subr.bf16.mxu0 0
      %2056 = vmatpush1.bf16.msra.mxu0 0
      %2057 = vmatprep.subr.bf16.mxu0 0
      %2058 = vmatpush1.bf16.msra.mxu0 0
      %2059 = vmatprep.subr.bf16.mxu0 0
      %2060 = vmatpush1.bf16.msra.mxu0 0
      %2061 = vmatprep.mubr.bf16.mxu0 0
      %2062 = vmatmul.mubr.bf16.gmra.mrb[0].mxu0 %v1948
      %v2063 = vpop.f32.mrb[0].mxu0
      %v2064 = vadd.f32 0.0, %v2063
      %v2065 = vpop.f32.mrb[0].mxu0
      %v2066 = vpop.f32.mrb[0].mxu0
      %v2067 = vadd.f32 0.0, %v2066
      %v2068 = vpop.f32.mrb[0].mxu0
      %2069 = vmatprep.mubr.bf16.mxu0 0
      %2070 = vmatmul.mubr.bf16.gmra.mrb[0].mxu0 %v1949
      %v2071 = vpop.f32.mrb[0].mxu0
      %v2072 = vadd.f32 0.0, %v2071
      %v2073 = vpop.f32.mrb[0].mxu0
      %v2074 = vpop.f32.mrb[0].mxu0
      %v2075 = vadd.f32 0.0, %v2074
      %v2076 = vpop.f32.mrb[0].mxu0
      %2077 = vmatprep.mubr.bf16.mxu0 0
      %2078 = vmatmul.mubr.bf16.gmra.mrb[0].mxu0 %v1950
      %v2079 = vpop.f32.mrb[0].mxu0
      %v2080 = vadd.f32 0.0, %v2079
      %v2081 = vpop.f32.mrb[0].mxu0
      %v2082 = vpop.f32.mrb[0].mxu0
      %v2083 = vadd.f32 0.0, %v2082
      %v2084 = vpop.f32.mrb[0].mxu0
      %2085 = vmatprep.mubr.bf16.mxu0 0
      %2086 = vmatmul.mubr.bf16.gmra.mrb[0].mxu0 %v1951
      %v2087 = vpop.f32.mrb[0].mxu0
      %v2088 = vadd.f32 0.0, %v2087
      %v2089 = vpop.f32.mrb[0].mxu0
      %v2090 = vpop.f32.mrb[0].mxu0
      %v2091 = vadd.f32 0.0, %v2090
      %v2092 = vpop.f32.mrb[0].mxu0
      %2093 = vmatprep.mubr.bf16.mxu0 0
      %2094 = vmatmul.mubr.bf16.gmra.mrb[0].mxu0 %v1952
      %v2095 = vpop.f32.mrb[0].mxu0
      %v2096 = vadd.f32 0.0, %v2095
      %v2097 = vpop.f32.mrb[0].mxu0
      %v2098 = vpop.f32.mrb[0].mxu0
      %v2099 = vadd.f32 0.0, %v2098
      %v2100 = vpop.f32.mrb[0].mxu0
      %2101 = vmatprep.mubr.bf16.mxu0 0
      %2102 = vmatmul.mubr.bf16.gmra.mrb[0].mxu0 %v1953
      %v2103 = vpop.f32.mrb[0].mxu0
      %v2104 = vadd.f32 0.0, %v2103
      %v2105 = vpop.f32.mrb[0].mxu0
      %v2106 = vpop.f32.mrb[0].mxu0
      %v2107 = vadd.f32 0.0, %v2106
      %v2108 = vpop.f32.mrb[0].mxu0
      %2109 = vmatprep.mubr.bf16.mxu0 0
      %2110 = vmatmul.mubr.bf16.gmra.mrb[0].mxu0 %v1954
      %v2111 = vpop.f32.mrb[0].mxu0
      %v2112 = vadd.f32 0.0, %v2111
      %v2113 = vpop.f32.mrb[0].mxu0
      %v2114 = vpop.f32.mrb[0].mxu0
      %v2115 = vadd.f32 0.0, %v2114
      %v2116 = vpop.f32.mrb[0].mxu0
      %2117 = vmatprep.mubr.bf16.mxu0 0
      %2118 = vmatmul.mubr.bf16.gmra.mrb[0].mxu0 %v1955
      %v2119 = vpop.f32.mrb[0].mxu0
      %v2120 = vadd.f32 0.0, %v2119
      %v2121 = vpop.f32.mrb[0].mxu0
      %v2122 = vpop.f32.mrb[0].mxu0
      %v2123 = vadd.f32 0.0, %v2122
      %v2124 = vpop.f32.mrb[0].mxu0
      %2125 = vmatprep.mubr.bf16.mxu0 0
      %2126 = vmatmul.mubr.bf16.gmra.mrb[0].mxu0 %v1956
      %v2127 = vpop.f32.mrb[0].mxu0
      %v2128 = vadd.f32 0.0, %v2127
      %v2129 = vpop.f32.mrb[0].mxu0
      %v2130 = vpop.f32.mrb[0].mxu0
      %v2131 = vadd.f32 0.0, %v2130
      %v2132 = vpop.f32.mrb[0].mxu0
      %2133 = vmatprep.mubr.bf16.mxu0 0
      %2134 = vmatmul.mubr.bf16.gmra.mrb[0].mxu0 %v1957
      %v2135 = vpop.f32.mrb[0].mxu0
      %v2136 = vadd.f32 0.0, %v2135
      %v2137 = vpop.f32.mrb[0].mxu0
      %v2138 = vpop.f32.mrb[0].mxu0
      %v2139 = vadd.f32 0.0, %v2138
      %v2140 = vpop.f32.mrb[0].mxu0
      %2141 = vmatprep.mubr.bf16.mxu0 0
      %2142 = vmatmul.mubr.bf16.gmra.mrb[0].mxu0 %v1958
      %v2143 = vpop.f32.mrb[0].mxu0
      %v2144 = vadd.f32 0.0, %v2143
      %v2145 = vpop.f32.mrb[0].mxu0
      %v2146 = vpop.f32.mrb[0].mxu0
      %v2147 = vadd.f32 0.0, %v2146
      %v2148 = vpop.f32.mrb[0].mxu0
      %2149 = vmatprep.mubr.bf16.mxu0 0
      %2150 = vmatmul.mubr.bf16.gmra.mrb[0].mxu0 %v1959
      %v2151 = vpop.f32.mrb[0].mxu0
      %v2152 = vadd.f32 0.0, %v2151
      %v2153 = vpop.f32.mrb[0].mxu0
      %v2154 = vpop.f32.mrb[0].mxu0
      %v2155 = vadd.f32 0.0, %v2154
      %v2156 = vpop.f32.mrb[0].mxu0
      %2157 = vmatprep.mubr.bf16.mxu0 0
      %2158 = vmatmul.mubr.bf16.gmra.mrb[0].mxu0 %v1960
      %v2159 = vpop.f32.mrb[0].mxu0
      %v2160 = vadd.f32 0.0, %v2159
      %v2161 = vpop.f32.mrb[0].mxu0
      %v2162 = vpop.f32.mrb[0].mxu0
      %v2163 = vadd.f32 0.0, %v2162
      %v2164 = vpop.f32.mrb[0].mxu0
      %2165 = vmatprep.mubr.bf16.mxu0 0
      %2166 = vmatmul.mubr.bf16.gmra.mrb[0].mxu0 %v1961
      %v2167 = vpop.f32.mrb[0].mxu0
      %v2168 = vadd.f32 0.0, %v2167
      %v2169 = vpop.f32.mrb[0].mxu0
      %v2170 = vpop.f32.mrb[0].mxu0
      %v2171 = vadd.f32 0.0, %v2170
      %v2172 = vpop.f32.mrb[0].mxu0
      %2173 = vmatprep.mubr.bf16.mxu0 0
      %2174 = vmatmul.mubr.bf16.gmra.mrb[0].mxu0 %v1962
      %v2175 = vpop.f32.mrb[0].mxu0
      %v2176 = vadd.f32 0.0, %v2175
      %v2177 = vpop.f32.mrb[0].mxu0
      %v2178 = vpop.f32.mrb[0].mxu0
      %v2179 = vadd.f32 0.0, %v2178
      %v2180 = vpop.f32.mrb[0].mxu0
      %2181 = vmatprep.mubr.bf16.mxu0 0
      %2182 = vmatmul.mubr.bf16.gmra.mrb[0].mxu0 %v1963
      %v2183 = vpop.f32.mrb[0].mxu0
      %v2184 = vadd.f32 0.0, %v2183
      %v2185 = vpop.f32.mrb[0].mxu0
      %v2186 = vpop.f32.mrb[0].mxu0
      %v2187 = vadd.f32 0.0, %v2186
      %v2188 = vpop.f32.mrb[0].mxu0
      %2189 = vdwg.mxu0
      %v2190 = vadd.f32 %v1883, %v2064
      %v2191 = vadd.f32 %v1884, %v2067
      %v2192 = vadd.f32 %v1885, %v2072
      %v2193 = vadd.f32 %v1886, %v2075
      %v2194 = vadd.f32 %v1887, %v2080
      %v2195 = vadd.f32 %v1888, %v2083
      %v2196 = vadd.f32 %v1889, %v2088
      %v2197 = vadd.f32 %v1890, %v2091
      %v2198 = vadd.f32 %v1891, %v2096
      %v2199 = vadd.f32 %v1892, %v2099
      %v2200 = vadd.f32 %v1893, %v2104
      %v2201 = vadd.f32 %v1894, %v2107
      %v2202 = vadd.f32 %v1895, %v2112
      %v2203 = vadd.f32 %v1896, %v2115
      %v2204 = vadd.f32 %v1897, %v2120
      %v2205 = vadd.f32 %v1898, %v2123
      %v2206 = vadd.f32 %v1899, %v2128
      %v2207 = vadd.f32 %v1900, %v2131
      %v2208 = vadd.f32 %v1901, %v2136
      %v2209 = vadd.f32 %v1902, %v2139
      %v2210 = vadd.f32 %v1903, %v2144
      %v2211 = vadd.f32 %v1904, %v2147
      %v2212 = vadd.f32 %v1905, %v2152
      %v2213 = vadd.f32 %v1906, %v2155
      %v2214 = vadd.f32 %v1907, %v2160
      %v2215 = vadd.f32 %v1908, %v2163
      %v2216 = vadd.f32 %v1909, %v2168
      %v2217 = vadd.f32 %v1910, %v2171
      %v2218 = vadd.f32 %v1911, %v2176
      %v2219 = vadd.f32 %v1912, %v2179
      %v2220 = vadd.f32 %v1913, %v2184
      %v2221 = vadd.f32 %v1914, %v2187
      %v2222 = vld [vmem:[%s1915 + $0x1] sm:$0xff]
      %v2223 = vld [vmem:[%s1915 + $0x9] sm:$0xff]
      %v2224 = vld [vmem:[%s1915 + $0x19] sm:$0xff]
      %v2225 = vld [vmem:[%s1915 + $0x21] sm:$0xff]
      %v2226 = vld [vmem:[%s1915 + $0x31] sm:$0xff]
      %v2227 = vld [vmem:[%s1915 + $0x39] sm:$0xff]
      %v2228 = vld [vmem:[%s1915 + $0x49] sm:$0xff]
      %v2229 = vld [vmem:[%s1915 + $0x51] sm:$0xff]
      %v2230 = vld [vmem:[%s1915 + $0x61] sm:$0xff]
      %v2231 = vld [vmem:[%s1915 + $0x69] sm:$0xff]
      %v2232 = vld [vmem:[%s1915 + $0x79] sm:$0xff]
      %v2233 = vld [vmem:[%s1915 + $0x81] sm:$0xff]
      %v2234 = vld [vmem:[%s1915 + $0x91] sm:$0xff]
      %v2235 = vld [vmem:[%s1915 + $0x99] sm:$0xff]
      %v2236 = vld [vmem:[%s1915 + $0xa9] sm:$0xff]
      %v2237 = vld [vmem:[%s1915 + $0xb1] sm:$0xff]
      %v2238 = vld [vmem:[%s1915 + $0xc1] sm:$0xff]
      %v2239 = vld [vmem:[%s1915 + $0xc9] sm:$0xff]
      %v2240 = vld [vmem:[%s1915 + $0xd9] sm:$0xff]
      %v2241 = vld [vmem:[%s1915 + $0xe1] sm:$0xff]
      %v2242 = vld [vmem:[%s1915 + $0xf1] sm:$0xff]
      %v2243 = vld [vmem:[%s1915 + $0xf9] sm:$0xff]
      %v2244 = vld [vmem:[%s1915 + $0x109] sm:$0xff]
      %v2245 = vld [vmem:[%s1915 + $0x111] sm:$0xff]
      %v2246 = vld [vmem:[%s1915 + $0x121] sm:$0xff]
      %v2247 = vld [vmem:[%s1915 + $0x129] sm:$0xff]
      %v2248 = vld [vmem:[%s1915 + $0x139] sm:$0xff]
      %v2249 = vld [vmem:[%s1915 + $0x141] sm:$0xff]
      %v2250 = vld [vmem:[%s1915 + $0x151] sm:$0xff]
      %v2251 = vld [vmem:[%s1915 + $0x159] sm:$0xff]
      %v2252 = vld [vmem:[%s1915 + $0x169] sm:$0xff]
      %v2253 = vld [vmem:[%s1915 + $0x171] sm:$0xff]
      %v2254 = vpack.c.bf16 %v2223, %v2222
      %v2255 = vpack.c.bf16 %v2225, %v2224
      %v2256 = vpack.c.bf16 %v2227, %v2226
      %v2257 = vpack.c.bf16 %v2229, %v2228
      %v2258 = vpack.c.bf16 %v2231, %v2230
      %v2259 = vpack.c.bf16 %v2233, %v2232
      %v2260 = vpack.c.bf16 %v2235, %v2234
      %v2261 = vpack.c.bf16 %v2237, %v2236
      %v2262 = vpack.c.bf16 %v2239, %v2238
      %v2263 = vpack.c.bf16 %v2241, %v2240
      %v2264 = vpack.c.bf16 %v2243, %v2242
      %v2265 = vpack.c.bf16 %v2245, %v2244
      %v2266 = vpack.c.bf16 %v2247, %v2246
      %v2267 = vpack.c.bf16 %v2249, %v2248
      %v2268 = vpack.c.bf16 %v2251, %v2250
      %v2269 = vpack.c.bf16 %v2253, %v2252
      %s2270 = scalar_lea.vmem %s1, 448
      %v2271 = vld [vmem:[%s2270] sm:$0xf]
      %v2272 = vld [vmem:[%s2270 + $0x4] sm:$0xf]
      %v2273 = vld [vmem:[%s2270 + $0x8] sm:$0xf]
      %v2274 = vld [vmem:[%s2270 + $0xc] sm:$0xf]
      %v2275 = vld [vmem:[%s2270 + $0x10] sm:$0xf]
      %v2276 = vld [vmem:[%s2270 + $0x14] sm:$0xf]
      %v2277 = vld [vmem:[%s2270 + $0x18] sm:$0xf]
      %v2278 = vld [vmem:[%s2270 + $0x1c] sm:$0xf]
      %v2279 = vld [vmem:[%s2270 + $0x20] sm:$0xf]
      %v2280 = vld [vmem:[%s2270 + $0x24] sm:$0xf]
      %v2281 = vld [vmem:[%s2270 + $0x28] sm:$0xf]
      %v2282 = vld [vmem:[%s2270 + $0x2c] sm:$0xf]
      %v2283 = vld [vmem:[%s2270 + $0x30] sm:$0xf]
      %v2284 = vld [vmem:[%s2270 + $0x34] sm:$0xf]
      %v2285 = vld [vmem:[%s2270 + $0x38] sm:$0xf]
      %v2286 = vld [vmem:[%s2270 + $0x3c] sm:$0xf]
      %v2303 = vunpack.c.l.b16 %v2271
      %v2304 = vunpack.c.l.b16 %v2272
      %v2305 = vunpack.c.l.b16 %v2273
      %v2306 = vunpack.c.l.b16 %v2274
      %v2307 = vunpack.c.l.b16 %v2275
      %v2308 = vunpack.c.l.b16 %v2276
      %v2309 = vunpack.c.l.b16 %v2277
      %v2310 = vunpack.c.l.b16 %v2278
      %v2311 = vunpack.c.l.b16 %v2279
      %v2312 = vunpack.c.l.b16 %v2280
      %v2313 = vunpack.c.l.b16 %v2281
      %v2314 = vunpack.c.l.b16 %v2282
      %v2315 = vunpack.c.l.b16 %v2283
      %v2316 = vunpack.c.l.b16 %v2284
      %v2317 = vunpack.c.l.b16 %v2285
      %v2318 = vunpack.c.l.b16 %v2286
      %v2319 = vpack.c.b16 %v2304, %v2303
      %v2320 = vpack.c.b16 %v2306, %v2305
      %v2321 = vpack.c.b16 %v2308, %v2307
      %v2322 = vpack.c.b16 %v2310, %v2309
      %v2323 = vpack.c.b16 %v2312, %v2311
      %v2324 = vpack.c.b16 %v2314, %v2313
      %v2325 = vpack.c.b16 %v2316, %v2315
      %v2326 = vpack.c.b16 %v2318, %v2317
      %2335 = vmatprep.subr.bf16.mxu0 0
      %2336 = vmatpush1.bf16.msra.mxu0 %v2319
      %2337 = vmatprep.subr.bf16.mxu0 0
      %2338 = vmatpush1.bf16.msra.mxu0 %v2320
      %2339 = vmatprep.subr.bf16.mxu0 0
      %2340 = vmatpush1.bf16.msra.mxu0 %v2321
      %2341 = vmatprep.subr.bf16.mxu0 0
      %2342 = vmatpush1.bf16.msra.mxu0 %v2322
      %2343 = vmatprep.subr.bf16.mxu0 0
      %2344 = vmatpush1.bf16.msra.mxu0 %v2323
      %2345 = vmatprep.subr.bf16.mxu0 0
      %2346 = vmatpush1.bf16.msra.mxu0 %v2324
      %2347 = vmatprep.subr.bf16.mxu0 0
      %2348 = vmatpush1.bf16.msra.mxu0 %v2325
      %2349 = vmatprep.subr.bf16.mxu0 0
      %2350 = vmatpush1.bf16.msra.mxu0 %v2326
      %2351 = vmatprep.subr.bf16.mxu0 0
      %2352 = vmatpush1.bf16.msra.mxu0 0
      %2353 = vmatprep.subr.bf16.mxu0 0
      %2354 = vmatpush1.bf16.msra.mxu0 0
      %2355 = vmatprep.subr.bf16.mxu0 0
      %2356 = vmatpush1.bf16.msra.mxu0 0
      %2357 = vmatprep.subr.bf16.mxu0 0
      %2358 = vmatpush1.bf16.msra.mxu0 0
      %2359 = vmatprep.subr.bf16.mxu0 0
      %2360 = vmatpush1.bf16.msra.mxu0 0
      %2361 = vmatprep.subr.bf16.mxu0 0
      %2362 = vmatpush1.bf16.msra.mxu0 0
      %2363 = vmatprep.subr.bf16.mxu0 0
      %2364 = vmatpush1.bf16.msra.mxu0 0
      %2365 = vmatprep.subr.bf16.mxu0 0
      %2366 = vmatpush1.bf16.msra.mxu0 0
      %2367 = vmatprep.mubr.bf16.mxu0 0
      %2368 = vmatmul.mubr.bf16.gmra.mrb[0].mxu0 %v2254
      %v2369 = vpop.f32.mrb[0].mxu0
      %v2370 = vadd.f32 0.0, %v2369
      %v2371 = vpop.f32.mrb[0].mxu0
      %v2372 = vpop.f32.mrb[0].mxu0
      %v2373 = vadd.f32 0.0, %v2372
      %v2374 = vpop.f32.mrb[0].mxu0
      %2375 = vmatprep.mubr.bf16.mxu0 0
      %2376 = vmatmul.mubr.bf16.gmra.mrb[0].mxu0 %v2255
      %v2377 = vpop.f32.mrb[0].mxu0
      %v2378 = vadd.f32 0.0, %v2377
      %v2379 = vpop.f32.mrb[0].mxu0
      %v2380 = vpop.f32.mrb[0].mxu0
      %v2381 = vadd.f32 0.0, %v2380
      %v2382 = vpop.f32.mrb[0].mxu0
      %2383 = vmatprep.mubr.bf16.mxu0 0
      %2384 = vmatmul.mubr.bf16.gmra.mrb[0].mxu0 %v2256
      %v2385 = vpop.f32.mrb[0].mxu0
      %v2386 = vadd.f32 0.0, %v2385
      %v2387 = vpop.f32.mrb[0].mxu0
      %v2388 = vpop.f32.mrb[0].mxu0
      %v2389 = vadd.f32 0.0, %v2388
      %v2390 = vpop.f32.mrb[0].mxu0
      %2391 = vmatprep.mubr.bf16.mxu0 0
      %2392 = vmatmul.mubr.bf16.gmra.mrb[0].mxu0 %v2257
      %v2393 = vpop.f32.mrb[0].mxu0
      %v2394 = vadd.f32 0.0, %v2393
      %v2395 = vpop.f32.mrb[0].mxu0
      %v2396 = vpop.f32.mrb[0].mxu0
      %v2397 = vadd.f32 0.0, %v2396
      %v2398 = vpop.f32.mrb[0].mxu0
      %2399 = vmatprep.mubr.bf16.mxu0 0
      %2400 = vmatmul.mubr.bf16.gmra.mrb[0].mxu0 %v2258
      %v2401 = vpop.f32.mrb[0].mxu0
      %v2402 = vadd.f32 0.0, %v2401
      %v2403 = vpop.f32.mrb[0].mxu0
      %v2404 = vpop.f32.mrb[0].mxu0
      %v2405 = vadd.f32 0.0, %v2404
      %v2406 = vpop.f32.mrb[0].mxu0
      %2407 = vmatprep.mubr.bf16.mxu0 0
      %2408 = vmatmul.mubr.bf16.gmra.mrb[0].mxu0 %v2259
      %v2409 = vpop.f32.mrb[0].mxu0
      %v2410 = vadd.f32 0.0, %v2409
      %v2411 = vpop.f32.mrb[0].mxu0
      %v2412 = vpop.f32.mrb[0].mxu0
      %v2413 = vadd.f32 0.0, %v2412
      %v2414 = vpop.f32.mrb[0].mxu0
      %2415 = vmatprep.mubr.bf16.mxu0 0
      %2416 = vmatmul.mubr.bf16.gmra.mrb[0].mxu0 %v2260
      %v2417 = vpop.f32.mrb[0].mxu0
      %v2418 = vadd.f32 0.0, %v2417
      %v2419 = vpop.f32.mrb[0].mxu0
      %v2420 = vpop.f32.mrb[0].mxu0
      %v2421 = vadd.f32 0.0, %v2420
      %v2422 = vpop.f32.mrb[0].mxu0
      %2423 = vmatprep.mubr.bf16.mxu0 0
      %2424 = vmatmul.mubr.bf16.gmra.mrb[0].mxu0 %v2261
      %v2425 = vpop.f32.mrb[0].mxu0
      %v2426 = vadd.f32 0.0, %v2425
      %v2427 = vpop.f32.mrb[0].mxu0
      %v2428 = vpop.f32.mrb[0].mxu0
      %v2429 = vadd.f32 0.0, %v2428
      %v2430 = vpop.f32.mrb[0].mxu0
      %2431 = vmatprep.mubr.bf16.mxu0 0
      %2432 = vmatmul.mubr.bf16.gmra.mrb[0].mxu0 %v2262
      %v2433 = vpop.f32.mrb[0].mxu0
      %v2434 = vadd.f32 0.0, %v2433
      %v2435 = vpop.f32.mrb[0].mxu0
      %v2436 = vpop.f32.mrb[0].mxu0
      %v2437 = vadd.f32 0.0, %v2436
      %v2438 = vpop.f32.mrb[0].mxu0
      %2439 = vmatprep.mubr.bf16.mxu0 0
      %2440 = vmatmul.mubr.bf16.gmra.mrb[0].mxu0 %v2263
      %v2441 = vpop.f32.mrb[0].mxu0
      %v2442 = vadd.f32 0.0, %v2441
      %v2443 = vpop.f32.mrb[0].mxu0
      %v2444 = vpop.f32.mrb[0].mxu0
      %v2445 = vadd.f32 0.0, %v2444
      %v2446 = vpop.f32.mrb[0].mxu0
      %2447 = vmatprep.mubr.bf16.mxu0 0
      %2448 = vmatmul.mubr.bf16.gmra.mrb[0].mxu0 %v2264
      %v2449 = vpop.f32.mrb[0].mxu0
      %v2450 = vadd.f32 0.0, %v2449
      %v2451 = vpop.f32.mrb[0].mxu0
      %v2452 = vpop.f32.mrb[0].mxu0
      %v2453 = vadd.f32 0.0, %v2452
      %v2454 = vpop.f32.mrb[0].mxu0
      %2455 = vmatprep.mubr.bf16.mxu0 0
      %2456 = vmatmul.mubr.bf16.gmra.mrb[0].mxu0 %v2265
      %v2457 = vpop.f32.mrb[0].mxu0
      %v2458 = vadd.f32 0.0, %v2457
      %v2459 = vpop.f32.mrb[0].mxu0
      %v2460 = vpop.f32.mrb[0].mxu0
      %v2461 = vadd.f32 0.0, %v2460
      %v2462 = vpop.f32.mrb[0].mxu0
      %2463 = vmatprep.mubr.bf16.mxu0 0
      %2464 = vmatmul.mubr.bf16.gmra.mrb[0].mxu0 %v2266
      %v2465 = vpop.f32.mrb[0].mxu0
      %v2466 = vadd.f32 0.0, %v2465
      %v2467 = vpop.f32.mrb[0].mxu0
      %v2468 = vpop.f32.mrb[0].mxu0
      %v2469 = vadd.f32 0.0, %v2468
      %v2470 = vpop.f32.mrb[0].mxu0
      %2471 = vmatprep.mubr.bf16.mxu0 0
      %2472 = vmatmul.mubr.bf16.gmra.mrb[0].mxu0 %v2267
      %v2473 = vpop.f32.mrb[0].mxu0
      %v2474 = vadd.f32 0.0, %v2473
      %v2475 = vpop.f32.mrb[0].mxu0
      %v2476 = vpop.f32.mrb[0].mxu0
      %v2477 = vadd.f32 0.0, %v2476
      %v2478 = vpop.f32.mrb[0].mxu0
      %2479 = vmatprep.mubr.bf16.mxu0 0
      %2480 = vmatmul.mubr.bf16.gmra.mrb[0].mxu0 %v2268
      %v2481 = vpop.f32.mrb[0].mxu0
      %v2482 = vadd.f32 0.0, %v2481
      %v2483 = vpop.f32.mrb[0].mxu0
      %v2484 = vpop.f32.mrb[0].mxu0
      %v2485 = vadd.f32 0.0, %v2484
      %v2486 = vpop.f32.mrb[0].mxu0
      %2487 = vmatprep.mubr.bf16.mxu0 0
      %2488 = vmatmul.mubr.bf16.gmra.mrb[0].mxu0 %v2269
      %v2489 = vpop.f32.mrb[0].mxu0
      %v2490 = vadd.f32 0.0, %v2489
      %v2491 = vpop.f32.mrb[0].mxu0
      %v2492 = vpop.f32.mrb[0].mxu0
      %v2493 = vadd.f32 0.0, %v2492
      %v2494 = vpop.f32.mrb[0].mxu0
      %2495 = vdwg.mxu0
      %v2496 = vadd.f32 %v2190, %v2370
      %v2497 = vadd.f32 %v2191, %v2373
      %v2498 = vadd.f32 %v2192, %v2378
      %v2499 = vadd.f32 %v2193, %v2381
      %v2500 = vadd.f32 %v2194, %v2386
      %v2501 = vadd.f32 %v2195, %v2389
      %v2502 = vadd.f32 %v2196, %v2394
      %v2503 = vadd.f32 %v2197, %v2397
      %v2504 = vadd.f32 %v2198, %v2402
      %v2505 = vadd.f32 %v2199, %v2405
      %v2506 = vadd.f32 %v2200, %v2410
      %v2507 = vadd.f32 %v2201, %v2413
      %v2508 = vadd.f32 %v2202, %v2418
      %v2509 = vadd.f32 %v2203, %v2421
      %v2510 = vadd.f32 %v2204, %v2426
      %v2511 = vadd.f32 %v2205, %v2429
      %v2512 = vadd.f32 %v2206, %v2434
      %v2513 = vadd.f32 %v2207, %v2437
      %v2514 = vadd.f32 %v2208, %v2442
      %v2515 = vadd.f32 %v2209, %v2445
      %v2516 = vadd.f32 %v2210, %v2450
      %v2517 = vadd.f32 %v2211, %v2453
      %v2518 = vadd.f32 %v2212, %v2458
      %v2519 = vadd.f32 %v2213, %v2461
      %v2520 = vadd.f32 %v2214, %v2466
      %v2521 = vadd.f32 %v2215, %v2469
      %v2522 = vadd.f32 %v2216, %v2474
      %v2523 = vadd.f32 %v2217, %v2477
      %v2524 = vadd.f32 %v2218, %v2482
      %v2525 = vadd.f32 %v2219, %v2485
      %v2526 = vadd.f32 %v2220, %v2490
      %v2527 = vadd.f32 %v2221, %v2493
      %v2528 = vld [vmem:[%s1915 + $0x2] sm:$0xff]
      %v2529 = vld [vmem:[%s1915 + $0xa] sm:$0xff]
      %v2530 = vld [vmem:[%s1915 + $0x1a] sm:$0xff]
      %v2531 = vld [vmem:[%s1915 + $0x22] sm:$0xff]
      %v2532 = vld [vmem:[%s1915 + $0x32] sm:$0xff]
      %v2533 = vld [vmem:[%s1915 + $0x3a] sm:$0xff]
      %v2534 = vld [vmem:[%s1915 + $0x4a] sm:$0xff]
      %v2535 = vld [vmem:[%s1915 + $0x52] sm:$0xff]
      %v2536 = vld [vmem:[%s1915 + $0x62] sm:$0xff]
      %v2537 = vld [vmem:[%s1915 + $0x6a] sm:$0xff]
      %v2538 = vld [vmem:[%s1915 + $0x7a] sm:$0xff]
      %v2539 = vld [vmem:[%s1915 + $0x82] sm:$0xff]
      %v2540 = vld [vmem:[%s1915 + $0x92] sm:$0xff]
      %v2541 = vld [vmem:[%s1915 + $0x9a] sm:$0xff]
      %v2542 = vld [vmem:[%s1915 + $0xaa] sm:$0xff]
      %v2543 = vld [vmem:[%s1915 + $0xb2] sm:$0xff]
      %v2544 = vld [vmem:[%s1915 + $0xc2] sm:$0xff]
      %v2545 = vld [vmem:[%s1915 + $0xca] sm:$0xff]
      %v2546 = vld [vmem:[%s1915 + $0xda] sm:$0xff]
      %v2547 = vld [vmem:[%s1915 + $0xe2] sm:$0xff]
      %v2548 = vld [vmem:[%s1915 + $0xf2] sm:$0xff]
      %v2549 = vld [vmem:[%s1915 + $0xfa] sm:$0xff]
      %v2550 = vld [vmem:[%s1915 + $0x10a] sm:$0xff]
      %v2551 = vld [vmem:[%s1915 + $0x112] sm:$0xff]
      %v2552 = vld [vmem:[%s1915 + $0x122] sm:$0xff]
      %v2553 = vld [vmem:[%s1915 + $0x12a] sm:$0xff]
      %v2554 = vld [vmem:[%s1915 + $0x13a] sm:$0xff]
      %v2555 = vld [vmem:[%s1915 + $0x142] sm:$0xff]
      %v2556 = vld [vmem:[%s1915 + $0x152] sm:$0xff]
      %v2557 = vld [vmem:[%s1915 + $0x15a] sm:$0xff]
      %v2558 = vld [vmem:[%s1915 + $0x16a] sm:$0xff]
      %v2559 = vld [vmem:[%s1915 + $0x172] sm:$0xff]
      %v2560 = vpack.c.bf16 %v2529, %v2528
      %v2561 = vpack.c.bf16 %v2531, %v2530
      %v2562 = vpack.c.bf16 %v2533, %v2532
      %v2563 = vpack.c.bf16 %v2535, %v2534
      %v2564 = vpack.c.bf16 %v2537, %v2536
      %v2565 = vpack.c.bf16 %v2539, %v2538
      %v2566 = vpack.c.bf16 %v2541, %v2540
      %v2567 = vpack.c.bf16 %v2543, %v2542
      %v2568 = vpack.c.bf16 %v2545, %v2544
      %v2569 = vpack.c.bf16 %v2547, %v2546
      %v2570 = vpack.c.bf16 %v2549, %v2548
      %v2571 = vpack.c.bf16 %v2551, %v2550
      %v2572 = vpack.c.bf16 %v2553, %v2552
      %v2573 = vpack.c.bf16 %v2555, %v2554
      %v2574 = vpack.c.bf16 %v2557, %v2556
      %v2575 = vpack.c.bf16 %v2559, %v2558
      %s2576 = scalar_lea.vmem %s1, 512
      %v2577 = vld [vmem:[%s2576] sm:$0xf]
      %v2578 = vld [vmem:[%s2576 + $0x4] sm:$0xf]
      %v2579 = vld [vmem:[%s2576 + $0x8] sm:$0xf]
      %v2580 = vld [vmem:[%s2576 + $0xc] sm:$0xf]
      %v2581 = vld [vmem:[%s2576 + $0x10] sm:$0xf]
      %v2582 = vld [vmem:[%s2576 + $0x14] sm:$0xf]
      %v2583 = vld [vmem:[%s2576 + $0x18] sm:$0xf]
      %v2584 = vld [vmem:[%s2576 + $0x1c] sm:$0xf]
      %v2585 = vld [vmem:[%s2576 + $0x20] sm:$0xf]
      %v2586 = vld [vmem:[%s2576 + $0x24] sm:$0xf]
      %v2587 = vld [vmem:[%s2576 + $0x28] sm:$0xf]
      %v2588 = vld [vmem:[%s2576 + $0x2c] sm:$0xf]
      %v2589 = vld [vmem:[%s2576 + $0x30] sm:$0xf]
      %v2590 = vld [vmem:[%s2576 + $0x34] sm:$0xf]
      %v2591 = vld [vmem:[%s2576 + $0x38] sm:$0xf]
      %v2592 = vld [vmem:[%s2576 + $0x3c] sm:$0xf]
      %v2609 = vunpack.c.l.b16 %v2577
      %v2610 = vunpack.c.l.b16 %v2578
      %v2611 = vunpack.c.l.b16 %v2579
      %v2612 = vunpack.c.l.b16 %v2580
      %v2613 = vunpack.c.l.b16 %v2581
      %v2614 = vunpack.c.l.b16 %v2582
      %v2615 = vunpack.c.l.b16 %v2583
      %v2616 = vunpack.c.l.b16 %v2584
      %v2617 = vunpack.c.l.b16 %v2585
      %v2618 = vunpack.c.l.b16 %v2586
      %v2619 = vunpack.c.l.b16 %v2587
      %v2620 = vunpack.c.l.b16 %v2588
      %v2621 = vunpack.c.l.b16 %v2589
      %v2622 = vunpack.c.l.b16 %v2590
      %v2623 = vunpack.c.l.b16 %v2591
      %v2624 = vunpack.c.l.b16 %v2592
      %v2625 = vpack.c.b16 %v2610, %v2609
      %v2626 = vpack.c.b16 %v2612, %v2611
      %v2627 = vpack.c.b16 %v2614, %v2613
      %v2628 = vpack.c.b16 %v2616, %v2615
      %v2629 = vpack.c.b16 %v2618, %v2617
      %v2630 = vpack.c.b16 %v2620, %v2619
      %v2631 = vpack.c.b16 %v2622, %v2621
      %v2632 = vpack.c.b16 %v2624, %v2623
      %2641 = vmatprep.subr.bf16.mxu0 0
      %2642 = vmatpush1.bf16.msra.mxu0 %v2625
      %2643 = vmatprep.subr.bf16.mxu0 0
      %2644 = vmatpush1.bf16.msra.mxu0 %v2626
      %2645 = vmatprep.subr.bf16.mxu0 0
      %2646 = vmatpush1.bf16.msra.mxu0 %v2627
      %2647 = vmatprep.subr.bf16.mxu0 0
      %2648 = vmatpush1.bf16.msra.mxu0 %v2628
      %2649 = vmatprep.subr.bf16.mxu0 0
      %2650 = vmatpush1.bf16.msra.mxu0 %v2629
      %2651 = vmatprep.subr.bf16.mxu0 0
      %2652 = vmatpush1.bf16.msra.mxu0 %v2630
      %2653 = vmatprep.subr.bf16.mxu0 0
      %2654 = vmatpush1.bf16.msra.mxu0 %v2631
      %2655 = vmatprep.subr.bf16.mxu0 0
      %2656 = vmatpush1.bf16.msra.mxu0 %v2632
      %2657 = vmatprep.subr.bf16.mxu0 0
      %2658 = vmatpush1.bf16.msra.mxu0 0
      %2659 = vmatprep.subr.bf16.mxu0 0
      %2660 = vmatpush1.bf16.msra.mxu0 0
      %2661 = vmatprep.subr.bf16.mxu0 0
      %2662 = vmatpush1.bf16.msra.mxu0 0
      %2663 = vmatprep.subr.bf16.mxu0 0
      %2664 = vmatpush1.bf16.msra.mxu0 0
      %2665 = vmatprep.subr.bf16.mxu0 0
      %2666 = vmatpush1.bf16.msra.mxu0 0
      %2667 = vmatprep.subr.bf16.mxu0 0
      %2668 = vmatpush1.bf16.msra.mxu0 0
      %2669 = vmatprep.subr.bf16.mxu0 0
      %2670 = vmatpush1.bf16.msra.mxu0 0
      %2671 = vmatprep.subr.bf16.mxu0 0
      %2672 = vmatpush1.bf16.msra.mxu0 0
      %2673 = vmatprep.mubr.bf16.mxu0 0
      %2674 = vmatmul.mubr.bf16.gmra.mrb[0].mxu0 %v2560
      %v2675 = vpop.f32.mrb[0].mxu0
      %v2676 = vadd.f32 0.0, %v2675
      %v2677 = vpop.f32.mrb[0].mxu0
      %v2678 = vpop.f32.mrb[0].mxu0
      %v2679 = vadd.f32 0.0, %v2678
      %v2680 = vpop.f32.mrb[0].mxu0
      %2681 = vmatprep.mubr.bf16.mxu0 0
      %2682 = vmatmul.mubr.bf16.gmra.mrb[0].mxu0 %v2561
      %v2683 = vpop.f32.mrb[0].mxu0
      %v2684 = vadd.f32 0.0, %v2683
      %v2685 = vpop.f32.mrb[0].mxu0
      %v2686 = vpop.f32.mrb[0].mxu0
      %v2687 = vadd.f32 0.0, %v2686
      %v2688 = vpop.f32.mrb[0].mxu0
      %2689 = vmatprep.mubr.bf16.mxu0 0
      %2690 = vmatmul.mubr.bf16.gmra.mrb[0].mxu0 %v2562
      %v2691 = vpop.f32.mrb[0].mxu0
      %v2692 = vadd.f32 0.0, %v2691
      %v2693 = vpop.f32.mrb[0].mxu0
      %v2694 = vpop.f32.mrb[0].mxu0
      %v2695 = vadd.f32 0.0, %v2694
      %v2696 = vpop.f32.mrb[0].mxu0
      %2697 = vmatprep.mubr.bf16.mxu0 0
      %2698 = vmatmul.mubr.bf16.gmra.mrb[0].mxu0 %v2563
      %v2699 = vpop.f32.mrb[0].mxu0
      %v2700 = vadd.f32 0.0, %v2699
      %v2701 = vpop.f32.mrb[0].mxu0
      %v2702 = vpop.f32.mrb[0].mxu0
      %v2703 = vadd.f32 0.0, %v2702
      %v2704 = vpop.f32.mrb[0].mxu0
      %2705 = vmatprep.mubr.bf16.mxu0 0
      %2706 = vmatmul.mubr.bf16.gmra.mrb[0].mxu0 %v2564
      %v2707 = vpop.f32.mrb[0].mxu0
      %v2708 = vadd.f32 0.0, %v2707
      %v2709 = vpop.f32.mrb[0].mxu0
      %v2710 = vpop.f32.mrb[0].mxu0
      %v2711 = vadd.f32 0.0, %v2710
      %v2712 = vpop.f32.mrb[0].mxu0
      %2713 = vmatprep.mubr.bf16.mxu0 0
      %2714 = vmatmul.mubr.bf16.gmra.mrb[0].mxu0 %v2565
      %v2715 = vpop.f32.mrb[0].mxu0
      %v2716 = vadd.f32 0.0, %v2715
      %v2717 = vpop.f32.mrb[0].mxu0
      %v2718 = vpop.f32.mrb[0].mxu0
      %v2719 = vadd.f32 0.0, %v2718
      %v2720 = vpop.f32.mrb[0].mxu0
      %2721 = vmatprep.mubr.bf16.mxu0 0
      %2722 = vmatmul.mubr.bf16.gmra.mrb[0].mxu0 %v2566
      %v2723 = vpop.f32.mrb[0].mxu0
      %v2724 = vadd.f32 0.0, %v2723
      %v2725 = vpop.f32.mrb[0].mxu0
      %v2726 = vpop.f32.mrb[0].mxu0
      %v2727 = vadd.f32 0.0, %v2726
      %v2728 = vpop.f32.mrb[0].mxu0
      %2729 = vmatprep.mubr.bf16.mxu0 0
      %2730 = vmatmul.mubr.bf16.gmra.mrb[0].mxu0 %v2567
      %v2731 = vpop.f32.mrb[0].mxu0
      %v2732 = vadd.f32 0.0, %v2731
      %v2733 = vpop.f32.mrb[0].mxu0
      %v2734 = vpop.f32.mrb[0].mxu0
      %v2735 = vadd.f32 0.0, %v2734
      %v2736 = vpop.f32.mrb[0].mxu0
      %2737 = vmatprep.mubr.bf16.mxu0 0
      %2738 = vmatmul.mubr.bf16.gmra.mrb[0].mxu0 %v2568
      %v2739 = vpop.f32.mrb[0].mxu0
      %v2740 = vadd.f32 0.0, %v2739
      %v2741 = vpop.f32.mrb[0].mxu0
      %v2742 = vpop.f32.mrb[0].mxu0
      %v2743 = vadd.f32 0.0, %v2742
      %v2744 = vpop.f32.mrb[0].mxu0
      %2745 = vmatprep.mubr.bf16.mxu0 0
      %2746 = vmatmul.mubr.bf16.gmra.mrb[0].mxu0 %v2569
      %v2747 = vpop.f32.mrb[0].mxu0
      %v2748 = vadd.f32 0.0, %v2747
      %v2749 = vpop.f32.mrb[0].mxu0
      %v2750 = vpop.f32.mrb[0].mxu0
      %v2751 = vadd.f32 0.0, %v2750
      %v2752 = vpop.f32.mrb[0].mxu0
      %2753 = vmatprep.mubr.bf16.mxu0 0
      %2754 = vmatmul.mubr.bf16.gmra.mrb[0].mxu0 %v2570
      %v2755 = vpop.f32.mrb[0].mxu0
      %v2756 = vadd.f32 0.0, %v2755
      %v2757 = vpop.f32.mrb[0].mxu0
      %v2758 = vpop.f32.mrb[0].mxu0
      %v2759 = vadd.f32 0.0, %v2758
      %v2760 = vpop.f32.mrb[0].mxu0
      %2761 = vmatprep.mubr.bf16.mxu0 0
      %2762 = vmatmul.mubr.bf16.gmra.mrb[0].mxu0 %v2571
      %v2763 = vpop.f32.mrb[0].mxu0
      %v2764 = vadd.f32 0.0, %v2763
      %v2765 = vpop.f32.mrb[0].mxu0
      %v2766 = vpop.f32.mrb[0].mxu0
      %v2767 = vadd.f32 0.0, %v2766
      %v2768 = vpop.f32.mrb[0].mxu0
      %2769 = vmatprep.mubr.bf16.mxu0 0
      %2770 = vmatmul.mubr.bf16.gmra.mrb[0].mxu0 %v2572
      %v2771 = vpop.f32.mrb[0].mxu0
      %v2772 = vadd.f32 0.0, %v2771
      %v2773 = vpop.f32.mrb[0].mxu0
      %v2774 = vpop.f32.mrb[0].mxu0
      %v2775 = vadd.f32 0.0, %v2774
      %v2776 = vpop.f32.mrb[0].mxu0
      %2777 = vmatprep.mubr.bf16.mxu0 0
      %2778 = vmatmul.mubr.bf16.gmra.mrb[0].mxu0 %v2573
      %v2779 = vpop.f32.mrb[0].mxu0
      %v2780 = vadd.f32 0.0, %v2779
      %v2781 = vpop.f32.mrb[0].mxu0
      %v2782 = vpop.f32.mrb[0].mxu0
      %v2783 = vadd.f32 0.0, %v2782
      %v2784 = vpop.f32.mrb[0].mxu0
      %2785 = vmatprep.mubr.bf16.mxu0 0
      %2786 = vmatmul.mubr.bf16.gmra.mrb[0].mxu0 %v2574
      %v2787 = vpop.f32.mrb[0].mxu0
      %v2788 = vadd.f32 0.0, %v2787
      %v2789 = vpop.f32.mrb[0].mxu0
      %v2790 = vpop.f32.mrb[0].mxu0
      %v2791 = vadd.f32 0.0, %v2790
      %v2792 = vpop.f32.mrb[0].mxu0
      %2793 = vmatprep.mubr.bf16.mxu0 0
      %2794 = vmatmul.mubr.bf16.gmra.mrb[0].mxu0 %v2575
      %v2795 = vpop.f32.mrb[0].mxu0
      %v2796 = vadd.f32 0.0, %v2795
      %v2797 = vpop.f32.mrb[0].mxu0
      %v2798 = vpop.f32.mrb[0].mxu0
      %v2799 = vadd.f32 0.0, %v2798
      %v2800 = vpop.f32.mrb[0].mxu0
      %2801 = vdwg.mxu0
      %v2802 = vadd.f32 %v2496, %v2676
      %v2803 = vadd.f32 %v2497, %v2679
      %v2804 = vadd.f32 %v2498, %v2684
      %v2805 = vadd.f32 %v2499, %v2687
      %v2806 = vadd.f32 %v2500, %v2692
      %v2807 = vadd.f32 %v2501, %v2695
      %v2808 = vadd.f32 %v2502, %v2700
      %v2809 = vadd.f32 %v2503, %v2703
      %v2810 = vadd.f32 %v2504, %v2708
      %v2811 = vadd.f32 %v2505, %v2711
      %v2812 = vadd.f32 %v2506, %v2716
      %v2813 = vadd.f32 %v2507, %v2719
      %v2814 = vadd.f32 %v2508, %v2724
      %v2815 = vadd.f32 %v2509, %v2727
      %v2816 = vadd.f32 %v2510, %v2732
      %v2817 = vadd.f32 %v2511, %v2735
      %v2818 = vadd.f32 %v2512, %v2740
      %v2819 = vadd.f32 %v2513, %v2743
      %v2820 = vadd.f32 %v2514, %v2748
      %v2821 = vadd.f32 %v2515, %v2751
      %v2822 = vadd.f32 %v2516, %v2756
      %v2823 = vadd.f32 %v2517, %v2759
      %v2824 = vadd.f32 %v2518, %v2764
      %v2825 = vadd.f32 %v2519, %v2767
      %v2826 = vadd.f32 %v2520, %v2772
      %v2827 = vadd.f32 %v2521, %v2775
      %v2828 = vadd.f32 %v2522, %v2780
      %v2829 = vadd.f32 %v2523, %v2783
      %v2830 = vadd.f32 %v2524, %v2788
      %v2831 = vadd.f32 %v2525, %v2791
      %v2832 = vadd.f32 %v2526, %v2796
      %v2833 = vadd.f32 %v2527, %v2799
      %v2834 = vadd.f32 %v2802, %v2803
      %v2835 = vadd.f32 %v2834, %v2804
      %v2836 = vadd.f32 %v2835, %v2805
      %v2837 = vadd.f32 %v2836, %v2806
      %v2838 = vadd.f32 %v2837, %v2807
      %v2839 = vadd.f32 %v2838, %v2808
      %v2840 = vadd.f32 %v2839, %v2809
      %v2841 = vadd.f32 %v2840, %v2810
      %v2842 = vadd.f32 %v2841, %v2811
      %v2843 = vadd.f32 %v2842, %v2812
      %v2844 = vadd.f32 %v2843, %v2813
      %v2845 = vadd.f32 %v2844, %v2814
      %v2846 = vadd.f32 %v2845, %v2815
      %v2847 = vadd.f32 %v2846, %v2816
      %v2848 = vadd.f32 %v2847, %v2817
      %v2849 = vadd.f32 %v2848, %v2818
      %v2850 = vadd.f32 %v2849, %v2819
      %v2851 = vadd.f32 %v2850, %v2820
      %v2852 = vadd.f32 %v2851, %v2821
      %v2853 = vadd.f32 %v2852, %v2822
      %v2854 = vadd.f32 %v2853, %v2823
      %v2855 = vadd.f32 %v2854, %v2824
      %v2856 = vadd.f32 %v2855, %v2825
      %v2857 = vadd.f32 %v2856, %v2826
      %v2858 = vadd.f32 %v2857, %v2827
      %v2859 = vadd.f32 %v2858, %v2828
      %v2860 = vadd.f32 %v2859, %v2829
      %v2861 = vadd.f32 %v2860, %v2830
      %v2862 = vadd.f32 %v2861, %v2831
      %v2863 = vadd.f32 %v2862, %v2832
      %v2864 = vadd.f32 %v2863, %v2833
      %v2865 = vrot.slane %v2864, 4
      %v2866 = vadd.f32 %v2864, %v2865
      %v2867 = vrot.slane %v2866, 2
      %v2868 = vadd.f32 %v2866, %v2867
      %v2869 = vrot.slane %v2868, 1
      %v2870 = vadd.f32 %v2868, %v2869
      %2871 = vst [vmem:[%s141] sm:$0x1] %v2870
      %v2872 = vmul.f32 %v2802, %v2802
      %v2873 = vmul.f32 %v2803, %v2803
      %v2874 = vmul.f32 %v2804, %v2804
      %v2875 = vmul.f32 %v2805, %v2805
      %v2876 = vmul.f32 %v2806, %v2806
      %v2877 = vmul.f32 %v2807, %v2807
      %v2878 = vmul.f32 %v2808, %v2808
      %v2879 = vmul.f32 %v2809, %v2809
      %v2880 = vmul.f32 %v2810, %v2810
      %v2881 = vmul.f32 %v2811, %v2811
      %v2882 = vmul.f32 %v2812, %v2812
      %v2883 = vmul.f32 %v2813, %v2813
      %v2884 = vmul.f32 %v2814, %v2814
      %v2885 = vmul.f32 %v2815, %v2815
      %v2886 = vmul.f32 %v2816, %v2816
      %v2887 = vmul.f32 %v2817, %v2817
      %v2888 = vmul.f32 %v2818, %v2818
      %v2889 = vmul.f32 %v2819, %v2819
      %v2890 = vmul.f32 %v2820, %v2820
      %v2891 = vmul.f32 %v2821, %v2821
      %v2892 = vmul.f32 %v2822, %v2822
      %v2893 = vmul.f32 %v2823, %v2823
      %v2894 = vmul.f32 %v2824, %v2824
      %v2895 = vmul.f32 %v2825, %v2825
      %v2896 = vmul.f32 %v2826, %v2826
      %v2897 = vmul.f32 %v2827, %v2827
      %v2898 = vmul.f32 %v2828, %v2828
      %v2899 = vmul.f32 %v2829, %v2829
      %v2900 = vmul.f32 %v2830, %v2830
      %v2901 = vmul.f32 %v2831, %v2831
      %v2902 = vmul.f32 %v2832, %v2832
      %v2903 = vmul.f32 %v2833, %v2833
      %v2904 = vadd.f32 %v2872, %v2873
      %v2905 = vadd.f32 %v2904, %v2874
      %v2906 = vadd.f32 %v2905, %v2875
      %v2907 = vadd.f32 %v2906, %v2876
      %v2908 = vadd.f32 %v2907, %v2877
      %v2909 = vadd.f32 %v2908, %v2878
      %v2910 = vadd.f32 %v2909, %v2879
      %v2911 = vadd.f32 %v2910, %v2880
      %v2912 = vadd.f32 %v2911, %v2881
      %v2913 = vadd.f32 %v2912, %v2882
      %v2914 = vadd.f32 %v2913, %v2883
      %v2915 = vadd.f32 %v2914, %v2884
      %v2916 = vadd.f32 %v2915, %v2885
      %v2917 = vadd.f32 %v2916, %v2886
      %v2918 = vadd.f32 %v2917, %v2887
      %v2919 = vadd.f32 %v2918, %v2888
      %v2920 = vadd.f32 %v2919, %v2889
      %v2921 = vadd.f32 %v2920, %v2890
      %v2922 = vadd.f32 %v2921, %v2891
      %v2923 = vadd.f32 %v2922, %v2892
      %v2924 = vadd.f32 %v2923, %v2893
      %v2925 = vadd.f32 %v2924, %v2894
      %v2926 = vadd.f32 %v2925, %v2895
      %v2927 = vadd.f32 %v2926, %v2896
      %v2928 = vadd.f32 %v2927, %v2897
      %v2929 = vadd.f32 %v2928, %v2898
      %v2930 = vadd.f32 %v2929, %v2899
      %v2931 = vadd.f32 %v2930, %v2900
      %v2932 = vadd.f32 %v2931, %v2901
      %v2933 = vadd.f32 %v2932, %v2902
      %v2934 = vadd.f32 %v2933, %v2903
      %v2935 = vrot.slane %v2934, 4
      %v2936 = vadd.f32 %v2934, %v2935
      %v2937 = vrot.slane %v2936, 2
      %v2938 = vadd.f32 %v2936, %v2937
      %v2939 = vrot.slane %v2938, 1
      %v2940 = vadd.f32 %v2938, %v2939
      %2941 = vst [vmem:[%s141 + $0x1] sm:$0x1] %v2940
      %p2942 = scmp.lt.s32.totalorder %s13, 1
      %s2943 = scalar_select %p2942, %s13, 1
      %s2944 = smul.addr %s2943, 2
      %s2945 = scalar_lea.vmem %s2, %s2944
      // Predicated region
      $region29: #{newblock_forward.2} parent=27 // pred_check
        %p2946 = pneg %p78
      $region30: #{newblock_forward.2} parent=27 // pred_check_branch
        %2948 = sbr.rel (%p2946) target = $region32
      $region31: #{newblock_forward.2} parent=27 // pred_region
        _
      $region32: #{newblock_forward.2} parent=27 // pred_fallthru
        _
    $region28: #{newblock_forward.2} parent=5 // pred_fallthru
      _
    %p2949 = scmp.le.s32.totalorder 2, %s8
    // Predicated region
    $region33: #{newblock_forward.2} parent=5 // pred_check
      %p2950 = pneg %p2949
    $region34: #{newblock_forward.2} parent=5 // pred_check_branch
      %2952 = sbr.rel (%p2950) target = $region36
    $region35: #{newblock_forward.2} parent=5 // pred_region
      %s2953 = ssub.s32 %s8, 2
      // Predicated region
      $region37: #{newblock_forward.2} parent=35 // pred_check
        %p2954 = pneg %p84
      $region38: #{newblock_forward.2} parent=35 // pred_check_branch
        %2956 = sbr.rel (%p2954) target = $region40
      $region39: #{newblock_forward.2} parent=35 // pred_region
        %p2957 = scmp.lt.s32.totalorder %s14, 1
        %s2958 = scalar_select %p2957, %s14, 1
        %s2959 = smul.addr %s2958, 2
        %s2960 = scalar_lea.vmem %s2, %s2959
      $region40: #{newblock_forward.2} parent=35 // pred_fallthru
        _
    $region36: #{newblock_forward.2} parent=5 // pred_fallthru
      _
  $region6: #{newblock_forward.2} parent=0 // loop_footer
    %s12 = sadd.s32 1, %s8
  $region7: #{newblock_forward.2} parent=0 // loop_footer_branch
    %7 = sbr.rel target = $region3
  $region8: #{newblock_forward.2} parent=0 // loop_exit
    _

// kernel: newblock_forward.3
$region0: #{newblock_forward.3}
  #allocation0 [shape = 'u32[]', space=smem, size = 0x4, offset = 0x4, fixed_abs, tag = 'smem constant byte address 0x4 - core index']
  #allocation1 [shape = 'u32[144,128]{1,0:T(1,128)}', space=vmem, size = 0x12000, scoped, tag = 'internal scratch']
  %s0 = inlined_call_operand.vmem [shape: f32[2,18,18,128], index: 0, kind: input, shape index: {}]
  %s1 = inlined_call_operand.vmem [shape: bf16[9,128,128], index: 1, kind: input, shape index: {}]
  %s2 = inlined_call_operand.vmem [shape: f32[1,128], index: 2, kind: input, shape index: {}]
  %s3 = inlined_call_operand.vmem [shape: f32[1,128], index: 3, kind: input, shape index: {}]
  %s4 = inlined_call_operand.hbm [shape: f32[2,16,16,128], index: 4, kind: output, shape index: {}]
  %s5 = sld [smem:[#allocation0]]
  $region49: #{newblock_forward.3} parent=0
    _
  %s7 = ssub.s32 1, %s5
  %s8 = scalar_select 0, %s7, %s5
  $region1: #{newblock_forward.3} parent=0
    #allocation2 [shape = 'u8[262144]{0}', space=vmem, size = 0x40000, scoped, tag = 'output window, operand 0']
    #allocation3 [shape = 's32[2]{0}', space=sflag, size = 0x8, scoped, tag = 'scoped memory for newblock_forward.3']
    %9 = vsyncpa [#allocation3], 0
    %s10 = scalar_lea.sflag [#allocation3], 1
    %11 = vsyncpa %s10, 0
    loop: start=0, step=1, limit=4
    $region2: #{newblock_forward.3} parent=1 // loop_pre_header
      _
    $region3: #{newblock_forward.3} parent=1 // loop_header
      %s13 = sphi 0, %s17
      %p14 = scmp.ge.s32.totalorder %s13, 4
      %s23 = sphi 0, %s25
      %s26 = sphi 0, %s23
      %s27 = sphi 0, %s26
      %s43 = sphi 0, %s27
      %s47 = sphi 0, %s47
      %s49 = sphi 0, %s47
      %s50 = sphi 0, %s49
      %s64 = sphi 0, %s50
      %s68 = sphi 0, %s68
      %s70 = sphi 0, %s68
      %s71 = sphi 0, %s70
      %s85 = sphi 0, %s71
      %s89 = sphi 0, %s89
      %s91 = sphi 0, %s89
      %s92 = sphi 0, %s91
      %s106 = sphi 0, %s92
      %s112 = sphi 0, %s114
      %s115 = sphi 0, %s112
      %s116 = sphi 0, %s115
      %s132 = sphi 0, %s116
    $region4: #{newblock_forward.3} parent=1 // loop_header_branch
      %16 = sbr.rel (%p14) target = $region8
    $region5: #{newblock_forward.3} parent=1 // loop_body
      %s18 = ssub.s32 %s13, 1
      %s19 = ssub.s32 %s13, 2
      %s20 = sadd.s32 %s13, 1
      %s21 = ssub.s32 %s13, %s20
      %p22 = scmp.eq.s32.totalorder %s21, 0
      %s24 = sadd.s32 %s23, 1
      %s25 = scalar_select %p22, %s23, %s24
      %p28 = pneg %p22
      %p29 = scmp.eq.s32.totalorder %s13, 1
      %p30 = por %p28, %p29
      %p31 = scmp.ne.s32.totalorder %s23, %s26
      %p32 = scmp.eq.s32.totalorder %s13, 0
      %p33 = por %p31, %p32
      %p34 = scmp.ne.s32.totalorder %s23, %s26
      %p35 = scmp.eq.s32.totalorder %s18, 1
      %p36 = por %p34, %p35
      %p37 = scmp.ne.s32.totalorder %s26, %s27
      %p38 = scmp.eq.s32.totalorder %s18, 0
      %p39 = por %p37, %p38
      %p40 = scmp.ne.s32.totalorder %s26, %s27
      %p41 = scmp.eq.s32.totalorder %s19, 1
      %p42 = por %p40, %p41
      %p44 = scmp.ne.s32.totalorder %s27, %s43
      %p45 = scmp.eq.s32.totalorder %s19, 0
      %p46 = por %p44, %p45
      %s48 = sadd.s32 %s47, 1
      %p51 = scmp.eq.s32.totalorder %s13, 1
      %p52 = scmp.ne.s32.totalorder %s47, %s49
      %p53 = scmp.eq.s32.totalorder %s13, 0
      %p54 = por %p52, %p53
      %p55 = scmp.ne.s32.totalorder %s47, %s49
      %p56 = scmp.eq.s32.totalorder %s18, 1
      %p57 = por %p55, %p56
      %p58 = scmp.ne.s32.totalorder %s49, %s50
      %p59 = scmp.eq.s32.totalorder %s18, 0
      %p60 = por %p58, %p59
      %p61 = scmp.ne.s32.totalorder %s49, %s50
      %p62 = scmp.eq.s32.totalorder %s19, 1
      %p63 = por %p61, %p62
      %p65 = scmp.ne.s32.totalorder %s50, %s64
      %p66 = scmp.eq.s32.totalorder %s19, 0
      %p67 = por %p65, %p66
      %s69 = sadd.s32 %s68, 1
      %p72 = scmp.eq.s32.totalorder %s13, 1
      %p73 = scmp.ne.s32.totalorder %s68, %s70
      %p74 = scmp.eq.s32.totalorder %s13, 0
      %p75 = por %p73, %p74
      %p76 = scmp.ne.s32.totalorder %s68, %s70
      %p77 = scmp.eq.s32.totalorder %s18, 1
      %p78 = por %p76, %p77
      %p79 = scmp.ne.s32.totalorder %s70, %s71
      %p80 = scmp.eq.s32.totalorder %s18, 0
      %p81 = por %p79, %p80
      %p82 = scmp.ne.s32.totalorder %s70, %s71
      %p83 = scmp.eq.s32.totalorder %s19, 1
      %p84 = por %p82, %p83
      %p86 = scmp.ne.s32.totalorder %s71, %s85
      %p87 = scmp.eq.s32.totalorder %s19, 0
      %p88 = por %p86, %p87
      %s90 = sadd.s32 %s89, 1
      %p93 = scmp.eq.s32.totalorder %s13, 1
      %p94 = scmp.ne.s32.totalorder %s89, %s91
      %p95 = scmp.eq.s32.totalorder %s13, 0
      %p96 = por %p94, %p95
      %p97 = scmp.ne.s32.totalorder %s89, %s91
      %p98 = scmp.eq.s32.totalorder %s18, 1
      %p99 = por %p97, %p98
      %p100 = scmp.ne.s32.totalorder %s91, %s92
      %p101 = scmp.eq.s32.totalorder %s18, 0
      %p102 = por %p100, %p101
      %p103 = scmp.ne.s32.totalorder %s91, %s92
      %p104 = scmp.eq.s32.totalorder %s19, 1
      %p105 = por %p103, %p104
      %p107 = scmp.ne.s32.totalorder %s92, %s106
      %p108 = scmp.eq.s32.totalorder %s19, 0
      %p109 = por %p107, %p108
      %s110 = ssub.s32 %s13, %s20
      %p111 = scmp.eq.s32.totalorder %s110, 0
      %s113 = sadd.s32 %s112, 1
      %s114 = scalar_select %p111, %s112, %s113
      %p117 = pneg %p111
      %p118 = scmp.eq.s32.totalorder %s13, 1
      %p119 = por %p117, %p118
      %p120 = scmp.ne.s32.totalorder %s112, %s115
      %p121 = scmp.eq.s32.totalorder %s13, 0
      %p122 = por %p120, %p121
      %p123 = scmp.ne.s32.totalorder %s112, %s115
      %p124 = scmp.eq.s32.totalorder %s18, 1
      %p125 = por %p123, %p124
      %p126 = scmp.ne.s32.totalorder %s115, %s116
      %p127 = scmp.eq.s32.totalorder %s18, 0
      %p128 = por %p126, %p127
      %p129 = scmp.ne.s32.totalorder %s115, %s116
      %p130 = scmp.eq.s32.totalorder %s19, 1
      %p131 = por %p129, %p130
      %p133 = scmp.ne.s32.totalorder %s116, %s132
      %p134 = scmp.eq.s32.totalorder %s19, 0
      %p135 = por %p133, %p134
      %p136 = scmp.le.s32.totalorder 1, %s13
      %p137 = scmp.lt.s32.totalorder %s13, 3
      %p138 = pnand %p136, %p137
      %p139 = pneg %p138
      // Predicated region
      $region9: #{newblock_forward.3} parent=5 // pred_check
        _
      $region10: #{newblock_forward.3} parent=5 // pred_check_branch
        %141 = sbr.rel (%p138) target = $region12
      $region11: #{newblock_forward.3} parent=5 // pred_region
        %s142 = ssub.s32 %s13, 1
        // Predicated region
        $region13: #{newblock_forward.3} parent=11 // pred_check
          %p143 = pneg %p60
        $region14: #{newblock_forward.3} parent=11 // pred_check_branch
          %145 = sbr.rel (%p143) target = $region16
        $region15: #{newblock_forward.3} parent=11 // pred_region
          _
        $region16: #{newblock_forward.3} parent=11 // pred_fallthru
          _
        // Predicated region
        $region17: #{newblock_forward.3} parent=11 // pred_check
          %p146 = pneg %p81
        $region18: #{newblock_forward.3} parent=11 // pred_check_branch
          %148 = sbr.rel (%p146) target = $region20
        $region19: #{newblock_forward.3} parent=11 // pred_region
          _
        $region20: #{newblock_forward.3} parent=11 // pred_fallthru
          _
        // Predicated region
        $region21: #{newblock_forward.3} parent=11 // pred_check
          %p149 = pneg %p102
        $region22: #{newblock_forward.3} parent=11 // pred_check_branch
          %151 = sbr.rel (%p149) target = $region24
        $region23: #{newblock_forward.3} parent=11 // pred_region
          _
        $region24: #{newblock_forward.3} parent=11 // pred_fallthru
          _
      $region12: #{newblock_forward.3} parent=5 // pred_fallthru
        _
      %p152 = scmp.lt.s32.totalorder %s13, 2
      // Predicated region
      $region25: #{newblock_forward.3} parent=5 // pred_check
        %p153 = pneg %p152
      $region26: #{newblock_forward.3} parent=5 // pred_check_branch
        %155 = sbr.rel (%p153) target = $region28
      $region27: #{newblock_forward.3} parent=5 // pred_region
        // Predicated region
        $region29: #{newblock_forward.3} parent=27 // pred_check
          %p156 = pneg %p33
        $region30: #{newblock_forward.3} parent=27 // pred_check_branch
          %158 = sbr.rel (%p156) target = $region32
        $region31: #{newblock_forward.3} parent=27 // pred_region
          %p159 = scmp.lt.s32.totalorder %s13, 1
          %s160 = scalar_select %p159, %s13, 1
          %s161 = smul.addr %s160, 54
          %s162 = smul.addr %s161, 8
          %s163 = scalar_lea.vmem %s0, %s162
        $region32: #{newblock_forward.3} parent=27 // pred_fallthru
          _
      $region28: #{newblock_forward.3} parent=5 // pred_fallthru
        _
      %p164 = scmp.le.s32.totalorder 1, %s13
      %p165 = scmp.lt.s32.totalorder %s13, 3
      %p166 = pnand %p164, %p165
      %p167 = pneg %p166
      // Predicated region
      $region33: #{newblock_forward.3} parent=5 // pred_check
        _
      $region34: #{newblock_forward.3} parent=5 // pred_check_branch
        %169 = sbr.rel (%p166) target = $region36
      $region35: #{newblock_forward.3} parent=5 // pred_region
        %s170 = ssub.s32 %s13, 1
        %p171 = scmp.lt.s32.totalorder %s18, 1
        %s172 = scalar_select %p171, %s18, 1
        %s173 = smul.addr %s172, 54
        %s174 = smul.addr %s173, 8
        %s175 = scalar_lea.vmem %s0, %s174
        %p176 = pneg %p39
        %p177 = pneg %p36
        %p178 = pneg %p60
        %p179 = pneg %p57
        %p180 = pneg %p81
        %p181 = pneg %p78
        %p182 = pneg %p102
        %p183 = pneg %p99
        %p184 = pneg %p128
        %p185 = pneg %p125
        %s186 = sand.u32 %s115, 1
        %s187 = scalar_lea.sflag [#allocation3], %s186
        %s188 = sand.u32 %s115, 1
        %s189 = smul.addr %s188, 256
        %s190 = scalar_lea.vmem [#allocation2], %s189
        %p191 = scmp.lt.s32.totalorder %s18, 1
        %s192 = scalar_select %p191, %s18, 1
        %s193 = smul.addr %s192, 54
        %s194 = smul.addr %s193, 8
        %s195 = scalar_lea.vmem %s0, %s194
        %v197 = vld [vmem:[%s195] sm:$0xff]
        %v198 = vld [vmem:[%s195 + $0x8] sm:$0xff]
        %v199 = vld [vmem:[%s195 + $0x18] sm:$0xff]
        %v200 = vld [vmem:[%s195 + $0x20] sm:$0xff]
        %v201 = vld [vmem:[%s195 + $0x30] sm:$0xff]
        %v202 = vld [vmem:[%s195 + $0x38] sm:$0xff]
        %v203 = vld [vmem:[%s195 + $0x48] sm:$0xff]
        %v204 = vld [vmem:[%s195 + $0x50] sm:$0xff]
        %v205 = vld [vmem:[%s195 + $0x60] sm:$0xff]
        %v206 = vld [vmem:[%s195 + $0x68] sm:$0xff]
        %v207 = vld [vmem:[%s195 + $0x78] sm:$0xff]
        %v208 = vld [vmem:[%s195 + $0x80] sm:$0xff]
        %v209 = vld [vmem:[%s195 + $0x90] sm:$0xff]
        %v210 = vld [vmem:[%s195 + $0x98] sm:$0xff]
        %v211 = vld [vmem:[%s195 + $0xa8] sm:$0xff]
        %v212 = vld [vmem:[%s195 + $0xb0] sm:$0xff]
        %v213 = vld [vmem:[%s195 + $0xc0] sm:$0xff]
        %v214 = vld [vmem:[%s195 + $0xc8] sm:$0xff]
        %v215 = vld [vmem:[%s195 + $0xd8] sm:$0xff]
        %v216 = vld [vmem:[%s195 + $0xe0] sm:$0xff]
        %v217 = vld [vmem:[%s195 + $0xf0] sm:$0xff]
        %v218 = vld [vmem:[%s195 + $0xf8] sm:$0xff]
        %v219 = vld [vmem:[%s195 + $0x108] sm:$0xff]
        %v220 = vld [vmem:[%s195 + $0x110] sm:$0xff]
        %v221 = vld [vmem:[%s195 + $0x120] sm:$0xff]
        %v222 = vld [vmem:[%s195 + $0x128] sm:$0xff]
        %v223 = vld [vmem:[%s195 + $0x138] sm:$0xff]
        %v224 = vld [vmem:[%s195 + $0x140] sm:$0xff]
        %v225 = vld [vmem:[%s195 + $0x150] sm:$0xff]
        %v226 = vld [vmem:[%s195 + $0x158] sm:$0xff]
        %v227 = vld [vmem:[%s195 + $0x168] sm:$0xff]
        %v228 = vld [vmem:[%s195 + $0x170] sm:$0xff]
        %v229 = vpack.c.bf16 %v198, %v197
        %v230 = vpack.c.bf16 %v200, %v199
        %v231 = vpack.c.bf16 %v202, %v201
        %v232 = vpack.c.bf16 %v204, %v203
        %v233 = vpack.c.bf16 %v206, %v205
        %v234 = vpack.c.bf16 %v208, %v207
        %v235 = vpack.c.bf16 %v210, %v209
        %v236 = vpack.c.bf16 %v212, %v211
        %v237 = vpack.c.bf16 %v214, %v213
        %v238 = vpack.c.bf16 %v216, %v215
        %v239 = vpack.c.bf16 %v218, %v217
        %v240 = vpack.c.bf16 %v220, %v219
        %v241 = vpack.c.bf16 %v222, %v221
        %v242 = vpack.c.bf16 %v224, %v223
        %v243 = vpack.c.bf16 %v226, %v225
        %v244 = vpack.c.bf16 %v228, %v227
        %v245 = vld [vmem:[%s1] sm:$0xf]
        %v246 = vld [vmem:[%s1 + $0x4] sm:$0xf]
        %v247 = vld [vmem:[%s1 + $0x8] sm:$0xf]
        %v248 = vld [vmem:[%s1 + $0xc] sm:$0xf]
        %v249 = vld [vmem:[%s1 + $0x10] sm:$0xf]
        %v250 = vld [vmem:[%s1 + $0x14] sm:$0xf]
        %v251 = vld [vmem:[%s1 + $0x18] sm:$0xf]
        %v252 = vld [vmem:[%s1 + $0x1c] sm:$0xf]
        %v253 = vld [vmem:[%s1 + $0x20] sm:$0xf]
        %v254 = vld [vmem:[%s1 + $0x24] sm:$0xf]
        %v255 = vld [vmem:[%s1 + $0x28] sm:$0xf]
        %v256 = vld [vmem:[%s1 + $0x2c] sm:$0xf]
        %v257 = vld [vmem:[%s1 + $0x30] sm:$0xf]
        %v258 = vld [vmem:[%s1 + $0x34] sm:$0xf]
        %v259 = vld [vmem:[%s1 + $0x38] sm:$0xf]
        %v260 = vld [vmem:[%s1 + $0x3c] sm:$0xf]
        %v261 = vld [vmem:[%s195 + $0x1] sm:$0xff]
        %v262 = vld [vmem:[%s195 + $0x9] sm:$0xff]
        %v263 = vld [vmem:[%s195 + $0x19] sm:$0xff]
        %v264 = vld [vmem:[%s195 + $0x21] sm:$0xff]
        %v265 = vld [vmem:[%s195 + $0x31] sm:$0xff]
        %v266 = vld [vmem:[%s195 + $0x39] sm:$0xff]
        %v267 = vld [vmem:[%s195 + $0x49] sm:$0xff]
        %v268 = vld [vmem:[%s195 + $0x51] sm:$0xff]
        %v269 = vld [vmem:[%s195 + $0x61] sm:$0xff]
        %v270 = vld [vmem:[%s195 + $0x69] sm:$0xff]
        %v271 = vld [vmem:[%s195 + $0x79] sm:$0xff]
        %v272 = vld [vmem:[%s195 + $0x81] sm:$0xff]
        %v273 = vld [vmem:[%s195 + $0x91] sm:$0xff]
        %v274 = vld [vmem:[%s195 + $0x99] sm:$0xff]
        %v275 = vld [vmem:[%s195 + $0xa9] sm:$0xff]
        %v276 = vld [vmem:[%s195 + $0xb1] sm:$0xff]
        %v277 = vld [vmem:[%s195 + $0xc1] sm:$0xff]
        %v278 = vld [vmem:[%s195 + $0xc9] sm:$0xff]
        %v279 = vld [vmem:[%s195 + $0xd9] sm:$0xff]
        %v280 = vld [vmem:[%s195 + $0xe1] sm:$0xff]
        %v281 = vld [vmem:[%s195 + $0xf1] sm:$0xff]
        %v282 = vld [vmem:[%s195 + $0xf9] sm:$0xff]
        %v283 = vld [vmem:[%s195 + $0x109] sm:$0xff]
        %v284 = vld [vmem:[%s195 + $0x111] sm:$0xff]
        %v285 = vld [vmem:[%s195 + $0x121] sm:$0xff]
        %v286 = vld [vmem:[%s195 + $0x129] sm:$0xff]
        %v287 = vld [vmem:[%s195 + $0x139] sm:$0xff]
        %v288 = vld [vmem:[%s195 + $0x141] sm:$0xff]
        %v289 = vld [vmem:[%s195 + $0x151] sm:$0xff]
        %v290 = vld [vmem:[%s195 + $0x159] sm:$0xff]
        %v291 = vld [vmem:[%s195 + $0x169] sm:$0xff]
        %v292 = vld [vmem:[%s195 + $0x171] sm:$0xff]
        %v293 = vpack.c.bf16 %v262, %v261
        %v294 = vpack.c.bf16 %v264, %v263
        %v295 = vpack.c.bf16 %v266, %v265
        %v296 = vpack.c.bf16 %v268, %v267
        %v297 = vpack.c.bf16 %v270, %v269
        %v298 = vpack.c.bf16 %v272, %v271
        %v299 = vpack.c.bf16 %v274, %v273
        %v300 = vpack.c.bf16 %v276, %v275
        %v301 = vpack.c.bf16 %v278, %v277
        %v302 = vpack.c.bf16 %v280, %v279
        %v303 = vpack.c.bf16 %v282, %v281
        %v304 = vpack.c.bf16 %v284, %v283
        %v305 = vpack.c.bf16 %v286, %v285
        %v306 = vpack.c.bf16 %v288, %v287
        %v307 = vpack.c.bf16 %v290, %v289
        %v308 = vpack.c.bf16 %v292, %v291
        %s309 = scalar_lea.vmem %s1, 64
        %v310 = vld [vmem:[%s309] sm:$0xf]
        %v311 = vld [vmem:[%s309 + $0x4] sm:$0xf]
        %v312 = vld [vmem:[%s309 + $0x8] sm:$0xf]
        %v313 = vld [vmem:[%s309 + $0xc] sm:$0xf]
        %v314 = vld [vmem:[%s309 + $0x10] sm:$0xf]
        %v315 = vld [vmem:[%s309 + $0x14] sm:$0xf]
        %v316 = vld [vmem:[%s309 + $0x18] sm:$0xf]
        %v317 = vld [vmem:[%s309 + $0x1c] sm:$0xf]
        %v318 = vld [vmem:[%s309 + $0x20] sm:$0xf]
        %v319 = vld [vmem:[%s309 + $0x24] sm:$0xf]
        %v320 = vld [vmem:[%s309 + $0x28] sm:$0xf]
        %v321 = vld [vmem:[%s309 + $0x2c] sm:$0xf]
        %v322 = vld [vmem:[%s309 + $0x30] sm:$0xf]
        %v323 = vld [vmem:[%s309 + $0x34] sm:$0xf]
        %v324 = vld [vmem:[%s309 + $0x38] sm:$0xf]
        %v325 = vld [vmem:[%s309 + $0x3c] sm:$0xf]
        %v342 = vunpack.c.l.b16 %v310
        %v343 = vunpack.c.l.b16 %v311
        %v344 = vunpack.c.l.b16 %v312
        %v345 = vunpack.c.l.b16 %v313
        %v346 = vunpack.c.l.b16 %v314
        %v347 = vunpack.c.l.b16 %v315
        %v348 = vunpack.c.l.b16 %v316
        %v349 = vunpack.c.l.b16 %v317
        %v350 = vunpack.c.l.b16 %v318
        %v351 = vunpack.c.l.b16 %v319
        %v352 = vunpack.c.l.b16 %v320
        %v353 = vunpack.c.l.b16 %v321
        %v354 = vunpack.c.l.b16 %v322
        %v355 = vunpack.c.l.b16 %v323
        %v356 = vunpack.c.l.b16 %v324
        %v357 = vunpack.c.l.b16 %v325
        %v358 = vpack.c.b16 %v343, %v342
        %v359 = vpack.c.b16 %v345, %v344
        %v360 = vpack.c.b16 %v347, %v346
        %v361 = vpack.c.b16 %v349, %v348
        %v362 = vpack.c.b16 %v351, %v350
        %v363 = vpack.c.b16 %v353, %v352
        %v364 = vpack.c.b16 %v355, %v354
        %v365 = vpack.c.b16 %v357, %v356
        %374 = vmatprep.subr.bf16.mxu0 0
        %375 = vmatpush1.bf16.msra.mxu0 %v358
        %376 = vmatprep.subr.bf16.mxu0 0
        %377 = vmatpush1.bf16.msra.mxu0 %v359
        %378 = vmatprep.subr.bf16.mxu0 0
        %379 = vmatpush1.bf16.msra.mxu0 %v360
        %380 = vmatprep.subr.bf16.mxu0 0
        %381 = vmatpush1.bf16.msra.mxu0 %v361
        %382 = vmatprep.subr.bf16.mxu0 0
        %383 = vmatpush1.bf16.msra.mxu0 %v362
        %384 = vmatprep.subr.bf16.mxu0 0
        %385 = vmatpush1.bf16.msra.mxu0 %v363
        %386 = vmatprep.subr.bf16.mxu0 0
        %387 = vmatpush1.bf16.msra.mxu0 %v364
        %388 = vmatprep.subr.bf16.mxu0 0
        %389 = vmatpush1.bf16.msra.mxu0 %v365
        %390 = vmatprep.subr.bf16.mxu0 0
        %391 = vmatpush1.bf16.msra.mxu0 0
        %392 = vmatprep.subr.bf16.mxu0 0
        %393 = vmatpush1.bf16.msra.mxu0 0
        %394 = vmatprep.subr.bf16.mxu0 0
        %395 = vmatpush1.bf16.msra.mxu0 0
        %396 = vmatprep.subr.bf16.mxu0 0
        %397 = vmatpush1.bf16.msra.mxu0 0
        %398 = vmatprep.subr.bf16.mxu0 0
        %399 = vmatpush1.bf16.msra.mxu0 0
        %400 = vmatprep.subr.bf16.mxu0 0
        %401 = vmatpush1.bf16.msra.mxu0 0
        %402 = vmatprep.subr.bf16.mxu0 0
        %403 = vmatpush1.bf16.msra.mxu0 0
        %404 = vmatprep.subr.bf16.mxu0 0
        %405 = vmatpush1.bf16.msra.mxu0 0
        %406 = vmatprep.mubr.bf16.mxu0 0
        %407 = vmatmul.mubr.bf16.gmra.mrb[0].mxu0 %v293
        %v408 = vpop.f32.mrb[0].mxu0
        %v409 = vadd.f32 0.0, %v408
        %v410 = vpop.f32.mrb[0].mxu0
        %v411 = vpop.f32.mrb[0].mxu0
        %v412 = vadd.f32 0.0, %v411
        %v413 = vpop.f32.mrb[0].mxu0
        %414 = vmatprep.mubr.bf16.mxu0 0
        %415 = vmatmul.mubr.bf16.gmra.mrb[0].mxu0 %v294
        %v416 = vpop.f32.mrb[0].mxu0
        %v417 = vadd.f32 0.0, %v416
        %v418 = vpop.f32.mrb[0].mxu0
        %v419 = vpop.f32.mrb[0].mxu0
        %v420 = vadd.f32 0.0, %v419
        %v421 = vpop.f32.mrb[0].mxu0
        %422 = vmatprep.mubr.bf16.mxu0 0
        %423 = vmatmul.mubr.bf16.gmra.mrb[0].mxu0 %v295
        %v424 = vpop.f32.mrb[0].mxu0
        %v425 = vadd.f32 0.0, %v424
        %v426 = vpop.f32.mrb[0].mxu0
        %v427 = vpop.f32.mrb[0].mxu0
        %v428 = vadd.f32 0.0, %v427
        %v429 = vpop.f32.mrb[0].mxu0
        %430 = vmatprep.mubr.bf16.mxu0 0
        %431 = vmatmul.mubr.bf16.gmra.mrb[0].mxu0 %v296
        %v432 = vpop.f32.mrb[0].mxu0
        %v433 = vadd.f32 0.0, %v432
        %v434 = vpop.f32.mrb[0].mxu0
        %v435 = vpop.f32.mrb[0].mxu0
        %v436 = vadd.f32 0.0, %v435
        %v437 = vpop.f32.mrb[0].mxu0
        %438 = vmatprep.mubr.bf16.mxu0 0
        %439 = vmatmul.mubr.bf16.gmra.mrb[0].mxu0 %v297
        %v440 = vpop.f32.mrb[0].mxu0
        %v441 = vadd.f32 0.0, %v440
        %v442 = vpop.f32.mrb[0].mxu0
        %v443 = vpop.f32.mrb[0].mxu0
        %v444 = vadd.f32 0.0, %v443
        %v445 = vpop.f32.mrb[0].mxu0
        %446 = vmatprep.mubr.bf16.mxu0 0
        %447 = vmatmul.mubr.bf16.gmra.mrb[0].mxu0 %v298
        %v448 = vpop.f32.mrb[0].mxu0
        %v449 = vadd.f32 0.0, %v448
        %v450 = vpop.f32.mrb[0].mxu0
        %v451 = vpop.f32.mrb[0].mxu0
        %v452 = vadd.f32 0.0, %v451
        %v453 = vpop.f32.mrb[0].mxu0
        %454 = vmatprep.mubr.bf16.mxu0 0
        %455 = vmatmul.mubr.bf16.gmra.mrb[0].mxu0 %v299
        %v456 = vpop.f32.mrb[0].mxu0
        %v457 = vadd.f32 0.0, %v456
        %v458 = vpop.f32.mrb[0].mxu0
        %v459 = vpop.f32.mrb[0].mxu0
        %v460 = vadd.f32 0.0, %v459
        %v461 = vpop.f32.mrb[0].mxu0
        %462 = vmatprep.mubr.bf16.mxu0 0
        %463 = vmatmul.mubr.bf16.gmra.mrb[0].mxu0 %v300
        %v464 = vpop.f32.mrb[0].mxu0
        %v465 = vadd.f32 0.0, %v464
        %v466 = vpop.f32.mrb[0].mxu0
        %v467 = vpop.f32.mrb[0].mxu0
        %v468 = vadd.f32 0.0, %v467
        %v469 = vpop.f32.mrb[0].mxu0
        %470 = vmatprep.mubr.bf16.mxu0 0
        %471 = vmatmul.mubr.bf16.gmra.mrb[0].mxu0 %v301
        %v472 = vpop.f32.mrb[0].mxu0
        %v473 = vadd.f32 0.0, %v472
        %v474 = vpop.f32.mrb[0].mxu0
        %v475 = vpop.f32.mrb[0].mxu0
        %v476 = vadd.f32 0.0, %v475
        %v477 = vpop.f32.mrb[0].mxu0
        %478 = vmatprep.mubr.bf16.mxu0 0
        %479 = vmatmul.mubr.bf16.gmra.mrb[0].mxu0 %v302
        %v480 = vpop.f32.mrb[0].mxu0
        %v481 = vadd.f32 0.0, %v480
        %v482 = vpop.f32.mrb[0].mxu0
        %v483 = vpop.f32.mrb[0].mxu0
        %v484 = vadd.f32 0.0, %v483
        %v485 = vpop.f32.mrb[0].mxu0
        %486 = vmatprep.mubr.bf16.mxu0 0
        %487 = vmatmul.mubr.bf16.gmra.mrb[0].mxu0 %v303
        %v488 = vpop.f32.mrb[0].mxu0
        %v489 = vadd.f32 0.0, %v488
        %v490 = vpop.f32.mrb[0].mxu0
        %v491 = vpop.f32.mrb[0].mxu0
        %v492 = vadd.f32 0.0, %v491
        %v493 = vpop.f32.mrb[0].mxu0
        %494 = vmatprep.mubr.bf16.mxu0 0
        %495 = vmatmul.mubr.bf16.gmra.mrb[0].mxu0 %v304
        %v496 = vpop.f32.mrb[0].mxu0
        %v497 = vadd.f32 0.0, %v496
        %v498 = vpop.f32.mrb[0].mxu0
        %v499 = vpop.f32.mrb[0].mxu0
        %v500 = vadd.f32 0.0, %v499
        %v501 = vpop.f32.mrb[0].mxu0
        %502 = vmatprep.mubr.bf16.mxu0 0
        %503 = vmatmul.mubr.bf16.gmra.mrb[0].mxu0 %v305
        %v504 = vpop.f32.mrb[0].mxu0
        %v505 = vadd.f32 0.0, %v504
        %v506 = vpop.f32.mrb[0].mxu0
        %v507 = vpop.f32.mrb[0].mxu0
        %v508 = vadd.f32 0.0, %v507
        %v509 = vpop.f32.mrb[0].mxu0
        %510 = vmatprep.mubr.bf16.mxu0 0
        %511 = vmatmul.mubr.bf16.gmra.mrb[0].mxu0 %v306
        %v512 = vpop.f32.mrb[0].mxu0
        %v513 = vadd.f32 0.0, %v512
        %v514 = vpop.f32.mrb[0].mxu0
        %v515 = vpop.f32.mrb[0].mxu0
        %v516 = vadd.f32 0.0, %v515
        %v517 = vpop.f32.mrb[0].mxu0
        %518 = vmatprep.mubr.bf16.mxu0 0
        %519 = vmatmul.mubr.bf16.gmra.mrb[0].mxu0 %v307
        %v520 = vpop.f32.mrb[0].mxu0
        %v521 = vadd.f32 0.0, %v520
        %v522 = vpop.f32.mrb[0].mxu0
        %v523 = vpop.f32.mrb[0].mxu0
        %v524 = vadd.f32 0.0, %v523
        %v525 = vpop.f32.mrb[0].mxu0
        %526 = vmatprep.mubr.bf16.mxu0 0
        %527 = vmatmul.mubr.bf16.gmra.mrb[0].mxu0 %v308
        %v528 = vpop.f32.mrb[0].mxu0
        %v529 = vadd.f32 0.0, %v528
        %v530 = vpop.f32.mrb[0].mxu0
        %v531 = vpop.f32.mrb[0].mxu0
        %v532 = vadd.f32 0.0, %v531
        %v533 = vpop.f32.mrb[0].mxu0
        %534 = vdwg.mxu0
        %v551 = vunpack.c.l.b16 %v245
        %v552 = vunpack.c.l.b16 %v246
        %v553 = vunpack.c.l.b16 %v247
        %v554 = vunpack.c.l.b16 %v248
        %v555 = vunpack.c.l.b16 %v249
        %v556 = vunpack.c.l.b16 %v250
        %v557 = vunpack.c.l.b16 %v251
        %v558 = vunpack.c.l.b16 %v252
        %v559 = vunpack.c.l.b16 %v253
        %v560 = vunpack.c.l.b16 %v254
        %v561 = vunpack.c.l.b16 %v255
        %v562 = vunpack.c.l.b16 %v256
        %v563 = vunpack.c.l.b16 %v257
        %v564 = vunpack.c.l.b16 %v258
        %v565 = vunpack.c.l.b16 %v259
        %v566 = vunpack.c.l.b16 %v260
        %v567 = vpack.c.b16 %v552, %v551
        %v568 = vpack.c.b16 %v554, %v553
        %v569 = vpack.c.b16 %v556, %v555
        %v570 = vpack.c.b16 %v558, %v557
        %v571 = vpack.c.b16 %v560, %v559
        %v572 = vpack.c.b16 %v562, %v561
        %v573 = vpack.c.b16 %v564, %v563
        %v574 = vpack.c.b16 %v566, %v565
        %583 = vmatprep.subr.bf16.mxu0 0
        %584 = vmatpush1.bf16.msra.mxu0 %v567
        %585 = vmatprep.subr.bf16.mxu0 0
        %586 = vmatpush1.bf16.msra.mxu0 %v568
        %587 = vmatprep.subr.bf16.mxu0 0
        %588 = vmatpush1.bf16.msra.mxu0 %v569
        %589 = vmatprep.subr.bf16.mxu0 0
        %590 = vmatpush1.bf16.msra.mxu0 %v570
        %591 = vmatprep.subr.bf16.mxu0 0
        %592 = vmatpush1.bf16.msra.mxu0 %v571
        %593 = vmatprep.subr.bf16.mxu0 0
        %594 = vmatpush1.bf16.msra.mxu0 %v572
        %595 = vmatprep.subr.bf16.mxu0 0
        %596 = vmatpush1.bf16.msra.mxu0 %v573
        %597 = vmatprep.subr.bf16.mxu0 0
        %598 = vmatpush1.bf16.msra.mxu0 %v574
        %599 = vmatprep.subr.bf16.mxu0 0
        %600 = vmatpush1.bf16.msra.mxu0 0
        %601 = vmatprep.subr.bf16.mxu0 0
        %602 = vmatpush1.bf16.msra.mxu0 0
        %603 = vmatprep.subr.bf16.mxu0 0
        %604 = vmatpush1.bf16.msra.mxu0 0
        %605 = vmatprep.subr.bf16.mxu0 0
        %606 = vmatpush1.bf16.msra.mxu0 0
        %607 = vmatprep.subr.bf16.mxu0 0
        %608 = vmatpush1.bf16.msra.mxu0 0
        %609 = vmatprep.subr.bf16.mxu0 0
        %610 = vmatpush1.bf16.msra.mxu0 0
        %611 = vmatprep.subr.bf16.mxu0 0
        %612 = vmatpush1.bf16.msra.mxu0 0
        %613 = vmatprep.subr.bf16.mxu0 0
        %614 = vmatpush1.bf16.msra.mxu0 0
        %615 = vmatprep.mubr.bf16.mxu0 0
        %616 = vmatmul.mubr.bf16.gmra.mrb[0].mxu0 %v229
        %v617 = vpop.f32.mrb[0].mxu0
        %v618 = vadd.f32 %v409, %v617
        %v619 = vpop.f32.mrb[0].mxu0
        %v620 = vpop.f32.mrb[0].mxu0
        %v621 = vadd.f32 %v412, %v620
        %v622 = vpop.f32.mrb[0].mxu0
        %623 = vmatprep.mubr.bf16.mxu0 0
        %624 = vmatmul.mubr.bf16.gmra.mrb[0].mxu0 %v230
        %v625 = vpop.f32.mrb[0].mxu0
        %v626 = vadd.f32 %v417, %v625
        %v627 = vpop.f32.mrb[0].mxu0
        %v628 = vpop.f32.mrb[0].mxu0
        %v629 = vadd.f32 %v420, %v628
        %v630 = vpop.f32.mrb[0].mxu0
        %631 = vmatprep.mubr.bf16.mxu0 0
        %632 = vmatmul.mubr.bf16.gmra.mrb[0].mxu0 %v231
        %v633 = vpop.f32.mrb[0].mxu0
        %v634 = vadd.f32 %v425, %v633
        %v635 = vpop.f32.mrb[0].mxu0
        %v636 = vpop.f32.mrb[0].mxu0
        %v637 = vadd.f32 %v428, %v636
        %v638 = vpop.f32.mrb[0].mxu0
        %639 = vmatprep.mubr.bf16.mxu0 0
        %640 = vmatmul.mubr.bf16.gmra.mrb[0].mxu0 %v232
        %v641 = vpop.f32.mrb[0].mxu0
        %v642 = vadd.f32 %v433, %v641
        %v643 = vpop.f32.mrb[0].mxu0
        %v644 = vpop.f32.mrb[0].mxu0
        %v645 = vadd.f32 %v436, %v644
        %v646 = vpop.f32.mrb[0].mxu0
        %647 = vmatprep.mubr.bf16.mxu0 0
        %648 = vmatmul.mubr.bf16.gmra.mrb[0].mxu0 %v233
        %v649 = vpop.f32.mrb[0].mxu0
        %v650 = vadd.f32 %v441, %v649
        %v651 = vpop.f32.mrb[0].mxu0
        %v652 = vpop.f32.mrb[0].mxu0
        %v653 = vadd.f32 %v444, %v652
        %v654 = vpop.f32.mrb[0].mxu0
        %655 = vmatprep.mubr.bf16.mxu0 0
        %656 = vmatmul.mubr.bf16.gmra.mrb[0].mxu0 %v234
        %v657 = vpop.f32.mrb[0].mxu0
        %v658 = vadd.f32 %v449, %v657
        %v659 = vpop.f32.mrb[0].mxu0
        %v660 = vpop.f32.mrb[0].mxu0
        %v661 = vadd.f32 %v452, %v660
        %v662 = vpop.f32.mrb[0].mxu0
        %663 = vmatprep.mubr.bf16.mxu0 0
        %664 = vmatmul.mubr.bf16.gmra.mrb[0].mxu0 %v235
        %v665 = vpop.f32.mrb[0].mxu0
        %v666 = vadd.f32 %v457, %v665
        %v667 = vpop.f32.mrb[0].mxu0
        %v668 = vpop.f32.mrb[0].mxu0
        %v669 = vadd.f32 %v460, %v668
        %v670 = vpop.f32.mrb[0].mxu0
        %671 = vmatprep.mubr.bf16.mxu0 0
        %672 = vmatmul.mubr.bf16.gmra.mrb[0].mxu0 %v236
        %v673 = vpop.f32.mrb[0].mxu0
        %v674 = vadd.f32 %v465, %v673
        %v675 = vpop.f32.mrb[0].mxu0
        %v676 = vpop.f32.mrb[0].mxu0
        %v677 = vadd.f32 %v468, %v676
        %v678 = vpop.f32.mrb[0].mxu0
        %679 = vmatprep.mubr.bf16.mxu0 0
        %680 = vmatmul.mubr.bf16.gmra.mrb[0].mxu0 %v237
        %v681 = vpop.f32.mrb[0].mxu0
        %v682 = vadd.f32 %v473, %v681
        %v683 = vpop.f32.mrb[0].mxu0
        %v684 = vpop.f32.mrb[0].mxu0
        %v685 = vadd.f32 %v476, %v684
        %v686 = vpop.f32.mrb[0].mxu0
        %687 = vmatprep.mubr.bf16.mxu0 0
        %688 = vmatmul.mubr.bf16.gmra.mrb[0].mxu0 %v238
        %v689 = vpop.f32.mrb[0].mxu0
        %v690 = vadd.f32 %v481, %v689
        %v691 = vpop.f32.mrb[0].mxu0
        %v692 = vpop.f32.mrb[0].mxu0
        %v693 = vadd.f32 %v484, %v692
        %v694 = vpop.f32.mrb[0].mxu0
        %695 = vmatprep.mubr.bf16.mxu0 0
        %696 = vmatmul.mubr.bf16.gmra.mrb[0].mxu0 %v239
        %v697 = vpop.f32.mrb[0].mxu0
        %v698 = vadd.f32 %v489, %v697
        %v699 = vpop.f32.mrb[0].mxu0
        %v700 = vpop.f32.mrb[0].mxu0
        %v701 = vadd.f32 %v492, %v700
        %v702 = vpop.f32.mrb[0].mxu0
        %703 = vmatprep.mubr.bf16.mxu0 0
        %704 = vmatmul.mubr.bf16.gmra.mrb[0].mxu0 %v240
        %v705 = vpop.f32.mrb[0].mxu0
        %v706 = vadd.f32 %v497, %v705
        %v707 = vpop.f32.mrb[0].mxu0
        %v708 = vpop.f32.mrb[0].mxu0
        %v709 = vadd.f32 %v500, %v708
        %v710 = vpop.f32.mrb[0].mxu0
        %711 = vmatprep.mubr.bf16.mxu0 0
        %712 = vmatmul.mubr.bf16.gmra.mrb[0].mxu0 %v241
        %v713 = vpop.f32.mrb[0].mxu0
        %v714 = vadd.f32 %v505, %v713
        %v715 = vpop.f32.mrb[0].mxu0
        %v716 = vpop.f32.mrb[0].mxu0
        %v717 = vadd.f32 %v508, %v716
        %v718 = vpop.f32.mrb[0].mxu0
        %719 = vmatprep.mubr.bf16.mxu0 0
        %720 = vmatmul.mubr.bf16.gmra.mrb[0].mxu0 %v242
        %v721 = vpop.f32.mrb[0].mxu0
        %v722 = vadd.f32 %v513, %v721
        %v723 = vpop.f32.mrb[0].mxu0
        %v724 = vpop.f32.mrb[0].mxu0
        %v725 = vadd.f32 %v516, %v724
        %v726 = vpop.f32.mrb[0].mxu0
        %727 = vmatprep.mubr.bf16.mxu0 0
        %728 = vmatmul.mubr.bf16.gmra.mrb[0].mxu0 %v243
        %v729 = vpop.f32.mrb[0].mxu0
        %v730 = vadd.f32 %v521, %v729
        %v731 = vpop.f32.mrb[0].mxu0
        %v732 = vpop.f32.mrb[0].mxu0
        %v733 = vadd.f32 %v524, %v732
        %v734 = vpop.f32.mrb[0].mxu0
        %735 = vmatprep.mubr.bf16.mxu0 0
        %736 = vmatmul.mubr.bf16.gmra.mrb[0].mxu0 %v244
        %v737 = vpop.f32.mrb[0].mxu0
        %v738 = vadd.f32 %v529, %v737
        %v739 = vpop.f32.mrb[0].mxu0
        %v740 = vpop.f32.mrb[0].mxu0
        %v741 = vadd.f32 %v532, %v740
        %v742 = vpop.f32.mrb[0].mxu0
        %743 = vdwg.mxu0
        %v744 = vld [vmem:[%s195 + $0x2] sm:$0xff]
        %v745 = vld [vmem:[%s195 + $0xa] sm:$0xff]
        %v746 = vld [vmem:[%s195 + $0x1a] sm:$0xff]
        %v747 = vld [vmem:[%s195 + $0x22] sm:$0xff]
        %v748 = vld [vmem:[%s195 + $0x32] sm:$0xff]
        %v749 = vld [vmem:[%s195 + $0x3a] sm:$0xff]
        %v750 = vld [vmem:[%s195 + $0x4a] sm:$0xff]
        %v751 = vld [vmem:[%s195 + $0x52] sm:$0xff]
        %v752 = vld [vmem:[%s195 + $0x62] sm:$0xff]
        %v753 = vld [vmem:[%s195 + $0x6a] sm:$0xff]
        %v754 = vld [vmem:[%s195 + $0x7a] sm:$0xff]
        %v755 = vld [vmem:[%s195 + $0x82] sm:$0xff]
        %v756 = vld [vmem:[%s195 + $0x92] sm:$0xff]
        %v757 = vld [vmem:[%s195 + $0x9a] sm:$0xff]
        %v758 = vld [vmem:[%s195 + $0xaa] sm:$0xff]
        %v759 = vld [vmem:[%s195 + $0xb2] sm:$0xff]
        %v760 = vld [vmem:[%s195 + $0xc2] sm:$0xff]
        %v761 = vld [vmem:[%s195 + $0xca] sm:$0xff]
        %v762 = vld [vmem:[%s195 + $0xda] sm:$0xff]
        %v763 = vld [vmem:[%s195 + $0xe2] sm:$0xff]
        %v764 = vld [vmem:[%s195 + $0xf2] sm:$0xff]
        %v765 = vld [vmem:[%s195 + $0xfa] sm:$0xff]
        %v766 = vld [vmem:[%s195 + $0x10a] sm:$0xff]
        %v767 = vld [vmem:[%s195 + $0x112] sm:$0xff]
        %v768 = vld [vmem:[%s195 + $0x122] sm:$0xff]
        %v769 = vld [vmem:[%s195 + $0x12a] sm:$0xff]
        %v770 = vld [vmem:[%s195 + $0x13a] sm:$0xff]
        %v771 = vld [vmem:[%s195 + $0x142] sm:$0xff]
        %v772 = vld [vmem:[%s195 + $0x152] sm:$0xff]
        %v773 = vld [vmem:[%s195 + $0x15a] sm:$0xff]
        %v774 = vld [vmem:[%s195 + $0x16a] sm:$0xff]
        %v775 = vld [vmem:[%s195 + $0x172] sm:$0xff]
        %v776 = vpack.c.bf16 %v745, %v744
        %v777 = vpack.c.bf16 %v747, %v746
        %v778 = vpack.c.bf16 %v749, %v748
        %v779 = vpack.c.bf16 %v751, %v750
        %v780 = vpack.c.bf16 %v753, %v752
        %v781 = vpack.c.bf16 %v755, %v754
        %v782 = vpack.c.bf16 %v757, %v756
        %v783 = vpack.c.bf16 %v759, %v758
        %v784 = vpack.c.bf16 %v761, %v760
        %v785 = vpack.c.bf16 %v763, %v762
        %v786 = vpack.c.bf16 %v765, %v764
        %v787 = vpack.c.bf16 %v767, %v766
        %v788 = vpack.c.bf16 %v769, %v768
        %v789 = vpack.c.bf16 %v771, %v770
        %v790 = vpack.c.bf16 %v773, %v772
        %v791 = vpack.c.bf16 %v775, %v774
        %s792 = scalar_lea.vmem %s1, 128
        %v793 = vld [vmem:[%s792] sm:$0xf]
        %v794 = vld [vmem:[%s792 + $0x4] sm:$0xf]
        %v795 = vld [vmem:[%s792 + $0x8] sm:$0xf]
        %v796 = vld [vmem:[%s792 + $0xc] sm:$0xf]
        %v797 = vld [vmem:[%s792 + $0x10] sm:$0xf]
        %v798 = vld [vmem:[%s792 + $0x14] sm:$0xf]
        %v799 = vld [vmem:[%s792 + $0x18] sm:$0xf]
        %v800 = vld [vmem:[%s792 + $0x1c] sm:$0xf]
        %v801 = vld [vmem:[%s792 + $0x20] sm:$0xf]
        %v802 = vld [vmem:[%s792 + $0x24] sm:$0xf]
        %v803 = vld [vmem:[%s792 + $0x28] sm:$0xf]
        %v804 = vld [vmem:[%s792 + $0x2c] sm:$0xf]
        %v805 = vld [vmem:[%s792 + $0x30] sm:$0xf]
        %v806 = vld [vmem:[%s792 + $0x34] sm:$0xf]
        %v807 = vld [vmem:[%s792 + $0x38] sm:$0xf]
        %v808 = vld [vmem:[%s792 + $0x3c] sm:$0xf]
        %v825 = vunpack.c.l.b16 %v793
        %v826 = vunpack.c.l.b16 %v794
        %v827 = vunpack.c.l.b16 %v795
        %v828 = vunpack.c.l.b16 %v796
        %v829 = vunpack.c.l.b16 %v797
        %v830 = vunpack.c.l.b16 %v798
        %v831 = vunpack.c.l.b16 %v799
        %v832 = vunpack.c.l.b16 %v800
        %v833 = vunpack.c.l.b16 %v801
        %v834 = vunpack.c.l.b16 %v802
        %v835 = vunpack.c.l.b16 %v803
        %v836 = vunpack.c.l.b16 %v804
        %v837 = vunpack.c.l.b16 %v805
        %v838 = vunpack.c.l.b16 %v806
        %v839 = vunpack.c.l.b16 %v807
        %v840 = vunpack.c.l.b16 %v808
        %v841 = vpack.c.b16 %v826, %v825
        %v842 = vpack.c.b16 %v828, %v827
        %v843 = vpack.c.b16 %v830, %v829
        %v844 = vpack.c.b16 %v832, %v831
        %v845 = vpack.c.b16 %v834, %v833
        %v846 = vpack.c.b16 %v836, %v835
        %v847 = vpack.c.b16 %v838, %v837
        %v848 = vpack.c.b16 %v840, %v839
        %857 = vmatprep.subr.bf16.mxu0 0
        %858 = vmatpush1.bf16.msra.mxu0 %v841
        %859 = vmatprep.subr.bf16.mxu0 0
        %860 = vmatpush1.bf16.msra.mxu0 %v842
        %861 = vmatprep.subr.bf16.mxu0 0
        %862 = vmatpush1.bf16.msra.mxu0 %v843
        %863 = vmatprep.subr.bf16.mxu0 0
        %864 = vmatpush1.bf16.msra.mxu0 %v844
        %865 = vmatprep.subr.bf16.mxu0 0
        %866 = vmatpush1.bf16.msra.mxu0 %v845
        %867 = vmatprep.subr.bf16.mxu0 0
        %868 = vmatpush1.bf16.msra.mxu0 %v846
        %869 = vmatprep.subr.bf16.mxu0 0
        %870 = vmatpush1.bf16.msra.mxu0 %v847
        %871 = vmatprep.subr.bf16.mxu0 0
        %872 = vmatpush1.bf16.msra.mxu0 %v848
        %873 = vmatprep.subr.bf16.mxu0 0
        %874 = vmatpush1.bf16.msra.mxu0 0
        %875 = vmatprep.subr.bf16.mxu0 0
        %876 = vmatpush1.bf16.msra.mxu0 0
        %877 = vmatprep.subr.bf16.mxu0 0
        %878 = vmatpush1.bf16.msra.mxu0 0
        %879 = vmatprep.subr.bf16.mxu0 0
        %880 = vmatpush1.bf16.msra.mxu0 0
        %881 = vmatprep.subr.bf16.mxu0 0
        %882 = vmatpush1.bf16.msra.mxu0 0
        %883 = vmatprep.subr.bf16.mxu0 0
        %884 = vmatpush1.bf16.msra.mxu0 0
        %885 = vmatprep.subr.bf16.mxu0 0
        %886 = vmatpush1.bf16.msra.mxu0 0
        %887 = vmatprep.subr.bf16.mxu0 0
        %888 = vmatpush1.bf16.msra.mxu0 0
        %889 = vmatprep.mubr.bf16.mxu0 0
        %890 = vmatmul.mubr.bf16.gmra.mrb[0].mxu0 %v776
        %v891 = vpop.f32.mrb[0].mxu0
        %v892 = vadd.f32 0.0, %v891
        %v893 = vpop.f32.mrb[0].mxu0
        %v894 = vpop.f32.mrb[0].mxu0
        %v895 = vadd.f32 0.0, %v894
        %v896 = vpop.f32.mrb[0].mxu0
        %897 = vmatprep.mubr.bf16.mxu0 0
        %898 = vmatmul.mubr.bf16.gmra.mrb[0].mxu0 %v777
        %v899 = vpop.f32.mrb[0].mxu0
        %v900 = vadd.f32 0.0, %v899
        %v901 = vpop.f32.mrb[0].mxu0
        %v902 = vpop.f32.mrb[0].mxu0
        %v903 = vadd.f32 0.0, %v902
        %v904 = vpop.f32.mrb[0].mxu0
        %905 = vmatprep.mubr.bf16.mxu0 0
        %906 = vmatmul.mubr.bf16.gmra.mrb[0].mxu0 %v778
        %v907 = vpop.f32.mrb[0].mxu0
        %v908 = vadd.f32 0.0, %v907
        %v909 = vpop.f32.mrb[0].mxu0
        %v910 = vpop.f32.mrb[0].mxu0
        %v911 = vadd.f32 0.0, %v910
        %v912 = vpop.f32.mrb[0].mxu0
        %913 = vmatprep.mubr.bf16.mxu0 0
        %914 = vmatmul.mubr.bf16.gmra.mrb[0].mxu0 %v779
        %v915 = vpop.f32.mrb[0].mxu0
        %v916 = vadd.f32 0.0, %v915
        %v917 = vpop.f32.mrb[0].mxu0
        %v918 = vpop.f32.mrb[0].mxu0
        %v919 = vadd.f32 0.0, %v918
        %v920 = vpop.f32.mrb[0].mxu0
        %921 = vmatprep.mubr.bf16.mxu0 0
        %922 = vmatmul.mubr.bf16.gmra.mrb[0].mxu0 %v780
        %v923 = vpop.f32.mrb[0].mxu0
        %v924 = vadd.f32 0.0, %v923
        %v925 = vpop.f32.mrb[0].mxu0
        %v926 = vpop.f32.mrb[0].mxu0
        %v927 = vadd.f32 0.0, %v926
        %v928 = vpop.f32.mrb[0].mxu0
        %929 = vmatprep.mubr.bf16.mxu0 0
        %930 = vmatmul.mubr.bf16.gmra.mrb[0].mxu0 %v781
        %v931 = vpop.f32.mrb[0].mxu0
        %v932 = vadd.f32 0.0, %v931
        %v933 = vpop.f32.mrb[0].mxu0
        %v934 = vpop.f32.mrb[0].mxu0
        %v935 = vadd.f32 0.0, %v934
        %v936 = vpop.f32.mrb[0].mxu0
        %937 = vmatprep.mubr.bf16.mxu0 0
        %938 = vmatmul.mubr.bf16.gmra.mrb[0].mxu0 %v782
        %v939 = vpop.f32.mrb[0].mxu0
        %v940 = vadd.f32 0.0, %v939
        %v941 = vpop.f32.mrb[0].mxu0
        %v942 = vpop.f32.mrb[0].mxu0
        %v943 = vadd.f32 0.0, %v942
        %v944 = vpop.f32.mrb[0].mxu0
        %945 = vmatprep.mubr.bf16.mxu0 0
        %946 = vmatmul.mubr.bf16.gmra.mrb[0].mxu0 %v783
        %v947 = vpop.f32.mrb[0].mxu0
        %v948 = vadd.f32 0.0, %v947
        %v949 = vpop.f32.mrb[0].mxu0
        %v950 = vpop.f32.mrb[0].mxu0
        %v951 = vadd.f32 0.0, %v950
        %v952 = vpop.f32.mrb[0].mxu0
        %953 = vmatprep.mubr.bf16.mxu0 0
        %954 = vmatmul.mubr.bf16.gmra.mrb[0].mxu0 %v784
        %v955 = vpop.f32.mrb[0].mxu0
        %v956 = vadd.f32 0.0, %v955
        %v957 = vpop.f32.mrb[0].mxu0
        %v958 = vpop.f32.mrb[0].mxu0
        %v959 = vadd.f32 0.0, %v958
        %v960 = vpop.f32.mrb[0].mxu0
        %961 = vmatprep.mubr.bf16.mxu0 0
        %962 = vmatmul.mubr.bf16.gmra.mrb[0].mxu0 %v785
        %v963 = vpop.f32.mrb[0].mxu0
        %v964 = vadd.f32 0.0, %v963
        %v965 = vpop.f32.mrb[0].mxu0
        %v966 = vpop.f32.mrb[0].mxu0
        %v967 = vadd.f32 0.0, %v966
        %v968 = vpop.f32.mrb[0].mxu0
        %969 = vmatprep.mubr.bf16.mxu0 0
        %970 = vmatmul.mubr.bf16.gmra.mrb[0].mxu0 %v786
        %v971 = vpop.f32.mrb[0].mxu0
        %v972 = vadd.f32 0.0, %v971
        %v973 = vpop.f32.mrb[0].mxu0
        %v974 = vpop.f32.mrb[0].mxu0
        %v975 = vadd.f32 0.0, %v974
        %v976 = vpop.f32.mrb[0].mxu0
        %977 = vmatprep.mubr.bf16.mxu0 0
        %978 = vmatmul.mubr.bf16.gmra.mrb[0].mxu0 %v787
        %v979 = vpop.f32.mrb[0].mxu0
        %v980 = vadd.f32 0.0, %v979
        %v981 = vpop.f32.mrb[0].mxu0
        %v982 = vpop.f32.mrb[0].mxu0
        %v983 = vadd.f32 0.0, %v982
        %v984 = vpop.f32.mrb[0].mxu0
        %985 = vmatprep.mubr.bf16.mxu0 0
        %986 = vmatmul.mubr.bf16.gmra.mrb[0].mxu0 %v788
        %v987 = vpop.f32.mrb[0].mxu0
        %v988 = vadd.f32 0.0, %v987
        %v989 = vpop.f32.mrb[0].mxu0
        %v990 = vpop.f32.mrb[0].mxu0
        %v991 = vadd.f32 0.0, %v990
        %v992 = vpop.f32.mrb[0].mxu0
        %993 = vmatprep.mubr.bf16.mxu0 0
        %994 = vmatmul.mubr.bf16.gmra.mrb[0].mxu0 %v789
        %v995 = vpop.f32.mrb[0].mxu0
        %v996 = vadd.f32 0.0, %v995
        %v997 = vpop.f32.mrb[0].mxu0
        %v998 = vpop.f32.mrb[0].mxu0
        %v999 = vadd.f32 0.0, %v998
        %v1000 = vpop.f32.mrb[0].mxu0
        %1001 = vmatprep.mubr.bf16.mxu0 0
        %1002 = vmatmul.mubr.bf16.gmra.mrb[0].mxu0 %v790
        %v1003 = vpop.f32.mrb[0].mxu0
        %v1004 = vadd.f32 0.0, %v1003
        %v1005 = vpop.f32.mrb[0].mxu0
        %v1006 = vpop.f32.mrb[0].mxu0
        %v1007 = vadd.f32 0.0, %v1006
        %v1008 = vpop.f32.mrb[0].mxu0
        %1009 = vmatprep.mubr.bf16.mxu0 0
        %1010 = vmatmul.mubr.bf16.gmra.mrb[0].mxu0 %v791
        %v1011 = vpop.f32.mrb[0].mxu0
        %v1012 = vadd.f32 0.0, %v1011
        %v1013 = vpop.f32.mrb[0].mxu0
        %v1014 = vpop.f32.mrb[0].mxu0
        %v1015 = vadd.f32 0.0, %v1014
        %v1016 = vpop.f32.mrb[0].mxu0
        %1017 = vdwg.mxu0
        %v1018 = vadd.f32 %v618, %v892
        %v1019 = vadd.f32 %v621, %v895
        %v1020 = vadd.f32 %v626, %v900
        %v1021 = vadd.f32 %v629, %v903
        %v1022 = vadd.f32 %v634, %v908
        %v1023 = vadd.f32 %v637, %v911
        %v1024 = vadd.f32 %v642, %v916
        %v1025 = vadd.f32 %v645, %v919
        %v1026 = vadd.f32 %v650, %v924
        %v1027 = vadd.f32 %v653, %v927
        %v1028 = vadd.f32 %v658, %v932
        %v1029 = vadd.f32 %v661, %v935
        %v1030 = vadd.f32 %v666, %v940
        %v1031 = vadd.f32 %v669, %v943
        %v1032 = vadd.f32 %v674, %v948
        %v1033 = vadd.f32 %v677, %v951
        %v1034 = vadd.f32 %v682, %v956
        %v1035 = vadd.f32 %v685, %v959
        %v1036 = vadd.f32 %v690, %v964
        %v1037 = vadd.f32 %v693, %v967
        %v1038 = vadd.f32 %v698, %v972
        %v1039 = vadd.f32 %v701, %v975
        %v1040 = vadd.f32 %v706, %v980
        %v1041 = vadd.f32 %v709, %v983
        %v1042 = vadd.f32 %v714, %v988
        %v1043 = vadd.f32 %v717, %v991
        %v1044 = vadd.f32 %v722, %v996
        %v1045 = vadd.f32 %v725, %v999
        %v1046 = vadd.f32 %v730, %v1004
        %v1047 = vadd.f32 %v733, %v1007
        %v1048 = vadd.f32 %v738, %v1012
        %v1049 = vadd.f32 %v741, %v1015
        %s1050 = scalar_lea.vmem %s195, 24
        %v1051 = vld [vmem:[%s1050] sm:$0xff]
        %v1052 = vld [vmem:[%s1050 + $0x8] sm:$0xff]
        %v1053 = vld [vmem:[%s1050 + $0x18] sm:$0xff]
        %v1054 = vld [vmem:[%s1050 + $0x20] sm:$0xff]
        %v1055 = vld [vmem:[%s1050 + $0x30] sm:$0xff]
        %v1056 = vld [vmem:[%s1050 + $0x38] sm:$0xff]
        %v1057 = vld [vmem:[%s1050 + $0x48] sm:$0xff]
        %v1058 = vld [vmem:[%s1050 + $0x50] sm:$0xff]
        %v1059 = vld [vmem:[%s1050 + $0x60] sm:$0xff]
        %v1060 = vld [vmem:[%s1050 + $0x68] sm:$0xff]
        %v1061 = vld [vmem:[%s1050 + $0x78] sm:$0xff]
        %v1062 = vld [vmem:[%s1050 + $0x80] sm:$0xff]
        %v1063 = vld [vmem:[%s1050 + $0x90] sm:$0xff]
        %v1064 = vld [vmem:[%s1050 + $0x98] sm:$0xff]
        %v1065 = vld [vmem:[%s1050 + $0xa8] sm:$0xff]
        %v1066 = vld [vmem:[%s1050 + $0xb0] sm:$0xff]
        %v1067 = vld [vmem:[%s1050 + $0xc0] sm:$0xff]
        %v1068 = vld [vmem:[%s1050 + $0xc8] sm:$0xff]
        %v1069 = vld [vmem:[%s1050 + $0xd8] sm:$0xff]
        %v1070 = vld [vmem:[%s1050 + $0xe0] sm:$0xff]
        %v1071 = vld [vmem:[%s1050 + $0xf0] sm:$0xff]
        %v1072 = vld [vmem:[%s1050 + $0xf8] sm:$0xff]
        %v1073 = vld [vmem:[%s1050 + $0x108] sm:$0xff]
        %v1074 = vld [vmem:[%s1050 + $0x110] sm:$0xff]
        %v1075 = vld [vmem:[%s1050 + $0x120] sm:$0xff]
        %v1076 = vld [vmem:[%s1050 + $0x128] sm:$0xff]
        %v1077 = vld [vmem:[%s1050 + $0x138] sm:$0xff]
        %v1078 = vld [vmem:[%s1050 + $0x140] sm:$0xff]
        %v1079 = vld [vmem:[%s1050 + $0x150] sm:$0xff]
        %v1080 = vld [vmem:[%s1050 + $0x158] sm:$0xff]
        %v1081 = vld [vmem:[%s1050 + $0x168] sm:$0xff]
        %v1082 = vld [vmem:[%s1050 + $0x170] sm:$0xff]
        %v1083 = vpack.c.bf16 %v1052, %v1051
        %v1084 = vpack.c.bf16 %v1054, %v1053
        %v1085 = vpack.c.bf16 %v1056, %v1055
        %v1086 = vpack.c.bf16 %v1058, %v1057
        %v1087 = vpack.c.bf16 %v1060, %v1059
        %v1088 = vpack.c.bf16 %v1062, %v1061
        %v1089 = vpack.c.bf16 %v1064, %v1063
        %v1090 = vpack.c.bf16 %v1066, %v1065
        %v1091 = vpack.c.bf16 %v1068, %v1067
        %v1092 = vpack.c.bf16 %v1070, %v1069
        %v1093 = vpack.c.bf16 %v1072, %v1071
        %v1094 = vpack.c.bf16 %v1074, %v1073
        %v1095 = vpack.c.bf16 %v1076, %v1075
        %v1096 = vpack.c.bf16 %v1078, %v1077
        %v1097 = vpack.c.bf16 %v1080, %v1079
        %v1098 = vpack.c.bf16 %v1082, %v1081
        %s1099 = scalar_lea.vmem %s1, 192
        %v1100 = vld [vmem:[%s1099] sm:$0xf]
        %v1101 = vld [vmem:[%s1099 + $0x4] sm:$0xf]
        %v1102 = vld [vmem:[%s1099 + $0x8] sm:$0xf]
        %v1103 = vld [vmem:[%s1099 + $0xc] sm:$0xf]
        %v1104 = vld [vmem:[%s1099 + $0x10] sm:$0xf]
        %v1105 = vld [vmem:[%s1099 + $0x14] sm:$0xf]
        %v1106 = vld [vmem:[%s1099 + $0x18] sm:$0xf]
        %v1107 = vld [vmem:[%s1099 + $0x1c] sm:$0xf]
        %v1108 = vld [vmem:[%s1099 + $0x20] sm:$0xf]
        %v1109 = vld [vmem:[%s1099 + $0x24] sm:$0xf]
        %v1110 = vld [vmem:[%s1099 + $0x28] sm:$0xf]
        %v1111 = vld [vmem:[%s1099 + $0x2c] sm:$0xf]
        %v1112 = vld [vmem:[%s1099 + $0x30] sm:$0xf]
        %v1113 = vld [vmem:[%s1099 + $0x34] sm:$0xf]
        %v1114 = vld [vmem:[%s1099 + $0x38] sm:$0xf]
        %v1115 = vld [vmem:[%s1099 + $0x3c] sm:$0xf]
        %v1132 = vunpack.c.l.b16 %v1100
        %v1133 = vunpack.c.l.b16 %v1101
        %v1134 = vunpack.c.l.b16 %v1102
        %v1135 = vunpack.c.l.b16 %v1103
        %v1136 = vunpack.c.l.b16 %v1104
        %v1137 = vunpack.c.l.b16 %v1105
        %v1138 = vunpack.c.l.b16 %v1106
        %v1139 = vunpack.c.l.b16 %v1107
        %v1140 = vunpack.c.l.b16 %v1108
        %v1141 = vunpack.c.l.b16 %v1109
        %v1142 = vunpack.c.l.b16 %v1110
        %v1143 = vunpack.c.l.b16 %v1111
        %v1144 = vunpack.c.l.b16 %v1112
        %v1145 = vunpack.c.l.b16 %v1113
        %v1146 = vunpack.c.l.b16 %v1114
        %v1147 = vunpack.c.l.b16 %v1115
        %v1148 = vpack.c.b16 %v1133, %v1132
        %v1149 = vpack.c.b16 %v1135, %v1134
        %v1150 = vpack.c.b16 %v1137, %v1136
        %v1151 = vpack.c.b16 %v1139, %v1138
        %v1152 = vpack.c.b16 %v1141, %v1140
        %v1153 = vpack.c.b16 %v1143, %v1142
        %v1154 = vpack.c.b16 %v1145, %v1144
        %v1155 = vpack.c.b16 %v1147, %v1146
        %1164 = vmatprep.subr.bf16.mxu0 0
        %1165 = vmatpush1.bf16.msra.mxu0 %v1148
        %1166 = vmatprep.subr.bf16.mxu0 0
        %1167 = vmatpush1.bf16.msra.mxu0 %v1149
        %1168 = vmatprep.subr.bf16.mxu0 0
        %1169 = vmatpush1.bf16.msra.mxu0 %v1150
        %1170 = vmatprep.subr.bf16.mxu0 0
        %1171 = vmatpush1.bf16.msra.mxu0 %v1151
        %1172 = vmatprep.subr.bf16.mxu0 0
        %1173 = vmatpush1.bf16.msra.mxu0 %v1152
        %1174 = vmatprep.subr.bf16.mxu0 0
        %1175 = vmatpush1.bf16.msra.mxu0 %v1153
        %1176 = vmatprep.subr.bf16.mxu0 0
        %1177 = vmatpush1.bf16.msra.mxu0 %v1154
        %1178 = vmatprep.subr.bf16.mxu0 0
        %1179 = vmatpush1.bf16.msra.mxu0 %v1155
        %1180 = vmatprep.subr.bf16.mxu0 0
        %1181 = vmatpush1.bf16.msra.mxu0 0
        %1182 = vmatprep.subr.bf16.mxu0 0
        %1183 = vmatpush1.bf16.msra.mxu0 0
        %1184 = vmatprep.subr.bf16.mxu0 0
        %1185 = vmatpush1.bf16.msra.mxu0 0
        %1186 = vmatprep.subr.bf16.mxu0 0
        %1187 = vmatpush1.bf16.msra.mxu0 0
        %1188 = vmatprep.subr.bf16.mxu0 0
        %1189 = vmatpush1.bf16.msra.mxu0 0
        %1190 = vmatprep.subr.bf16.mxu0 0
        %1191 = vmatpush1.bf16.msra.mxu0 0
        %1192 = vmatprep.subr.bf16.mxu0 0
        %1193 = vmatpush1.bf16.msra.mxu0 0
        %1194 = vmatprep.subr.bf16.mxu0 0
        %1195 = vmatpush1.bf16.msra.mxu0 0
        %1196 = vmatprep.mubr.bf16.mxu0 0
        %1197 = vmatmul.mubr.bf16.gmra.mrb[0].mxu0 %v1083
        %v1198 = vpop.f32.mrb[0].mxu0
        %v1199 = vadd.f32 0.0, %v1198
        %v1200 = vpop.f32.mrb[0].mxu0
        %v1201 = vpop.f32.mrb[0].mxu0
        %v1202 = vadd.f32 0.0, %v1201
        %v1203 = vpop.f32.mrb[0].mxu0
        %1204 = vmatprep.mubr.bf16.mxu0 0
        %1205 = vmatmul.mubr.bf16.gmra.mrb[0].mxu0 %v1084
        %v1206 = vpop.f32.mrb[0].mxu0
        %v1207 = vadd.f32 0.0, %v1206
        %v1208 = vpop.f32.mrb[0].mxu0
        %v1209 = vpop.f32.mrb[0].mxu0
        %v1210 = vadd.f32 0.0, %v1209
        %v1211 = vpop.f32.mrb[0].mxu0
        %1212 = vmatprep.mubr.bf16.mxu0 0
        %1213 = vmatmul.mubr.bf16.gmra.mrb[0].mxu0 %v1085
        %v1214 = vpop.f32.mrb[0].mxu0
        %v1215 = vadd.f32 0.0, %v1214
        %v1216 = vpop.f32.mrb[0].mxu0
        %v1217 = vpop.f32.mrb[0].mxu0
        %v1218 = vadd.f32 0.0, %v1217
        %v1219 = vpop.f32.mrb[0].mxu0
        %1220 = vmatprep.mubr.bf16.mxu0 0
        %1221 = vmatmul.mubr.bf16.gmra.mrb[0].mxu0 %v1086
        %v1222 = vpop.f32.mrb[0].mxu0
        %v1223 = vadd.f32 0.0, %v1222
        %v1224 = vpop.f32.mrb[0].mxu0
        %v1225 = vpop.f32.mrb[0].mxu0
        %v1226 = vadd.f32 0.0, %v1225
        %v1227 = vpop.f32.mrb[0].mxu0
        %1228 = vmatprep.mubr.bf16.mxu0 0
        %1229 = vmatmul.mubr.bf16.gmra.mrb[0].mxu0 %v1087
        %v1230 = vpop.f32.mrb[0].mxu0
        %v1231 = vadd.f32 0.0, %v1230
        %v1232 = vpop.f32.mrb[0].mxu0
        %v1233 = vpop.f32.mrb[0].mxu0
        %v1234 = vadd.f32 0.0, %v1233
        %v1235 = vpop.f32.mrb[0].mxu0
        %1236 = vmatprep.mubr.bf16.mxu0 0
        %1237 = vmatmul.mubr.bf16.gmra.mrb[0].mxu0 %v1088
        %v1238 = vpop.f32.mrb[0].mxu0
        %v1239 = vadd.f32 0.0, %v1238
        %v1240 = vpop.f32.mrb[0].mxu0
        %v1241 = vpop.f32.mrb[0].mxu0
        %v1242 = vadd.f32 0.0, %v1241
        %v1243 = vpop.f32.mrb[0].mxu0
        %1244 = vmatprep.mubr.bf16.mxu0 0
        %1245 = vmatmul.mubr.bf16.gmra.mrb[0].mxu0 %v1089
        %v1246 = vpop.f32.mrb[0].mxu0
        %v1247 = vadd.f32 0.0, %v1246
        %v1248 = vpop.f32.mrb[0].mxu0
        %v1249 = vpop.f32.mrb[0].mxu0
        %v1250 = vadd.f32 0.0, %v1249
        %v1251 = vpop.f32.mrb[0].mxu0
        %1252 = vmatprep.mubr.bf16.mxu0 0
        %1253 = vmatmul.mubr.bf16.gmra.mrb[0].mxu0 %v1090
        %v1254 = vpop.f32.mrb[0].mxu0
        %v1255 = vadd.f32 0.0, %v1254
        %v1256 = vpop.f32.mrb[0].mxu0
        %v1257 = vpop.f32.mrb[0].mxu0
        %v1258 = vadd.f32 0.0, %v1257
        %v1259 = vpop.f32.mrb[0].mxu0
        %1260 = vmatprep.mubr.bf16.mxu0 0
        %1261 = vmatmul.mubr.bf16.gmra.mrb[0].mxu0 %v1091
        %v1262 = vpop.f32.mrb[0].mxu0
        %v1263 = vadd.f32 0.0, %v1262
        %v1264 = vpop.f32.mrb[0].mxu0
        %v1265 = vpop.f32.mrb[0].mxu0
        %v1266 = vadd.f32 0.0, %v1265
        %v1267 = vpop.f32.mrb[0].mxu0
        %1268 = vmatprep.mubr.bf16.mxu0 0
        %1269 = vmatmul.mubr.bf16.gmra.mrb[0].mxu0 %v1092
        %v1270 = vpop.f32.mrb[0].mxu0
        %v1271 = vadd.f32 0.0, %v1270
        %v1272 = vpop.f32.mrb[0].mxu0
        %v1273 = vpop.f32.mrb[0].mxu0
        %v1274 = vadd.f32 0.0, %v1273
        %v1275 = vpop.f32.mrb[0].mxu0
        %1276 = vmatprep.mubr.bf16.mxu0 0
        %1277 = vmatmul.mubr.bf16.gmra.mrb[0].mxu0 %v1093
        %v1278 = vpop.f32.mrb[0].mxu0
        %v1279 = vadd.f32 0.0, %v1278
        %v1280 = vpop.f32.mrb[0].mxu0
        %v1281 = vpop.f32.mrb[0].mxu0
        %v1282 = vadd.f32 0.0, %v1281
        %v1283 = vpop.f32.mrb[0].mxu0
        %1284 = vmatprep.mubr.bf16.mxu0 0
        %1285 = vmatmul.mubr.bf16.gmra.mrb[0].mxu0 %v1094
        %v1286 = vpop.f32.mrb[0].mxu0
        %v1287 = vadd.f32 0.0, %v1286
        %v1288 = vpop.f32.mrb[0].mxu0
        %v1289 = vpop.f32.mrb[0].mxu0
        %v1290 = vadd.f32 0.0, %v1289
        %v1291 = vpop.f32.mrb[0].mxu0
        %1292 = vmatprep.mubr.bf16.mxu0 0
        %1293 = vmatmul.mubr.bf16.gmra.mrb[0].mxu0 %v1095
        %v1294 = vpop.f32.mrb[0].mxu0
        %v1295 = vadd.f32 0.0, %v1294
        %v1296 = vpop.f32.mrb[0].mxu0
        %v1297 = vpop.f32.mrb[0].mxu0
        %v1298 = vadd.f32 0.0, %v1297
        %v1299 = vpop.f32.mrb[0].mxu0
        %1300 = vmatprep.mubr.bf16.mxu0 0
        %1301 = vmatmul.mubr.bf16.gmra.mrb[0].mxu0 %v1096
        %v1302 = vpop.f32.mrb[0].mxu0
        %v1303 = vadd.f32 0.0, %v1302
        %v1304 = vpop.f32.mrb[0].mxu0
        %v1305 = vpop.f32.mrb[0].mxu0
        %v1306 = vadd.f32 0.0, %v1305
        %v1307 = vpop.f32.mrb[0].mxu0
        %1308 = vmatprep.mubr.bf16.mxu0 0
        %1309 = vmatmul.mubr.bf16.gmra.mrb[0].mxu0 %v1097
        %v1310 = vpop.f32.mrb[0].mxu0
        %v1311 = vadd.f32 0.0, %v1310
        %v1312 = vpop.f32.mrb[0].mxu0
        %v1313 = vpop.f32.mrb[0].mxu0
        %v1314 = vadd.f32 0.0, %v1313
        %v1315 = vpop.f32.mrb[0].mxu0
        %1316 = vmatprep.mubr.bf16.mxu0 0
        %1317 = vmatmul.mubr.bf16.gmra.mrb[0].mxu0 %v1098
        %v1318 = vpop.f32.mrb[0].mxu0
        %v1319 = vadd.f32 0.0, %v1318
        %v1320 = vpop.f32.mrb[0].mxu0
        %v1321 = vpop.f32.mrb[0].mxu0
        %v1322 = vadd.f32 0.0, %v1321
        %v1323 = vpop.f32.mrb[0].mxu0
        %1324 = vdwg.mxu0
        %v1325 = vadd.f32 %v1018, %v1199
        %v1326 = vadd.f32 %v1019, %v1202
        %v1327 = vadd.f32 %v1020, %v1207
        %v1328 = vadd.f32 %v1021, %v1210
        %v1329 = vadd.f32 %v1022, %v1215
        %v1330 = vadd.f32 %v1023, %v1218
        %v1331 = vadd.f32 %v1024, %v1223
        %v1332 = vadd.f32 %v1025, %v1226
        %v1333 = vadd.f32 %v1026, %v1231
        %v1334 = vadd.f32 %v1027, %v1234
        %v1335 = vadd.f32 %v1028, %v1239
        %v1336 = vadd.f32 %v1029, %v1242
        %v1337 = vadd.f32 %v1030, %v1247
        %v1338 = vadd.f32 %v1031, %v1250
        %v1339 = vadd.f32 %v1032, %v1255
        %v1340 = vadd.f32 %v1033, %v1258
        %v1341 = vadd.f32 %v1034, %v1263
        %v1342 = vadd.f32 %v1035, %v1266
        %v1343 = vadd.f32 %v1036, %v1271
        %v1344 = vadd.f32 %v1037, %v1274
        %v1345 = vadd.f32 %v1038, %v1279
        %v1346 = vadd.f32 %v1039, %v1282
        %v1347 = vadd.f32 %v1040, %v1287
        %v1348 = vadd.f32 %v1041, %v1290
        %v1349 = vadd.f32 %v1042, %v1295
        %v1350 = vadd.f32 %v1043, %v1298
        %v1351 = vadd.f32 %v1044, %v1303
        %v1352 = vadd.f32 %v1045, %v1306
        %v1353 = vadd.f32 %v1046, %v1311
        %v1354 = vadd.f32 %v1047, %v1314
        %v1355 = vadd.f32 %v1048, %v1319
        %v1356 = vadd.f32 %v1049, %v1322
        %v1357 = vld [vmem:[%s1050 + $0x1] sm:$0xff]
        %v1358 = vld [vmem:[%s1050 + $0x9] sm:$0xff]
        %v1359 = vld [vmem:[%s1050 + $0x19] sm:$0xff]
        %v1360 = vld [vmem:[%s1050 + $0x21] sm:$0xff]
        %v1361 = vld [vmem:[%s1050 + $0x31] sm:$0xff]
        %v1362 = vld [vmem:[%s1050 + $0x39] sm:$0xff]
        %v1363 = vld [vmem:[%s1050 + $0x49] sm:$0xff]
        %v1364 = vld [vmem:[%s1050 + $0x51] sm:$0xff]
        %v1365 = vld [vmem:[%s1050 + $0x61] sm:$0xff]
        %v1366 = vld [vmem:[%s1050 + $0x69] sm:$0xff]
        %v1367 = vld [vmem:[%s1050 + $0x79] sm:$0xff]
        %v1368 = vld [vmem:[%s1050 + $0x81] sm:$0xff]
        %v1369 = vld [vmem:[%s1050 + $0x91] sm:$0xff]
        %v1370 = vld [vmem:[%s1050 + $0x99] sm:$0xff]
        %v1371 = vld [vmem:[%s1050 + $0xa9] sm:$0xff]
        %v1372 = vld [vmem:[%s1050 + $0xb1] sm:$0xff]
        %v1373 = vld [vmem:[%s1050 + $0xc1] sm:$0xff]
        %v1374 = vld [vmem:[%s1050 + $0xc9] sm:$0xff]
        %v1375 = vld [vmem:[%s1050 + $0xd9] sm:$0xff]
        %v1376 = vld [vmem:[%s1050 + $0xe1] sm:$0xff]
        %v1377 = vld [vmem:[%s1050 + $0xf1] sm:$0xff]
        %v1378 = vld [vmem:[%s1050 + $0xf9] sm:$0xff]
        %v1379 = vld [vmem:[%s1050 + $0x109] sm:$0xff]
        %v1380 = vld [vmem:[%s1050 + $0x111] sm:$0xff]
        %v1381 = vld [vmem:[%s1050 + $0x121] sm:$0xff]
        %v1382 = vld [vmem:[%s1050 + $0x129] sm:$0xff]
        %v1383 = vld [vmem:[%s1050 + $0x139] sm:$0xff]
        %v1384 = vld [vmem:[%s1050 + $0x141] sm:$0xff]
        %v1385 = vld [vmem:[%s1050 + $0x151] sm:$0xff]
        %v1386 = vld [vmem:[%s1050 + $0x159] sm:$0xff]
        %v1387 = vld [vmem:[%s1050 + $0x169] sm:$0xff]
        %v1388 = vld [vmem:[%s1050 + $0x171] sm:$0xff]
        %v1389 = vpack.c.bf16 %v1358, %v1357
        %v1390 = vpack.c.bf16 %v1360, %v1359
        %v1391 = vpack.c.bf16 %v1362, %v1361
        %v1392 = vpack.c.bf16 %v1364, %v1363
        %v1393 = vpack.c.bf16 %v1366, %v1365
        %v1394 = vpack.c.bf16 %v1368, %v1367
        %v1395 = vpack.c.bf16 %v1370, %v1369
        %v1396 = vpack.c.bf16 %v1372, %v1371
        %v1397 = vpack.c.bf16 %v1374, %v1373
        %v1398 = vpack.c.bf16 %v1376, %v1375
        %v1399 = vpack.c.bf16 %v1378, %v1377
        %v1400 = vpack.c.bf16 %v1380, %v1379
        %v1401 = vpack.c.bf16 %v1382, %v1381
        %v1402 = vpack.c.bf16 %v1384, %v1383
        %v1403 = vpack.c.bf16 %v1386, %v1385
        %v1404 = vpack.c.bf16 %v1388, %v1387
        %s1405 = scalar_lea.vmem %s1, 256
        %v1406 = vld [vmem:[%s1405] sm:$0xf]
        %v1407 = vld [vmem:[%s1405 + $0x4] sm:$0xf]
        %v1408 = vld [vmem:[%s1405 + $0x8] sm:$0xf]
        %v1409 = vld [vmem:[%s1405 + $0xc] sm:$0xf]
        %v1410 = vld [vmem:[%s1405 + $0x10] sm:$0xf]
        %v1411 = vld [vmem:[%s1405 + $0x14] sm:$0xf]
        %v1412 = vld [vmem:[%s1405 + $0x18] sm:$0xf]
        %v1413 = vld [vmem:[%s1405 + $0x1c] sm:$0xf]
        %v1414 = vld [vmem:[%s1405 + $0x20] sm:$0xf]
        %v1415 = vld [vmem:[%s1405 + $0x24] sm:$0xf]
        %v1416 = vld [vmem:[%s1405 + $0x28] sm:$0xf]
        %v1417 = vld [vmem:[%s1405 + $0x2c] sm:$0xf]
        %v1418 = vld [vmem:[%s1405 + $0x30] sm:$0xf]
        %v1419 = vld [vmem:[%s1405 + $0x34] sm:$0xf]
        %v1420 = vld [vmem:[%s1405 + $0x38] sm:$0xf]
        %v1421 = vld [vmem:[%s1405 + $0x3c] sm:$0xf]
        %v1438 = vunpack.c.l.b16 %v1406
        %v1439 = vunpack.c.l.b16 %v1407
        %v1440 = vunpack.c.l.b16 %v1408
        %v1441 = vunpack.c.l.b16 %v1409
        %v1442 = vunpack.c.l.b16 %v1410
        %v1443 = vunpack.c.l.b16 %v1411
        %v1444 = vunpack.c.l.b16 %v1412
        %v1445 = vunpack.c.l.b16 %v1413
        %v1446 = vunpack.c.l.b16 %v1414
        %v1447 = vunpack.c.l.b16 %v1415
        %v1448 = vunpack.c.l.b16 %v1416
        %v1449 = vunpack.c.l.b16 %v1417
        %v1450 = vunpack.c.l.b16 %v1418
        %v1451 = vunpack.c.l.b16 %v1419
        %v1452 = vunpack.c.l.b16 %v1420
        %v1453 = vunpack.c.l.b16 %v1421
        %v1454 = vpack.c.b16 %v1439, %v1438
        %v1455 = vpack.c.b16 %v1441, %v1440
        %v1456 = vpack.c.b16 %v1443, %v1442
        %v1457 = vpack.c.b16 %v1445, %v1444
        %v1458 = vpack.c.b16 %v1447, %v1446
        %v1459 = vpack.c.b16 %v1449, %v1448
        %v1460 = vpack.c.b16 %v1451, %v1450
        %v1461 = vpack.c.b16 %v1453, %v1452
        %1470 = vmatprep.subr.bf16.mxu0 0
        %1471 = vmatpush1.bf16.msra.mxu0 %v1454
        %1472 = vmatprep.subr.bf16.mxu0 0
        %1473 = vmatpush1.bf16.msra.mxu0 %v1455
        %1474 = vmatprep.subr.bf16.mxu0 0
        %1475 = vmatpush1.bf16.msra.mxu0 %v1456
        %1476 = vmatprep.subr.bf16.mxu0 0
        %1477 = vmatpush1.bf16.msra.mxu0 %v1457
        %1478 = vmatprep.subr.bf16.mxu0 0
        %1479 = vmatpush1.bf16.msra.mxu0 %v1458
        %1480 = vmatprep.subr.bf16.mxu0 0
        %1481 = vmatpush1.bf16.msra.mxu0 %v1459
        %1482 = vmatprep.subr.bf16.mxu0 0
        %1483 = vmatpush1.bf16.msra.mxu0 %v1460
        %1484 = vmatprep.subr.bf16.mxu0 0
        %1485 = vmatpush1.bf16.msra.mxu0 %v1461
        %1486 = vmatprep.subr.bf16.mxu0 0
        %1487 = vmatpush1.bf16.msra.mxu0 0
        %1488 = vmatprep.subr.bf16.mxu0 0
        %1489 = vmatpush1.bf16.msra.mxu0 0
        %1490 = vmatprep.subr.bf16.mxu0 0
        %1491 = vmatpush1.bf16.msra.mxu0 0
        %1492 = vmatprep.subr.bf16.mxu0 0
        %1493 = vmatpush1.bf16.msra.mxu0 0
        %1494 = vmatprep.subr.bf16.mxu0 0
        %1495 = vmatpush1.bf16.msra.mxu0 0
        %1496 = vmatprep.subr.bf16.mxu0 0
        %1497 = vmatpush1.bf16.msra.mxu0 0
        %1498 = vmatprep.subr.bf16.mxu0 0
        %1499 = vmatpush1.bf16.msra.mxu0 0
        %1500 = vmatprep.subr.bf16.mxu0 0
        %1501 = vmatpush1.bf16.msra.mxu0 0
        %1502 = vmatprep.mubr.bf16.mxu0 0
        %1503 = vmatmul.mubr.bf16.gmra.mrb[0].mxu0 %v1389
        %v1504 = vpop.f32.mrb[0].mxu0
        %v1505 = vadd.f32 0.0, %v1504
        %v1506 = vpop.f32.mrb[0].mxu0
        %v1507 = vpop.f32.mrb[0].mxu0
        %v1508 = vadd.f32 0.0, %v1507
        %v1509 = vpop.f32.mrb[0].mxu0
        %1510 = vmatprep.mubr.bf16.mxu0 0
        %1511 = vmatmul.mubr.bf16.gmra.mrb[0].mxu0 %v1390
        %v1512 = vpop.f32.mrb[0].mxu0
        %v1513 = vadd.f32 0.0, %v1512
        %v1514 = vpop.f32.mrb[0].mxu0
        %v1515 = vpop.f32.mrb[0].mxu0
        %v1516 = vadd.f32 0.0, %v1515
        %v1517 = vpop.f32.mrb[0].mxu0
        %1518 = vmatprep.mubr.bf16.mxu0 0
        %1519 = vmatmul.mubr.bf16.gmra.mrb[0].mxu0 %v1391
        %v1520 = vpop.f32.mrb[0].mxu0
        %v1521 = vadd.f32 0.0, %v1520
        %v1522 = vpop.f32.mrb[0].mxu0
        %v1523 = vpop.f32.mrb[0].mxu0
        %v1524 = vadd.f32 0.0, %v1523
        %v1525 = vpop.f32.mrb[0].mxu0
        %1526 = vmatprep.mubr.bf16.mxu0 0
        %1527 = vmatmul.mubr.bf16.gmra.mrb[0].mxu0 %v1392
        %v1528 = vpop.f32.mrb[0].mxu0
        %v1529 = vadd.f32 0.0, %v1528
        %v1530 = vpop.f32.mrb[0].mxu0
        %v1531 = vpop.f32.mrb[0].mxu0
        %v1532 = vadd.f32 0.0, %v1531
        %v1533 = vpop.f32.mrb[0].mxu0
        %1534 = vmatprep.mubr.bf16.mxu0 0
        %1535 = vmatmul.mubr.bf16.gmra.mrb[0].mxu0 %v1393
        %v1536 = vpop.f32.mrb[0].mxu0
        %v1537 = vadd.f32 0.0, %v1536
        %v1538 = vpop.f32.mrb[0].mxu0
        %v1539 = vpop.f32.mrb[0].mxu0
        %v1540 = vadd.f32 0.0, %v1539
        %v1541 = vpop.f32.mrb[0].mxu0
        %1542 = vmatprep.mubr.bf16.mxu0 0
        %1543 = vmatmul.mubr.bf16.gmra.mrb[0].mxu0 %v1394
        %v1544 = vpop.f32.mrb[0].mxu0
        %v1545 = vadd.f32 0.0, %v1544
        %v1546 = vpop.f32.mrb[0].mxu0
        %v1547 = vpop.f32.mrb[0].mxu0
        %v1548 = vadd.f32 0.0, %v1547
        %v1549 = vpop.f32.mrb[0].mxu0
        %1550 = vmatprep.mubr.bf16.mxu0 0
        %1551 = vmatmul.mubr.bf16.gmra.mrb[0].mxu0 %v1395
        %v1552 = vpop.f32.mrb[0].mxu0
        %v1553 = vadd.f32 0.0, %v1552
        %v1554 = vpop.f32.mrb[0].mxu0
        %v1555 = vpop.f32.mrb[0].mxu0
        %v1556 = vadd.f32 0.0, %v1555
        %v1557 = vpop.f32.mrb[0].mxu0
        %1558 = vmatprep.mubr.bf16.mxu0 0
        %1559 = vmatmul.mubr.bf16.gmra.mrb[0].mxu0 %v1396
        %v1560 = vpop.f32.mrb[0].mxu0
        %v1561 = vadd.f32 0.0, %v1560
        %v1562 = vpop.f32.mrb[0].mxu0
        %v1563 = vpop.f32.mrb[0].mxu0
        %v1564 = vadd.f32 0.0, %v1563
        %v1565 = vpop.f32.mrb[0].mxu0
        %1566 = vmatprep.mubr.bf16.mxu0 0
        %1567 = vmatmul.mubr.bf16.gmra.mrb[0].mxu0 %v1397
        %v1568 = vpop.f32.mrb[0].mxu0
        %v1569 = vadd.f32 0.0, %v1568
        %v1570 = vpop.f32.mrb[0].mxu0
        %v1571 = vpop.f32.mrb[0].mxu0
        %v1572 = vadd.f32 0.0, %v1571
        %v1573 = vpop.f32.mrb[0].mxu0
        %1574 = vmatprep.mubr.bf16.mxu0 0
        %1575 = vmatmul.mubr.bf16.gmra.mrb[0].mxu0 %v1398
        %v1576 = vpop.f32.mrb[0].mxu0
        %v1577 = vadd.f32 0.0, %v1576
        %v1578 = vpop.f32.mrb[0].mxu0
        %v1579 = vpop.f32.mrb[0].mxu0
        %v1580 = vadd.f32 0.0, %v1579
        %v1581 = vpop.f32.mrb[0].mxu0
        %1582 = vmatprep.mubr.bf16.mxu0 0
        %1583 = vmatmul.mubr.bf16.gmra.mrb[0].mxu0 %v1399
        %v1584 = vpop.f32.mrb[0].mxu0
        %v1585 = vadd.f32 0.0, %v1584
        %v1586 = vpop.f32.mrb[0].mxu0
        %v1587 = vpop.f32.mrb[0].mxu0
        %v1588 = vadd.f32 0.0, %v1587
        %v1589 = vpop.f32.mrb[0].mxu0
        %1590 = vmatprep.mubr.bf16.mxu0 0
        %1591 = vmatmul.mubr.bf16.gmra.mrb[0].mxu0 %v1400
        %v1592 = vpop.f32.mrb[0].mxu0
        %v1593 = vadd.f32 0.0, %v1592
        %v1594 = vpop.f32.mrb[0].mxu0
        %v1595 = vpop.f32.mrb[0].mxu0
        %v1596 = vadd.f32 0.0, %v1595
        %v1597 = vpop.f32.mrb[0].mxu0
        %1598 = vmatprep.mubr.bf16.mxu0 0
        %1599 = vmatmul.mubr.bf16.gmra.mrb[0].mxu0 %v1401
        %v1600 = vpop.f32.mrb[0].mxu0
        %v1601 = vadd.f32 0.0, %v1600
        %v1602 = vpop.f32.mrb[0].mxu0
        %v1603 = vpop.f32.mrb[0].mxu0
        %v1604 = vadd.f32 0.0, %v1603
        %v1605 = vpop.f32.mrb[0].mxu0
        %1606 = vmatprep.mubr.bf16.mxu0 0
        %1607 = vmatmul.mubr.bf16.gmra.mrb[0].mxu0 %v1402
        %v1608 = vpop.f32.mrb[0].mxu0
        %v1609 = vadd.f32 0.0, %v1608
        %v1610 = vpop.f32.mrb[0].mxu0
        %v1611 = vpop.f32.mrb[0].mxu0
        %v1612 = vadd.f32 0.0, %v1611
        %v1613 = vpop.f32.mrb[0].mxu0
        %1614 = vmatprep.mubr.bf16.mxu0 0
        %1615 = vmatmul.mubr.bf16.gmra.mrb[0].mxu0 %v1403
        %v1616 = vpop.f32.mrb[0].mxu0
        %v1617 = vadd.f32 0.0, %v1616
        %v1618 = vpop.f32.mrb[0].mxu0
        %v1619 = vpop.f32.mrb[0].mxu0
        %v1620 = vadd.f32 0.0, %v1619
        %v1621 = vpop.f32.mrb[0].mxu0
        %1622 = vmatprep.mubr.bf16.mxu0 0
        %1623 = vmatmul.mubr.bf16.gmra.mrb[0].mxu0 %v1404
        %v1624 = vpop.f32.mrb[0].mxu0
        %v1625 = vadd.f32 0.0, %v1624
        %v1626 = vpop.f32.mrb[0].mxu0
        %v1627 = vpop.f32.mrb[0].mxu0
        %v1628 = vadd.f32 0.0, %v1627
        %v1629 = vpop.f32.mrb[0].mxu0
        %1630 = vdwg.mxu0
        %v1631 = vadd.f32 %v1325, %v1505
        %v1632 = vadd.f32 %v1326, %v1508
        %v1633 = vadd.f32 %v1327, %v1513
        %v1634 = vadd.f32 %v1328, %v1516
        %v1635 = vadd.f32 %v1329, %v1521
        %v1636 = vadd.f32 %v1330, %v1524
        %v1637 = vadd.f32 %v1331, %v1529
        %v1638 = vadd.f32 %v1332, %v1532
        %v1639 = vadd.f32 %v1333, %v1537
        %v1640 = vadd.f32 %v1334, %v1540
        %v1641 = vadd.f32 %v1335, %v1545
        %v1642 = vadd.f32 %v1336, %v1548
        %v1643 = vadd.f32 %v1337, %v1553
        %v1644 = vadd.f32 %v1338, %v1556
        %v1645 = vadd.f32 %v1339, %v1561
        %v1646 = vadd.f32 %v1340, %v1564
        %v1647 = vadd.f32 %v1341, %v1569
        %v1648 = vadd.f32 %v1342, %v1572
        %v1649 = vadd.f32 %v1343, %v1577
        %v1650 = vadd.f32 %v1344, %v1580
        %v1651 = vadd.f32 %v1345, %v1585
        %v1652 = vadd.f32 %v1346, %v1588
        %v1653 = vadd.f32 %v1347, %v1593
        %v1654 = vadd.f32 %v1348, %v1596
        %v1655 = vadd.f32 %v1349, %v1601
        %v1656 = vadd.f32 %v1350, %v1604
        %v1657 = vadd.f32 %v1351, %v1609
        %v1658 = vadd.f32 %v1352, %v1612
        %v1659 = vadd.f32 %v1353, %v1617
        %v1660 = vadd.f32 %v1354, %v1620
        %v1661 = vadd.f32 %v1355, %v1625
        %v1662 = vadd.f32 %v1356, %v1628
        %v1663 = vld [vmem:[%s1050 + $0x2] sm:$0xff]
        %v1664 = vld [vmem:[%s1050 + $0xa] sm:$0xff]
        %v1665 = vld [vmem:[%s1050 + $0x1a] sm:$0xff]
        %v1666 = vld [vmem:[%s1050 + $0x22] sm:$0xff]
        %v1667 = vld [vmem:[%s1050 + $0x32] sm:$0xff]
        %v1668 = vld [vmem:[%s1050 + $0x3a] sm:$0xff]
        %v1669 = vld [vmem:[%s1050 + $0x4a] sm:$0xff]
        %v1670 = vld [vmem:[%s1050 + $0x52] sm:$0xff]
        %v1671 = vld [vmem:[%s1050 + $0x62] sm:$0xff]
        %v1672 = vld [vmem:[%s1050 + $0x6a] sm:$0xff]
        %v1673 = vld [vmem:[%s1050 + $0x7a] sm:$0xff]
        %v1674 = vld [vmem:[%s1050 + $0x82] sm:$0xff]
        %v1675 = vld [vmem:[%s1050 + $0x92] sm:$0xff]
        %v1676 = vld [vmem:[%s1050 + $0x9a] sm:$0xff]
        %v1677 = vld [vmem:[%s1050 + $0xaa] sm:$0xff]
        %v1678 = vld [vmem:[%s1050 + $0xb2] sm:$0xff]
        %v1679 = vld [vmem:[%s1050 + $0xc2] sm:$0xff]
        %v1680 = vld [vmem:[%s1050 + $0xca] sm:$0xff]
        %v1681 = vld [vmem:[%s1050 + $0xda] sm:$0xff]
        %v1682 = vld [vmem:[%s1050 + $0xe2] sm:$0xff]
        %v1683 = vld [vmem:[%s1050 + $0xf2] sm:$0xff]
        %v1684 = vld [vmem:[%s1050 + $0xfa] sm:$0xff]
        %v1685 = vld [vmem:[%s1050 + $0x10a] sm:$0xff]
        %v1686 = vld [vmem:[%s1050 + $0x112] sm:$0xff]
        %v1687 = vld [vmem:[%s1050 + $0x122] sm:$0xff]
        %v1688 = vld [vmem:[%s1050 + $0x12a] sm:$0xff]
        %v1689 = vld [vmem:[%s1050 + $0x13a] sm:$0xff]
        %v1690 = vld [vmem:[%s1050 + $0x142] sm:$0xff]
        %v1691 = vld [vmem:[%s1050 + $0x152] sm:$0xff]
        %v1692 = vld [vmem:[%s1050 + $0x15a] sm:$0xff]
        %v1693 = vld [vmem:[%s1050 + $0x16a] sm:$0xff]
        %v1694 = vld [vmem:[%s1050 + $0x172] sm:$0xff]
        %v1695 = vpack.c.bf16 %v1664, %v1663
        %v1696 = vpack.c.bf16 %v1666, %v1665
        %v1697 = vpack.c.bf16 %v1668, %v1667
        %v1698 = vpack.c.bf16 %v1670, %v1669
        %v1699 = vpack.c.bf16 %v1672, %v1671
        %v1700 = vpack.c.bf16 %v1674, %v1673
        %v1701 = vpack.c.bf16 %v1676, %v1675
        %v1702 = vpack.c.bf16 %v1678, %v1677
        %v1703 = vpack.c.bf16 %v1680, %v1679
        %v1704 = vpack.c.bf16 %v1682, %v1681
        %v1705 = vpack.c.bf16 %v1684, %v1683
        %v1706 = vpack.c.bf16 %v1686, %v1685
        %v1707 = vpack.c.bf16 %v1688, %v1687
        %v1708 = vpack.c.bf16 %v1690, %v1689
        %v1709 = vpack.c.bf16 %v1692, %v1691
        %v1710 = vpack.c.bf16 %v1694, %v1693
        %s1711 = scalar_lea.vmem %s1, 320
        %v1712 = vld [vmem:[%s1711] sm:$0xf]
        %v1713 = vld [vmem:[%s1711 + $0x4] sm:$0xf]
        %v1714 = vld [vmem:[%s1711 + $0x8] sm:$0xf]
        %v1715 = vld [vmem:[%s1711 + $0xc] sm:$0xf]
        %v1716 = vld [vmem:[%s1711 + $0x10] sm:$0xf]
        %v1717 = vld [vmem:[%s1711 + $0x14] sm:$0xf]
        %v1718 = vld [vmem:[%s1711 + $0x18] sm:$0xf]
        %v1719 = vld [vmem:[%s1711 + $0x1c] sm:$0xf]
        %v1720 = vld [vmem:[%s1711 + $0x20] sm:$0xf]
        %v1721 = vld [vmem:[%s1711 + $0x24] sm:$0xf]
        %v1722 = vld [vmem:[%s1711 + $0x28] sm:$0xf]
        %v1723 = vld [vmem:[%s1711 + $0x2c] sm:$0xf]
        %v1724 = vld [vmem:[%s1711 + $0x30] sm:$0xf]
        %v1725 = vld [vmem:[%s1711 + $0x34] sm:$0xf]
        %v1726 = vld [vmem:[%s1711 + $0x38] sm:$0xf]
        %v1727 = vld [vmem:[%s1711 + $0x3c] sm:$0xf]
        %v1744 = vunpack.c.l.b16 %v1712
        %v1745 = vunpack.c.l.b16 %v1713
        %v1746 = vunpack.c.l.b16 %v1714
        %v1747 = vunpack.c.l.b16 %v1715
        %v1748 = vunpack.c.l.b16 %v1716
        %v1749 = vunpack.c.l.b16 %v1717
        %v1750 = vunpack.c.l.b16 %v1718
        %v1751 = vunpack.c.l.b16 %v1719
        %v1752 = vunpack.c.l.b16 %v1720
        %v1753 = vunpack.c.l.b16 %v1721
        %v1754 = vunpack.c.l.b16 %v1722
        %v1755 = vunpack.c.l.b16 %v1723
        %v1756 = vunpack.c.l.b16 %v1724
        %v1757 = vunpack.c.l.b16 %v1725
        %v1758 = vunpack.c.l.b16 %v1726
        %v1759 = vunpack.c.l.b16 %v1727
        %v1760 = vpack.c.b16 %v1745, %v1744
        %v1761 = vpack.c.b16 %v1747, %v1746
        %v1762 = vpack.c.b16 %v1749, %v1748
        %v1763 = vpack.c.b16 %v1751, %v1750
        %v1764 = vpack.c.b16 %v1753, %v1752
        %v1765 = vpack.c.b16 %v1755, %v1754
        %v1766 = vpack.c.b16 %v1757, %v1756
        %v1767 = vpack.c.b16 %v1759, %v1758
        %1776 = vmatprep.subr.bf16.mxu0 0
        %1777 = vmatpush1.bf16.msra.mxu0 %v1760
        %1778 = vmatprep.subr.bf16.mxu0 0
        %1779 = vmatpush1.bf16.msra.mxu0 %v1761
        %1780 = vmatprep.subr.bf16.mxu0 0
        %1781 = vmatpush1.bf16.msra.mxu0 %v1762
        %1782 = vmatprep.subr.bf16.mxu0 0
        %1783 = vmatpush1.bf16.msra.mxu0 %v1763
        %1784 = vmatprep.subr.bf16.mxu0 0
        %1785 = vmatpush1.bf16.msra.mxu0 %v1764
        %1786 = vmatprep.subr.bf16.mxu0 0
        %1787 = vmatpush1.bf16.msra.mxu0 %v1765
        %1788 = vmatprep.subr.bf16.mxu0 0
        %1789 = vmatpush1.bf16.msra.mxu0 %v1766
        %1790 = vmatprep.subr.bf16.mxu0 0
        %1791 = vmatpush1.bf16.msra.mxu0 %v1767
        %1792 = vmatprep.subr.bf16.mxu0 0
        %1793 = vmatpush1.bf16.msra.mxu0 0
        %1794 = vmatprep.subr.bf16.mxu0 0
        %1795 = vmatpush1.bf16.msra.mxu0 0
        %1796 = vmatprep.subr.bf16.mxu0 0
        %1797 = vmatpush1.bf16.msra.mxu0 0
        %1798 = vmatprep.subr.bf16.mxu0 0
        %1799 = vmatpush1.bf16.msra.mxu0 0
        %1800 = vmatprep.subr.bf16.mxu0 0
        %1801 = vmatpush1.bf16.msra.mxu0 0
        %1802 = vmatprep.subr.bf16.mxu0 0
        %1803 = vmatpush1.bf16.msra.mxu0 0
        %1804 = vmatprep.subr.bf16.mxu0 0
        %1805 = vmatpush1.bf16.msra.mxu0 0
        %1806 = vmatprep.subr.bf16.mxu0 0
        %1807 = vmatpush1.bf16.msra.mxu0 0
        %1808 = vmatprep.mubr.bf16.mxu0 0
        %1809 = vmatmul.mubr.bf16.gmra.mrb[0].mxu0 %v1695
        %v1810 = vpop.f32.mrb[0].mxu0
        %v1811 = vadd.f32 0.0, %v1810
        %v1812 = vpop.f32.mrb[0].mxu0
        %v1813 = vpop.f32.mrb[0].mxu0
        %v1814 = vadd.f32 0.0, %v1813
        %v1815 = vpop.f32.mrb[0].mxu0
        %1816 = vmatprep.mubr.bf16.mxu0 0
        %1817 = vmatmul.mubr.bf16.gmra.mrb[0].mxu0 %v1696
        %v1818 = vpop.f32.mrb[0].mxu0
        %v1819 = vadd.f32 0.0, %v1818
        %v1820 = vpop.f32.mrb[0].mxu0
        %v1821 = vpop.f32.mrb[0].mxu0
        %v1822 = vadd.f32 0.0, %v1821
        %v1823 = vpop.f32.mrb[0].mxu0
        %1824 = vmatprep.mubr.bf16.mxu0 0
        %1825 = vmatmul.mubr.bf16.gmra.mrb[0].mxu0 %v1697
        %v1826 = vpop.f32.mrb[0].mxu0
        %v1827 = vadd.f32 0.0, %v1826
        %v1828 = vpop.f32.mrb[0].mxu0
        %v1829 = vpop.f32.mrb[0].mxu0
        %v1830 = vadd.f32 0.0, %v1829
        %v1831 = vpop.f32.mrb[0].mxu0
        %1832 = vmatprep.mubr.bf16.mxu0 0
        %1833 = vmatmul.mubr.bf16.gmra.mrb[0].mxu0 %v1698
        %v1834 = vpop.f32.mrb[0].mxu0
        %v1835 = vadd.f32 0.0, %v1834
        %v1836 = vpop.f32.mrb[0].mxu0
        %v1837 = vpop.f32.mrb[0].mxu0
        %v1838 = vadd.f32 0.0, %v1837
        %v1839 = vpop.f32.mrb[0].mxu0
        %1840 = vmatprep.mubr.bf16.mxu0 0
        %1841 = vmatmul.mubr.bf16.gmra.mrb[0].mxu0 %v1699
        %v1842 = vpop.f32.mrb[0].mxu0
        %v1843 = vadd.f32 0.0, %v1842
        %v1844 = vpop.f32.mrb[0].mxu0
        %v1845 = vpop.f32.mrb[0].mxu0
        %v1846 = vadd.f32 0.0, %v1845
        %v1847 = vpop.f32.mrb[0].mxu0
        %1848 = vmatprep.mubr.bf16.mxu0 0
        %1849 = vmatmul.mubr.bf16.gmra.mrb[0].mxu0 %v1700
        %v1850 = vpop.f32.mrb[0].mxu0
        %v1851 = vadd.f32 0.0, %v1850
        %v1852 = vpop.f32.mrb[0].mxu0
        %v1853 = vpop.f32.mrb[0].mxu0
        %v1854 = vadd.f32 0.0, %v1853
        %v1855 = vpop.f32.mrb[0].mxu0
        %1856 = vmatprep.mubr.bf16.mxu0 0
        %1857 = vmatmul.mubr.bf16.gmra.mrb[0].mxu0 %v1701
        %v1858 = vpop.f32.mrb[0].mxu0
        %v1859 = vadd.f32 0.0, %v1858
        %v1860 = vpop.f32.mrb[0].mxu0
        %v1861 = vpop.f32.mrb[0].mxu0
        %v1862 = vadd.f32 0.0, %v1861
        %v1863 = vpop.f32.mrb[0].mxu0
        %1864 = vmatprep.mubr.bf16.mxu0 0
        %1865 = vmatmul.mubr.bf16.gmra.mrb[0].mxu0 %v1702
        %v1866 = vpop.f32.mrb[0].mxu0
        %v1867 = vadd.f32 0.0, %v1866
        %v1868 = vpop.f32.mrb[0].mxu0
        %v1869 = vpop.f32.mrb[0].mxu0
        %v1870 = vadd.f32 0.0, %v1869
        %v1871 = vpop.f32.mrb[0].mxu0
        %1872 = vmatprep.mubr.bf16.mxu0 0
        %1873 = vmatmul.mubr.bf16.gmra.mrb[0].mxu0 %v1703
        %v1874 = vpop.f32.mrb[0].mxu0
        %v1875 = vadd.f32 0.0, %v1874
        %v1876 = vpop.f32.mrb[0].mxu0
        %v1877 = vpop.f32.mrb[0].mxu0
        %v1878 = vadd.f32 0.0, %v1877
        %v1879 = vpop.f32.mrb[0].mxu0
        %1880 = vmatprep.mubr.bf16.mxu0 0
        %1881 = vmatmul.mubr.bf16.gmra.mrb[0].mxu0 %v1704
        %v1882 = vpop.f32.mrb[0].mxu0
        %v1883 = vadd.f32 0.0, %v1882
        %v1884 = vpop.f32.mrb[0].mxu0
        %v1885 = vpop.f32.mrb[0].mxu0
        %v1886 = vadd.f32 0.0, %v1885
        %v1887 = vpop.f32.mrb[0].mxu0
        %1888 = vmatprep.mubr.bf16.mxu0 0
        %1889 = vmatmul.mubr.bf16.gmra.mrb[0].mxu0 %v1705
        %v1890 = vpop.f32.mrb[0].mxu0
        %v1891 = vadd.f32 0.0, %v1890
        %v1892 = vpop.f32.mrb[0].mxu0
        %v1893 = vpop.f32.mrb[0].mxu0
        %v1894 = vadd.f32 0.0, %v1893
        %v1895 = vpop.f32.mrb[0].mxu0
        %1896 = vmatprep.mubr.bf16.mxu0 0
        %1897 = vmatmul.mubr.bf16.gmra.mrb[0].mxu0 %v1706
        %v1898 = vpop.f32.mrb[0].mxu0
        %v1899 = vadd.f32 0.0, %v1898
        %v1900 = vpop.f32.mrb[0].mxu0
        %v1901 = vpop.f32.mrb[0].mxu0
        %v1902 = vadd.f32 0.0, %v1901
        %v1903 = vpop.f32.mrb[0].mxu0
        %1904 = vmatprep.mubr.bf16.mxu0 0
        %1905 = vmatmul.mubr.bf16.gmra.mrb[0].mxu0 %v1707
        %v1906 = vpop.f32.mrb[0].mxu0
        %v1907 = vadd.f32 0.0, %v1906
        %v1908 = vpop.f32.mrb[0].mxu0
        %v1909 = vpop.f32.mrb[0].mxu0
        %v1910 = vadd.f32 0.0, %v1909
        %v1911 = vpop.f32.mrb[0].mxu0
        %1912 = vmatprep.mubr.bf16.mxu0 0
        %1913 = vmatmul.mubr.bf16.gmra.mrb[0].mxu0 %v1708
        %v1914 = vpop.f32.mrb[0].mxu0
        %v1915 = vadd.f32 0.0, %v1914
        %v1916 = vpop.f32.mrb[0].mxu0
        %v1917 = vpop.f32.mrb[0].mxu0
        %v1918 = vadd.f32 0.0, %v1917
        %v1919 = vpop.f32.mrb[0].mxu0
        %1920 = vmatprep.mubr.bf16.mxu0 0
        %1921 = vmatmul.mubr.bf16.gmra.mrb[0].mxu0 %v1709
        %v1922 = vpop.f32.mrb[0].mxu0
        %v1923 = vadd.f32 0.0, %v1922
        %v1924 = vpop.f32.mrb[0].mxu0
        %v1925 = vpop.f32.mrb[0].mxu0
        %v1926 = vadd.f32 0.0, %v1925
        %v1927 = vpop.f32.mrb[0].mxu0
        %1928 = vmatprep.mubr.bf16.mxu0 0
        %1929 = vmatmul.mubr.bf16.gmra.mrb[0].mxu0 %v1710
        %v1930 = vpop.f32.mrb[0].mxu0
        %v1931 = vadd.f32 0.0, %v1930
        %v1932 = vpop.f32.mrb[0].mxu0
        %v1933 = vpop.f32.mrb[0].mxu0
        %v1934 = vadd.f32 0.0, %v1933
        %v1935 = vpop.f32.mrb[0].mxu0
        %1936 = vdwg.mxu0
        %v1937 = vadd.f32 %v1631, %v1811
        %v1938 = vadd.f32 %v1632, %v1814
        %v1939 = vadd.f32 %v1633, %v1819
        %v1940 = vadd.f32 %v1634, %v1822
        %v1941 = vadd.f32 %v1635, %v1827
        %v1942 = vadd.f32 %v1636, %v1830
        %v1943 = vadd.f32 %v1637, %v1835
        %v1944 = vadd.f32 %v1638, %v1838
        %v1945 = vadd.f32 %v1639, %v1843
        %v1946 = vadd.f32 %v1640, %v1846
        %v1947 = vadd.f32 %v1641, %v1851
        %v1948 = vadd.f32 %v1642, %v1854
        %v1949 = vadd.f32 %v1643, %v1859
        %v1950 = vadd.f32 %v1644, %v1862
        %v1951 = vadd.f32 %v1645, %v1867
        %v1952 = vadd.f32 %v1646, %v1870
        %v1953 = vadd.f32 %v1647, %v1875
        %v1954 = vadd.f32 %v1648, %v1878
        %v1955 = vadd.f32 %v1649, %v1883
        %v1956 = vadd.f32 %v1650, %v1886
        %v1957 = vadd.f32 %v1651, %v1891
        %v1958 = vadd.f32 %v1652, %v1894
        %v1959 = vadd.f32 %v1653, %v1899
        %v1960 = vadd.f32 %v1654, %v1902
        %v1961 = vadd.f32 %v1655, %v1907
        %v1962 = vadd.f32 %v1656, %v1910
        %v1963 = vadd.f32 %v1657, %v1915
        %v1964 = vadd.f32 %v1658, %v1918
        %v1965 = vadd.f32 %v1659, %v1923
        %v1966 = vadd.f32 %v1660, %v1926
        %v1967 = vadd.f32 %v1661, %v1931
        %v1968 = vadd.f32 %v1662, %v1934
        %s1969 = scalar_lea.vmem %s195, 48
        %v1970 = vld [vmem:[%s1969] sm:$0xff]
        %v1971 = vld [vmem:[%s1969 + $0x8] sm:$0xff]
        %v1972 = vld [vmem:[%s1969 + $0x18] sm:$0xff]
        %v1973 = vld [vmem:[%s1969 + $0x20] sm:$0xff]
        %v1974 = vld [vmem:[%s1969 + $0x30] sm:$0xff]
        %v1975 = vld [vmem:[%s1969 + $0x38] sm:$0xff]
        %v1976 = vld [vmem:[%s1969 + $0x48] sm:$0xff]
        %v1977 = vld [vmem:[%s1969 + $0x50] sm:$0xff]
        %v1978 = vld [vmem:[%s1969 + $0x60] sm:$0xff]
        %v1979 = vld [vmem:[%s1969 + $0x68] sm:$0xff]
        %v1980 = vld [vmem:[%s1969 + $0x78] sm:$0xff]
        %v1981 = vld [vmem:[%s1969 + $0x80] sm:$0xff]
        %v1982 = vld [vmem:[%s1969 + $0x90] sm:$0xff]
        %v1983 = vld [vmem:[%s1969 + $0x98] sm:$0xff]
        %v1984 = vld [vmem:[%s1969 + $0xa8] sm:$0xff]
        %v1985 = vld [vmem:[%s1969 + $0xb0] sm:$0xff]
        %v1986 = vld [vmem:[%s1969 + $0xc0] sm:$0xff]
        %v1987 = vld [vmem:[%s1969 + $0xc8] sm:$0xff]
        %v1988 = vld [vmem:[%s1969 + $0xd8] sm:$0xff]
        %v1989 = vld [vmem:[%s1969 + $0xe0] sm:$0xff]
        %v1990 = vld [vmem:[%s1969 + $0xf0] sm:$0xff]
        %v1991 = vld [vmem:[%s1969 + $0xf8] sm:$0xff]
        %v1992 = vld [vmem:[%s1969 + $0x108] sm:$0xff]
        %v1993 = vld [vmem:[%s1969 + $0x110] sm:$0xff]
        %v1994 = vld [vmem:[%s1969 + $0x120] sm:$0xff]
        %v1995 = vld [vmem:[%s1969 + $0x128] sm:$0xff]
        %v1996 = vld [vmem:[%s1969 + $0x138] sm:$0xff]
        %v1997 = vld [vmem:[%s1969 + $0x140] sm:$0xff]
        %v1998 = vld [vmem:[%s1969 + $0x150] sm:$0xff]
        %v1999 = vld [vmem:[%s1969 + $0x158] sm:$0xff]
        %v2000 = vld [vmem:[%s1969 + $0x168] sm:$0xff]
        %v2001 = vld [vmem:[%s1969 + $0x170] sm:$0xff]
        %v2002 = vpack.c.bf16 %v1971, %v1970
        %v2003 = vpack.c.bf16 %v1973, %v1972
        %v2004 = vpack.c.bf16 %v1975, %v1974
        %v2005 = vpack.c.bf16 %v1977, %v1976
        %v2006 = vpack.c.bf16 %v1979, %v1978
        %v2007 = vpack.c.bf16 %v1981, %v1980
        %v2008 = vpack.c.bf16 %v1983, %v1982
        %v2009 = vpack.c.bf16 %v1985, %v1984
        %v2010 = vpack.c.bf16 %v1987, %v1986
        %v2011 = vpack.c.bf16 %v1989, %v1988
        %v2012 = vpack.c.bf16 %v1991, %v1990
        %v2013 = vpack.c.bf16 %v1993, %v1992
        %v2014 = vpack.c.bf16 %v1995, %v1994
        %v2015 = vpack.c.bf16 %v1997, %v1996
        %v2016 = vpack.c.bf16 %v1999, %v1998
        %v2017 = vpack.c.bf16 %v2001, %v2000
        %s2018 = scalar_lea.vmem %s1, 384
        %v2019 = vld [vmem:[%s2018] sm:$0xf]
        %v2020 = vld [vmem:[%s2018 + $0x4] sm:$0xf]
        %v2021 = vld [vmem:[%s2018 + $0x8] sm:$0xf]
        %v2022 = vld [vmem:[%s2018 + $0xc] sm:$0xf]
        %v2023 = vld [vmem:[%s2018 + $0x10] sm:$0xf]
        %v2024 = vld [vmem:[%s2018 + $0x14] sm:$0xf]
        %v2025 = vld [vmem:[%s2018 + $0x18] sm:$0xf]
        %v2026 = vld [vmem:[%s2018 + $0x1c] sm:$0xf]
        %v2027 = vld [vmem:[%s2018 + $0x20] sm:$0xf]
        %v2028 = vld [vmem:[%s2018 + $0x24] sm:$0xf]
        %v2029 = vld [vmem:[%s2018 + $0x28] sm:$0xf]
        %v2030 = vld [vmem:[%s2018 + $0x2c] sm:$0xf]
        %v2031 = vld [vmem:[%s2018 + $0x30] sm:$0xf]
        %v2032 = vld [vmem:[%s2018 + $0x34] sm:$0xf]
        %v2033 = vld [vmem:[%s2018 + $0x38] sm:$0xf]
        %v2034 = vld [vmem:[%s2018 + $0x3c] sm:$0xf]
        %v2051 = vunpack.c.l.b16 %v2019
        %v2052 = vunpack.c.l.b16 %v2020
        %v2053 = vunpack.c.l.b16 %v2021
        %v2054 = vunpack.c.l.b16 %v2022
        %v2055 = vunpack.c.l.b16 %v2023
        %v2056 = vunpack.c.l.b16 %v2024
        %v2057 = vunpack.c.l.b16 %v2025
        %v2058 = vunpack.c.l.b16 %v2026
        %v2059 = vunpack.c.l.b16 %v2027
        %v2060 = vunpack.c.l.b16 %v2028
        %v2061 = vunpack.c.l.b16 %v2029
        %v2062 = vunpack.c.l.b16 %v2030
        %v2063 = vunpack.c.l.b16 %v2031
        %v2064 = vunpack.c.l.b16 %v2032
        %v2065 = vunpack.c.l.b16 %v2033
        %v2066 = vunpack.c.l.b16 %v2034
        %v2067 = vpack.c.b16 %v2052, %v2051
        %v2068 = vpack.c.b16 %v2054, %v2053
        %v2069 = vpack.c.b16 %v2056, %v2055
        %v2070 = vpack.c.b16 %v2058, %v2057
        %v2071 = vpack.c.b16 %v2060, %v2059
        %v2072 = vpack.c.b16 %v2062, %v2061
        %v2073 = vpack.c.b16 %v2064, %v2063
        %v2074 = vpack.c.b16 %v2066, %v2065
        %2083 = vmatprep.subr.bf16.mxu0 0
        %2084 = vmatpush1.bf16.msra.mxu0 %v2067
        %2085 = vmatprep.subr.bf16.mxu0 0
        %2086 = vmatpush1.bf16.msra.mxu0 %v2068
        %2087 = vmatprep.subr.bf16.mxu0 0
        %2088 = vmatpush1.bf16.msra.mxu0 %v2069
        %2089 = vmatprep.subr.bf16.mxu0 0
        %2090 = vmatpush1.bf16.msra.mxu0 %v2070
        %2091 = vmatprep.subr.bf16.mxu0 0
        %2092 = vmatpush1.bf16.msra.mxu0 %v2071
        %2093 = vmatprep.subr.bf16.mxu0 0
        %2094 = vmatpush1.bf16.msra.mxu0 %v2072
        %2095 = vmatprep.subr.bf16.mxu0 0
        %2096 = vmatpush1.bf16.msra.mxu0 %v2073
        %2097 = vmatprep.subr.bf16.mxu0 0
        %2098 = vmatpush1.bf16.msra.mxu0 %v2074
        %2099 = vmatprep.subr.bf16.mxu0 0
        %2100 = vmatpush1.bf16.msra.mxu0 0
        %2101 = vmatprep.subr.bf16.mxu0 0
        %2102 = vmatpush1.bf16.msra.mxu0 0
        %2103 = vmatprep.subr.bf16.mxu0 0
        %2104 = vmatpush1.bf16.msra.mxu0 0
        %2105 = vmatprep.subr.bf16.mxu0 0
        %2106 = vmatpush1.bf16.msra.mxu0 0
        %2107 = vmatprep.subr.bf16.mxu0 0
        %2108 = vmatpush1.bf16.msra.mxu0 0
        %2109 = vmatprep.subr.bf16.mxu0 0
        %2110 = vmatpush1.bf16.msra.mxu0 0
        %2111 = vmatprep.subr.bf16.mxu0 0
        %2112 = vmatpush1.bf16.msra.mxu0 0
        %2113 = vmatprep.subr.bf16.mxu0 0
        %2114 = vmatpush1.bf16.msra.mxu0 0
        %2115 = vmatprep.mubr.bf16.mxu0 0
        %2116 = vmatmul.mubr.bf16.gmra.mrb[0].mxu0 %v2002
        %v2117 = vpop.f32.mrb[0].mxu0
        %v2118 = vadd.f32 0.0, %v2117
        %v2119 = vpop.f32.mrb[0].mxu0
        %v2120 = vpop.f32.mrb[0].mxu0
        %v2121 = vadd.f32 0.0, %v2120
        %v2122 = vpop.f32.mrb[0].mxu0
        %2123 = vmatprep.mubr.bf16.mxu0 0
        %2124 = vmatmul.mubr.bf16.gmra.mrb[0].mxu0 %v2003
        %v2125 = vpop.f32.mrb[0].mxu0
        %v2126 = vadd.f32 0.0, %v2125
        %v2127 = vpop.f32.mrb[0].mxu0
        %v2128 = vpop.f32.mrb[0].mxu0
        %v2129 = vadd.f32 0.0, %v2128
        %v2130 = vpop.f32.mrb[0].mxu0
        %2131 = vmatprep.mubr.bf16.mxu0 0
        %2132 = vmatmul.mubr.bf16.gmra.mrb[0].mxu0 %v2004
        %v2133 = vpop.f32.mrb[0].mxu0
        %v2134 = vadd.f32 0.0, %v2133
        %v2135 = vpop.f32.mrb[0].mxu0
        %v2136 = vpop.f32.mrb[0].mxu0
        %v2137 = vadd.f32 0.0, %v2136
        %v2138 = vpop.f32.mrb[0].mxu0
        %2139 = vmatprep.mubr.bf16.mxu0 0
        %2140 = vmatmul.mubr.bf16.gmra.mrb[0].mxu0 %v2005
        %v2141 = vpop.f32.mrb[0].mxu0
        %v2142 = vadd.f32 0.0, %v2141
        %v2143 = vpop.f32.mrb[0].mxu0
        %v2144 = vpop.f32.mrb[0].mxu0
        %v2145 = vadd.f32 0.0, %v2144
        %v2146 = vpop.f32.mrb[0].mxu0
        %2147 = vmatprep.mubr.bf16.mxu0 0
        %2148 = vmatmul.mubr.bf16.gmra.mrb[0].mxu0 %v2006
        %v2149 = vpop.f32.mrb[0].mxu0
        %v2150 = vadd.f32 0.0, %v2149
        %v2151 = vpop.f32.mrb[0].mxu0
        %v2152 = vpop.f32.mrb[0].mxu0
        %v2153 = vadd.f32 0.0, %v2152
        %v2154 = vpop.f32.mrb[0].mxu0
        %2155 = vmatprep.mubr.bf16.mxu0 0
        %2156 = vmatmul.mubr.bf16.gmra.mrb[0].mxu0 %v2007
        %v2157 = vpop.f32.mrb[0].mxu0
        %v2158 = vadd.f32 0.0, %v2157
        %v2159 = vpop.f32.mrb[0].mxu0
        %v2160 = vpop.f32.mrb[0].mxu0
        %v2161 = vadd.f32 0.0, %v2160
        %v2162 = vpop.f32.mrb[0].mxu0
        %2163 = vmatprep.mubr.bf16.mxu0 0
        %2164 = vmatmul.mubr.bf16.gmra.mrb[0].mxu0 %v2008
        %v2165 = vpop.f32.mrb[0].mxu0
        %v2166 = vadd.f32 0.0, %v2165
        %v2167 = vpop.f32.mrb[0].mxu0
        %v2168 = vpop.f32.mrb[0].mxu0
        %v2169 = vadd.f32 0.0, %v2168
        %v2170 = vpop.f32.mrb[0].mxu0
        %2171 = vmatprep.mubr.bf16.mxu0 0
        %2172 = vmatmul.mubr.bf16.gmra.mrb[0].mxu0 %v2009
        %v2173 = vpop.f32.mrb[0].mxu0
        %v2174 = vadd.f32 0.0, %v2173
        %v2175 = vpop.f32.mrb[0].mxu0
        %v2176 = vpop.f32.mrb[0].mxu0
        %v2177 = vadd.f32 0.0, %v2176
        %v2178 = vpop.f32.mrb[0].mxu0
        %2179 = vmatprep.mubr.bf16.mxu0 0
        %2180 = vmatmul.mubr.bf16.gmra.mrb[0].mxu0 %v2010
        %v2181 = vpop.f32.mrb[0].mxu0
        %v2182 = vadd.f32 0.0, %v2181
        %v2183 = vpop.f32.mrb[0].mxu0
        %v2184 = vpop.f32.mrb[0].mxu0
        %v2185 = vadd.f32 0.0, %v2184
        %v2186 = vpop.f32.mrb[0].mxu0
        %2187 = vmatprep.mubr.bf16.mxu0 0
        %2188 = vmatmul.mubr.bf16.gmra.mrb[0].mxu0 %v2011
        %v2189 = vpop.f32.mrb[0].mxu0
        %v2190 = vadd.f32 0.0, %v2189
        %v2191 = vpop.f32.mrb[0].mxu0
        %v2192 = vpop.f32.mrb[0].mxu0
        %v2193 = vadd.f32 0.0, %v2192
        %v2194 = vpop.f32.mrb[0].mxu0
        %2195 = vmatprep.mubr.bf16.mxu0 0
        %2196 = vmatmul.mubr.bf16.gmra.mrb[0].mxu0 %v2012
        %v2197 = vpop.f32.mrb[0].mxu0
        %v2198 = vadd.f32 0.0, %v2197
        %v2199 = vpop.f32.mrb[0].mxu0
        %v2200 = vpop.f32.mrb[0].mxu0
        %v2201 = vadd.f32 0.0, %v2200
        %v2202 = vpop.f32.mrb[0].mxu0
        %2203 = vmatprep.mubr.bf16.mxu0 0
        %2204 = vmatmul.mubr.bf16.gmra.mrb[0].mxu0 %v2013
        %v2205 = vpop.f32.mrb[0].mxu0
        %v2206 = vadd.f32 0.0, %v2205
        %v2207 = vpop.f32.mrb[0].mxu0
        %v2208 = vpop.f32.mrb[0].mxu0
        %v2209 = vadd.f32 0.0, %v2208
        %v2210 = vpop.f32.mrb[0].mxu0
        %2211 = vmatprep.mubr.bf16.mxu0 0
        %2212 = vmatmul.mubr.bf16.gmra.mrb[0].mxu0 %v2014
        %v2213 = vpop.f32.mrb[0].mxu0
        %v2214 = vadd.f32 0.0, %v2213
        %v2215 = vpop.f32.mrb[0].mxu0
        %v2216 = vpop.f32.mrb[0].mxu0
        %v2217 = vadd.f32 0.0, %v2216
        %v2218 = vpop.f32.mrb[0].mxu0
        %2219 = vmatprep.mubr.bf16.mxu0 0
        %2220 = vmatmul.mubr.bf16.gmra.mrb[0].mxu0 %v2015
        %v2221 = vpop.f32.mrb[0].mxu0
        %v2222 = vadd.f32 0.0, %v2221
        %v2223 = vpop.f32.mrb[0].mxu0
        %v2224 = vpop.f32.mrb[0].mxu0
        %v2225 = vadd.f32 0.0, %v2224
        %v2226 = vpop.f32.mrb[0].mxu0
        %2227 = vmatprep.mubr.bf16.mxu0 0
        %2228 = vmatmul.mubr.bf16.gmra.mrb[0].mxu0 %v2016
        %v2229 = vpop.f32.mrb[0].mxu0
        %v2230 = vadd.f32 0.0, %v2229
        %v2231 = vpop.f32.mrb[0].mxu0
        %v2232 = vpop.f32.mrb[0].mxu0
        %v2233 = vadd.f32 0.0, %v2232
        %v2234 = vpop.f32.mrb[0].mxu0
        %2235 = vmatprep.mubr.bf16.mxu0 0
        %2236 = vmatmul.mubr.bf16.gmra.mrb[0].mxu0 %v2017
        %v2237 = vpop.f32.mrb[0].mxu0
        %v2238 = vadd.f32 0.0, %v2237
        %v2239 = vpop.f32.mrb[0].mxu0
        %v2240 = vpop.f32.mrb[0].mxu0
        %v2241 = vadd.f32 0.0, %v2240
        %v2242 = vpop.f32.mrb[0].mxu0
        %2243 = vdwg.mxu0
        %v2244 = vadd.f32 %v1937, %v2118
        %v2245 = vadd.f32 %v1938, %v2121
        %v2246 = vadd.f32 %v1939, %v2126
        %v2247 = vadd.f32 %v1940, %v2129
        %v2248 = vadd.f32 %v1941, %v2134
        %v2249 = vadd.f32 %v1942, %v2137
        %v2250 = vadd.f32 %v1943, %v2142
        %v2251 = vadd.f32 %v1944, %v2145
        %v2252 = vadd.f32 %v1945, %v2150
        %v2253 = vadd.f32 %v1946, %v2153
        %v2254 = vadd.f32 %v1947, %v2158
        %v2255 = vadd.f32 %v1948, %v2161
        %v2256 = vadd.f32 %v1949, %v2166
        %v2257 = vadd.f32 %v1950, %v2169
        %v2258 = vadd.f32 %v1951, %v2174
        %v2259 = vadd.f32 %v1952, %v2177
        %v2260 = vadd.f32 %v1953, %v2182
        %v2261 = vadd.f32 %v1954, %v2185
        %v2262 = vadd.f32 %v1955, %v2190
        %v2263 = vadd.f32 %v1956, %v2193
        %v2264 = vadd.f32 %v1957, %v2198
        %v2265 = vadd.f32 %v1958, %v2201
        %v2266 = vadd.f32 %v1959, %v2206
        %v2267 = vadd.f32 %v1960, %v2209
        %v2268 = vadd.f32 %v1961, %v2214
        %v2269 = vadd.f32 %v1962, %v2217
        %v2270 = vadd.f32 %v1963, %v2222
        %v2271 = vadd.f32 %v1964, %v2225
        %v2272 = vadd.f32 %v1965, %v2230
        %v2273 = vadd.f32 %v1966, %v2233
        %v2274 = vadd.f32 %v1967, %v2238
        %v2275 = vadd.f32 %v1968, %v2241
        %v2276 = vld [vmem:[%s1969 + $0x1] sm:$0xff]
        %v2277 = vld [vmem:[%s1969 + $0x9] sm:$0xff]
        %v2278 = vld [vmem:[%s1969 + $0x19] sm:$0xff]
        %v2279 = vld [vmem:[%s1969 + $0x21] sm:$0xff]
        %v2280 = vld [vmem:[%s1969 + $0x31] sm:$0xff]
        %v2281 = vld [vmem:[%s1969 + $0x39] sm:$0xff]
        %v2282 = vld [vmem:[%s1969 + $0x49] sm:$0xff]
        %v2283 = vld [vmem:[%s1969 + $0x51] sm:$0xff]
        %v2284 = vld [vmem:[%s1969 + $0x61] sm:$0xff]
        %v2285 = vld [vmem:[%s1969 + $0x69] sm:$0xff]
        %v2286 = vld [vmem:[%s1969 + $0x79] sm:$0xff]
        %v2287 = vld [vmem:[%s1969 + $0x81] sm:$0xff]
        %v2288 = vld [vmem:[%s1969 + $0x91] sm:$0xff]
        %v2289 = vld [vmem:[%s1969 + $0x99] sm:$0xff]
        %v2290 = vld [vmem:[%s1969 + $0xa9] sm:$0xff]
        %v2291 = vld [vmem:[%s1969 + $0xb1] sm:$0xff]
        %v2292 = vld [vmem:[%s1969 + $0xc1] sm:$0xff]
        %v2293 = vld [vmem:[%s1969 + $0xc9] sm:$0xff]
        %v2294 = vld [vmem:[%s1969 + $0xd9] sm:$0xff]
        %v2295 = vld [vmem:[%s1969 + $0xe1] sm:$0xff]
        %v2296 = vld [vmem:[%s1969 + $0xf1] sm:$0xff]
        %v2297 = vld [vmem:[%s1969 + $0xf9] sm:$0xff]
        %v2298 = vld [vmem:[%s1969 + $0x109] sm:$0xff]
        %v2299 = vld [vmem:[%s1969 + $0x111] sm:$0xff]
        %v2300 = vld [vmem:[%s1969 + $0x121] sm:$0xff]
        %v2301 = vld [vmem:[%s1969 + $0x129] sm:$0xff]
        %v2302 = vld [vmem:[%s1969 + $0x139] sm:$0xff]
        %v2303 = vld [vmem:[%s1969 + $0x141] sm:$0xff]
        %v2304 = vld [vmem:[%s1969 + $0x151] sm:$0xff]
        %v2305 = vld [vmem:[%s1969 + $0x159] sm:$0xff]
        %v2306 = vld [vmem:[%s1969 + $0x169] sm:$0xff]
        %v2307 = vld [vmem:[%s1969 + $0x171] sm:$0xff]
        %v2308 = vpack.c.bf16 %v2277, %v2276
        %v2309 = vpack.c.bf16 %v2279, %v2278
        %v2310 = vpack.c.bf16 %v2281, %v2280
        %v2311 = vpack.c.bf16 %v2283, %v2282
        %v2312 = vpack.c.bf16 %v2285, %v2284
        %v2313 = vpack.c.bf16 %v2287, %v2286
        %v2314 = vpack.c.bf16 %v2289, %v2288
        %v2315 = vpack.c.bf16 %v2291, %v2290
        %v2316 = vpack.c.bf16 %v2293, %v2292
        %v2317 = vpack.c.bf16 %v2295, %v2294
        %v2318 = vpack.c.bf16 %v2297, %v2296
        %v2319 = vpack.c.bf16 %v2299, %v2298
        %v2320 = vpack.c.bf16 %v2301, %v2300
        %v2321 = vpack.c.bf16 %v2303, %v2302
        %v2322 = vpack.c.bf16 %v2305, %v2304
        %v2323 = vpack.c.bf16 %v2307, %v2306
        %s2324 = scalar_lea.vmem %s1, 448
        %v2325 = vld [vmem:[%s2324] sm:$0xf]
        %v2326 = vld [vmem:[%s2324 + $0x4] sm:$0xf]
        %v2327 = vld [vmem:[%s2324 + $0x8] sm:$0xf]
        %v2328 = vld [vmem:[%s2324 + $0xc] sm:$0xf]
        %v2329 = vld [vmem:[%s2324 + $0x10] sm:$0xf]
        %v2330 = vld [vmem:[%s2324 + $0x14] sm:$0xf]
        %v2331 = vld [vmem:[%s2324 + $0x18] sm:$0xf]
        %v2332 = vld [vmem:[%s2324 + $0x1c] sm:$0xf]
        %v2333 = vld [vmem:[%s2324 + $0x20] sm:$0xf]
        %v2334 = vld [vmem:[%s2324 + $0x24] sm:$0xf]
        %v2335 = vld [vmem:[%s2324 + $0x28] sm:$0xf]
        %v2336 = vld [vmem:[%s2324 + $0x2c] sm:$0xf]
        %v2337 = vld [vmem:[%s2324 + $0x30] sm:$0xf]
        %v2338 = vld [vmem:[%s2324 + $0x34] sm:$0xf]
        %v2339 = vld [vmem:[%s2324 + $0x38] sm:$0xf]
        %v2340 = vld [vmem:[%s2324 + $0x3c] sm:$0xf]
        %v2357 = vunpack.c.l.b16 %v2325
        %v2358 = vunpack.c.l.b16 %v2326
        %v2359 = vunpack.c.l.b16 %v2327
        %v2360 = vunpack.c.l.b16 %v2328
        %v2361 = vunpack.c.l.b16 %v2329
        %v2362 = vunpack.c.l.b16 %v2330
        %v2363 = vunpack.c.l.b16 %v2331
        %v2364 = vunpack.c.l.b16 %v2332
        %v2365 = vunpack.c.l.b16 %v2333
        %v2366 = vunpack.c.l.b16 %v2334
        %v2367 = vunpack.c.l.b16 %v2335
        %v2368 = vunpack.c.l.b16 %v2336
        %v2369 = vunpack.c.l.b16 %v2337
        %v2370 = vunpack.c.l.b16 %v2338
        %v2371 = vunpack.c.l.b16 %v2339
        %v2372 = vunpack.c.l.b16 %v2340
        %v2373 = vpack.c.b16 %v2358, %v2357
        %v2374 = vpack.c.b16 %v2360, %v2359
        %v2375 = vpack.c.b16 %v2362, %v2361
        %v2376 = vpack.c.b16 %v2364, %v2363
        %v2377 = vpack.c.b16 %v2366, %v2365
        %v2378 = vpack.c.b16 %v2368, %v2367
        %v2379 = vpack.c.b16 %v2370, %v2369
        %v2380 = vpack.c.b16 %v2372, %v2371
        %2389 = vmatprep.subr.bf16.mxu0 0
        %2390 = vmatpush1.bf16.msra.mxu0 %v2373
        %2391 = vmatprep.subr.bf16.mxu0 0
        %2392 = vmatpush1.bf16.msra.mxu0 %v2374
        %2393 = vmatprep.subr.bf16.mxu0 0
        %2394 = vmatpush1.bf16.msra.mxu0 %v2375
        %2395 = vmatprep.subr.bf16.mxu0 0
        %2396 = vmatpush1.bf16.msra.mxu0 %v2376
        %2397 = vmatprep.subr.bf16.mxu0 0
        %2398 = vmatpush1.bf16.msra.mxu0 %v2377
        %2399 = vmatprep.subr.bf16.mxu0 0
        %2400 = vmatpush1.bf16.msra.mxu0 %v2378
        %2401 = vmatprep.subr.bf16.mxu0 0
        %2402 = vmatpush1.bf16.msra.mxu0 %v2379
        %2403 = vmatprep.subr.bf16.mxu0 0
        %2404 = vmatpush1.bf16.msra.mxu0 %v2380
        %2405 = vmatprep.subr.bf16.mxu0 0
        %2406 = vmatpush1.bf16.msra.mxu0 0
        %2407 = vmatprep.subr.bf16.mxu0 0
        %2408 = vmatpush1.bf16.msra.mxu0 0
        %2409 = vmatprep.subr.bf16.mxu0 0
        %2410 = vmatpush1.bf16.msra.mxu0 0
        %2411 = vmatprep.subr.bf16.mxu0 0
        %2412 = vmatpush1.bf16.msra.mxu0 0
        %2413 = vmatprep.subr.bf16.mxu0 0
        %2414 = vmatpush1.bf16.msra.mxu0 0
        %2415 = vmatprep.subr.bf16.mxu0 0
        %2416 = vmatpush1.bf16.msra.mxu0 0
        %2417 = vmatprep.subr.bf16.mxu0 0
        %2418 = vmatpush1.bf16.msra.mxu0 0
        %2419 = vmatprep.subr.bf16.mxu0 0
        %2420 = vmatpush1.bf16.msra.mxu0 0
        %2421 = vmatprep.mubr.bf16.mxu0 0
        %2422 = vmatmul.mubr.bf16.gmra.mrb[0].mxu0 %v2308
        %v2423 = vpop.f32.mrb[0].mxu0
        %v2424 = vadd.f32 0.0, %v2423
        %v2425 = vpop.f32.mrb[0].mxu0
        %v2426 = vpop.f32.mrb[0].mxu0
        %v2427 = vadd.f32 0.0, %v2426
        %v2428 = vpop.f32.mrb[0].mxu0
        %2429 = vmatprep.mubr.bf16.mxu0 0
        %2430 = vmatmul.mubr.bf16.gmra.mrb[0].mxu0 %v2309
        %v2431 = vpop.f32.mrb[0].mxu0
        %v2432 = vadd.f32 0.0, %v2431
        %v2433 = vpop.f32.mrb[0].mxu0
        %v2434 = vpop.f32.mrb[0].mxu0
        %v2435 = vadd.f32 0.0, %v2434
        %v2436 = vpop.f32.mrb[0].mxu0
        %2437 = vmatprep.mubr.bf16.mxu0 0
        %2438 = vmatmul.mubr.bf16.gmra.mrb[0].mxu0 %v2310
        %v2439 = vpop.f32.mrb[0].mxu0
        %v2440 = vadd.f32 0.0, %v2439
        %v2441 = vpop.f32.mrb[0].mxu0
        %v2442 = vpop.f32.mrb[0].mxu0
        %v2443 = vadd.f32 0.0, %v2442
        %v2444 = vpop.f32.mrb[0].mxu0
        %2445 = vmatprep.mubr.bf16.mxu0 0
        %2446 = vmatmul.mubr.bf16.gmra.mrb[0].mxu0 %v2311
        %v2447 = vpop.f32.mrb[0].mxu0
        %v2448 = vadd.f32 0.0, %v2447
        %v2449 = vpop.f32.mrb[0].mxu0
        %v2450 = vpop.f32.mrb[0].mxu0
        %v2451 = vadd.f32 0.0, %v2450
        %v2452 = vpop.f32.mrb[0].mxu0
        %2453 = vmatprep.mubr.bf16.mxu0 0
        %2454 = vmatmul.mubr.bf16.gmra.mrb[0].mxu0 %v2312
        %v2455 = vpop.f32.mrb[0].mxu0
        %v2456 = vadd.f32 0.0, %v2455
        %v2457 = vpop.f32.mrb[0].mxu0
        %v2458 = vpop.f32.mrb[0].mxu0
        %v2459 = vadd.f32 0.0, %v2458
        %v2460 = vpop.f32.mrb[0].mxu0
        %2461 = vmatprep.mubr.bf16.mxu0 0
        %2462 = vmatmul.mubr.bf16.gmra.mrb[0].mxu0 %v2313
        %v2463 = vpop.f32.mrb[0].mxu0
        %v2464 = vadd.f32 0.0, %v2463
        %v2465 = vpop.f32.mrb[0].mxu0
        %v2466 = vpop.f32.mrb[0].mxu0
        %v2467 = vadd.f32 0.0, %v2466
        %v2468 = vpop.f32.mrb[0].mxu0
        %2469 = vmatprep.mubr.bf16.mxu0 0
        %2470 = vmatmul.mubr.bf16.gmra.mrb[0].mxu0 %v2314
        %v2471 = vpop.f32.mrb[0].mxu0
        %v2472 = vadd.f32 0.0, %v2471
        %v2473 = vpop.f32.mrb[0].mxu0
        %v2474 = vpop.f32.mrb[0].mxu0
        %v2475 = vadd.f32 0.0, %v2474
        %v2476 = vpop.f32.mrb[0].mxu0
        %2477 = vmatprep.mubr.bf16.mxu0 0
        %2478 = vmatmul.mubr.bf16.gmra.mrb[0].mxu0 %v2315
        %v2479 = vpop.f32.mrb[0].mxu0
        %v2480 = vadd.f32 0.0, %v2479
        %v2481 = vpop.f32.mrb[0].mxu0
        %v2482 = vpop.f32.mrb[0].mxu0
        %v2483 = vadd.f32 0.0, %v2482
        %v2484 = vpop.f32.mrb[0].mxu0
        %2485 = vmatprep.mubr.bf16.mxu0 0
        %2486 = vmatmul.mubr.bf16.gmra.mrb[0].mxu0 %v2316
        %v2487 = vpop.f32.mrb[0].mxu0
        %v2488 = vadd.f32 0.0, %v2487
        %v2489 = vpop.f32.mrb[0].mxu0
        %v2490 = vpop.f32.mrb[0].mxu0
        %v2491 = vadd.f32 0.0, %v2490
        %v2492 = vpop.f32.mrb[0].mxu0
        %2493 = vmatprep.mubr.bf16.mxu0 0
        %2494 = vmatmul.mubr.bf16.gmra.mrb[0].mxu0 %v2317
        %v2495 = vpop.f32.mrb[0].mxu0
        %v2496 = vadd.f32 0.0, %v2495
        %v2497 = vpop.f32.mrb[0].mxu0
        %v2498 = vpop.f32.mrb[0].mxu0
        %v2499 = vadd.f32 0.0, %v2498
        %v2500 = vpop.f32.mrb[0].mxu0
        %2501 = vmatprep.mubr.bf16.mxu0 0
        %2502 = vmatmul.mubr.bf16.gmra.mrb[0].mxu0 %v2318
        %v2503 = vpop.f32.mrb[0].mxu0
        %v2504 = vadd.f32 0.0, %v2503
        %v2505 = vpop.f32.mrb[0].mxu0
        %v2506 = vpop.f32.mrb[0].mxu0
        %v2507 = vadd.f32 0.0, %v2506
        %v2508 = vpop.f32.mrb[0].mxu0
        %2509 = vmatprep.mubr.bf16.mxu0 0
        %2510 = vmatmul.mubr.bf16.gmra.mrb[0].mxu0 %v2319
        %v2511 = vpop.f32.mrb[0].mxu0
        %v2512 = vadd.f32 0.0, %v2511
        %v2513 = vpop.f32.mrb[0].mxu0
        %v2514 = vpop.f32.mrb[0].mxu0
        %v2515 = vadd.f32 0.0, %v2514
        %v2516 = vpop.f32.mrb[0].mxu0
        %2517 = vmatprep.mubr.bf16.mxu0 0
        %2518 = vmatmul.mubr.bf16.gmra.mrb[0].mxu0 %v2320
        %v2519 = vpop.f32.mrb[0].mxu0
        %v2520 = vadd.f32 0.0, %v2519
        %v2521 = vpop.f32.mrb[0].mxu0
        %v2522 = vpop.f32.mrb[0].mxu0
        %v2523 = vadd.f32 0.0, %v2522
        %v2524 = vpop.f32.mrb[0].mxu0
        %2525 = vmatprep.mubr.bf16.mxu0 0
        %2526 = vmatmul.mubr.bf16.gmra.mrb[0].mxu0 %v2321
        %v2527 = vpop.f32.mrb[0].mxu0
        %v2528 = vadd.f32 0.0, %v2527
        %v2529 = vpop.f32.mrb[0].mxu0
        %v2530 = vpop.f32.mrb[0].mxu0
        %v2531 = vadd.f32 0.0, %v2530
        %v2532 = vpop.f32.mrb[0].mxu0
        %2533 = vmatprep.mubr.bf16.mxu0 0
        %2534 = vmatmul.mubr.bf16.gmra.mrb[0].mxu0 %v2322
        %v2535 = vpop.f32.mrb[0].mxu0
        %v2536 = vadd.f32 0.0, %v2535
        %v2537 = vpop.f32.mrb[0].mxu0
        %v2538 = vpop.f32.mrb[0].mxu0
        %v2539 = vadd.f32 0.0, %v2538
        %v2540 = vpop.f32.mrb[0].mxu0
        %2541 = vmatprep.mubr.bf16.mxu0 0
        %2542 = vmatmul.mubr.bf16.gmra.mrb[0].mxu0 %v2323
        %v2543 = vpop.f32.mrb[0].mxu0
        %v2544 = vadd.f32 0.0, %v2543
        %v2545 = vpop.f32.mrb[0].mxu0
        %v2546 = vpop.f32.mrb[0].mxu0
        %v2547 = vadd.f32 0.0, %v2546
        %v2548 = vpop.f32.mrb[0].mxu0
        %2549 = vdwg.mxu0
        %v2550 = vadd.f32 %v2244, %v2424
        %v2551 = vadd.f32 %v2245, %v2427
        %v2552 = vadd.f32 %v2246, %v2432
        %v2553 = vadd.f32 %v2247, %v2435
        %v2554 = vadd.f32 %v2248, %v2440
        %v2555 = vadd.f32 %v2249, %v2443
        %v2556 = vadd.f32 %v2250, %v2448
        %v2557 = vadd.f32 %v2251, %v2451
        %v2558 = vadd.f32 %v2252, %v2456
        %v2559 = vadd.f32 %v2253, %v2459
        %v2560 = vadd.f32 %v2254, %v2464
        %v2561 = vadd.f32 %v2255, %v2467
        %v2562 = vadd.f32 %v2256, %v2472
        %v2563 = vadd.f32 %v2257, %v2475
        %v2564 = vadd.f32 %v2258, %v2480
        %v2565 = vadd.f32 %v2259, %v2483
        %v2566 = vadd.f32 %v2260, %v2488
        %v2567 = vadd.f32 %v2261, %v2491
        %v2568 = vadd.f32 %v2262, %v2496
        %v2569 = vadd.f32 %v2263, %v2499
        %v2570 = vadd.f32 %v2264, %v2504
        %v2571 = vadd.f32 %v2265, %v2507
        %v2572 = vadd.f32 %v2266, %v2512
        %v2573 = vadd.f32 %v2267, %v2515
        %v2574 = vadd.f32 %v2268, %v2520
        %v2575 = vadd.f32 %v2269, %v2523
        %v2576 = vadd.f32 %v2270, %v2528
        %v2577 = vadd.f32 %v2271, %v2531
        %v2578 = vadd.f32 %v2272, %v2536
        %v2579 = vadd.f32 %v2273, %v2539
        %v2580 = vadd.f32 %v2274, %v2544
        %v2581 = vadd.f32 %v2275, %v2547
        %v2582 = vld [vmem:[%s1969 + $0x2] sm:$0xff]
        %v2583 = vld [vmem:[%s1969 + $0xa] sm:$0xff]
        %v2584 = vld [vmem:[%s1969 + $0x1a] sm:$0xff]
        %v2585 = vld [vmem:[%s1969 + $0x22] sm:$0xff]
        %v2586 = vld [vmem:[%s1969 + $0x32] sm:$0xff]
        %v2587 = vld [vmem:[%s1969 + $0x3a] sm:$0xff]
        %v2588 = vld [vmem:[%s1969 + $0x4a] sm:$0xff]
        %v2589 = vld [vmem:[%s1969 + $0x52] sm:$0xff]
        %v2590 = vld [vmem:[%s1969 + $0x62] sm:$0xff]
        %v2591 = vld [vmem:[%s1969 + $0x6a] sm:$0xff]
        %v2592 = vld [vmem:[%s1969 + $0x7a] sm:$0xff]
        %v2593 = vld [vmem:[%s1969 + $0x82] sm:$0xff]
        %v2594 = vld [vmem:[%s1969 + $0x92] sm:$0xff]
        %v2595 = vld [vmem:[%s1969 + $0x9a] sm:$0xff]
        %v2596 = vld [vmem:[%s1969 + $0xaa] sm:$0xff]
        %v2597 = vld [vmem:[%s1969 + $0xb2] sm:$0xff]
        %v2598 = vld [vmem:[%s1969 + $0xc2] sm:$0xff]
        %v2599 = vld [vmem:[%s1969 + $0xca] sm:$0xff]
        %v2600 = vld [vmem:[%s1969 + $0xda] sm:$0xff]
        %v2601 = vld [vmem:[%s1969 + $0xe2] sm:$0xff]
        %v2602 = vld [vmem:[%s1969 + $0xf2] sm:$0xff]
        %v2603 = vld [vmem:[%s1969 + $0xfa] sm:$0xff]
        %v2604 = vld [vmem:[%s1969 + $0x10a] sm:$0xff]
        %v2605 = vld [vmem:[%s1969 + $0x112] sm:$0xff]
        %v2606 = vld [vmem:[%s1969 + $0x122] sm:$0xff]
        %v2607 = vld [vmem:[%s1969 + $0x12a] sm:$0xff]
        %v2608 = vld [vmem:[%s1969 + $0x13a] sm:$0xff]
        %v2609 = vld [vmem:[%s1969 + $0x142] sm:$0xff]
        %v2610 = vld [vmem:[%s1969 + $0x152] sm:$0xff]
        %v2611 = vld [vmem:[%s1969 + $0x15a] sm:$0xff]
        %v2612 = vld [vmem:[%s1969 + $0x16a] sm:$0xff]
        %v2613 = vld [vmem:[%s1969 + $0x172] sm:$0xff]
        %v2614 = vpack.c.bf16 %v2583, %v2582
        %v2615 = vpack.c.bf16 %v2585, %v2584
        %v2616 = vpack.c.bf16 %v2587, %v2586
        %v2617 = vpack.c.bf16 %v2589, %v2588
        %v2618 = vpack.c.bf16 %v2591, %v2590
        %v2619 = vpack.c.bf16 %v2593, %v2592
        %v2620 = vpack.c.bf16 %v2595, %v2594
        %v2621 = vpack.c.bf16 %v2597, %v2596
        %v2622 = vpack.c.bf16 %v2599, %v2598
        %v2623 = vpack.c.bf16 %v2601, %v2600
        %v2624 = vpack.c.bf16 %v2603, %v2602
        %v2625 = vpack.c.bf16 %v2605, %v2604
        %v2626 = vpack.c.bf16 %v2607, %v2606
        %v2627 = vpack.c.bf16 %v2609, %v2608
        %v2628 = vpack.c.bf16 %v2611, %v2610
        %v2629 = vpack.c.bf16 %v2613, %v2612
        %s2630 = scalar_lea.vmem %s1, 512
        %v2631 = vld [vmem:[%s2630] sm:$0xf]
        %v2632 = vld [vmem:[%s2630 + $0x4] sm:$0xf]
        %v2633 = vld [vmem:[%s2630 + $0x8] sm:$0xf]
        %v2634 = vld [vmem:[%s2630 + $0xc] sm:$0xf]
        %v2635 = vld [vmem:[%s2630 + $0x10] sm:$0xf]
        %v2636 = vld [vmem:[%s2630 + $0x14] sm:$0xf]
        %v2637 = vld [vmem:[%s2630 + $0x18] sm:$0xf]
        %v2638 = vld [vmem:[%s2630 + $0x1c] sm:$0xf]
        %v2639 = vld [vmem:[%s2630 + $0x20] sm:$0xf]
        %v2640 = vld [vmem:[%s2630 + $0x24] sm:$0xf]
        %v2641 = vld [vmem:[%s2630 + $0x28] sm:$0xf]
        %v2642 = vld [vmem:[%s2630 + $0x2c] sm:$0xf]
        %v2643 = vld [vmem:[%s2630 + $0x30] sm:$0xf]
        %v2644 = vld [vmem:[%s2630 + $0x34] sm:$0xf]
        %v2645 = vld [vmem:[%s2630 + $0x38] sm:$0xf]
        %v2646 = vld [vmem:[%s2630 + $0x3c] sm:$0xf]
        %v2663 = vunpack.c.l.b16 %v2631
        %v2664 = vunpack.c.l.b16 %v2632
        %v2665 = vunpack.c.l.b16 %v2633
        %v2666 = vunpack.c.l.b16 %v2634
        %v2667 = vunpack.c.l.b16 %v2635
        %v2668 = vunpack.c.l.b16 %v2636
        %v2669 = vunpack.c.l.b16 %v2637
        %v2670 = vunpack.c.l.b16 %v2638
        %v2671 = vunpack.c.l.b16 %v2639
        %v2672 = vunpack.c.l.b16 %v2640
        %v2673 = vunpack.c.l.b16 %v2641
        %v2674 = vunpack.c.l.b16 %v2642
        %v2675 = vunpack.c.l.b16 %v2643
        %v2676 = vunpack.c.l.b16 %v2644
        %v2677 = vunpack.c.l.b16 %v2645
        %v2678 = vunpack.c.l.b16 %v2646
        %v2679 = vpack.c.b16 %v2664, %v2663
        %v2680 = vpack.c.b16 %v2666, %v2665
        %v2681 = vpack.c.b16 %v2668, %v2667
        %v2682 = vpack.c.b16 %v2670, %v2669
        %v2683 = vpack.c.b16 %v2672, %v2671
        %v2684 = vpack.c.b16 %v2674, %v2673
        %v2685 = vpack.c.b16 %v2676, %v2675
        %v2686 = vpack.c.b16 %v2678, %v2677
        %2695 = vmatprep.subr.bf16.mxu0 0
        %2696 = vmatpush1.bf16.msra.mxu0 %v2679
        %2697 = vmatprep.subr.bf16.mxu0 0
        %2698 = vmatpush1.bf16.msra.mxu0 %v2680
        %2699 = vmatprep.subr.bf16.mxu0 0
        %2700 = vmatpush1.bf16.msra.mxu0 %v2681
        %2701 = vmatprep.subr.bf16.mxu0 0
        %2702 = vmatpush1.bf16.msra.mxu0 %v2682
        %2703 = vmatprep.subr.bf16.mxu0 0
        %2704 = vmatpush1.bf16.msra.mxu0 %v2683
        %2705 = vmatprep.subr.bf16.mxu0 0
        %2706 = vmatpush1.bf16.msra.mxu0 %v2684
        %2707 = vmatprep.subr.bf16.mxu0 0
        %2708 = vmatpush1.bf16.msra.mxu0 %v2685
        %2709 = vmatprep.subr.bf16.mxu0 0
        %2710 = vmatpush1.bf16.msra.mxu0 %v2686
        %2711 = vmatprep.subr.bf16.mxu0 0
        %2712 = vmatpush1.bf16.msra.mxu0 0
        %2713 = vmatprep.subr.bf16.mxu0 0
        %2714 = vmatpush1.bf16.msra.mxu0 0
        %2715 = vmatprep.subr.bf16.mxu0 0
        %2716 = vmatpush1.bf16.msra.mxu0 0
        %2717 = vmatprep.subr.bf16.mxu0 0
        %2718 = vmatpush1.bf16.msra.mxu0 0
        %2719 = vmatprep.subr.bf16.mxu0 0
        %2720 = vmatpush1.bf16.msra.mxu0 0
        %2721 = vmatprep.subr.bf16.mxu0 0
        %2722 = vmatpush1.bf16.msra.mxu0 0
        %2723 = vmatprep.subr.bf16.mxu0 0
        %2724 = vmatpush1.bf16.msra.mxu0 0
        %2725 = vmatprep.subr.bf16.mxu0 0
        %2726 = vmatpush1.bf16.msra.mxu0 0
        %2727 = vmatprep.mubr.bf16.mxu0 0
        %2728 = vmatmul.mubr.bf16.gmra.mrb[0].mxu0 %v2614
        %v2729 = vpop.f32.mrb[0].mxu0
        %v2730 = vadd.f32 0.0, %v2729
        %v2731 = vpop.f32.mrb[0].mxu0
        %v2732 = vpop.f32.mrb[0].mxu0
        %v2733 = vadd.f32 0.0, %v2732
        %v2734 = vpop.f32.mrb[0].mxu0
        %2735 = vmatprep.mubr.bf16.mxu0 0
        %2736 = vmatmul.mubr.bf16.gmra.mrb[0].mxu0 %v2615
        %v2737 = vpop.f32.mrb[0].mxu0
        %v2738 = vadd.f32 0.0, %v2737
        %v2739 = vpop.f32.mrb[0].mxu0
        %v2740 = vpop.f32.mrb[0].mxu0
        %v2741 = vadd.f32 0.0, %v2740
        %v2742 = vpop.f32.mrb[0].mxu0
        %2743 = vmatprep.mubr.bf16.mxu0 0
        %2744 = vmatmul.mubr.bf16.gmra.mrb[0].mxu0 %v2616
        %v2745 = vpop.f32.mrb[0].mxu0
        %v2746 = vadd.f32 0.0, %v2745
        %v2747 = vpop.f32.mrb[0].mxu0
        %v2748 = vpop.f32.mrb[0].mxu0
        %v2749 = vadd.f32 0.0, %v2748
        %v2750 = vpop.f32.mrb[0].mxu0
        %2751 = vmatprep.mubr.bf16.mxu0 0
        %2752 = vmatmul.mubr.bf16.gmra.mrb[0].mxu0 %v2617
        %v2753 = vpop.f32.mrb[0].mxu0
        %v2754 = vadd.f32 0.0, %v2753
        %v2755 = vpop.f32.mrb[0].mxu0
        %v2756 = vpop.f32.mrb[0].mxu0
        %v2757 = vadd.f32 0.0, %v2756
        %v2758 = vpop.f32.mrb[0].mxu0
        %2759 = vmatprep.mubr.bf16.mxu0 0
        %2760 = vmatmul.mubr.bf16.gmra.mrb[0].mxu0 %v2618
        %v2761 = vpop.f32.mrb[0].mxu0
        %v2762 = vadd.f32 0.0, %v2761
        %v2763 = vpop.f32.mrb[0].mxu0
        %v2764 = vpop.f32.mrb[0].mxu0
        %v2765 = vadd.f32 0.0, %v2764
        %v2766 = vpop.f32.mrb[0].mxu0
        %2767 = vmatprep.mubr.bf16.mxu0 0
        %2768 = vmatmul.mubr.bf16.gmra.mrb[0].mxu0 %v2619
        %v2769 = vpop.f32.mrb[0].mxu0
        %v2770 = vadd.f32 0.0, %v2769
        %v2771 = vpop.f32.mrb[0].mxu0
        %v2772 = vpop.f32.mrb[0].mxu0
        %v2773 = vadd.f32 0.0, %v2772
        %v2774 = vpop.f32.mrb[0].mxu0
        %2775 = vmatprep.mubr.bf16.mxu0 0
        %2776 = vmatmul.mubr.bf16.gmra.mrb[0].mxu0 %v2620
        %v2777 = vpop.f32.mrb[0].mxu0
        %v2778 = vadd.f32 0.0, %v2777
        %v2779 = vpop.f32.mrb[0].mxu0
        %v2780 = vpop.f32.mrb[0].mxu0
        %v2781 = vadd.f32 0.0, %v2780
        %v2782 = vpop.f32.mrb[0].mxu0
        %2783 = vmatprep.mubr.bf16.mxu0 0
        %2784 = vmatmul.mubr.bf16.gmra.mrb[0].mxu0 %v2621
        %v2785 = vpop.f32.mrb[0].mxu0
        %v2786 = vadd.f32 0.0, %v2785
        %v2787 = vpop.f32.mrb[0].mxu0
        %v2788 = vpop.f32.mrb[0].mxu0
        %v2789 = vadd.f32 0.0, %v2788
        %v2790 = vpop.f32.mrb[0].mxu0
        %2791 = vmatprep.mubr.bf16.mxu0 0
        %2792 = vmatmul.mubr.bf16.gmra.mrb[0].mxu0 %v2622
        %v2793 = vpop.f32.mrb[0].mxu0
        %v2794 = vadd.f32 0.0, %v2793
        %v2795 = vpop.f32.mrb[0].mxu0
        %v2796 = vpop.f32.mrb[0].mxu0
        %v2797 = vadd.f32 0.0, %v2796
        %v2798 = vpop.f32.mrb[0].mxu0
        %2799 = vmatprep.mubr.bf16.mxu0 0
        %2800 = vmatmul.mubr.bf16.gmra.mrb[0].mxu0 %v2623
        %v2801 = vpop.f32.mrb[0].mxu0
        %v2802 = vadd.f32 0.0, %v2801
        %v2803 = vpop.f32.mrb[0].mxu0
        %v2804 = vpop.f32.mrb[0].mxu0
        %v2805 = vadd.f32 0.0, %v2804
        %v2806 = vpop.f32.mrb[0].mxu0
        %2807 = vmatprep.mubr.bf16.mxu0 0
        %2808 = vmatmul.mubr.bf16.gmra.mrb[0].mxu0 %v2624
        %v2809 = vpop.f32.mrb[0].mxu0
        %v2810 = vadd.f32 0.0, %v2809
        %v2811 = vpop.f32.mrb[0].mxu0
        %v2812 = vpop.f32.mrb[0].mxu0
        %v2813 = vadd.f32 0.0, %v2812
        %v2814 = vpop.f32.mrb[0].mxu0
        %2815 = vmatprep.mubr.bf16.mxu0 0
        %2816 = vmatmul.mubr.bf16.gmra.mrb[0].mxu0 %v2625
        %v2817 = vpop.f32.mrb[0].mxu0
        %v2818 = vadd.f32 0.0, %v2817
        %v2819 = vpop.f32.mrb[0].mxu0
        %v2820 = vpop.f32.mrb[0].mxu0
        %v2821 = vadd.f32 0.0, %v2820
        %v2822 = vpop.f32.mrb[0].mxu0
        %2823 = vmatprep.mubr.bf16.mxu0 0
        %2824 = vmatmul.mubr.bf16.gmra.mrb[0].mxu0 %v2626
        %v2825 = vpop.f32.mrb[0].mxu0
        %v2826 = vadd.f32 0.0, %v2825
        %v2827 = vpop.f32.mrb[0].mxu0
        %v2828 = vpop.f32.mrb[0].mxu0
        %v2829 = vadd.f32 0.0, %v2828
        %v2830 = vpop.f32.mrb[0].mxu0
        %2831 = vmatprep.mubr.bf16.mxu0 0
        %2832 = vmatmul.mubr.bf16.gmra.mrb[0].mxu0 %v2627
        %v2833 = vpop.f32.mrb[0].mxu0
        %v2834 = vadd.f32 0.0, %v2833
        %v2835 = vpop.f32.mrb[0].mxu0
        %v2836 = vpop.f32.mrb[0].mxu0
        %v2837 = vadd.f32 0.0, %v2836
        %v2838 = vpop.f32.mrb[0].mxu0
        %2839 = vmatprep.mubr.bf16.mxu0 0
        %2840 = vmatmul.mubr.bf16.gmra.mrb[0].mxu0 %v2628
        %v2841 = vpop.f32.mrb[0].mxu0
        %v2842 = vadd.f32 0.0, %v2841
        %v2843 = vpop.f32.mrb[0].mxu0
        %v2844 = vpop.f32.mrb[0].mxu0
        %v2845 = vadd.f32 0.0, %v2844
        %v2846 = vpop.f32.mrb[0].mxu0
        %2847 = vmatprep.mubr.bf16.mxu0 0
        %2848 = vmatmul.mubr.bf16.gmra.mrb[0].mxu0 %v2629
        %v2849 = vpop.f32.mrb[0].mxu0
        %v2850 = vadd.f32 0.0, %v2849
        %v2851 = vpop.f32.mrb[0].mxu0
        %v2852 = vpop.f32.mrb[0].mxu0
        %v2853 = vadd.f32 0.0, %v2852
        %v2854 = vpop.f32.mrb[0].mxu0
        %2855 = vdwg.mxu0
        %v2856 = vadd.f32 %v2550, %v2730
        %v2857 = vadd.f32 %v2551, %v2733
        %v2858 = vadd.f32 %v2552, %v2738
        %v2859 = vadd.f32 %v2553, %v2741
        %v2860 = vadd.f32 %v2554, %v2746
        %v2861 = vadd.f32 %v2555, %v2749
        %v2862 = vadd.f32 %v2556, %v2754
        %v2863 = vadd.f32 %v2557, %v2757
        %v2864 = vadd.f32 %v2558, %v2762
        %v2865 = vadd.f32 %v2559, %v2765
        %v2866 = vadd.f32 %v2560, %v2770
        %v2867 = vadd.f32 %v2561, %v2773
        %v2868 = vadd.f32 %v2562, %v2778
        %v2869 = vadd.f32 %v2563, %v2781
        %v2870 = vadd.f32 %v2564, %v2786
        %v2871 = vadd.f32 %v2565, %v2789
        %v2872 = vadd.f32 %v2566, %v2794
        %v2873 = vadd.f32 %v2567, %v2797
        %v2874 = vadd.f32 %v2568, %v2802
        %v2875 = vadd.f32 %v2569, %v2805
        %v2876 = vadd.f32 %v2570, %v2810
        %v2877 = vadd.f32 %v2571, %v2813
        %v2878 = vadd.f32 %v2572, %v2818
        %v2879 = vadd.f32 %v2573, %v2821
        %v2880 = vadd.f32 %v2574, %v2826
        %v2881 = vadd.f32 %v2575, %v2829
        %v2882 = vadd.f32 %v2576, %v2834
        %v2883 = vadd.f32 %v2577, %v2837
        %v2884 = vadd.f32 %v2578, %v2842
        %v2885 = vadd.f32 %v2579, %v2845
        %v2886 = vadd.f32 %v2580, %v2850
        %v2887 = vadd.f32 %v2581, %v2853
        %v2888 = vld [vmem:[%s2] sm:$0x1]
        %v2890 = vlaneseq
        %v2891 = vshrl.u32 %v2890, 7
        %v2892 = vsub.s32 0, %v2891
        %v2893 = vrot.slane %v2888, %v2892
        %v2895 = vmul.f32 %v2856, %v2893
        %v2896 = vmul.f32 %v2857, %v2893
        %v2897 = vmul.f32 %v2858, %v2893
        %v2898 = vmul.f32 %v2859, %v2893
        %v2899 = vmul.f32 %v2860, %v2893
        %v2900 = vmul.f32 %v2861, %v2893
        %v2901 = vmul.f32 %v2862, %v2893
        %v2902 = vmul.f32 %v2863, %v2893
        %v2903 = vmul.f32 %v2864, %v2893
        %v2904 = vmul.f32 %v2865, %v2893
        %v2905 = vmul.f32 %v2866, %v2893
        %v2906 = vmul.f32 %v2867, %v2893
        %v2907 = vmul.f32 %v2868, %v2893
        %v2908 = vmul.f32 %v2869, %v2893
        %v2909 = vmul.f32 %v2870, %v2893
        %v2910 = vmul.f32 %v2871, %v2893
        %v2911 = vmul.f32 %v2872, %v2893
        %v2912 = vmul.f32 %v2873, %v2893
        %v2913 = vmul.f32 %v2874, %v2893
        %v2914 = vmul.f32 %v2875, %v2893
        %v2915 = vmul.f32 %v2876, %v2893
        %v2916 = vmul.f32 %v2877, %v2893
        %v2917 = vmul.f32 %v2878, %v2893
        %v2918 = vmul.f32 %v2879, %v2893
        %v2919 = vmul.f32 %v2880, %v2893
        %v2920 = vmul.f32 %v2881, %v2893
        %v2921 = vmul.f32 %v2882, %v2893
        %v2922 = vmul.f32 %v2883, %v2893
        %v2923 = vmul.f32 %v2884, %v2893
        %v2924 = vmul.f32 %v2885, %v2893
        %v2925 = vmul.f32 %v2886, %v2893
        %v2926 = vmul.f32 %v2887, %v2893
        %v2927 = vld [vmem:[%s3] sm:$0x1]
        %v2929 = vlaneseq
        %v2930 = vshrl.u32 %v2929, 7
        %v2931 = vsub.s32 0, %v2930
        %v2932 = vrot.slane %v2927, %v2931
        %v2934 = vadd.f32 %v2895, %v2932
        %v2935 = vadd.f32 %v2896, %v2932
        %v2936 = vadd.f32 %v2897, %v2932
        %v2937 = vadd.f32 %v2898, %v2932
        %v2938 = vadd.f32 %v2899, %v2932
        %v2939 = vadd.f32 %v2900, %v2932
        %v2940 = vadd.f32 %v2901, %v2932
        %v2941 = vadd.f32 %v2902, %v2932
        %v2942 = vadd.f32 %v2903, %v2932
        %v2943 = vadd.f32 %v2904, %v2932
        %v2944 = vadd.f32 %v2905, %v2932
        %v2945 = vadd.f32 %v2906, %v2932
        %v2946 = vadd.f32 %v2907, %v2932
        %v2947 = vadd.f32 %v2908, %v2932
        %v2948 = vadd.f32 %v2909, %v2932
        %v2949 = vadd.f32 %v2910, %v2932
        %v2950 = vadd.f32 %v2911, %v2932
        %v2951 = vadd.f32 %v2912, %v2932
        %v2952 = vadd.f32 %v2913, %v2932
        %v2953 = vadd.f32 %v2914, %v2932
        %v2954 = vadd.f32 %v2915, %v2932
        %v2955 = vadd.f32 %v2916, %v2932
        %v2956 = vadd.f32 %v2917, %v2932
        %v2957 = vadd.f32 %v2918, %v2932
        %v2958 = vadd.f32 %v2919, %v2932
        %v2959 = vadd.f32 %v2920, %v2932
        %v2960 = vadd.f32 %v2921, %v2932
        %v2961 = vadd.f32 %v2922, %v2932
        %v2962 = vadd.f32 %v2923, %v2932
        %v2963 = vadd.f32 %v2924, %v2932
        %v2964 = vadd.f32 %v2925, %v2932
        %v2965 = vadd.f32 %v2926, %v2932
        %v2966 = vadd.f32 %v2934, %v1357
        %v2967 = vadd.f32 %v2935, %v1358
        %v2968 = vadd.f32 %v2936, %v1359
        %v2969 = vadd.f32 %v2937, %v1360
        %v2970 = vadd.f32 %v2938, %v1361
        %v2971 = vadd.f32 %v2939, %v1362
        %v2972 = vadd.f32 %v2940, %v1363
        %v2973 = vadd.f32 %v2941, %v1364
        %v2974 = vadd.f32 %v2942, %v1365
        %v2975 = vadd.f32 %v2943, %v1366
        %v2976 = vadd.f32 %v2944, %v1367
        %v2977 = vadd.f32 %v2945, %v1368
        %v2978 = vadd.f32 %v2946, %v1369
        %v2979 = vadd.f32 %v2947, %v1370
        %v2980 = vadd.f32 %v2948, %v1371
        %v2981 = vadd.f32 %v2949, %v1372
        %v2982 = vadd.f32 %v2950, %v1373
        %v2983 = vadd.f32 %v2951, %v1374
        %v2984 = vadd.f32 %v2952, %v1375
        %v2985 = vadd.f32 %v2953, %v1376
        %v2986 = vadd.f32 %v2954, %v1377
        %v2987 = vadd.f32 %v2955, %v1378
        %v2988 = vadd.f32 %v2956, %v1379
        %v2989 = vadd.f32 %v2957, %v1380
        %v2990 = vadd.f32 %v2958, %v1381
        %v2991 = vadd.f32 %v2959, %v1382
        %v2992 = vadd.f32 %v2960, %v1383
        %v2993 = vadd.f32 %v2961, %v1384
        %v2994 = vadd.f32 %v2962, %v1385
        %v2995 = vadd.f32 %v2963, %v1386
        %v2996 = vadd.f32 %v2964, %v1387
        %v2997 = vadd.f32 %v2965, %v1388
        %v2998 = vmax.f32 %v2966, 0.0
        %v2999 = vmax.f32 %v2967, 0.0
        %v3000 = vmax.f32 %v2968, 0.0
        %v3001 = vmax.f32 %v2969, 0.0
        %v3002 = vmax.f32 %v2970, 0.0
        %v3003 = vmax.f32 %v2971, 0.0
        %v3004 = vmax.f32 %v2972, 0.0
        %v3005 = vmax.f32 %v2973, 0.0
        %v3006 = vmax.f32 %v2974, 0.0
        %v3007 = vmax.f32 %v2975, 0.0
        %v3008 = vmax.f32 %v2976, 0.0
        %v3009 = vmax.f32 %v2977, 0.0
        %v3010 = vmax.f32 %v2978, 0.0
        %v3011 = vmax.f32 %v2979, 0.0
        %v3012 = vmax.f32 %v2980, 0.0
        %v3013 = vmax.f32 %v2981, 0.0
        %v3014 = vmax.f32 %v2982, 0.0
        %v3015 = vmax.f32 %v2983, 0.0
        %v3016 = vmax.f32 %v2984, 0.0
        %v3017 = vmax.f32 %v2985, 0.0
        %v3018 = vmax.f32 %v2986, 0.0
        %v3019 = vmax.f32 %v2987, 0.0
        %v3020 = vmax.f32 %v2988, 0.0
        %v3021 = vmax.f32 %v2989, 0.0
        %v3022 = vmax.f32 %v2990, 0.0
        %v3023 = vmax.f32 %v2991, 0.0
        %v3024 = vmax.f32 %v2992, 0.0
        %v3025 = vmax.f32 %v2993, 0.0
        %v3026 = vmax.f32 %v2994, 0.0
        %v3027 = vmax.f32 %v2995, 0.0
        %v3028 = vmax.f32 %v2996, 0.0
        %v3029 = vmax.f32 %v2997, 0.0
        %3030 = vst [vmem:[%s190] sm:$0xff] %v2998
        %3031 = vst [vmem:[%s190 + $0x8] sm:$0xff] %v2999
        %3032 = vst [vmem:[%s190 + $0x10] sm:$0xff] %v3000
        %3033 = vst [vmem:[%s190 + $0x18] sm:$0xff] %v3001
        %3034 = vst [vmem:[%s190 + $0x20] sm:$0xff] %v3002
        %3035 = vst [vmem:[%s190 + $0x28] sm:$0xff] %v3003
        %3036 = vst [vmem:[%s190 + $0x30] sm:$0xff] %v3004
        %3037 = vst [vmem:[%s190 + $0x38] sm:$0xff] %v3005
        %3038 = vst [vmem:[%s190 + $0x40] sm:$0xff] %v3006
        %3039 = vst [vmem:[%s190 + $0x48] sm:$0xff] %v3007
        %3040 = vst [vmem:[%s190 + $0x50] sm:$0xff] %v3008
        %3041 = vst [vmem:[%s190 + $0x58] sm:$0xff] %v3009
        %3042 = vst [vmem:[%s190 + $0x60] sm:$0xff] %v3010
        %3043 = vst [vmem:[%s190 + $0x68] sm:$0xff] %v3011
        %3044 = vst [vmem:[%s190 + $0x70] sm:$0xff] %v3012
        %3045 = vst [vmem:[%s190 + $0x78] sm:$0xff] %v3013
        %3046 = vst [vmem:[%s190 + $0x80] sm:$0xff] %v3014
        %3047 = vst [vmem:[%s190 + $0x88] sm:$0xff] %v3015
        %3048 = vst [vmem:[%s190 + $0x90] sm:$0xff] %v3016
        %3049 = vst [vmem:[%s190 + $0x98] sm:$0xff] %v3017
        %3050 = vst [vmem:[%s190 + $0xa0] sm:$0xff] %v3018
        %3051 = vst [vmem:[%s190 + $0xa8] sm:$0xff] %v3019
        %3052 = vst [vmem:[%s190 + $0xb0] sm:$0xff] %v3020
        %3053 = vst [vmem:[%s190 + $0xb8] sm:$0xff] %v3021
        %3054 = vst [vmem:[%s190 + $0xc0] sm:$0xff] %v3022
        %3055 = vst [vmem:[%s190 + $0xc8] sm:$0xff] %v3023
        %3056 = vst [vmem:[%s190 + $0xd0] sm:$0xff] %v3024
        %3057 = vst [vmem:[%s190 + $0xd8] sm:$0xff] %v3025
        %3058 = vst [vmem:[%s190 + $0xe0] sm:$0xff] %v3026
        %3059 = vst [vmem:[%s190 + $0xe8] sm:$0xff] %v3027
        %3060 = vst [vmem:[%s190 + $0xf0] sm:$0xff] %v3028
        %3061 = vst [vmem:[%s190 + $0xf8] sm:$0xff] %v3029
        %s3062 = sand.u32 %s115, 1
        %s3063 = scalar_lea.sflag [#allocation3], %s3062
        %s3064 = sand.u32 %s115, 1
        %s3065 = smul.addr %s3064, 256
        %s3066 = scalar_lea.vmem [#allocation2], %s3065
        // Predicated region
        $region37: #{newblock_forward.3} parent=35 // pred_check
          %p3067 = pneg %p125
        $region38: #{newblock_forward.3} parent=35 // pred_check_branch
          %3069 = sbr.rel (%p3067) target = $region40
        $region39: #{newblock_forward.3} parent=35 // pred_region
          %s3071 = ssub.s32 4096, 4096
          %3072 = vsyncadd %s3063, %s3071
          %s3073 = smul.addr %s18, 32
          %s3074 = smul.addr %s3073, 128
          %s3075 = scalar_lea.hbm %s4, %s3074
          %s3076 = sshll.u32 %s3066, 4
          %s3077 = int_to_ptr.vmem [resolvable:$true] %s3076
          %3082 = dma.vmem_to_hbm [thread:$0]  %s3077, 4096, %s3075, %s3063, 128, 128, 8
        $region40: #{newblock_forward.3} parent=35 // pred_fallthru
          _
      $region36: #{newblock_forward.3} parent=5 // pred_fallthru
        _
      %p3083 = scmp.le.s32.totalorder 2, %s13
      // Predicated region
      $region41: #{newblock_forward.3} parent=5 // pred_check
        %p3084 = pneg %p3083
      $region42: #{newblock_forward.3} parent=5 // pred_check_branch
        %3086 = sbr.rel (%p3084) target = $region44
      $region43: #{newblock_forward.3} parent=5 // pred_region
        %s3087 = ssub.s32 %s13, 2
        // Predicated region
        $region45: #{newblock_forward.3} parent=43 // pred_check
          %p3088 = pneg %p131
        $region46: #{newblock_forward.3} parent=43 // pred_check_branch
          %3090 = sbr.rel (%p3088) target = $region48
        $region47: #{newblock_forward.3} parent=43 // pred_region
          %s3091 = sand.u32 %s116, 1
          %s3092 = scalar_lea.sflag [#allocation3], %s3091
          %s3093 = sand.u32 %s116, 1
          %s3094 = smul.addr %s3093, 256
          %s3095 = scalar_lea.vmem [#allocation2], %s3094
          %3096 = dma.done %s3092, 4096
        $region48: #{newblock_forward.3} parent=43 // pred_fallthru
          _
      $region44: #{newblock_forward.3} parent=5 // pred_fallthru
        _
    $region6: #{newblock_forward.3} parent=1 // loop_footer
      %s17 = sadd.s32 1, %s13
    $region7: #{newblock_forward.3} parent=1 // loop_footer_branch
      %12 = sbr.rel target = $region3
    $region8: #{newblock_forward.3} parent=1 // loop_exit
      _
    %3097 = vsyncpa [#allocation3], 1
    %s3098 = scalar_lea.sflag [#allocation3], 1
    %3099 = vsyncpa %s3098, 1

</llo_original>
